<compile_context>
chip_gen: v7x
topology: tpu7x:2x2x1
jax: 0.10.0
libtpu: 0.0.40
codegen_flags: <defaults>
</compile_context>

<pallas_src>
import functools
import math

import jax
import jax.numpy as jnp
from jax import lax
from jax.experimental import pallas as pl


SA_KEYS = ("ln1_g", "ln1_b", "w_qkv", "b_qkv", "w_o", "b_o",
           "ln2_g", "ln2_b", "w_fc", "b_fc", "w_pr", "b_pr")
CROSS_KEYS = ("lnq_g", "lnq_b", "lnk_g", "lnk_b",
              "w_q", "b_q", "w_k", "b_k", "w_v", "b_v", "w_o", "b_o",
              "ln2_g", "ln2_b", "w_fc", "b_fc", "w_pr", "b_pr")

# contract last dims of both operands: q @ k^T without materializing k.T
_TRANS_B = (((1,), (1,)), ((), ()))


# ----------------------------- kernel helpers ------------------------------

def _bf16_dot(a, b):
    """MXU matmul with bf16 operands and f32 accumulation."""
    return jnp.dot(a.astype(jnp.bfloat16), b.astype(jnp.bfloat16),
                   preferred_element_type=jnp.float32)


def _ln(x, g, b, eps):
    mu = jnp.mean(x, axis=-1, keepdims=True)
    var = jnp.mean(jnp.square(x - mu), axis=-1, keepdims=True)
    return (x - mu) * lax.rsqrt(var + eps) * g + b


def _softmax_rows(s):
    s = s - jnp.max(s, axis=-1, keepdims=True)
    p = jnp.exp(s)
    return p * pl.reciprocal(jnp.sum(p, axis=-1, keepdims=True), approx=True)


def _mha_out(q, k, v, w_o, n_heads):
    """q:(Tq,E) k,v:(Tk,E) -> (Tq,E) f32, already output-projected (no bias).

    Transpose/concat-free MHA: scores via dot_general contracting last dims,
    and the head-concat folded into row-slices of W_o, so per-head contexts
    are combined with MXU matmul adds instead of lane concatenation.
    """
    E = q.shape[-1]
    hd = E // n_heads
    scale = 1.0 / math.sqrt(hd)
    out = None
    for h in range(n_heads):
        sl = slice(h * hd, (h + 1) * hd)
        qh = q[:, sl].astype(jnp.bfloat16)
        kh = k[:, sl].astype(jnp.bfloat16)
        vh = v[:, sl].astype(jnp.bfloat16)
        sc = lax.dot_general(qh, kh, _TRANS_B,
                             preferred_element_type=jnp.float32) * scale
        p = _softmax_rows(sc)
        ctx = jnp.dot(p.astype(jnp.bfloat16), vh,
                      preferred_element_type=jnp.float32)
        contrib = _bf16_dot(ctx, w_o[sl, :])
        out = contrib if out is None else out + contrib
    return out


def _sa_body(x, p, batch, tokens, n_heads, eps):
    """Pre-LN self-attention + MLP block on batch-folded tokens.

    x: (batch*tokens, E) f32.  LN / QKV / MLP matmuls are batch-folded; only
    the score/softmax step is done per batch via static sublane slices.
    """
    E = x.shape[-1]
    h = _ln(x, p["ln1_g"], p["ln1_b"], eps)
    qkv = _bf16_dot(h, p["w_qkv"]) + p["b_qkv"]                # (B*T, 3E)
    ys = []
    for b in range(batch):
        rows = slice(b * tokens, (b + 1) * tokens)
        q = qkv[rows, 0:E]
        k = qkv[rows, E:2 * E]
        v = qkv[rows, 2 * E:3 * E]
        ys.append(_mha_out(q, k, v, p["w_o"], n_heads))
    attn = ys[0] if batch == 1 else jnp.concatenate(ys, axis=0)
    x = x + attn + p["b_o"]
    h2 = _ln(x, p["ln2_g"], p["ln2_b"], eps)
    # TODO(synk): config.activation is a constructor argument of the PyTorch
    # module; tanh-approximate GELU is assumed here.
    m = jax.nn.gelu(_bf16_dot(h2, p["w_fc"]) + p["b_fc"], approximate=True)
    return x + _bf16_dot(m, p["w_pr"]) + p["b_pr"]


def _cross_body(g, pos, p, batch, g_tokens, n_heads, eps):
    """Cross-attention block: queries = positional sequence encodings (shared
    across the batch), keys/values = grid tokens; followed by a pre-LN MLP.

    g: (batch*g_tokens, Eg) f32, pos: (P, Es) f32 -> (batch*P, Es) f32.
    """
    q = _bf16_dot(_ln(pos, p["lnq_g"], p["lnq_b"], eps), p["w_q"]) + p["b_q"]
    kvn = _ln(g, p["lnk_g"], p["lnk_b"], eps)                  # (B*G, Eg)
    k = _bf16_dot(kvn, p["w_k"]) + p["b_k"]                    # (B*G, Es)
    v = _bf16_dot(kvn, p["w_v"]) + p["b_v"]                    # (B*G, Es)
    xs = []
    for b in range(batch):
        rows = slice(b * g_tokens, (b + 1) * g_tokens)
        y = _mha_out(q, k[rows], v[rows], p["w_o"], n_heads)   # (P, Es)
        xs.append(pos + y + p["b_o"])
    x = xs[0] if batch == 1 else jnp.concatenate(xs, axis=0)   # (B*P, Es)
    h2 = _ln(x, p["ln2_g"], p["ln2_b"], eps)
    m = jax.nn.gelu(_bf16_dot(h2, p["w_fc"]) + p["b_fc"], approximate=True)
    return x + _bf16_dot(m, p["w_pr"]) + p["b_pr"]


# ------------------------------ fused kernel --------------------------------

def _decoder_kernel(*refs, batch, grid_tokens, seq_tokens,
                    n_heads_grid, n_heads_seq, n_layers, eps):
    it = iter(refs)
    g_ref = next(it)                                     # (B*G, Eg)
    pos_ref = next(it)                                   # (P, Es)
    gt = {k: next(it)[...] for k in SA_KEYS}             # grid transformer
    xp = {k: next(it)[...] for k in CROSS_KEYS}          # grid -> sequence
    sq_refs = {k: next(it) for k in SA_KEYS}             # seq layers (stacked)
    o_ref = next(it)                                     # (B*P, Es)

    # grid_transformer over flattened grid tokens (batch-folded matmuls).
    g = g_ref[...].astype(jnp.float32)
    g = _sa_body(g, gt, batch, grid_tokens, n_heads_grid, eps)

    # grid_to_sequence: cross-attention from positional sequence encodings
    # (shared across batch -> no broadcast tensor materialized) into grid.
    pos = pos_ref[...].astype(jnp.float32)
    s = _cross_body(g, pos, xp, batch, grid_tokens, n_heads_grid, eps)

    # sequence_transformer (extra_embed width 0 -> no effect).
    for l in range(n_layers):
        layer = {k: sq_refs[k][l] for k in SA_KEYS}
        s = _sa_body(s, layer, batch, seq_tokens, n_heads_seq, eps)

    o_ref[...] = s.astype(o_ref.dtype)


# ----------------------------- parameter setup ------------------------------

def _init_sa_params(key, E, mult, std):
    ks = jax.random.split(key, 4)
    f32, bf16 = jnp.float32, jnp.bfloat16
    return dict(
        ln1_g=jnp.ones((1, E), f32), ln1_b=jnp.zeros((1, E), f32),
        w_qkv=(jax.random.normal(ks[0], (E, 3 * E), f32) * std).astype(bf16),
        b_qkv=jnp.zeros((1, 3 * E), f32),
        w_o=(jax.random.normal(ks[1], (E, E), f32) * std).astype(bf16),
        b_o=jnp.zeros((1, E), f32),
        ln2_g=jnp.ones((1, E), f32), ln2_b=jnp.zeros((1, E), f32),
        w_fc=(jax.random.normal(ks[2], (E, mult * E), f32) * std).astype(bf16),
        b_fc=jnp.zeros((1, mult * E), f32),
        w_pr=(jax.random.normal(ks[3], (mult * E, E), f32) * std).astype(bf16),
        b_pr=jnp.zeros((1, E), f32),
    )


def _init_cross_params(key, Eg, Es, mult, std):
    ks = jax.random.split(key, 6)
    f32, bf16 = jnp.float32, jnp.bfloat16
    return dict(
        lnq_g=jnp.ones((1, Es), f32), lnq_b=jnp.zeros((1, Es), f32),
        lnk_g=jnp.ones((1, Eg), f32), lnk_b=jnp.zeros((1, Eg), f32),
        w_q=(jax.random.normal(ks[0], (Es, Es), f32) * std).astype(bf16),
        b_q=jnp.zeros((1, Es), f32),
        w_k=(jax.random.normal(ks[1], (Eg, Es), f32) * std).astype(bf16),
        b_k=jnp.zeros((1, Es), f32),
        w_v=(jax.random.normal(ks[2], (Eg, Es), f32) * std).astype(bf16),
        b_v=jnp.zeros((1, Es), f32),
        w_o=(jax.random.normal(ks[3], (Es, Es), f32) * std).astype(bf16),
        b_o=jnp.zeros((1, Es), f32),
        ln2_g=jnp.ones((1, Es), f32), ln2_b=jnp.zeros((1, Es), f32),
        w_fc=(jax.random.normal(ks[4], (Es, mult * Es), f32) * std).astype(bf16),
        b_fc=jnp.zeros((1, mult * Es), f32),
        w_pr=(jax.random.normal(ks[5], (mult * Es, Es), f32) * std).astype(bf16),
        b_pr=jnp.zeros((1, Es), f32),
    )


def init_decoder_params(key, cfg):
    k_grid, k_cross, k_pos, k_seq = jax.random.split(key, 4)
    L = cfg["n_sequence_layers"]
    seq_keys = jax.random.split(k_seq, L)
    seq_layers = [_init_sa_params(seq_keys[i], cfg["n_embed_sequence"],
                                  cfg["linear_size_multiplier"], cfg["init_std"])
                  for i in range(L)]
    # Stack per-layer params along a leading layer axis (one input per key).
    seq_stacked = {k: jnp.stack([lp[k] for lp in seq_layers], axis=0)
                   for k in SA_KEYS}
    return dict(
        grid_transformer=_init_sa_params(
            k_grid, cfg["n_embed_grid"],
            cfg["linear_size_multiplier"], cfg["init_std"]),
        grid_to_sequence=_init_cross_params(
            k_cross, cfg["n_embed_grid"], cfg["n_embed_sequence"],
            cfg["linear_size_multiplier"], cfg["init_std"]),
        pos_emb=(jax.random.normal(
            k_pos, (cfg["n_max_permutation_size"], cfg["n_embed_sequence"]),
            jnp.float32) * cfg["init_std"]),
        seq_stacked=seq_stacked,
    )


# -------------------------------- forward -----------------------------------

def permutation_grid_decoder_forward(x, params, cfg):
    """x: (B, n_grid_rows, n_grid_columns, n_embed_grid)
       -> (B, n_max_permutation_size, n_embed_sequence)"""
    B, R, C, Eg = x.shape
    G = R * C
    P = cfg["n_max_permutation_size"]
    Es = cfg["n_embed_sequence"]
    L = cfg["n_sequence_layers"]
    assert L >= 1

    g_tokens = x.reshape(B * G, Eg)   # batch-folded grid tokens

    inputs = [g_tokens, params["pos_emb"]]
    inputs += [params["grid_transformer"][k] for k in SA_KEYS]
    inputs += [params["grid_to_sequence"][k] for k in CROSS_KEYS]
    inputs += [params["seq_stacked"][k] for k in SA_KEYS]

    kernel = functools.partial(
        _decoder_kernel,
        batch=B, grid_tokens=G, seq_tokens=P,
        n_heads_grid=cfg["conv_transformer_n_heads"],
        n_heads_seq=cfg["sequence_n_heads"],
        n_layers=L, eps=cfg["ln_eps"])

    # Single fused call, no grid: every operand / activation lives in VMEM for
    # the whole forward; only the final (B*P, Es) result is written to HBM.
    out = pl.pallas_call(
        kernel,
        out_shape=jax.ShapeDtypeStruct((B * P, Es), x.dtype),
    )(*inputs)
    return out.reshape(B, P, Es)


# ---------------------------------- main -------------------------------------

if __name__ == "__main__":
    cfg = dict(
        n_embed_grid=32,
        n_embed_sequence=32,
        n_grid_rows=4,
        n_grid_columns=4,
        n_max_permutation_size=8,
        n_sequence_layers=2,
        conv_transformer_n_heads=2,
        sequence_n_heads=2,
        linear_size_multiplier=4,
        init_std=0.02,
        ln_eps=1e-5,
    )
    key = jax.random.PRNGKey(0)
    k_params, k_x = jax.random.split(key)
    params = init_decoder_params(k_params, cfg)

    batch = 2
    x = jax.random.normal(
        k_x, (batch, cfg["n_grid_rows"], cfg["n_grid_columns"],
              cfg["n_embed_grid"]),
        dtype=jnp.float32)

    out = permutation_grid_decoder_forward(x, params, cfg)
    out = jax.block_until_ready(out)
    assert out.shape == (batch, cfg["n_max_permutation_size"],
                         cfg["n_embed_sequence"])
    assert bool(jnp.all(jnp.isfinite(out)))
    print("KERNEL_OK")
</pallas_src>

<mosaic_0001>
module attributes {stable_mosaic.version = 11 : i64} {
  func.func @_decoder_kernel(%arg0: memref<32x32xf32, #tpu.memory_space<vmem>>, %arg1: memref<8x32xf32, #tpu.memory_space<vmem>>, %arg2: memref<1x32xf32, #tpu.memory_space<vmem>>, %arg3: memref<1x32xf32, #tpu.memory_space<vmem>>, %arg4: memref<32x96xbf16, #tpu.memory_space<vmem>>, %arg5: memref<1x96xf32, #tpu.memory_space<vmem>>, %arg6: memref<32x32xbf16, #tpu.memory_space<vmem>>, %arg7: memref<1x32xf32, #tpu.memory_space<vmem>>, %arg8: memref<1x32xf32, #tpu.memory_space<vmem>>, %arg9: memref<1x32xf32, #tpu.memory_space<vmem>>, %arg10: memref<32x128xbf16, #tpu.memory_space<vmem>>, %arg11: memref<1x128xf32, #tpu.memory_space<vmem>>, %arg12: memref<128x32xbf16, #tpu.memory_space<vmem>>, %arg13: memref<1x32xf32, #tpu.memory_space<vmem>>, %arg14: memref<1x32xf32, #tpu.memory_space<vmem>>, %arg15: memref<1x32xf32, #tpu.memory_space<vmem>>, %arg16: memref<1x32xf32, #tpu.memory_space<vmem>>, %arg17: memref<1x32xf32, #tpu.memory_space<vmem>>, %arg18: memref<32x32xbf16, #tpu.memory_space<vmem>>, %arg19: memref<1x32xf32, #tpu.memory_space<vmem>>, %arg20: memref<32x32xbf16, #tpu.memory_space<vmem>>, %arg21: memref<1x32xf32, #tpu.memory_space<vmem>>, %arg22: memref<32x32xbf16, #tpu.memory_space<vmem>>, %arg23: memref<1x32xf32, #tpu.memory_space<vmem>>, %arg24: memref<32x32xbf16, #tpu.memory_space<vmem>>, %arg25: memref<1x32xf32, #tpu.memory_space<vmem>>, %arg26: memref<1x32xf32, #tpu.memory_space<vmem>>, %arg27: memref<1x32xf32, #tpu.memory_space<vmem>>, %arg28: memref<32x128xbf16, #tpu.memory_space<vmem>>, %arg29: memref<1x128xf32, #tpu.memory_space<vmem>>, %arg30: memref<128x32xbf16, #tpu.memory_space<vmem>>, %arg31: memref<1x32xf32, #tpu.memory_space<vmem>>, %arg32: memref<2x1x32xf32, #tpu.memory_space<vmem>>, %arg33: memref<2x1x32xf32, #tpu.memory_space<vmem>>, %arg34: memref<2x32x96xbf16, #tpu.memory_space<vmem>>, %arg35: memref<2x1x96xf32, #tpu.memory_space<vmem>>, %arg36: memref<2x32x32xbf16, #tpu.memory_space<vmem>>, %arg37: memref<2x1x32xf32, #tpu.memory_space<vmem>>, %arg38: memref<2x1x32xf32, #tpu.memory_space<vmem>>, %arg39: memref<2x1x32xf32, #tpu.memory_space<vmem>>, %arg40: memref<2x32x128xbf16, #tpu.memory_space<vmem>>, %arg41: memref<2x1x128xf32, #tpu.memory_space<vmem>>, %arg42: memref<2x128x32xbf16, #tpu.memory_space<vmem>>, %arg43: memref<2x1x32xf32, #tpu.memory_space<vmem>>, %arg44: memref<16x32xf32, #tpu.memory_space<vmem>>) attributes {dimension_semantics = [], scalar_prefetch = 0 : i64, scratch_operands = 0 : i64, tpu.core_type = #tpu.core_type<tc>} {
    %c0 = arith.constant 0 : index
    %c0_0 = arith.constant 0 : index
    %0 = vector.load %arg2[%c0, %c0_0] : memref<1x32xf32, #tpu.memory_space<vmem>>, vector<1x32xf32>
    %c0_1 = arith.constant 0 : index
    %c0_2 = arith.constant 0 : index
    %1 = vector.load %arg3[%c0_1, %c0_2] : memref<1x32xf32, #tpu.memory_space<vmem>>, vector<1x32xf32>
    %c0_3 = arith.constant 0 : index
    %c0_4 = arith.constant 0 : index
    %2 = vector.load %arg4[%c0_3, %c0_4] : memref<32x96xbf16, #tpu.memory_space<vmem>>, vector<32x96xbf16>
    %c0_5 = arith.constant 0 : index
    %c0_6 = arith.constant 0 : index
    %3 = vector.load %arg5[%c0_5, %c0_6] : memref<1x96xf32, #tpu.memory_space<vmem>>, vector<1x96xf32>
    %c0_7 = arith.constant 0 : index
    %c0_8 = arith.constant 0 : index
    %4 = vector.load %arg6[%c0_7, %c0_8] : memref<32x32xbf16, #tpu.memory_space<vmem>>, vector<32x32xbf16>
    %c0_9 = arith.constant 0 : index
    %c0_10 = arith.constant 0 : index
    %5 = vector.load %arg7[%c0_9, %c0_10] : memref<1x32xf32, #tpu.memory_space<vmem>>, vector<1x32xf32>
    %c0_11 = arith.constant 0 : index
    %c0_12 = arith.constant 0 : index
    %6 = vector.load %arg8[%c0_11, %c0_12] : memref<1x32xf32, #tpu.memory_space<vmem>>, vector<1x32xf32>
    %c0_13 = arith.constant 0 : index
    %c0_14 = arith.constant 0 : index
    %7 = vector.load %arg9[%c0_13, %c0_14] : memref<1x32xf32, #tpu.memory_space<vmem>>, vector<1x32xf32>
    %c0_15 = arith.constant 0 : index
    %c0_16 = arith.constant 0 : index
    %8 = vector.load %arg10[%c0_15, %c0_16] : memref<32x128xbf16, #tpu.memory_space<vmem>>, vector<32x128xbf16>
    %c0_17 = arith.constant 0 : index
    %c0_18 = arith.constant 0 : index
    %9 = vector.load %arg11[%c0_17, %c0_18] : memref<1x128xf32, #tpu.memory_space<vmem>>, vector<1x128xf32>
    %c0_19 = arith.constant 0 : index
    %c0_20 = arith.constant 0 : index
    %10 = vector.load %arg12[%c0_19, %c0_20] : memref<128x32xbf16, #tpu.memory_space<vmem>>, vector<128x32xbf16>
    %c0_21 = arith.constant 0 : index
    %c0_22 = arith.constant 0 : index
    %11 = vector.load %arg13[%c0_21, %c0_22] : memref<1x32xf32, #tpu.memory_space<vmem>>, vector<1x32xf32>
    %c0_23 = arith.constant 0 : index
    %c0_24 = arith.constant 0 : index
    %12 = vector.load %arg14[%c0_23, %c0_24] : memref<1x32xf32, #tpu.memory_space<vmem>>, vector<1x32xf32>
    %c0_25 = arith.constant 0 : index
    %c0_26 = arith.constant 0 : index
    %13 = vector.load %arg15[%c0_25, %c0_26] : memref<1x32xf32, #tpu.memory_space<vmem>>, vector<1x32xf32>
    %c0_27 = arith.constant 0 : index
    %c0_28 = arith.constant 0 : index
    %14 = vector.load %arg16[%c0_27, %c0_28] : memref<1x32xf32, #tpu.memory_space<vmem>>, vector<1x32xf32>
    %c0_29 = arith.constant 0 : index
    %c0_30 = arith.constant 0 : index
    %15 = vector.load %arg17[%c0_29, %c0_30] : memref<1x32xf32, #tpu.memory_space<vmem>>, vector<1x32xf32>
    %c0_31 = arith.constant 0 : index
    %c0_32 = arith.constant 0 : index
    %16 = vector.load %arg18[%c0_31, %c0_32] : memref<32x32xbf16, #tpu.memory_space<vmem>>, vector<32x32xbf16>
    %c0_33 = arith.constant 0 : index
    %c0_34 = arith.constant 0 : index
    %17 = vector.load %arg19[%c0_33, %c0_34] : memref<1x32xf32, #tpu.memory_space<vmem>>, vector<1x32xf32>
    %c0_35 = arith.constant 0 : index
    %c0_36 = arith.constant 0 : index
    %18 = vector.load %arg20[%c0_35, %c0_36] : memref<32x32xbf16, #tpu.memory_space<vmem>>, vector<32x32xbf16>
    %c0_37 = arith.constant 0 : index
    %c0_38 = arith.constant 0 : index
    %19 = vector.load %arg21[%c0_37, %c0_38] : memref<1x32xf32, #tpu.memory_space<vmem>>, vector<1x32xf32>
    %c0_39 = arith.constant 0 : index
    %c0_40 = arith.constant 0 : index
    %20 = vector.load %arg22[%c0_39, %c0_40] : memref<32x32xbf16, #tpu.memory_space<vmem>>, vector<32x32xbf16>
    %c0_41 = arith.constant 0 : index
    %c0_42 = arith.constant 0 : index
    %21 = vector.load %arg23[%c0_41, %c0_42] : memref<1x32xf32, #tpu.memory_space<vmem>>, vector<1x32xf32>
    %c0_43 = arith.constant 0 : index
    %c0_44 = arith.constant 0 : index
    %22 = vector.load %arg24[%c0_43, %c0_44] : memref<32x32xbf16, #tpu.memory_space<vmem>>, vector<32x32xbf16>
    %c0_45 = arith.constant 0 : index
    %c0_46 = arith.constant 0 : index
    %23 = vector.load %arg25[%c0_45, %c0_46] : memref<1x32xf32, #tpu.memory_space<vmem>>, vector<1x32xf32>
    %c0_47 = arith.constant 0 : index
    %c0_48 = arith.constant 0 : index
    %24 = vector.load %arg26[%c0_47, %c0_48] : memref<1x32xf32, #tpu.memory_space<vmem>>, vector<1x32xf32>
    %c0_49 = arith.constant 0 : index
    %c0_50 = arith.constant 0 : index
    %25 = vector.load %arg27[%c0_49, %c0_50] : memref<1x32xf32, #tpu.memory_space<vmem>>, vector<1x32xf32>
    %c0_51 = arith.constant 0 : index
    %c0_52 = arith.constant 0 : index
    %26 = vector.load %arg28[%c0_51, %c0_52] : memref<32x128xbf16, #tpu.memory_space<vmem>>, vector<32x128xbf16>
    %c0_53 = arith.constant 0 : index
    %c0_54 = arith.constant 0 : index
    %27 = vector.load %arg29[%c0_53, %c0_54] : memref<1x128xf32, #tpu.memory_space<vmem>>, vector<1x128xf32>
    %c0_55 = arith.constant 0 : index
    %c0_56 = arith.constant 0 : index
    %28 = vector.load %arg30[%c0_55, %c0_56] : memref<128x32xbf16, #tpu.memory_space<vmem>>, vector<128x32xbf16>
    %c0_57 = arith.constant 0 : index
    %c0_58 = arith.constant 0 : index
    %29 = vector.load %arg31[%c0_57, %c0_58] : memref<1x32xf32, #tpu.memory_space<vmem>>, vector<1x32xf32>
    %c0_59 = arith.constant 0 : index
    %c0_60 = arith.constant 0 : index
    %30 = vector.load %arg0[%c0_59, %c0_60] : memref<32x32xf32, #tpu.memory_space<vmem>>, vector<32x32xf32>
    %cst = arith.constant dense<0.000000e+00> : vector<32xf32>
    %31 = vector.multi_reduction <add>, %30, %cst [1] : vector<32x32xf32> to vector<32xf32>
    %32 = vector.shape_cast %31 : vector<32xf32> to vector<32x1xf32>
    %cst_61 = arith.constant 3.200000e+01 : f32
    %33 = vector.broadcast %cst_61 : f32 to vector<32x1xf32>
    %34 = arith.divf %32, %33 : vector<32x1xf32>
    %35 = vector.broadcast %34 : vector<32x1xf32> to vector<32x32xf32>
    %36 = arith.subf %30, %35 : vector<32x32xf32>
    %37 = arith.mulf %36, %36 : vector<32x32xf32>
    %cst_62 = arith.constant dense<0.000000e+00> : vector<32xf32>
    %38 = vector.multi_reduction <add>, %37, %cst_62 [1] : vector<32x32xf32> to vector<32xf32>
    %39 = vector.shape_cast %38 : vector<32xf32> to vector<32x1xf32>
    %cst_63 = arith.constant 3.200000e+01 : f32
    %40 = vector.broadcast %cst_63 : f32 to vector<32x1xf32>
    %41 = arith.divf %39, %40 : vector<32x1xf32>
    %42 = vector.broadcast %34 : vector<32x1xf32> to vector<32x32xf32>
    %43 = arith.subf %30, %42 : vector<32x32xf32>
    %cst_64 = arith.constant 9.99999974E-6 : f32
    %44 = vector.broadcast %cst_64 : f32 to vector<32x1xf32>
    %45 = arith.addf %41, %44 : vector<32x1xf32>
    %46 = math.rsqrt %45 : vector<32x1xf32>
    %47 = vector.broadcast %46 : vector<32x1xf32> to vector<32x32xf32>
    %48 = arith.mulf %43, %47 : vector<32x32xf32>
    %49 = vector.broadcast %0 : vector<1x32xf32> to vector<32x32xf32>
    %50 = arith.mulf %48, %49 : vector<32x32xf32>
    %51 = vector.broadcast %1 : vector<1x32xf32> to vector<32x32xf32>
    %52 = arith.addf %50, %51 : vector<32x32xf32>
    %53 = arith.truncf %52 : vector<32x32xf32> to vector<32x32xbf16>
    %cst_65 = arith.constant dense<0.000000e+00> : vector<32x96xf32>
    %54 = tpu.matmul %53, %2, %cst_65 {dimension_numbers = #tpu.dot_dimension_numbers<[1], [0], [0], [1], [0, 0, 1, 1], [], []>} : vector<32x32xbf16>, vector<32x96xbf16>, vector<32x96xf32> -> vector<32x96xf32>
    %55 = vector.broadcast %3 : vector<1x96xf32> to vector<32x96xf32>
    %56 = arith.addf %54, %55 : vector<32x96xf32>
    %57 = vector.extract_strided_slice %56 {offsets = [0, 0], sizes = [16, 32], strides = [1, 1]} : vector<32x96xf32> to vector<16x32xf32>
    %58 = vector.extract_strided_slice %56 {offsets = [0, 32], sizes = [16, 32], strides = [1, 1]} : vector<32x96xf32> to vector<16x32xf32>
    %59 = vector.extract_strided_slice %56 {offsets = [0, 64], sizes = [16, 32], strides = [1, 1]} : vector<32x96xf32> to vector<16x32xf32>
    %60 = vector.extract_strided_slice %57 {offsets = [0, 0], sizes = [16, 16], strides = [1, 1]} : vector<16x32xf32> to vector<16x16xf32>
    %61 = arith.truncf %60 : vector<16x16xf32> to vector<16x16xbf16>
    %62 = vector.extract_strided_slice %58 {offsets = [0, 0], sizes = [16, 16], strides = [1, 1]} : vector<16x32xf32> to vector<16x16xf32>
    %63 = arith.truncf %62 : vector<16x16xf32> to vector<16x16xbf16>
    %64 = vector.extract_strided_slice %59 {offsets = [0, 0], sizes = [16, 16], strides = [1, 1]} : vector<16x32xf32> to vector<16x16xf32>
    %65 = arith.truncf %64 : vector<16x16xf32> to vector<16x16xbf16>
    %cst_66 = arith.constant dense<0.000000e+00> : vector<16x16xf32>
    %66 = tpu.matmul %61, %63, %cst_66 {dimension_numbers = #tpu.dot_dimension_numbers<[1], [1], [0], [0], [0, 0, 1, 0], [], []>} : vector<16x16xbf16>, vector<16x16xbf16>, vector<16x16xf32> -> vector<16x16xf32>
    %cst_67 = arith.constant 2.500000e-01 : f32
    %67 = vector.broadcast %cst_67 : f32 to vector<16x16xf32>
    %68 = arith.mulf %66, %67 : vector<16x16xf32>
    %cst_68 = arith.constant dense<0xFF800000> : vector<16xf32>
    %69 = vector.multi_reduction <maximumf>, %68, %cst_68 [1] : vector<16x16xf32> to vector<16xf32>
    %70 = vector.shape_cast %69 : vector<16xf32> to vector<16x1xf32>
    %71 = vector.broadcast %70 : vector<16x1xf32> to vector<16x16xf32>
    %72 = arith.subf %68, %71 : vector<16x16xf32>
    %73 = math.exp %72 : vector<16x16xf32>
    %cst_69 = arith.constant dense<0.000000e+00> : vector<16xf32>
    %74 = vector.multi_reduction <add>, %73, %cst_69 [1] : vector<16x16xf32> to vector<16xf32>
    %75 = vector.shape_cast %74 : vector<16xf32> to vector<16x1xf32>
    %76 = tpu.reciprocal %75 {approx = true} : vector<16x1xf32> -> vector<16x1xf32>
    %77 = vector.broadcast %76 : vector<16x1xf32> to vector<16x16xf32>
    %78 = arith.mulf %73, %77 : vector<16x16xf32>
    %79 = arith.truncf %78 : vector<16x16xf32> to vector<16x16xbf16>
    %cst_70 = arith.constant dense<0.000000e+00> : vector<16x16xf32>
    %80 = tpu.matmul %79, %65, %cst_70 {dimension_numbers = #tpu.dot_dimension_numbers<[1], [0], [0], [1], [0, 0, 1, 1], [], []>} : vector<16x16xbf16>, vector<16x16xbf16>, vector<16x16xf32> -> vector<16x16xf32>
    %81 = vector.extract_strided_slice %4 {offsets = [0, 0], sizes = [16, 32], strides = [1, 1]} : vector<32x32xbf16> to vector<16x32xbf16>
    %82 = arith.truncf %80 : vector<16x16xf32> to vector<16x16xbf16>
    %cst_71 = arith.constant dense<0.000000e+00> : vector<16x32xf32>
    %83 = tpu.matmul %82, %81, %cst_71 {dimension_numbers = #tpu.dot_dimension_numbers<[1], [0], [0], [1], [0, 0, 1, 1], [], []>} : vector<16x16xbf16>, vector<16x32xbf16>, vector<16x32xf32> -> vector<16x32xf32>
    %84 = vector.extract_strided_slice %57 {offsets = [0, 16], sizes = [16, 16], strides = [1, 1]} : vector<16x32xf32> to vector<16x16xf32>
    %85 = arith.truncf %84 : vector<16x16xf32> to vector<16x16xbf16>
    %86 = vector.extract_strided_slice %58 {offsets = [0, 16], sizes = [16, 16], strides = [1, 1]} : vector<16x32xf32> to vector<16x16xf32>
    %87 = arith.truncf %86 : vector<16x16xf32> to vector<16x16xbf16>
    %88 = vector.extract_strided_slice %59 {offsets = [0, 16], sizes = [16, 16], strides = [1, 1]} : vector<16x32xf32> to vector<16x16xf32>
    %89 = arith.truncf %88 : vector<16x16xf32> to vector<16x16xbf16>
    %cst_72 = arith.constant dense<0.000000e+00> : vector<16x16xf32>
    %90 = tpu.matmul %85, %87, %cst_72 {dimension_numbers = #tpu.dot_dimension_numbers<[1], [1], [0], [0], [0, 0, 1, 0], [], []>} : vector<16x16xbf16>, vector<16x16xbf16>, vector<16x16xf32> -> vector<16x16xf32>
    %cst_73 = arith.constant 2.500000e-01 : f32
    %91 = vector.broadcast %cst_73 : f32 to vector<16x16xf32>
    %92 = arith.mulf %90, %91 : vector<16x16xf32>
    %cst_74 = arith.constant dense<0xFF800000> : vector<16xf32>
    %93 = vector.multi_reduction <maximumf>, %92, %cst_74 [1] : vector<16x16xf32> to vector<16xf32>
    %94 = vector.shape_cast %93 : vector<16xf32> to vector<16x1xf32>
    %95 = vector.broadcast %94 : vector<16x1xf32> to vector<16x16xf32>
    %96 = arith.subf %92, %95 : vector<16x16xf32>
    %97 = math.exp %96 : vector<16x16xf32>
    %cst_75 = arith.constant dense<0.000000e+00> : vector<16xf32>
    %98 = vector.multi_reduction <add>, %97, %cst_75 [1] : vector<16x16xf32> to vector<16xf32>
    %99 = vector.shape_cast %98 : vector<16xf32> to vector<16x1xf32>
    %100 = tpu.reciprocal %99 {approx = true} : vector<16x1xf32> -> vector<16x1xf32>
    %101 = vector.broadcast %100 : vector<16x1xf32> to vector<16x16xf32>
    %102 = arith.mulf %97, %101 : vector<16x16xf32>
    %103 = arith.truncf %102 : vector<16x16xf32> to vector<16x16xbf16>
    %cst_76 = arith.constant dense<0.000000e+00> : vector<16x16xf32>
    %104 = tpu.matmul %103, %89, %cst_76 {dimension_numbers = #tpu.dot_dimension_numbers<[1], [0], [0], [1], [0, 0, 1, 1], [], []>} : vector<16x16xbf16>, vector<16x16xbf16>, vector<16x16xf32> -> vector<16x16xf32>
    %105 = vector.extract_strided_slice %4 {offsets = [16, 0], sizes = [16, 32], strides = [1, 1]} : vector<32x32xbf16> to vector<16x32xbf16>
    %106 = arith.truncf %104 : vector<16x16xf32> to vector<16x16xbf16>
    %cst_77 = arith.constant dense<0.000000e+00> : vector<16x32xf32>
    %107 = tpu.matmul %106, %105, %cst_77 {dimension_numbers = #tpu.dot_dimension_numbers<[1], [0], [0], [1], [0, 0, 1, 1], [], []>} : vector<16x16xbf16>, vector<16x32xbf16>, vector<16x32xf32> -> vector<16x32xf32>
    %108 = arith.addf %83, %107 : vector<16x32xf32>
    %109 = vector.extract_strided_slice %56 {offsets = [16, 0], sizes = [16, 32], strides = [1, 1]} : vector<32x96xf32> to vector<16x32xf32>
    %110 = vector.extract_strided_slice %56 {offsets = [16, 32], sizes = [16, 32], strides = [1, 1]} : vector<32x96xf32> to vector<16x32xf32>
    %111 = vector.extract_strided_slice %56 {offsets = [16, 64], sizes = [16, 32], strides = [1, 1]} : vector<32x96xf32> to vector<16x32xf32>
    %112 = vector.extract_strided_slice %109 {offsets = [0, 0], sizes = [16, 16], strides = [1, 1]} : vector<16x32xf32> to vector<16x16xf32>
    %113 = arith.truncf %112 : vector<16x16xf32> to vector<16x16xbf16>
    %114 = vector.extract_strided_slice %110 {offsets = [0, 0], sizes = [16, 16], strides = [1, 1]} : vector<16x32xf32> to vector<16x16xf32>
    %115 = arith.truncf %114 : vector<16x16xf32> to vector<16x16xbf16>
    %116 = vector.extract_strided_slice %111 {offsets = [0, 0], sizes = [16, 16], strides = [1, 1]} : vector<16x32xf32> to vector<16x16xf32>
    %117 = arith.truncf %116 : vector<16x16xf32> to vector<16x16xbf16>
    %cst_78 = arith.constant dense<0.000000e+00> : vector<16x16xf32>
    %118 = tpu.matmul %113, %115, %cst_78 {dimension_numbers = #tpu.dot_dimension_numbers<[1], [1], [0], [0], [0, 0, 1, 0], [], []>} : vector<16x16xbf16>, vector<16x16xbf16>, vector<16x16xf32> -> vector<16x16xf32>
    %cst_79 = arith.constant 2.500000e-01 : f32
    %119 = vector.broadcast %cst_79 : f32 to vector<16x16xf32>
    %120 = arith.mulf %118, %119 : vector<16x16xf32>
    %cst_80 = arith.constant dense<0xFF800000> : vector<16xf32>
    %121 = vector.multi_reduction <maximumf>, %120, %cst_80 [1] : vector<16x16xf32> to vector<16xf32>
    %122 = vector.shape_cast %121 : vector<16xf32> to vector<16x1xf32>
    %123 = vector.broadcast %122 : vector<16x1xf32> to vector<16x16xf32>
    %124 = arith.subf %120, %123 : vector<16x16xf32>
    %125 = math.exp %124 : vector<16x16xf32>
    %cst_81 = arith.constant dense<0.000000e+00> : vector<16xf32>
    %126 = vector.multi_reduction <add>, %125, %cst_81 [1] : vector<16x16xf32> to vector<16xf32>
    %127 = vector.shape_cast %126 : vector<16xf32> to vector<16x1xf32>
    %128 = tpu.reciprocal %127 {approx = true} : vector<16x1xf32> -> vector<16x1xf32>
    %129 = vector.broadcast %128 : vector<16x1xf32> to vector<16x16xf32>
    %130 = arith.mulf %125, %129 : vector<16x16xf32>
    %131 = arith.truncf %130 : vector<16x16xf32> to vector<16x16xbf16>
    %cst_82 = arith.constant dense<0.000000e+00> : vector<16x16xf32>
    %132 = tpu.matmul %131, %117, %cst_82 {dimension_numbers = #tpu.dot_dimension_numbers<[1], [0], [0], [1], [0, 0, 1, 1], [], []>} : vector<16x16xbf16>, vector<16x16xbf16>, vector<16x16xf32> -> vector<16x16xf32>
    %133 = vector.extract_strided_slice %4 {offsets = [0, 0], sizes = [16, 32], strides = [1, 1]} : vector<32x32xbf16> to vector<16x32xbf16>
    %134 = arith.truncf %132 : vector<16x16xf32> to vector<16x16xbf16>
    %cst_83 = arith.constant dense<0.000000e+00> : vector<16x32xf32>
    %135 = tpu.matmul %134, %133, %cst_83 {dimension_numbers = #tpu.dot_dimension_numbers<[1], [0], [0], [1], [0, 0, 1, 1], [], []>} : vector<16x16xbf16>, vector<16x32xbf16>, vector<16x32xf32> -> vector<16x32xf32>
    %136 = vector.extract_strided_slice %109 {offsets = [0, 16], sizes = [16, 16], strides = [1, 1]} : vector<16x32xf32> to vector<16x16xf32>
    %137 = arith.truncf %136 : vector<16x16xf32> to vector<16x16xbf16>
    %138 = vector.extract_strided_slice %110 {offsets = [0, 16], sizes = [16, 16], strides = [1, 1]} : vector<16x32xf32> to vector<16x16xf32>
    %139 = arith.truncf %138 : vector<16x16xf32> to vector<16x16xbf16>
    %140 = vector.extract_strided_slice %111 {offsets = [0, 16], sizes = [16, 16], strides = [1, 1]} : vector<16x32xf32> to vector<16x16xf32>
    %141 = arith.truncf %140 : vector<16x16xf32> to vector<16x16xbf16>
    %cst_84 = arith.constant dense<0.000000e+00> : vector<16x16xf32>
    %142 = tpu.matmul %137, %139, %cst_84 {dimension_numbers = #tpu.dot_dimension_numbers<[1], [1], [0], [0], [0, 0, 1, 0], [], []>} : vector<16x16xbf16>, vector<16x16xbf16>, vector<16x16xf32> -> vector<16x16xf32>
    %cst_85 = arith.constant 2.500000e-01 : f32
    %143 = vector.broadcast %cst_85 : f32 to vector<16x16xf32>
    %144 = arith.mulf %142, %143 : vector<16x16xf32>
    %cst_86 = arith.constant dense<0xFF800000> : vector<16xf32>
    %145 = vector.multi_reduction <maximumf>, %144, %cst_86 [1] : vector<16x16xf32> to vector<16xf32>
    %146 = vector.shape_cast %145 : vector<16xf32> to vector<16x1xf32>
    %147 = vector.broadcast %146 : vector<16x1xf32> to vector<16x16xf32>
    %148 = arith.subf %144, %147 : vector<16x16xf32>
    %149 = math.exp %148 : vector<16x16xf32>
    %cst_87 = arith.constant dense<0.000000e+00> : vector<16xf32>
    %150 = vector.multi_reduction <add>, %149, %cst_87 [1] : vector<16x16xf32> to vector<16xf32>
    %151 = vector.shape_cast %150 : vector<16xf32> to vector<16x1xf32>
    %152 = tpu.reciprocal %151 {approx = true} : vector<16x1xf32> -> vector<16x1xf32>
    %153 = vector.broadcast %152 : vector<16x1xf32> to vector<16x16xf32>
    %154 = arith.mulf %149, %153 : vector<16x16xf32>
    %155 = arith.truncf %154 : vector<16x16xf32> to vector<16x16xbf16>
    %cst_88 = arith.constant dense<0.000000e+00> : vector<16x16xf32>
    %156 = tpu.matmul %155, %141, %cst_88 {dimension_numbers = #tpu.dot_dimension_numbers<[1], [0], [0], [1], [0, 0, 1, 1], [], []>} : vector<16x16xbf16>, vector<16x16xbf16>, vector<16x16xf32> -> vector<16x16xf32>
    %157 = vector.extract_strided_slice %4 {offsets = [16, 0], sizes = [16, 32], strides = [1, 1]} : vector<32x32xbf16> to vector<16x32xbf16>
    %158 = arith.truncf %156 : vector<16x16xf32> to vector<16x16xbf16>
    %cst_89 = arith.constant dense<0.000000e+00> : vector<16x32xf32>
    %159 = tpu.matmul %158, %157, %cst_89 {dimension_numbers = #tpu.dot_dimension_numbers<[1], [0], [0], [1], [0, 0, 1, 1], [], []>} : vector<16x16xbf16>, vector<16x32xbf16>, vector<16x32xf32> -> vector<16x32xf32>
    %160 = arith.addf %135, %159 : vector<16x32xf32>
    %161 = tpu.concatenate %108, %160 in 0 : vector<16x32xf32>, vector<16x32xf32> -> vector<32x32xf32>
    %162 = arith.addf %30, %161 : vector<32x32xf32>
    %163 = vector.broadcast %5 : vector<1x32xf32> to vector<32x32xf32>
    %164 = arith.addf %162, %163 : vector<32x32xf32>
    %cst_90 = arith.constant dense<0.000000e+00> : vector<32xf32>
    %165 = vector.multi_reduction <add>, %164, %cst_90 [1] : vector<32x32xf32> to vector<32xf32>
    %166 = vector.shape_cast %165 : vector<32xf32> to vector<32x1xf32>
    %cst_91 = arith.constant 3.200000e+01 : f32
    %167 = vector.broadcast %cst_91 : f32 to vector<32x1xf32>
    %168 = arith.divf %166, %167 : vector<32x1xf32>
    %169 = vector.broadcast %168 : vector<32x1xf32> to vector<32x32xf32>
    %170 = arith.subf %164, %169 : vector<32x32xf32>
    %171 = arith.mulf %170, %170 : vector<32x32xf32>
    %cst_92 = arith.constant dense<0.000000e+00> : vector<32xf32>
    %172 = vector.multi_reduction <add>, %171, %cst_92 [1] : vector<32x32xf32> to vector<32xf32>
    %173 = vector.shape_cast %172 : vector<32xf32> to vector<32x1xf32>
    %cst_93 = arith.constant 3.200000e+01 : f32
    %174 = vector.broadcast %cst_93 : f32 to vector<32x1xf32>
    %175 = arith.divf %173, %174 : vector<32x1xf32>
    %176 = vector.broadcast %168 : vector<32x1xf32> to vector<32x32xf32>
    %177 = arith.subf %164, %176 : vector<32x32xf32>
    %cst_94 = arith.constant 9.99999974E-6 : f32
    %178 = vector.broadcast %cst_94 : f32 to vector<32x1xf32>
    %179 = arith.addf %175, %178 : vector<32x1xf32>
    %180 = math.rsqrt %179 : vector<32x1xf32>
    %181 = vector.broadcast %180 : vector<32x1xf32> to vector<32x32xf32>
    %182 = arith.mulf %177, %181 : vector<32x32xf32>
    %183 = vector.broadcast %6 : vector<1x32xf32> to vector<32x32xf32>
    %184 = arith.mulf %182, %183 : vector<32x32xf32>
    %185 = vector.broadcast %7 : vector<1x32xf32> to vector<32x32xf32>
    %186 = arith.addf %184, %185 : vector<32x32xf32>
    %187 = arith.truncf %186 : vector<32x32xf32> to vector<32x32xbf16>
    %cst_95 = arith.constant dense<0.000000e+00> : vector<32x128xf32>
    %188 = tpu.matmul %187, %8, %cst_95 {dimension_numbers = #tpu.dot_dimension_numbers<[1], [0], [0], [1], [0, 0, 1, 1], [], []>} : vector<32x32xbf16>, vector<32x128xbf16>, vector<32x128xf32> -> vector<32x128xf32>
    %189 = vector.broadcast %9 : vector<1x128xf32> to vector<32x128xf32>
    %190 = arith.addf %188, %189 : vector<32x128xf32>
    %191 = arith.mulf %190, %190 : vector<32x128xf32>
    %192 = arith.mulf %190, %191 : vector<32x128xf32>
    %cst_96 = arith.constant 4.471500e-02 : f32
    %193 = vector.broadcast %cst_96 : f32 to vector<32x128xf32>
    %194 = arith.mulf %193, %192 : vector<32x128xf32>
    %195 = arith.addf %190, %194 : vector<32x128xf32>
    %cst_97 = arith.constant 0.797884583 : f32
    %196 = vector.broadcast %cst_97 : f32 to vector<32x128xf32>
    %197 = arith.mulf %196, %195 : vector<32x128xf32>
    %198 = math.tanh %197 : vector<32x128xf32>
    %cst_98 = arith.constant 1.000000e+00 : f32
    %199 = vector.broadcast %cst_98 : f32 to vector<32x128xf32>
    %200 = arith.addf %199, %198 : vector<32x128xf32>
    %cst_99 = arith.constant 5.000000e-01 : f32
    %201 = vector.broadcast %cst_99 : f32 to vector<32x128xf32>
    %202 = arith.mulf %201, %200 : vector<32x128xf32>
    %203 = arith.mulf %190, %202 : vector<32x128xf32>
    %204 = arith.truncf %203 : vector<32x128xf32> to vector<32x128xbf16>
    %cst_100 = arith.constant dense<0.000000e+00> : vector<32x32xf32>
    %205 = tpu.matmul %204, %10, %cst_100 {dimension_numbers = #tpu.dot_dimension_numbers<[1], [0], [0], [1], [0, 0, 1, 1], [], []>} : vector<32x128xbf16>, vector<128x32xbf16>, vector<32x32xf32> -> vector<32x32xf32>
    %206 = arith.addf %164, %205 : vector<32x32xf32>
    %207 = vector.broadcast %11 : vector<1x32xf32> to vector<32x32xf32>
    %208 = arith.addf %206, %207 : vector<32x32xf32>
    %c0_101 = arith.constant 0 : index
    %c0_102 = arith.constant 0 : index
    %209 = vector.load %arg1[%c0_101, %c0_102] : memref<8x32xf32, #tpu.memory_space<vmem>>, vector<8x32xf32>
    %cst_103 = arith.constant dense<0.000000e+00> : vector<8xf32>
    %210 = vector.multi_reduction <add>, %209, %cst_103 [1] : vector<8x32xf32> to vector<8xf32>
    %211 = vector.shape_cast %210 : vector<8xf32> to vector<8x1xf32>
    %cst_104 = arith.constant 3.200000e+01 : f32
    %212 = vector.broadcast %cst_104 : f32 to vector<8x1xf32>
    %213 = arith.divf %211, %212 : vector<8x1xf32>
    %214 = vector.broadcast %213 : vector<8x1xf32> to vector<8x32xf32>
    %215 = arith.subf %209, %214 : vector<8x32xf32>
    %216 = arith.mulf %215, %215 : vector<8x32xf32>
    %cst_105 = arith.constant dense<0.000000e+00> : vector<8xf32>
    %217 = vector.multi_reduction <add>, %216, %cst_105 [1] : vector<8x32xf32> to vector<8xf32>
    %218 = vector.shape_cast %217 : vector<8xf32> to vector<8x1xf32>
    %cst_106 = arith.constant 3.200000e+01 : f32
    %219 = vector.broadcast %cst_106 : f32 to vector<8x1xf32>
    %220 = arith.divf %218, %219 : vector<8x1xf32>
    %221 = vector.broadcast %213 : vector<8x1xf32> to vector<8x32xf32>
    %222 = arith.subf %209, %221 : vector<8x32xf32>
    %cst_107 = arith.constant 9.99999974E-6 : f32
    %223 = vector.broadcast %cst_107 : f32 to vector<8x1xf32>
    %224 = arith.addf %220, %223 : vector<8x1xf32>
    %225 = math.rsqrt %224 : vector<8x1xf32>
    %226 = vector.broadcast %225 : vector<8x1xf32> to vector<8x32xf32>
    %227 = arith.mulf %222, %226 : vector<8x32xf32>
    %228 = vector.broadcast %12 : vector<1x32xf32> to vector<8x32xf32>
    %229 = arith.mulf %227, %228 : vector<8x32xf32>
    %230 = vector.broadcast %13 : vector<1x32xf32> to vector<8x32xf32>
    %231 = arith.addf %229, %230 : vector<8x32xf32>
    %232 = arith.truncf %231 : vector<8x32xf32> to vector<8x32xbf16>
    %cst_108 = arith.constant dense<0.000000e+00> : vector<8x32xf32>
    %233 = tpu.matmul %232, %16, %cst_108 {dimension_numbers = #tpu.dot_dimension_numbers<[1], [0], [0], [1], [0, 0, 1, 1], [], []>} : vector<8x32xbf16>, vector<32x32xbf16>, vector<8x32xf32> -> vector<8x32xf32>
    %234 = vector.broadcast %17 : vector<1x32xf32> to vector<8x32xf32>
    %235 = arith.addf %233, %234 : vector<8x32xf32>
    %cst_109 = arith.constant dense<0.000000e+00> : vector<32xf32>
    %236 = vector.multi_reduction <add>, %208, %cst_109 [1] : vector<32x32xf32> to vector<32xf32>
    %237 = vector.shape_cast %236 : vector<32xf32> to vector<32x1xf32>
    %cst_110 = arith.constant 3.200000e+01 : f32
    %238 = vector.broadcast %cst_110 : f32 to vector<32x1xf32>
    %239 = arith.divf %237, %238 : vector<32x1xf32>
    %240 = vector.broadcast %239 : vector<32x1xf32> to vector<32x32xf32>
    %241 = arith.subf %208, %240 : vector<32x32xf32>
    %242 = arith.mulf %241, %241 : vector<32x32xf32>
    %cst_111 = arith.constant dense<0.000000e+00> : vector<32xf32>
    %243 = vector.multi_reduction <add>, %242, %cst_111 [1] : vector<32x32xf32> to vector<32xf32>
    %244 = vector.shape_cast %243 : vector<32xf32> to vector<32x1xf32>
    %cst_112 = arith.constant 3.200000e+01 : f32
    %245 = vector.broadcast %cst_112 : f32 to vector<32x1xf32>
    %246 = arith.divf %244, %245 : vector<32x1xf32>
    %247 = vector.broadcast %239 : vector<32x1xf32> to vector<32x32xf32>
    %248 = arith.subf %208, %247 : vector<32x32xf32>
    %cst_113 = arith.constant 9.99999974E-6 : f32
    %249 = vector.broadcast %cst_113 : f32 to vector<32x1xf32>
    %250 = arith.addf %246, %249 : vector<32x1xf32>
    %251 = math.rsqrt %250 : vector<32x1xf32>
    %252 = vector.broadcast %251 : vector<32x1xf32> to vector<32x32xf32>
    %253 = arith.mulf %248, %252 : vector<32x32xf32>
    %254 = vector.broadcast %14 : vector<1x32xf32> to vector<32x32xf32>
    %255 = arith.mulf %253, %254 : vector<32x32xf32>
    %256 = vector.broadcast %15 : vector<1x32xf32> to vector<32x32xf32>
    %257 = arith.addf %255, %256 : vector<32x32xf32>
    %258 = arith.truncf %257 : vector<32x32xf32> to vector<32x32xbf16>
    %cst_114 = arith.constant dense<0.000000e+00> : vector<32x32xf32>
    %259 = tpu.matmul %258, %18, %cst_114 {dimension_numbers = #tpu.dot_dimension_numbers<[1], [0], [0], [1], [0, 0, 1, 1], [], []>} : vector<32x32xbf16>, vector<32x32xbf16>, vector<32x32xf32> -> vector<32x32xf32>
    %260 = vector.broadcast %19 : vector<1x32xf32> to vector<32x32xf32>
    %261 = arith.addf %259, %260 : vector<32x32xf32>
    %262 = arith.truncf %257 : vector<32x32xf32> to vector<32x32xbf16>
    %cst_115 = arith.constant dense<0.000000e+00> : vector<32x32xf32>
    %263 = tpu.matmul %262, %20, %cst_115 {dimension_numbers = #tpu.dot_dimension_numbers<[1], [0], [0], [1], [0, 0, 1, 1], [], []>} : vector<32x32xbf16>, vector<32x32xbf16>, vector<32x32xf32> -> vector<32x32xf32>
    %264 = vector.broadcast %21 : vector<1x32xf32> to vector<32x32xf32>
    %265 = arith.addf %263, %264 : vector<32x32xf32>
    %266 = vector.extract_strided_slice %261 {offsets = [0, 0], sizes = [16, 32], strides = [1, 1]} : vector<32x32xf32> to vector<16x32xf32>
    %267 = vector.extract_strided_slice %265 {offsets = [0, 0], sizes = [16, 32], strides = [1, 1]} : vector<32x32xf32> to vector<16x32xf32>
    %268 = vector.extract_strided_slice %235 {offsets = [0, 0], sizes = [8, 16], strides = [1, 1]} : vector<8x32xf32> to vector<8x16xf32>
    %269 = arith.truncf %268 : vector<8x16xf32> to vector<8x16xbf16>
    %270 = vector.extract_strided_slice %266 {offsets = [0, 0], sizes = [16, 16], strides = [1, 1]} : vector<16x32xf32> to vector<16x16xf32>
    %271 = arith.truncf %270 : vector<16x16xf32> to vector<16x16xbf16>
    %272 = vector.extract_strided_slice %267 {offsets = [0, 0], sizes = [16, 16], strides = [1, 1]} : vector<16x32xf32> to vector<16x16xf32>
    %273 = arith.truncf %272 : vector<16x16xf32> to vector<16x16xbf16>
    %cst_116 = arith.constant dense<0.000000e+00> : vector<8x16xf32>
    %274 = tpu.matmul %269, %271, %cst_116 {dimension_numbers = #tpu.dot_dimension_numbers<[1], [1], [0], [0], [0, 0, 1, 0], [], []>} : vector<8x16xbf16>, vector<16x16xbf16>, vector<8x16xf32> -> vector<8x16xf32>
    %cst_117 = arith.constant 2.500000e-01 : f32
    %275 = vector.broadcast %cst_117 : f32 to vector<8x16xf32>
    %276 = arith.mulf %274, %275 : vector<8x16xf32>
    %cst_118 = arith.constant dense<0xFF800000> : vector<8xf32>
    %277 = vector.multi_reduction <maximumf>, %276, %cst_118 [1] : vector<8x16xf32> to vector<8xf32>
    %278 = vector.shape_cast %277 : vector<8xf32> to vector<8x1xf32>
    %279 = vector.broadcast %278 : vector<8x1xf32> to vector<8x16xf32>
    %280 = arith.subf %276, %279 : vector<8x16xf32>
    %281 = math.exp %280 : vector<8x16xf32>
    %cst_119 = arith.constant dense<0.000000e+00> : vector<8xf32>
    %282 = vector.multi_reduction <add>, %281, %cst_119 [1] : vector<8x16xf32> to vector<8xf32>
    %283 = vector.shape_cast %282 : vector<8xf32> to vector<8x1xf32>
    %284 = tpu.reciprocal %283 {approx = true} : vector<8x1xf32> -> vector<8x1xf32>
    %285 = vector.broadcast %284 : vector<8x1xf32> to vector<8x16xf32>
    %286 = arith.mulf %281, %285 : vector<8x16xf32>
    %287 = arith.truncf %286 : vector<8x16xf32> to vector<8x16xbf16>
    %cst_120 = arith.constant dense<0.000000e+00> : vector<8x16xf32>
    %288 = tpu.matmul %287, %273, %cst_120 {dimension_numbers = #tpu.dot_dimension_numbers<[1], [0], [0], [1], [0, 0, 1, 1], [], []>} : vector<8x16xbf16>, vector<16x16xbf16>, vector<8x16xf32> -> vector<8x16xf32>
    %289 = vector.extract_strided_slice %22 {offsets = [0, 0], sizes = [16, 32], strides = [1, 1]} : vector<32x32xbf16> to vector<16x32xbf16>
    %290 = arith.truncf %288 : vector<8x16xf32> to vector<8x16xbf16>
    %cst_121 = arith.constant dense<0.000000e+00> : vector<8x32xf32>
    %291 = tpu.matmul %290, %289, %cst_121 {dimension_numbers = #tpu.dot_dimension_numbers<[1], [0], [0], [1], [0, 0, 1, 1], [], []>} : vector<8x16xbf16>, vector<16x32xbf16>, vector<8x32xf32> -> vector<8x32xf32>
    %292 = vector.extract_strided_slice %235 {offsets = [0, 16], sizes = [8, 16], strides = [1, 1]} : vector<8x32xf32> to vector<8x16xf32>
    %293 = arith.truncf %292 : vector<8x16xf32> to vector<8x16xbf16>
    %294 = vector.extract_strided_slice %266 {offsets = [0, 16], sizes = [16, 16], strides = [1, 1]} : vector<16x32xf32> to vector<16x16xf32>
    %295 = arith.truncf %294 : vector<16x16xf32> to vector<16x16xbf16>
    %296 = vector.extract_strided_slice %267 {offsets = [0, 16], sizes = [16, 16], strides = [1, 1]} : vector<16x32xf32> to vector<16x16xf32>
    %297 = arith.truncf %296 : vector<16x16xf32> to vector<16x16xbf16>
    %cst_122 = arith.constant dense<0.000000e+00> : vector<8x16xf32>
    %298 = tpu.matmul %293, %295, %cst_122 {dimension_numbers = #tpu.dot_dimension_numbers<[1], [1], [0], [0], [0, 0, 1, 0], [], []>} : vector<8x16xbf16>, vector<16x16xbf16>, vector<8x16xf32> -> vector<8x16xf32>
    %cst_123 = arith.constant 2.500000e-01 : f32
    %299 = vector.broadcast %cst_123 : f32 to vector<8x16xf32>
    %300 = arith.mulf %298, %299 : vector<8x16xf32>
    %cst_124 = arith.constant dense<0xFF800000> : vector<8xf32>
    %301 = vector.multi_reduction <maximumf>, %300, %cst_124 [1] : vector<8x16xf32> to vector<8xf32>
    %302 = vector.shape_cast %301 : vector<8xf32> to vector<8x1xf32>
    %303 = vector.broadcast %302 : vector<8x1xf32> to vector<8x16xf32>
    %304 = arith.subf %300, %303 : vector<8x16xf32>
    %305 = math.exp %304 : vector<8x16xf32>
    %cst_125 = arith.constant dense<0.000000e+00> : vector<8xf32>
    %306 = vector.multi_reduction <add>, %305, %cst_125 [1] : vector<8x16xf32> to vector<8xf32>
    %307 = vector.shape_cast %306 : vector<8xf32> to vector<8x1xf32>
    %308 = tpu.reciprocal %307 {approx = true} : vector<8x1xf32> -> vector<8x1xf32>
    %309 = vector.broadcast %308 : vector<8x1xf32> to vector<8x16xf32>
    %310 = arith.mulf %305, %309 : vector<8x16xf32>
    %311 = arith.truncf %310 : vector<8x16xf32> to vector<8x16xbf16>
    %cst_126 = arith.constant dense<0.000000e+00> : vector<8x16xf32>
    %312 = tpu.matmul %311, %297, %cst_126 {dimension_numbers = #tpu.dot_dimension_numbers<[1], [0], [0], [1], [0, 0, 1, 1], [], []>} : vector<8x16xbf16>, vector<16x16xbf16>, vector<8x16xf32> -> vector<8x16xf32>
    %313 = vector.extract_strided_slice %22 {offsets = [16, 0], sizes = [16, 32], strides = [1, 1]} : vector<32x32xbf16> to vector<16x32xbf16>
    %314 = arith.truncf %312 : vector<8x16xf32> to vector<8x16xbf16>
    %cst_127 = arith.constant dense<0.000000e+00> : vector<8x32xf32>
    %315 = tpu.matmul %314, %313, %cst_127 {dimension_numbers = #tpu.dot_dimension_numbers<[1], [0], [0], [1], [0, 0, 1, 1], [], []>} : vector<8x16xbf16>, vector<16x32xbf16>, vector<8x32xf32> -> vector<8x32xf32>
    %316 = arith.addf %291, %315 : vector<8x32xf32>
    %317 = arith.addf %209, %316 : vector<8x32xf32>
    %318 = vector.broadcast %23 : vector<1x32xf32> to vector<8x32xf32>
    %319 = arith.addf %317, %318 : vector<8x32xf32>
    %320 = vector.extract_strided_slice %261 {offsets = [16, 0], sizes = [16, 32], strides = [1, 1]} : vector<32x32xf32> to vector<16x32xf32>
    %321 = vector.extract_strided_slice %265 {offsets = [16, 0], sizes = [16, 32], strides = [1, 1]} : vector<32x32xf32> to vector<16x32xf32>
    %322 = vector.extract_strided_slice %235 {offsets = [0, 0], sizes = [8, 16], strides = [1, 1]} : vector<8x32xf32> to vector<8x16xf32>
    %323 = arith.truncf %322 : vector<8x16xf32> to vector<8x16xbf16>
    %324 = vector.extract_strided_slice %320 {offsets = [0, 0], sizes = [16, 16], strides = [1, 1]} : vector<16x32xf32> to vector<16x16xf32>
    %325 = arith.truncf %324 : vector<16x16xf32> to vector<16x16xbf16>
    %326 = vector.extract_strided_slice %321 {offsets = [0, 0], sizes = [16, 16], strides = [1, 1]} : vector<16x32xf32> to vector<16x16xf32>
    %327 = arith.truncf %326 : vector<16x16xf32> to vector<16x16xbf16>
    %cst_128 = arith.constant dense<0.000000e+00> : vector<8x16xf32>
    %328 = tpu.matmul %323, %325, %cst_128 {dimension_numbers = #tpu.dot_dimension_numbers<[1], [1], [0], [0], [0, 0, 1, 0], [], []>} : vector<8x16xbf16>, vector<16x16xbf16>, vector<8x16xf32> -> vector<8x16xf32>
    %cst_129 = arith.constant 2.500000e-01 : f32
    %329 = vector.broadcast %cst_129 : f32 to vector<8x16xf32>
    %330 = arith.mulf %328, %329 : vector<8x16xf32>
    %cst_130 = arith.constant dense<0xFF800000> : vector<8xf32>
    %331 = vector.multi_reduction <maximumf>, %330, %cst_130 [1] : vector<8x16xf32> to vector<8xf32>
    %332 = vector.shape_cast %331 : vector<8xf32> to vector<8x1xf32>
    %333 = vector.broadcast %332 : vector<8x1xf32> to vector<8x16xf32>
    %334 = arith.subf %330, %333 : vector<8x16xf32>
    %335 = math.exp %334 : vector<8x16xf32>
    %cst_131 = arith.constant dense<0.000000e+00> : vector<8xf32>
    %336 = vector.multi_reduction <add>, %335, %cst_131 [1] : vector<8x16xf32> to vector<8xf32>
    %337 = vector.shape_cast %336 : vector<8xf32> to vector<8x1xf32>
    %338 = tpu.reciprocal %337 {approx = true} : vector<8x1xf32> -> vector<8x1xf32>
    %339 = vector.broadcast %338 : vector<8x1xf32> to vector<8x16xf32>
    %340 = arith.mulf %335, %339 : vector<8x16xf32>
    %341 = arith.truncf %340 : vector<8x16xf32> to vector<8x16xbf16>
    %cst_132 = arith.constant dense<0.000000e+00> : vector<8x16xf32>
    %342 = tpu.matmul %341, %327, %cst_132 {dimension_numbers = #tpu.dot_dimension_numbers<[1], [0], [0], [1], [0, 0, 1, 1], [], []>} : vector<8x16xbf16>, vector<16x16xbf16>, vector<8x16xf32> -> vector<8x16xf32>
    %343 = vector.extract_strided_slice %22 {offsets = [0, 0], sizes = [16, 32], strides = [1, 1]} : vector<32x32xbf16> to vector<16x32xbf16>
    %344 = arith.truncf %342 : vector<8x16xf32> to vector<8x16xbf16>
    %cst_133 = arith.constant dense<0.000000e+00> : vector<8x32xf32>
    %345 = tpu.matmul %344, %343, %cst_133 {dimension_numbers = #tpu.dot_dimension_numbers<[1], [0], [0], [1], [0, 0, 1, 1], [], []>} : vector<8x16xbf16>, vector<16x32xbf16>, vector<8x32xf32> -> vector<8x32xf32>
    %346 = vector.extract_strided_slice %235 {offsets = [0, 16], sizes = [8, 16], strides = [1, 1]} : vector<8x32xf32> to vector<8x16xf32>
    %347 = arith.truncf %346 : vector<8x16xf32> to vector<8x16xbf16>
    %348 = vector.extract_strided_slice %320 {offsets = [0, 16], sizes = [16, 16], strides = [1, 1]} : vector<16x32xf32> to vector<16x16xf32>
    %349 = arith.truncf %348 : vector<16x16xf32> to vector<16x16xbf16>
    %350 = vector.extract_strided_slice %321 {offsets = [0, 16], sizes = [16, 16], strides = [1, 1]} : vector<16x32xf32> to vector<16x16xf32>
    %351 = arith.truncf %350 : vector<16x16xf32> to vector<16x16xbf16>
    %cst_134 = arith.constant dense<0.000000e+00> : vector<8x16xf32>
    %352 = tpu.matmul %347, %349, %cst_134 {dimension_numbers = #tpu.dot_dimension_numbers<[1], [1], [0], [0], [0, 0, 1, 0], [], []>} : vector<8x16xbf16>, vector<16x16xbf16>, vector<8x16xf32> -> vector<8x16xf32>
    %cst_135 = arith.constant 2.500000e-01 : f32
    %353 = vector.broadcast %cst_135 : f32 to vector<8x16xf32>
    %354 = arith.mulf %352, %353 : vector<8x16xf32>
    %cst_136 = arith.constant dense<0xFF800000> : vector<8xf32>
    %355 = vector.multi_reduction <maximumf>, %354, %cst_136 [1] : vector<8x16xf32> to vector<8xf32>
    %356 = vector.shape_cast %355 : vector<8xf32> to vector<8x1xf32>
    %357 = vector.broadcast %356 : vector<8x1xf32> to vector<8x16xf32>
    %358 = arith.subf %354, %357 : vector<8x16xf32>
    %359 = math.exp %358 : vector<8x16xf32>
    %cst_137 = arith.constant dense<0.000000e+00> : vector<8xf32>
    %360 = vector.multi_reduction <add>, %359, %cst_137 [1] : vector<8x16xf32> to vector<8xf32>
    %361 = vector.shape_cast %360 : vector<8xf32> to vector<8x1xf32>
    %362 = tpu.reciprocal %361 {approx = true} : vector<8x1xf32> -> vector<8x1xf32>
    %363 = vector.broadcast %362 : vector<8x1xf32> to vector<8x16xf32>
    %364 = arith.mulf %359, %363 : vector<8x16xf32>
    %365 = arith.truncf %364 : vector<8x16xf32> to vector<8x16xbf16>
    %cst_138 = arith.constant dense<0.000000e+00> : vector<8x16xf32>
    %366 = tpu.matmul %365, %351, %cst_138 {dimension_numbers = #tpu.dot_dimension_numbers<[1], [0], [0], [1], [0, 0, 1, 1], [], []>} : vector<8x16xbf16>, vector<16x16xbf16>, vector<8x16xf32> -> vector<8x16xf32>
    %367 = vector.extract_strided_slice %22 {offsets = [16, 0], sizes = [16, 32], strides = [1, 1]} : vector<32x32xbf16> to vector<16x32xbf16>
    %368 = arith.truncf %366 : vector<8x16xf32> to vector<8x16xbf16>
    %cst_139 = arith.constant dense<0.000000e+00> : vector<8x32xf32>
    %369 = tpu.matmul %368, %367, %cst_139 {dimension_numbers = #tpu.dot_dimension_numbers<[1], [0], [0], [1], [0, 0, 1, 1], [], []>} : vector<8x16xbf16>, vector<16x32xbf16>, vector<8x32xf32> -> vector<8x32xf32>
    %370 = arith.addf %345, %369 : vector<8x32xf32>
    %371 = arith.addf %209, %370 : vector<8x32xf32>
    %372 = vector.broadcast %23 : vector<1x32xf32> to vector<8x32xf32>
    %373 = arith.addf %371, %372 : vector<8x32xf32>
    %374 = tpu.concatenate %319, %373 in 0 : vector<8x32xf32>, vector<8x32xf32> -> vector<16x32xf32>
    %cst_140 = arith.constant dense<0.000000e+00> : vector<16xf32>
    %375 = vector.multi_reduction <add>, %374, %cst_140 [1] : vector<16x32xf32> to vector<16xf32>
    %376 = vector.shape_cast %375 : vector<16xf32> to vector<16x1xf32>
    %cst_141 = arith.constant 3.200000e+01 : f32
    %377 = vector.broadcast %cst_141 : f32 to vector<16x1xf32>
    %378 = arith.divf %376, %377 : vector<16x1xf32>
    %379 = vector.broadcast %378 : vector<16x1xf32> to vector<16x32xf32>
    %380 = arith.subf %374, %379 : vector<16x32xf32>
    %381 = arith.mulf %380, %380 : vector<16x32xf32>
    %cst_142 = arith.constant dense<0.000000e+00> : vector<16xf32>
    %382 = vector.multi_reduction <add>, %381, %cst_142 [1] : vector<16x32xf32> to vector<16xf32>
    %383 = vector.shape_cast %382 : vector<16xf32> to vector<16x1xf32>
    %cst_143 = arith.constant 3.200000e+01 : f32
    %384 = vector.broadcast %cst_143 : f32 to vector<16x1xf32>
    %385 = arith.divf %383, %384 : vector<16x1xf32>
    %386 = vector.broadcast %378 : vector<16x1xf32> to vector<16x32xf32>
    %387 = arith.subf %374, %386 : vector<16x32xf32>
    %cst_144 = arith.constant 9.99999974E-6 : f32
    %388 = vector.broadcast %cst_144 : f32 to vector<16x1xf32>
    %389 = arith.addf %385, %388 : vector<16x1xf32>
    %390 = math.rsqrt %389 : vector<16x1xf32>
    %391 = vector.broadcast %390 : vector<16x1xf32> to vector<16x32xf32>
    %392 = arith.mulf %387, %391 : vector<16x32xf32>
    %393 = vector.broadcast %24 : vector<1x32xf32> to vector<16x32xf32>
    %394 = arith.mulf %392, %393 : vector<16x32xf32>
    %395 = vector.broadcast %25 : vector<1x32xf32> to vector<16x32xf32>
    %396 = arith.addf %394, %395 : vector<16x32xf32>
    %397 = arith.truncf %396 : vector<16x32xf32> to vector<16x32xbf16>
    %cst_145 = arith.constant dense<0.000000e+00> : vector<16x128xf32>
    %398 = tpu.matmul %397, %26, %cst_145 {dimension_numbers = #tpu.dot_dimension_numbers<[1], [0], [0], [1], [0, 0, 1, 1], [], []>} : vector<16x32xbf16>, vector<32x128xbf16>, vector<16x128xf32> -> vector<16x128xf32>
    %399 = vector.broadcast %27 : vector<1x128xf32> to vector<16x128xf32>
    %400 = arith.addf %398, %399 : vector<16x128xf32>
    %401 = arith.mulf %400, %400 : vector<16x128xf32>
    %402 = arith.mulf %400, %401 : vector<16x128xf32>
    %cst_146 = arith.constant 4.471500e-02 : f32
    %403 = vector.broadcast %cst_146 : f32 to vector<16x128xf32>
    %404 = arith.mulf %403, %402 : vector<16x128xf32>
    %405 = arith.addf %400, %404 : vector<16x128xf32>
    %cst_147 = arith.constant 0.797884583 : f32
    %406 = vector.broadcast %cst_147 : f32 to vector<16x128xf32>
    %407 = arith.mulf %406, %405 : vector<16x128xf32>
    %408 = math.tanh %407 : vector<16x128xf32>
    %cst_148 = arith.constant 1.000000e+00 : f32
    %409 = vector.broadcast %cst_148 : f32 to vector<16x128xf32>
    %410 = arith.addf %409, %408 : vector<16x128xf32>
    %cst_149 = arith.constant 5.000000e-01 : f32
    %411 = vector.broadcast %cst_149 : f32 to vector<16x128xf32>
    %412 = arith.mulf %411, %410 : vector<16x128xf32>
    %413 = arith.mulf %400, %412 : vector<16x128xf32>
    %414 = arith.truncf %413 : vector<16x128xf32> to vector<16x128xbf16>
    %cst_150 = arith.constant dense<0.000000e+00> : vector<16x32xf32>
    %415 = tpu.matmul %414, %28, %cst_150 {dimension_numbers = #tpu.dot_dimension_numbers<[1], [0], [0], [1], [0, 0, 1, 1], [], []>} : vector<16x128xbf16>, vector<128x32xbf16>, vector<16x32xf32> -> vector<16x32xf32>
    %416 = arith.addf %374, %415 : vector<16x32xf32>
    %417 = vector.broadcast %29 : vector<1x32xf32> to vector<16x32xf32>
    %418 = arith.addf %416, %417 : vector<16x32xf32>
    %c0_151 = arith.constant 0 : index
    %c0_152 = arith.constant 0 : index
    %c0_153 = arith.constant 0 : index
    %419 = vector.load %arg32[%c0_151, %c0_152, %c0_153] : memref<2x1x32xf32, #tpu.memory_space<vmem>>, vector<1x1x32xf32>
    %420 = vector.shape_cast %419 : vector<1x1x32xf32> to vector<1x32xf32>
    %c0_154 = arith.constant 0 : index
    %c0_155 = arith.constant 0 : index
    %c0_156 = arith.constant 0 : index
    %421 = vector.load %arg33[%c0_154, %c0_155, %c0_156] : memref<2x1x32xf32, #tpu.memory_space<vmem>>, vector<1x1x32xf32>
    %422 = vector.shape_cast %421 : vector<1x1x32xf32> to vector<1x32xf32>
    %c0_157 = arith.constant 0 : index
    %c0_158 = arith.constant 0 : index
    %c0_159 = arith.constant 0 : index
    %423 = vector.load %arg34[%c0_157, %c0_158, %c0_159] : memref<2x32x96xbf16, #tpu.memory_space<vmem>>, vector<1x32x96xbf16>
    %424 = vector.shape_cast %423 : vector<1x32x96xbf16> to vector<32x96xbf16>
    %c0_160 = arith.constant 0 : index
    %c0_161 = arith.constant 0 : index
    %c0_162 = arith.constant 0 : index
    %425 = vector.load %arg35[%c0_160, %c0_161, %c0_162] : memref<2x1x96xf32, #tpu.memory_space<vmem>>, vector<1x1x96xf32>
    %426 = vector.shape_cast %425 : vector<1x1x96xf32> to vector<1x96xf32>
    %c0_163 = arith.constant 0 : index
    %c0_164 = arith.constant 0 : index
    %c0_165 = arith.constant 0 : index
    %427 = vector.load %arg36[%c0_163, %c0_164, %c0_165] : memref<2x32x32xbf16, #tpu.memory_space<vmem>>, vector<1x32x32xbf16>
    %428 = vector.shape_cast %427 : vector<1x32x32xbf16> to vector<32x32xbf16>
    %c0_166 = arith.constant 0 : index
    %c0_167 = arith.constant 0 : index
    %c0_168 = arith.constant 0 : index
    %429 = vector.load %arg37[%c0_166, %c0_167, %c0_168] : memref<2x1x32xf32, #tpu.memory_space<vmem>>, vector<1x1x32xf32>
    %430 = vector.shape_cast %429 : vector<1x1x32xf32> to vector<1x32xf32>
    %c0_169 = arith.constant 0 : index
    %c0_170 = arith.constant 0 : index
    %c0_171 = arith.constant 0 : index
    %431 = vector.load %arg38[%c0_169, %c0_170, %c0_171] : memref<2x1x32xf32, #tpu.memory_space<vmem>>, vector<1x1x32xf32>
    %432 = vector.shape_cast %431 : vector<1x1x32xf32> to vector<1x32xf32>
    %c0_172 = arith.constant 0 : index
    %c0_173 = arith.constant 0 : index
    %c0_174 = arith.constant 0 : index
    %433 = vector.load %arg39[%c0_172, %c0_173, %c0_174] : memref<2x1x32xf32, #tpu.memory_space<vmem>>, vector<1x1x32xf32>
    %434 = vector.shape_cast %433 : vector<1x1x32xf32> to vector<1x32xf32>
    %c0_175 = arith.constant 0 : index
    %c0_176 = arith.constant 0 : index
    %c0_177 = arith.constant 0 : index
    %435 = vector.load %arg40[%c0_175, %c0_176, %c0_177] : memref<2x32x128xbf16, #tpu.memory_space<vmem>>, vector<1x32x128xbf16>
    %436 = vector.shape_cast %435 : vector<1x32x128xbf16> to vector<32x128xbf16>
    %c0_178 = arith.constant 0 : index
    %c0_179 = arith.constant 0 : index
    %c0_180 = arith.constant 0 : index
    %437 = vector.load %arg41[%c0_178, %c0_179, %c0_180] : memref<2x1x128xf32, #tpu.memory_space<vmem>>, vector<1x1x128xf32>
    %438 = vector.shape_cast %437 : vector<1x1x128xf32> to vector<1x128xf32>
    %c0_181 = arith.constant 0 : index
    %c0_182 = arith.constant 0 : index
    %c0_183 = arith.constant 0 : index
    %439 = vector.load %arg42[%c0_181, %c0_182, %c0_183] : memref<2x128x32xbf16, #tpu.memory_space<vmem>>, vector<1x128x32xbf16>
    %440 = vector.shape_cast %439 : vector<1x128x32xbf16> to vector<128x32xbf16>
    %c0_184 = arith.constant 0 : index
    %c0_185 = arith.constant 0 : index
    %c0_186 = arith.constant 0 : index
    %441 = vector.load %arg43[%c0_184, %c0_185, %c0_186] : memref<2x1x32xf32, #tpu.memory_space<vmem>>, vector<1x1x32xf32>
    %442 = vector.shape_cast %441 : vector<1x1x32xf32> to vector<1x32xf32>
    %cst_187 = arith.constant dense<0.000000e+00> : vector<16xf32>
    %443 = vector.multi_reduction <add>, %418, %cst_187 [1] : vector<16x32xf32> to vector<16xf32>
    %444 = vector.shape_cast %443 : vector<16xf32> to vector<16x1xf32>
    %cst_188 = arith.constant 3.200000e+01 : f32
    %445 = vector.broadcast %cst_188 : f32 to vector<16x1xf32>
    %446 = arith.divf %444, %445 : vector<16x1xf32>
    %447 = vector.broadcast %446 : vector<16x1xf32> to vector<16x32xf32>
    %448 = arith.subf %418, %447 : vector<16x32xf32>
    %449 = arith.mulf %448, %448 : vector<16x32xf32>
    %cst_189 = arith.constant dense<0.000000e+00> : vector<16xf32>
    %450 = vector.multi_reduction <add>, %449, %cst_189 [1] : vector<16x32xf32> to vector<16xf32>
    %451 = vector.shape_cast %450 : vector<16xf32> to vector<16x1xf32>
    %cst_190 = arith.constant 3.200000e+01 : f32
    %452 = vector.broadcast %cst_190 : f32 to vector<16x1xf32>
    %453 = arith.divf %451, %452 : vector<16x1xf32>
    %454 = vector.broadcast %446 : vector<16x1xf32> to vector<16x32xf32>
    %455 = arith.subf %418, %454 : vector<16x32xf32>
    %cst_191 = arith.constant 9.99999974E-6 : f32
    %456 = vector.broadcast %cst_191 : f32 to vector<16x1xf32>
    %457 = arith.addf %453, %456 : vector<16x1xf32>
    %458 = math.rsqrt %457 : vector<16x1xf32>
    %459 = vector.broadcast %458 : vector<16x1xf32> to vector<16x32xf32>
    %460 = arith.mulf %455, %459 : vector<16x32xf32>
    %461 = vector.broadcast %420 : vector<1x32xf32> to vector<16x32xf32>
    %462 = arith.mulf %460, %461 : vector<16x32xf32>
    %463 = vector.broadcast %422 : vector<1x32xf32> to vector<16x32xf32>
    %464 = arith.addf %462, %463 : vector<16x32xf32>
    %465 = arith.truncf %464 : vector<16x32xf32> to vector<16x32xbf16>
    %cst_192 = arith.constant dense<0.000000e+00> : vector<16x96xf32>
    %466 = tpu.matmul %465, %424, %cst_192 {dimension_numbers = #tpu.dot_dimension_numbers<[1], [0], [0], [1], [0, 0, 1, 1], [], []>} : vector<16x32xbf16>, vector<32x96xbf16>, vector<16x96xf32> -> vector<16x96xf32>
    %467 = vector.broadcast %426 : vector<1x96xf32> to vector<16x96xf32>
    %468 = arith.addf %466, %467 : vector<16x96xf32>
    %469 = vector.extract_strided_slice %468 {offsets = [0, 0], sizes = [8, 32], strides = [1, 1]} : vector<16x96xf32> to vector<8x32xf32>
    %470 = vector.extract_strided_slice %468 {offsets = [0, 32], sizes = [8, 32], strides = [1, 1]} : vector<16x96xf32> to vector<8x32xf32>
    %471 = vector.extract_strided_slice %468 {offsets = [0, 64], sizes = [8, 32], strides = [1, 1]} : vector<16x96xf32> to vector<8x32xf32>
    %472 = vector.extract_strided_slice %469 {offsets = [0, 0], sizes = [8, 16], strides = [1, 1]} : vector<8x32xf32> to vector<8x16xf32>
    %473 = arith.truncf %472 : vector<8x16xf32> to vector<8x16xbf16>
    %474 = vector.extract_strided_slice %470 {offsets = [0, 0], sizes = [8, 16], strides = [1, 1]} : vector<8x32xf32> to vector<8x16xf32>
    %475 = arith.truncf %474 : vector<8x16xf32> to vector<8x16xbf16>
    %476 = vector.extract_strided_slice %471 {offsets = [0, 0], sizes = [8, 16], strides = [1, 1]} : vector<8x32xf32> to vector<8x16xf32>
    %477 = arith.truncf %476 : vector<8x16xf32> to vector<8x16xbf16>
    %cst_193 = arith.constant dense<0.000000e+00> : vector<8x8xf32>
    %478 = tpu.matmul %473, %475, %cst_193 {dimension_numbers = #tpu.dot_dimension_numbers<[1], [1], [0], [0], [0, 0, 1, 0], [], []>} : vector<8x16xbf16>, vector<8x16xbf16>, vector<8x8xf32> -> vector<8x8xf32>
    %cst_194 = arith.constant 2.500000e-01 : f32
    %479 = vector.broadcast %cst_194 : f32 to vector<8x8xf32>
    %480 = arith.mulf %478, %479 : vector<8x8xf32>
    %cst_195 = arith.constant dense<0xFF800000> : vector<8xf32>
    %481 = vector.multi_reduction <maximumf>, %480, %cst_195 [1] : vector<8x8xf32> to vector<8xf32>
    %482 = vector.shape_cast %481 : vector<8xf32> to vector<8x1xf32>
    %483 = vector.broadcast %482 : vector<8x1xf32> to vector<8x8xf32>
    %484 = arith.subf %480, %483 : vector<8x8xf32>
    %485 = math.exp %484 : vector<8x8xf32>
    %cst_196 = arith.constant dense<0.000000e+00> : vector<8xf32>
    %486 = vector.multi_reduction <add>, %485, %cst_196 [1] : vector<8x8xf32> to vector<8xf32>
    %487 = vector.shape_cast %486 : vector<8xf32> to vector<8x1xf32>
    %488 = tpu.reciprocal %487 {approx = true} : vector<8x1xf32> -> vector<8x1xf32>
    %489 = vector.broadcast %488 : vector<8x1xf32> to vector<8x8xf32>
    %490 = arith.mulf %485, %489 : vector<8x8xf32>
    %491 = arith.truncf %490 : vector<8x8xf32> to vector<8x8xbf16>
    %cst_197 = arith.constant dense<0.000000e+00> : vector<8x16xf32>
    %492 = tpu.matmul %491, %477, %cst_197 {dimension_numbers = #tpu.dot_dimension_numbers<[1], [0], [0], [1], [0, 0, 1, 1], [], []>} : vector<8x8xbf16>, vector<8x16xbf16>, vector<8x16xf32> -> vector<8x16xf32>
    %493 = vector.extract_strided_slice %428 {offsets = [0, 0], sizes = [16, 32], strides = [1, 1]} : vector<32x32xbf16> to vector<16x32xbf16>
    %494 = arith.truncf %492 : vector<8x16xf32> to vector<8x16xbf16>
    %cst_198 = arith.constant dense<0.000000e+00> : vector<8x32xf32>
    %495 = tpu.matmul %494, %493, %cst_198 {dimension_numbers = #tpu.dot_dimension_numbers<[1], [0], [0], [1], [0, 0, 1, 1], [], []>} : vector<8x16xbf16>, vector<16x32xbf16>, vector<8x32xf32> -> vector<8x32xf32>
    %496 = vector.extract_strided_slice %469 {offsets = [0, 16], sizes = [8, 16], strides = [1, 1]} : vector<8x32xf32> to vector<8x16xf32>
    %497 = arith.truncf %496 : vector<8x16xf32> to vector<8x16xbf16>
    %498 = vector.extract_strided_slice %470 {offsets = [0, 16], sizes = [8, 16], strides = [1, 1]} : vector<8x32xf32> to vector<8x16xf32>
    %499 = arith.truncf %498 : vector<8x16xf32> to vector<8x16xbf16>
    %500 = vector.extract_strided_slice %471 {offsets = [0, 16], sizes = [8, 16], strides = [1, 1]} : vector<8x32xf32> to vector<8x16xf32>
    %501 = arith.truncf %500 : vector<8x16xf32> to vector<8x16xbf16>
    %cst_199 = arith.constant dense<0.000000e+00> : vector<8x8xf32>
    %502 = tpu.matmul %497, %499, %cst_199 {dimension_numbers = #tpu.dot_dimension_numbers<[1], [1], [0], [0], [0, 0, 1, 0], [], []>} : vector<8x16xbf16>, vector<8x16xbf16>, vector<8x8xf32> -> vector<8x8xf32>
    %cst_200 = arith.constant 2.500000e-01 : f32
    %503 = vector.broadcast %cst_200 : f32 to vector<8x8xf32>
    %504 = arith.mulf %502, %503 : vector<8x8xf32>
    %cst_201 = arith.constant dense<0xFF800000> : vector<8xf32>
    %505 = vector.multi_reduction <maximumf>, %504, %cst_201 [1] : vector<8x8xf32> to vector<8xf32>
    %506 = vector.shape_cast %505 : vector<8xf32> to vector<8x1xf32>
    %507 = vector.broadcast %506 : vector<8x1xf32> to vector<8x8xf32>
    %508 = arith.subf %504, %507 : vector<8x8xf32>
    %509 = math.exp %508 : vector<8x8xf32>
    %cst_202 = arith.constant dense<0.000000e+00> : vector<8xf32>
    %510 = vector.multi_reduction <add>, %509, %cst_202 [1] : vector<8x8xf32> to vector<8xf32>
    %511 = vector.shape_cast %510 : vector<8xf32> to vector<8x1xf32>
    %512 = tpu.reciprocal %511 {approx = true} : vector<8x1xf32> -> vector<8x1xf32>
    %513 = vector.broadcast %512 : vector<8x1xf32> to vector<8x8xf32>
    %514 = arith.mulf %509, %513 : vector<8x8xf32>
    %515 = arith.truncf %514 : vector<8x8xf32> to vector<8x8xbf16>
    %cst_203 = arith.constant dense<0.000000e+00> : vector<8x16xf32>
    %516 = tpu.matmul %515, %501, %cst_203 {dimension_numbers = #tpu.dot_dimension_numbers<[1], [0], [0], [1], [0, 0, 1, 1], [], []>} : vector<8x8xbf16>, vector<8x16xbf16>, vector<8x16xf32> -> vector<8x16xf32>
    %517 = vector.extract_strided_slice %428 {offsets = [16, 0], sizes = [16, 32], strides = [1, 1]} : vector<32x32xbf16> to vector<16x32xbf16>
    %518 = arith.truncf %516 : vector<8x16xf32> to vector<8x16xbf16>
    %cst_204 = arith.constant dense<0.000000e+00> : vector<8x32xf32>
    %519 = tpu.matmul %518, %517, %cst_204 {dimension_numbers = #tpu.dot_dimension_numbers<[1], [0], [0], [1], [0, 0, 1, 1], [], []>} : vector<8x16xbf16>, vector<16x32xbf16>, vector<8x32xf32> -> vector<8x32xf32>
    %520 = arith.addf %495, %519 : vector<8x32xf32>
    %521 = vector.extract_strided_slice %468 {offsets = [8, 0], sizes = [8, 32], strides = [1, 1]} : vector<16x96xf32> to vector<8x32xf32>
    %522 = vector.extract_strided_slice %468 {offsets = [8, 32], sizes = [8, 32], strides = [1, 1]} : vector<16x96xf32> to vector<8x32xf32>
    %523 = vector.extract_strided_slice %468 {offsets = [8, 64], sizes = [8, 32], strides = [1, 1]} : vector<16x96xf32> to vector<8x32xf32>
    %524 = vector.extract_strided_slice %521 {offsets = [0, 0], sizes = [8, 16], strides = [1, 1]} : vector<8x32xf32> to vector<8x16xf32>
    %525 = arith.truncf %524 : vector<8x16xf32> to vector<8x16xbf16>
    %526 = vector.extract_strided_slice %522 {offsets = [0, 0], sizes = [8, 16], strides = [1, 1]} : vector<8x32xf32> to vector<8x16xf32>
    %527 = arith.truncf %526 : vector<8x16xf32> to vector<8x16xbf16>
    %528 = vector.extract_strided_slice %523 {offsets = [0, 0], sizes = [8, 16], strides = [1, 1]} : vector<8x32xf32> to vector<8x16xf32>
    %529 = arith.truncf %528 : vector<8x16xf32> to vector<8x16xbf16>
    %cst_205 = arith.constant dense<0.000000e+00> : vector<8x8xf32>
    %530 = tpu.matmul %525, %527, %cst_205 {dimension_numbers = #tpu.dot_dimension_numbers<[1], [1], [0], [0], [0, 0, 1, 0], [], []>} : vector<8x16xbf16>, vector<8x16xbf16>, vector<8x8xf32> -> vector<8x8xf32>
    %cst_206 = arith.constant 2.500000e-01 : f32
    %531 = vector.broadcast %cst_206 : f32 to vector<8x8xf32>
    %532 = arith.mulf %530, %531 : vector<8x8xf32>
    %cst_207 = arith.constant dense<0xFF800000> : vector<8xf32>
    %533 = vector.multi_reduction <maximumf>, %532, %cst_207 [1] : vector<8x8xf32> to vector<8xf32>
    %534 = vector.shape_cast %533 : vector<8xf32> to vector<8x1xf32>
    %535 = vector.broadcast %534 : vector<8x1xf32> to vector<8x8xf32>
    %536 = arith.subf %532, %535 : vector<8x8xf32>
    %537 = math.exp %536 : vector<8x8xf32>
    %cst_208 = arith.constant dense<0.000000e+00> : vector<8xf32>
    %538 = vector.multi_reduction <add>, %537, %cst_208 [1] : vector<8x8xf32> to vector<8xf32>
    %539 = vector.shape_cast %538 : vector<8xf32> to vector<8x1xf32>
    %540 = tpu.reciprocal %539 {approx = true} : vector<8x1xf32> -> vector<8x1xf32>
    %541 = vector.broadcast %540 : vector<8x1xf32> to vector<8x8xf32>
    %542 = arith.mulf %537, %541 : vector<8x8xf32>
    %543 = arith.truncf %542 : vector<8x8xf32> to vector<8x8xbf16>
    %cst_209 = arith.constant dense<0.000000e+00> : vector<8x16xf32>
    %544 = tpu.matmul %543, %529, %cst_209 {dimension_numbers = #tpu.dot_dimension_numbers<[1], [0], [0], [1], [0, 0, 1, 1], [], []>} : vector<8x8xbf16>, vector<8x16xbf16>, vector<8x16xf32> -> vector<8x16xf32>
    %545 = vector.extract_strided_slice %428 {offsets = [0, 0], sizes = [16, 32], strides = [1, 1]} : vector<32x32xbf16> to vector<16x32xbf16>
    %546 = arith.truncf %544 : vector<8x16xf32> to vector<8x16xbf16>
    %cst_210 = arith.constant dense<0.000000e+00> : vector<8x32xf32>
    %547 = tpu.matmul %546, %545, %cst_210 {dimension_numbers = #tpu.dot_dimension_numbers<[1], [0], [0], [1], [0, 0, 1, 1], [], []>} : vector<8x16xbf16>, vector<16x32xbf16>, vector<8x32xf32> -> vector<8x32xf32>
    %548 = vector.extract_strided_slice %521 {offsets = [0, 16], sizes = [8, 16], strides = [1, 1]} : vector<8x32xf32> to vector<8x16xf32>
    %549 = arith.truncf %548 : vector<8x16xf32> to vector<8x16xbf16>
    %550 = vector.extract_strided_slice %522 {offsets = [0, 16], sizes = [8, 16], strides = [1, 1]} : vector<8x32xf32> to vector<8x16xf32>
    %551 = arith.truncf %550 : vector<8x16xf32> to vector<8x16xbf16>
    %552 = vector.extract_strided_slice %523 {offsets = [0, 16], sizes = [8, 16], strides = [1, 1]} : vector<8x32xf32> to vector<8x16xf32>
    %553 = arith.truncf %552 : vector<8x16xf32> to vector<8x16xbf16>
    %cst_211 = arith.constant dense<0.000000e+00> : vector<8x8xf32>
    %554 = tpu.matmul %549, %551, %cst_211 {dimension_numbers = #tpu.dot_dimension_numbers<[1], [1], [0], [0], [0, 0, 1, 0], [], []>} : vector<8x16xbf16>, vector<8x16xbf16>, vector<8x8xf32> -> vector<8x8xf32>
    %cst_212 = arith.constant 2.500000e-01 : f32
    %555 = vector.broadcast %cst_212 : f32 to vector<8x8xf32>
    %556 = arith.mulf %554, %555 : vector<8x8xf32>
    %cst_213 = arith.constant dense<0xFF800000> : vector<8xf32>
    %557 = vector.multi_reduction <maximumf>, %556, %cst_213 [1] : vector<8x8xf32> to vector<8xf32>
    %558 = vector.shape_cast %557 : vector<8xf32> to vector<8x1xf32>
    %559 = vector.broadcast %558 : vector<8x1xf32> to vector<8x8xf32>
    %560 = arith.subf %556, %559 : vector<8x8xf32>
    %561 = math.exp %560 : vector<8x8xf32>
    %cst_214 = arith.constant dense<0.000000e+00> : vector<8xf32>
    %562 = vector.multi_reduction <add>, %561, %cst_214 [1] : vector<8x8xf32> to vector<8xf32>
    %563 = vector.shape_cast %562 : vector<8xf32> to vector<8x1xf32>
    %564 = tpu.reciprocal %563 {approx = true} : vector<8x1xf32> -> vector<8x1xf32>
    %565 = vector.broadcast %564 : vector<8x1xf32> to vector<8x8xf32>
    %566 = arith.mulf %561, %565 : vector<8x8xf32>
    %567 = arith.truncf %566 : vector<8x8xf32> to vector<8x8xbf16>
    %cst_215 = arith.constant dense<0.000000e+00> : vector<8x16xf32>
    %568 = tpu.matmul %567, %553, %cst_215 {dimension_numbers = #tpu.dot_dimension_numbers<[1], [0], [0], [1], [0, 0, 1, 1], [], []>} : vector<8x8xbf16>, vector<8x16xbf16>, vector<8x16xf32> -> vector<8x16xf32>
    %569 = vector.extract_strided_slice %428 {offsets = [16, 0], sizes = [16, 32], strides = [1, 1]} : vector<32x32xbf16> to vector<16x32xbf16>
    %570 = arith.truncf %568 : vector<8x16xf32> to vector<8x16xbf16>
    %cst_216 = arith.constant dense<0.000000e+00> : vector<8x32xf32>
    %571 = tpu.matmul %570, %569, %cst_216 {dimension_numbers = #tpu.dot_dimension_numbers<[1], [0], [0], [1], [0, 0, 1, 1], [], []>} : vector<8x16xbf16>, vector<16x32xbf16>, vector<8x32xf32> -> vector<8x32xf32>
    %572 = arith.addf %547, %571 : vector<8x32xf32>
    %573 = tpu.concatenate %520, %572 in 0 : vector<8x32xf32>, vector<8x32xf32> -> vector<16x32xf32>
    %574 = arith.addf %418, %573 : vector<16x32xf32>
    %575 = vector.broadcast %430 : vector<1x32xf32> to vector<16x32xf32>
    %576 = arith.addf %574, %575 : vector<16x32xf32>
    %cst_217 = arith.constant dense<0.000000e+00> : vector<16xf32>
    %577 = vector.multi_reduction <add>, %576, %cst_217 [1] : vector<16x32xf32> to vector<16xf32>
    %578 = vector.shape_cast %577 : vector<16xf32> to vector<16x1xf32>
    %cst_218 = arith.constant 3.200000e+01 : f32
    %579 = vector.broadcast %cst_218 : f32 to vector<16x1xf32>
    %580 = arith.divf %578, %579 : vector<16x1xf32>
    %581 = vector.broadcast %580 : vector<16x1xf32> to vector<16x32xf32>
    %582 = arith.subf %576, %581 : vector<16x32xf32>
    %583 = arith.mulf %582, %582 : vector<16x32xf32>
    %cst_219 = arith.constant dense<0.000000e+00> : vector<16xf32>
    %584 = vector.multi_reduction <add>, %583, %cst_219 [1] : vector<16x32xf32> to vector<16xf32>
    %585 = vector.shape_cast %584 : vector<16xf32> to vector<16x1xf32>
    %cst_220 = arith.constant 3.200000e+01 : f32
    %586 = vector.broadcast %cst_220 : f32 to vector<16x1xf32>
    %587 = arith.divf %585, %586 : vector<16x1xf32>
    %588 = vector.broadcast %580 : vector<16x1xf32> to vector<16x32xf32>
    %589 = arith.subf %576, %588 : vector<16x32xf32>
    %cst_221 = arith.constant 9.99999974E-6 : f32
    %590 = vector.broadcast %cst_221 : f32 to vector<16x1xf32>
    %591 = arith.addf %587, %590 : vector<16x1xf32>
    %592 = math.rsqrt %591 : vector<16x1xf32>
    %593 = vector.broadcast %592 : vector<16x1xf32> to vector<16x32xf32>
    %594 = arith.mulf %589, %593 : vector<16x32xf32>
    %595 = vector.broadcast %432 : vector<1x32xf32> to vector<16x32xf32>
    %596 = arith.mulf %594, %595 : vector<16x32xf32>
    %597 = vector.broadcast %434 : vector<1x32xf32> to vector<16x32xf32>
    %598 = arith.addf %596, %597 : vector<16x32xf32>
    %599 = arith.truncf %598 : vector<16x32xf32> to vector<16x32xbf16>
    %cst_222 = arith.constant dense<0.000000e+00> : vector<16x128xf32>
    %600 = tpu.matmul %599, %436, %cst_222 {dimension_numbers = #tpu.dot_dimension_numbers<[1], [0], [0], [1], [0, 0, 1, 1], [], []>} : vector<16x32xbf16>, vector<32x128xbf16>, vector<16x128xf32> -> vector<16x128xf32>
    %601 = vector.broadcast %438 : vector<1x128xf32> to vector<16x128xf32>
    %602 = arith.addf %600, %601 : vector<16x128xf32>
    %603 = arith.mulf %602, %602 : vector<16x128xf32>
    %604 = arith.mulf %602, %603 : vector<16x128xf32>
    %cst_223 = arith.constant 4.471500e-02 : f32
    %605 = vector.broadcast %cst_223 : f32 to vector<16x128xf32>
    %606 = arith.mulf %605, %604 : vector<16x128xf32>
    %607 = arith.addf %602, %606 : vector<16x128xf32>
    %cst_224 = arith.constant 0.797884583 : f32
    %608 = vector.broadcast %cst_224 : f32 to vector<16x128xf32>
    %609 = arith.mulf %608, %607 : vector<16x128xf32>
    %610 = math.tanh %609 : vector<16x128xf32>
    %cst_225 = arith.constant 1.000000e+00 : f32
    %611 = vector.broadcast %cst_225 : f32 to vector<16x128xf32>
    %612 = arith.addf %611, %610 : vector<16x128xf32>
    %cst_226 = arith.constant 5.000000e-01 : f32
    %613 = vector.broadcast %cst_226 : f32 to vector<16x128xf32>
    %614 = arith.mulf %613, %612 : vector<16x128xf32>
    %615 = arith.mulf %602, %614 : vector<16x128xf32>
    %616 = arith.truncf %615 : vector<16x128xf32> to vector<16x128xbf16>
    %cst_227 = arith.constant dense<0.000000e+00> : vector<16x32xf32>
    %617 = tpu.matmul %616, %440, %cst_227 {dimension_numbers = #tpu.dot_dimension_numbers<[1], [0], [0], [1], [0, 0, 1, 1], [], []>} : vector<16x128xbf16>, vector<128x32xbf16>, vector<16x32xf32> -> vector<16x32xf32>
    %618 = arith.addf %576, %617 : vector<16x32xf32>
    %619 = vector.broadcast %442 : vector<1x32xf32> to vector<16x32xf32>
    %620 = arith.addf %618, %619 : vector<16x32xf32>
    %c1 = arith.constant 1 : index
    %c0_228 = arith.constant 0 : index
    %c0_229 = arith.constant 0 : index
    %621 = vector.load %arg32[%c1, %c0_228, %c0_229] : memref<2x1x32xf32, #tpu.memory_space<vmem>>, vector<1x1x32xf32>
    %622 = vector.shape_cast %621 : vector<1x1x32xf32> to vector<1x32xf32>
    %c1_230 = arith.constant 1 : index
    %c0_231 = arith.constant 0 : index
    %c0_232 = arith.constant 0 : index
    %623 = vector.load %arg33[%c1_230, %c0_231, %c0_232] : memref<2x1x32xf32, #tpu.memory_space<vmem>>, vector<1x1x32xf32>
    %624 = vector.shape_cast %623 : vector<1x1x32xf32> to vector<1x32xf32>
    %c1_233 = arith.constant 1 : index
    %c0_234 = arith.constant 0 : index
    %c0_235 = arith.constant 0 : index
    %625 = vector.load %arg34[%c1_233, %c0_234, %c0_235] : memref<2x32x96xbf16, #tpu.memory_space<vmem>>, vector<1x32x96xbf16>
    %626 = vector.shape_cast %625 : vector<1x32x96xbf16> to vector<32x96xbf16>
    %c1_236 = arith.constant 1 : index
    %c0_237 = arith.constant 0 : index
    %c0_238 = arith.constant 0 : index
    %627 = vector.load %arg35[%c1_236, %c0_237, %c0_238] : memref<2x1x96xf32, #tpu.memory_space<vmem>>, vector<1x1x96xf32>
    %628 = vector.shape_cast %627 : vector<1x1x96xf32> to vector<1x96xf32>
    %c1_239 = arith.constant 1 : index
    %c0_240 = arith.constant 0 : index
    %c0_241 = arith.constant 0 : index
    %629 = vector.load %arg36[%c1_239, %c0_240, %c0_241] : memref<2x32x32xbf16, #tpu.memory_space<vmem>>, vector<1x32x32xbf16>
    %630 = vector.shape_cast %629 : vector<1x32x32xbf16> to vector<32x32xbf16>
    %c1_242 = arith.constant 1 : index
    %c0_243 = arith.constant 0 : index
    %c0_244 = arith.constant 0 : index
    %631 = vector.load %arg37[%c1_242, %c0_243, %c0_244] : memref<2x1x32xf32, #tpu.memory_space<vmem>>, vector<1x1x32xf32>
    %632 = vector.shape_cast %631 : vector<1x1x32xf32> to vector<1x32xf32>
    %c1_245 = arith.constant 1 : index
    %c0_246 = arith.constant 0 : index
    %c0_247 = arith.constant 0 : index
    %633 = vector.load %arg38[%c1_245, %c0_246, %c0_247] : memref<2x1x32xf32, #tpu.memory_space<vmem>>, vector<1x1x32xf32>
    %634 = vector.shape_cast %633 : vector<1x1x32xf32> to vector<1x32xf32>
    %c1_248 = arith.constant 1 : index
    %c0_249 = arith.constant 0 : index
    %c0_250 = arith.constant 0 : index
    %635 = vector.load %arg39[%c1_248, %c0_249, %c0_250] : memref<2x1x32xf32, #tpu.memory_space<vmem>>, vector<1x1x32xf32>
    %636 = vector.shape_cast %635 : vector<1x1x32xf32> to vector<1x32xf32>
    %c1_251 = arith.constant 1 : index
    %c0_252 = arith.constant 0 : index
    %c0_253 = arith.constant 0 : index
    %637 = vector.load %arg40[%c1_251, %c0_252, %c0_253] : memref<2x32x128xbf16, #tpu.memory_space<vmem>>, vector<1x32x128xbf16>
    %638 = vector.shape_cast %637 : vector<1x32x128xbf16> to vector<32x128xbf16>
    %c1_254 = arith.constant 1 : index
    %c0_255 = arith.constant 0 : index
    %c0_256 = arith.constant 0 : index
    %639 = vector.load %arg41[%c1_254, %c0_255, %c0_256] : memref<2x1x128xf32, #tpu.memory_space<vmem>>, vector<1x1x128xf32>
    %640 = vector.shape_cast %639 : vector<1x1x128xf32> to vector<1x128xf32>
    %c1_257 = arith.constant 1 : index
    %c0_258 = arith.constant 0 : index
    %c0_259 = arith.constant 0 : index
    %641 = vector.load %arg42[%c1_257, %c0_258, %c0_259] : memref<2x128x32xbf16, #tpu.memory_space<vmem>>, vector<1x128x32xbf16>
    %642 = vector.shape_cast %641 : vector<1x128x32xbf16> to vector<128x32xbf16>
    %c1_260 = arith.constant 1 : index
    %c0_261 = arith.constant 0 : index
    %c0_262 = arith.constant 0 : index
    %643 = vector.load %arg43[%c1_260, %c0_261, %c0_262] : memref<2x1x32xf32, #tpu.memory_space<vmem>>, vector<1x1x32xf32>
    %644 = vector.shape_cast %643 : vector<1x1x32xf32> to vector<1x32xf32>
    %cst_263 = arith.constant dense<0.000000e+00> : vector<16xf32>
    %645 = vector.multi_reduction <add>, %620, %cst_263 [1] : vector<16x32xf32> to vector<16xf32>
    %646 = vector.shape_cast %645 : vector<16xf32> to vector<16x1xf32>
    %cst_264 = arith.constant 3.200000e+01 : f32
    %647 = vector.broadcast %cst_264 : f32 to vector<16x1xf32>
    %648 = arith.divf %646, %647 : vector<16x1xf32>
    %649 = vector.broadcast %648 : vector<16x1xf32> to vector<16x32xf32>
    %650 = arith.subf %620, %649 : vector<16x32xf32>
    %651 = arith.mulf %650, %650 : vector<16x32xf32>
    %cst_265 = arith.constant dense<0.000000e+00> : vector<16xf32>
    %652 = vector.multi_reduction <add>, %651, %cst_265 [1] : vector<16x32xf32> to vector<16xf32>
    %653 = vector.shape_cast %652 : vector<16xf32> to vector<16x1xf32>
    %cst_266 = arith.constant 3.200000e+01 : f32
    %654 = vector.broadcast %cst_266 : f32 to vector<16x1xf32>
    %655 = arith.divf %653, %654 : vector<16x1xf32>
    %656 = vector.broadcast %648 : vector<16x1xf32> to vector<16x32xf32>
    %657 = arith.subf %620, %656 : vector<16x32xf32>
    %cst_267 = arith.constant 9.99999974E-6 : f32
    %658 = vector.broadcast %cst_267 : f32 to vector<16x1xf32>
    %659 = arith.addf %655, %658 : vector<16x1xf32>
    %660 = math.rsqrt %659 : vector<16x1xf32>
    %661 = vector.broadcast %660 : vector<16x1xf32> to vector<16x32xf32>
    %662 = arith.mulf %657, %661 : vector<16x32xf32>
    %663 = vector.broadcast %622 : vector<1x32xf32> to vector<16x32xf32>
    %664 = arith.mulf %662, %663 : vector<16x32xf32>
    %665 = vector.broadcast %624 : vector<1x32xf32> to vector<16x32xf32>
    %666 = arith.addf %664, %665 : vector<16x32xf32>
    %667 = arith.truncf %666 : vector<16x32xf32> to vector<16x32xbf16>
    %cst_268 = arith.constant dense<0.000000e+00> : vector<16x96xf32>
    %668 = tpu.matmul %667, %626, %cst_268 {dimension_numbers = #tpu.dot_dimension_numbers<[1], [0], [0], [1], [0, 0, 1, 1], [], []>} : vector<16x32xbf16>, vector<32x96xbf16>, vector<16x96xf32> -> vector<16x96xf32>
    %669 = vector.broadcast %628 : vector<1x96xf32> to vector<16x96xf32>
    %670 = arith.addf %668, %669 : vector<16x96xf32>
    %671 = vector.extract_strided_slice %670 {offsets = [0, 0], sizes = [8, 32], strides = [1, 1]} : vector<16x96xf32> to vector<8x32xf32>
    %672 = vector.extract_strided_slice %670 {offsets = [0, 32], sizes = [8, 32], strides = [1, 1]} : vector<16x96xf32> to vector<8x32xf32>
    %673 = vector.extract_strided_slice %670 {offsets = [0, 64], sizes = [8, 32], strides = [1, 1]} : vector<16x96xf32> to vector<8x32xf32>
    %674 = vector.extract_strided_slice %671 {offsets = [0, 0], sizes = [8, 16], strides = [1, 1]} : vector<8x32xf32> to vector<8x16xf32>
    %675 = arith.truncf %674 : vector<8x16xf32> to vector<8x16xbf16>
    %676 = vector.extract_strided_slice %672 {offsets = [0, 0], sizes = [8, 16], strides = [1, 1]} : vector<8x32xf32> to vector<8x16xf32>
    %677 = arith.truncf %676 : vector<8x16xf32> to vector<8x16xbf16>
    %678 = vector.extract_strided_slice %673 {offsets = [0, 0], sizes = [8, 16], strides = [1, 1]} : vector<8x32xf32> to vector<8x16xf32>
    %679 = arith.truncf %678 : vector<8x16xf32> to vector<8x16xbf16>
    %cst_269 = arith.constant dense<0.000000e+00> : vector<8x8xf32>
    %680 = tpu.matmul %675, %677, %cst_269 {dimension_numbers = #tpu.dot_dimension_numbers<[1], [1], [0], [0], [0, 0, 1, 0], [], []>} : vector<8x16xbf16>, vector<8x16xbf16>, vector<8x8xf32> -> vector<8x8xf32>
    %cst_270 = arith.constant 2.500000e-01 : f32
    %681 = vector.broadcast %cst_270 : f32 to vector<8x8xf32>
    %682 = arith.mulf %680, %681 : vector<8x8xf32>
    %cst_271 = arith.constant dense<0xFF800000> : vector<8xf32>
    %683 = vector.multi_reduction <maximumf>, %682, %cst_271 [1] : vector<8x8xf32> to vector<8xf32>
    %684 = vector.shape_cast %683 : vector<8xf32> to vector<8x1xf32>
    %685 = vector.broadcast %684 : vector<8x1xf32> to vector<8x8xf32>
    %686 = arith.subf %682, %685 : vector<8x8xf32>
    %687 = math.exp %686 : vector<8x8xf32>
    %cst_272 = arith.constant dense<0.000000e+00> : vector<8xf32>
    %688 = vector.multi_reduction <add>, %687, %cst_272 [1] : vector<8x8xf32> to vector<8xf32>
    %689 = vector.shape_cast %688 : vector<8xf32> to vector<8x1xf32>
    %690 = tpu.reciprocal %689 {approx = true} : vector<8x1xf32> -> vector<8x1xf32>
    %691 = vector.broadcast %690 : vector<8x1xf32> to vector<8x8xf32>
    %692 = arith.mulf %687, %691 : vector<8x8xf32>
    %693 = arith.truncf %692 : vector<8x8xf32> to vector<8x8xbf16>
    %cst_273 = arith.constant dense<0.000000e+00> : vector<8x16xf32>
    %694 = tpu.matmul %693, %679, %cst_273 {dimension_numbers = #tpu.dot_dimension_numbers<[1], [0], [0], [1], [0, 0, 1, 1], [], []>} : vector<8x8xbf16>, vector<8x16xbf16>, vector<8x16xf32> -> vector<8x16xf32>
    %695 = vector.extract_strided_slice %630 {offsets = [0, 0], sizes = [16, 32], strides = [1, 1]} : vector<32x32xbf16> to vector<16x32xbf16>
    %696 = arith.truncf %694 : vector<8x16xf32> to vector<8x16xbf16>
    %cst_274 = arith.constant dense<0.000000e+00> : vector<8x32xf32>
    %697 = tpu.matmul %696, %695, %cst_274 {dimension_numbers = #tpu.dot_dimension_numbers<[1], [0], [0], [1], [0, 0, 1, 1], [], []>} : vector<8x16xbf16>, vector<16x32xbf16>, vector<8x32xf32> -> vector<8x32xf32>
    %698 = vector.extract_strided_slice %671 {offsets = [0, 16], sizes = [8, 16], strides = [1, 1]} : vector<8x32xf32> to vector<8x16xf32>
    %699 = arith.truncf %698 : vector<8x16xf32> to vector<8x16xbf16>
    %700 = vector.extract_strided_slice %672 {offsets = [0, 16], sizes = [8, 16], strides = [1, 1]} : vector<8x32xf32> to vector<8x16xf32>
    %701 = arith.truncf %700 : vector<8x16xf32> to vector<8x16xbf16>
    %702 = vector.extract_strided_slice %673 {offsets = [0, 16], sizes = [8, 16], strides = [1, 1]} : vector<8x32xf32> to vector<8x16xf32>
    %703 = arith.truncf %702 : vector<8x16xf32> to vector<8x16xbf16>
    %cst_275 = arith.constant dense<0.000000e+00> : vector<8x8xf32>
    %704 = tpu.matmul %699, %701, %cst_275 {dimension_numbers = #tpu.dot_dimension_numbers<[1], [1], [0], [0], [0, 0, 1, 0], [], []>} : vector<8x16xbf16>, vector<8x16xbf16>, vector<8x8xf32> -> vector<8x8xf32>
    %cst_276 = arith.constant 2.500000e-01 : f32
    %705 = vector.broadcast %cst_276 : f32 to vector<8x8xf32>
    %706 = arith.mulf %704, %705 : vector<8x8xf32>
    %cst_277 = arith.constant dense<0xFF800000> : vector<8xf32>
    %707 = vector.multi_reduction <maximumf>, %706, %cst_277 [1] : vector<8x8xf32> to vector<8xf32>
    %708 = vector.shape_cast %707 : vector<8xf32> to vector<8x1xf32>
    %709 = vector.broadcast %708 : vector<8x1xf32> to vector<8x8xf32>
    %710 = arith.subf %706, %709 : vector<8x8xf32>
    %711 = math.exp %710 : vector<8x8xf32>
    %cst_278 = arith.constant dense<0.000000e+00> : vector<8xf32>
    %712 = vector.multi_reduction <add>, %711, %cst_278 [1] : vector<8x8xf32> to vector<8xf32>
    %713 = vector.shape_cast %712 : vector<8xf32> to vector<8x1xf32>
    %714 = tpu.reciprocal %713 {approx = true} : vector<8x1xf32> -> vector<8x1xf32>
    %715 = vector.broadcast %714 : vector<8x1xf32> to vector<8x8xf32>
    %716 = arith.mulf %711, %715 : vector<8x8xf32>
    %717 = arith.truncf %716 : vector<8x8xf32> to vector<8x8xbf16>
    %cst_279 = arith.constant dense<0.000000e+00> : vector<8x16xf32>
    %718 = tpu.matmul %717, %703, %cst_279 {dimension_numbers = #tpu.dot_dimension_numbers<[1], [0], [0], [1], [0, 0, 1, 1], [], []>} : vector<8x8xbf16>, vector<8x16xbf16>, vector<8x16xf32> -> vector<8x16xf32>
    %719 = vector.extract_strided_slice %630 {offsets = [16, 0], sizes = [16, 32], strides = [1, 1]} : vector<32x32xbf16> to vector<16x32xbf16>
    %720 = arith.truncf %718 : vector<8x16xf32> to vector<8x16xbf16>
    %cst_280 = arith.constant dense<0.000000e+00> : vector<8x32xf32>
    %721 = tpu.matmul %720, %719, %cst_280 {dimension_numbers = #tpu.dot_dimension_numbers<[1], [0], [0], [1], [0, 0, 1, 1], [], []>} : vector<8x16xbf16>, vector<16x32xbf16>, vector<8x32xf32> -> vector<8x32xf32>
    %722 = arith.addf %697, %721 : vector<8x32xf32>
    %723 = vector.extract_strided_slice %670 {offsets = [8, 0], sizes = [8, 32], strides = [1, 1]} : vector<16x96xf32> to vector<8x32xf32>
    %724 = vector.extract_strided_slice %670 {offsets = [8, 32], sizes = [8, 32], strides = [1, 1]} : vector<16x96xf32> to vector<8x32xf32>
    %725 = vector.extract_strided_slice %670 {offsets = [8, 64], sizes = [8, 32], strides = [1, 1]} : vector<16x96xf32> to vector<8x32xf32>
    %726 = vector.extract_strided_slice %723 {offsets = [0, 0], sizes = [8, 16], strides = [1, 1]} : vector<8x32xf32> to vector<8x16xf32>
    %727 = arith.truncf %726 : vector<8x16xf32> to vector<8x16xbf16>
    %728 = vector.extract_strided_slice %724 {offsets = [0, 0], sizes = [8, 16], strides = [1, 1]} : vector<8x32xf32> to vector<8x16xf32>
    %729 = arith.truncf %728 : vector<8x16xf32> to vector<8x16xbf16>
    %730 = vector.extract_strided_slice %725 {offsets = [0, 0], sizes = [8, 16], strides = [1, 1]} : vector<8x32xf32> to vector<8x16xf32>
    %731 = arith.truncf %730 : vector<8x16xf32> to vector<8x16xbf16>
    %cst_281 = arith.constant dense<0.000000e+00> : vector<8x8xf32>
    %732 = tpu.matmul %727, %729, %cst_281 {dimension_numbers = #tpu.dot_dimension_numbers<[1], [1], [0], [0], [0, 0, 1, 0], [], []>} : vector<8x16xbf16>, vector<8x16xbf16>, vector<8x8xf32> -> vector<8x8xf32>
    %cst_282 = arith.constant 2.500000e-01 : f32
    %733 = vector.broadcast %cst_282 : f32 to vector<8x8xf32>
    %734 = arith.mulf %732, %733 : vector<8x8xf32>
    %cst_283 = arith.constant dense<0xFF800000> : vector<8xf32>
    %735 = vector.multi_reduction <maximumf>, %734, %cst_283 [1] : vector<8x8xf32> to vector<8xf32>
    %736 = vector.shape_cast %735 : vector<8xf32> to vector<8x1xf32>
    %737 = vector.broadcast %736 : vector<8x1xf32> to vector<8x8xf32>
    %738 = arith.subf %734, %737 : vector<8x8xf32>
    %739 = math.exp %738 : vector<8x8xf32>
    %cst_284 = arith.constant dense<0.000000e+00> : vector<8xf32>
    %740 = vector.multi_reduction <add>, %739, %cst_284 [1] : vector<8x8xf32> to vector<8xf32>
    %741 = vector.shape_cast %740 : vector<8xf32> to vector<8x1xf32>
    %742 = tpu.reciprocal %741 {approx = true} : vector<8x1xf32> -> vector<8x1xf32>
    %743 = vector.broadcast %742 : vector<8x1xf32> to vector<8x8xf32>
    %744 = arith.mulf %739, %743 : vector<8x8xf32>
    %745 = arith.truncf %744 : vector<8x8xf32> to vector<8x8xbf16>
    %cst_285 = arith.constant dense<0.000000e+00> : vector<8x16xf32>
    %746 = tpu.matmul %745, %731, %cst_285 {dimension_numbers = #tpu.dot_dimension_numbers<[1], [0], [0], [1], [0, 0, 1, 1], [], []>} : vector<8x8xbf16>, vector<8x16xbf16>, vector<8x16xf32> -> vector<8x16xf32>
    %747 = vector.extract_strided_slice %630 {offsets = [0, 0], sizes = [16, 32], strides = [1, 1]} : vector<32x32xbf16> to vector<16x32xbf16>
    %748 = arith.truncf %746 : vector<8x16xf32> to vector<8x16xbf16>
    %cst_286 = arith.constant dense<0.000000e+00> : vector<8x32xf32>
    %749 = tpu.matmul %748, %747, %cst_286 {dimension_numbers = #tpu.dot_dimension_numbers<[1], [0], [0], [1], [0, 0, 1, 1], [], []>} : vector<8x16xbf16>, vector<16x32xbf16>, vector<8x32xf32> -> vector<8x32xf32>
    %750 = vector.extract_strided_slice %723 {offsets = [0, 16], sizes = [8, 16], strides = [1, 1]} : vector<8x32xf32> to vector<8x16xf32>
    %751 = arith.truncf %750 : vector<8x16xf32> to vector<8x16xbf16>
    %752 = vector.extract_strided_slice %724 {offsets = [0, 16], sizes = [8, 16], strides = [1, 1]} : vector<8x32xf32> to vector<8x16xf32>
    %753 = arith.truncf %752 : vector<8x16xf32> to vector<8x16xbf16>
    %754 = vector.extract_strided_slice %725 {offsets = [0, 16], sizes = [8, 16], strides = [1, 1]} : vector<8x32xf32> to vector<8x16xf32>
    %755 = arith.truncf %754 : vector<8x16xf32> to vector<8x16xbf16>
    %cst_287 = arith.constant dense<0.000000e+00> : vector<8x8xf32>
    %756 = tpu.matmul %751, %753, %cst_287 {dimension_numbers = #tpu.dot_dimension_numbers<[1], [1], [0], [0], [0, 0, 1, 0], [], []>} : vector<8x16xbf16>, vector<8x16xbf16>, vector<8x8xf32> -> vector<8x8xf32>
    %cst_288 = arith.constant 2.500000e-01 : f32
    %757 = vector.broadcast %cst_288 : f32 to vector<8x8xf32>
    %758 = arith.mulf %756, %757 : vector<8x8xf32>
    %cst_289 = arith.constant dense<0xFF800000> : vector<8xf32>
    %759 = vector.multi_reduction <maximumf>, %758, %cst_289 [1] : vector<8x8xf32> to vector<8xf32>
    %760 = vector.shape_cast %759 : vector<8xf32> to vector<8x1xf32>
    %761 = vector.broadcast %760 : vector<8x1xf32> to vector<8x8xf32>
    %762 = arith.subf %758, %761 : vector<8x8xf32>
    %763 = math.exp %762 : vector<8x8xf32>
    %cst_290 = arith.constant dense<0.000000e+00> : vector<8xf32>
    %764 = vector.multi_reduction <add>, %763, %cst_290 [1] : vector<8x8xf32> to vector<8xf32>
    %765 = vector.shape_cast %764 : vector<8xf32> to vector<8x1xf32>
    %766 = tpu.reciprocal %765 {approx = true} : vector<8x1xf32> -> vector<8x1xf32>
    %767 = vector.broadcast %766 : vector<8x1xf32> to vector<8x8xf32>
    %768 = arith.mulf %763, %767 : vector<8x8xf32>
    %769 = arith.truncf %768 : vector<8x8xf32> to vector<8x8xbf16>
    %cst_291 = arith.constant dense<0.000000e+00> : vector<8x16xf32>
    %770 = tpu.matmul %769, %755, %cst_291 {dimension_numbers = #tpu.dot_dimension_numbers<[1], [0], [0], [1], [0, 0, 1, 1], [], []>} : vector<8x8xbf16>, vector<8x16xbf16>, vector<8x16xf32> -> vector<8x16xf32>
    %771 = vector.extract_strided_slice %630 {offsets = [16, 0], sizes = [16, 32], strides = [1, 1]} : vector<32x32xbf16> to vector<16x32xbf16>
    %772 = arith.truncf %770 : vector<8x16xf32> to vector<8x16xbf16>
    %cst_292 = arith.constant dense<0.000000e+00> : vector<8x32xf32>
    %773 = tpu.matmul %772, %771, %cst_292 {dimension_numbers = #tpu.dot_dimension_numbers<[1], [0], [0], [1], [0, 0, 1, 1], [], []>} : vector<8x16xbf16>, vector<16x32xbf16>, vector<8x32xf32> -> vector<8x32xf32>
    %774 = arith.addf %749, %773 : vector<8x32xf32>
    %775 = tpu.concatenate %722, %774 in 0 : vector<8x32xf32>, vector<8x32xf32> -> vector<16x32xf32>
    %776 = arith.addf %620, %775 : vector<16x32xf32>
    %777 = vector.broadcast %632 : vector<1x32xf32> to vector<16x32xf32>
    %778 = arith.addf %776, %777 : vector<16x32xf32>
    %cst_293 = arith.constant dense<0.000000e+00> : vector<16xf32>
    %779 = vector.multi_reduction <add>, %778, %cst_293 [1] : vector<16x32xf32> to vector<16xf32>
    %780 = vector.shape_cast %779 : vector<16xf32> to vector<16x1xf32>
    %cst_294 = arith.constant 3.200000e+01 : f32
    %781 = vector.broadcast %cst_294 : f32 to vector<16x1xf32>
    %782 = arith.divf %780, %781 : vector<16x1xf32>
    %783 = vector.broadcast %782 : vector<16x1xf32> to vector<16x32xf32>
    %784 = arith.subf %778, %783 : vector<16x32xf32>
    %785 = arith.mulf %784, %784 : vector<16x32xf32>
    %cst_295 = arith.constant dense<0.000000e+00> : vector<16xf32>
    %786 = vector.multi_reduction <add>, %785, %cst_295 [1] : vector<16x32xf32> to vector<16xf32>
    %787 = vector.shape_cast %786 : vector<16xf32> to vector<16x1xf32>
    %cst_296 = arith.constant 3.200000e+01 : f32
    %788 = vector.broadcast %cst_296 : f32 to vector<16x1xf32>
    %789 = arith.divf %787, %788 : vector<16x1xf32>
    %790 = vector.broadcast %782 : vector<16x1xf32> to vector<16x32xf32>
    %791 = arith.subf %778, %790 : vector<16x32xf32>
    %cst_297 = arith.constant 9.99999974E-6 : f32
    %792 = vector.broadcast %cst_297 : f32 to vector<16x1xf32>
    %793 = arith.addf %789, %792 : vector<16x1xf32>
    %794 = math.rsqrt %793 : vector<16x1xf32>
    %795 = vector.broadcast %794 : vector<16x1xf32> to vector<16x32xf32>
    %796 = arith.mulf %791, %795 : vector<16x32xf32>
    %797 = vector.broadcast %634 : vector<1x32xf32> to vector<16x32xf32>
    %798 = arith.mulf %796, %797 : vector<16x32xf32>
    %799 = vector.broadcast %636 : vector<1x32xf32> to vector<16x32xf32>
    %800 = arith.addf %798, %799 : vector<16x32xf32>
    %801 = arith.truncf %800 : vector<16x32xf32> to vector<16x32xbf16>
    %cst_298 = arith.constant dense<0.000000e+00> : vector<16x128xf32>
    %802 = tpu.matmul %801, %638, %cst_298 {dimension_numbers = #tpu.dot_dimension_numbers<[1], [0], [0], [1], [0, 0, 1, 1], [], []>} : vector<16x32xbf16>, vector<32x128xbf16>, vector<16x128xf32> -> vector<16x128xf32>
    %803 = vector.broadcast %640 : vector<1x128xf32> to vector<16x128xf32>
    %804 = arith.addf %802, %803 : vector<16x128xf32>
    %805 = arith.mulf %804, %804 : vector<16x128xf32>
    %806 = arith.mulf %804, %805 : vector<16x128xf32>
    %cst_299 = arith.constant 4.471500e-02 : f32
    %807 = vector.broadcast %cst_299 : f32 to vector<16x128xf32>
    %808 = arith.mulf %807, %806 : vector<16x128xf32>
    %809 = arith.addf %804, %808 : vector<16x128xf32>
    %cst_300 = arith.constant 0.797884583 : f32
    %810 = vector.broadcast %cst_300 : f32 to vector<16x128xf32>
    %811 = arith.mulf %810, %809 : vector<16x128xf32>
    %812 = math.tanh %811 : vector<16x128xf32>
    %cst_301 = arith.constant 1.000000e+00 : f32
    %813 = vector.broadcast %cst_301 : f32 to vector<16x128xf32>
    %814 = arith.addf %813, %812 : vector<16x128xf32>
    %cst_302 = arith.constant 5.000000e-01 : f32
    %815 = vector.broadcast %cst_302 : f32 to vector<16x128xf32>
    %816 = arith.mulf %815, %814 : vector<16x128xf32>
    %817 = arith.mulf %804, %816 : vector<16x128xf32>
    %818 = arith.truncf %817 : vector<16x128xf32> to vector<16x128xbf16>
    %cst_303 = arith.constant dense<0.000000e+00> : vector<16x32xf32>
    %819 = tpu.matmul %818, %642, %cst_303 {dimension_numbers = #tpu.dot_dimension_numbers<[1], [0], [0], [1], [0, 0, 1, 1], [], []>} : vector<16x128xbf16>, vector<128x32xbf16>, vector<16x32xf32> -> vector<16x32xf32>
    %820 = arith.addf %778, %819 : vector<16x32xf32>
    %821 = vector.broadcast %644 : vector<1x32xf32> to vector<16x32xf32>
    %822 = arith.addf %820, %821 : vector<16x32xf32>
    %c0_304 = arith.constant 0 : index
    %c0_305 = arith.constant 0 : index
    %823 = vector.load %arg44[%c0_304, %c0_305] : memref<16x32xf32, #tpu.memory_space<vmem>>, vector<16x32xf32>
    tpu.vector_store %arg44[%c0_304, %c0_305], %822 {strides = array<i32>} : memref<16x32xf32, #tpu.memory_space<vmem>>, vector<16x32xf32>,
    return
  }
}

</mosaic_0001>

<llo_original>
// kernel: tpu_custom_call.1
$region0: #{tpu_custom_call.1}
  #allocation0 [shape = 'u32[]', space=smem, size = 0x4, offset = 0x4, fixed_abs, tag = 'smem constant byte address 0x4 - core index']
  #allocation1 [shape = 'u32[144,128]{1,0:T(1,128)}', space=vmem, size = 0x12000, scoped, tag = 'internal scratch']
  %s0 = inlined_call_operand.smem [shape: u32[45], index: -1, kind: input, shape index: {}]
  %s1 = sld [smem:[%s0]]
  %s2 = scalar_lea.smem %s0, 1
  %s3 = sld [smem:[%s2]]
  %s4 = scalar_lea.smem %s0, 2
  %s5 = sld [smem:[%s4]]
  %s6 = scalar_lea.smem %s0, 3
  %s7 = sld [smem:[%s6]]
  %s8 = scalar_lea.smem %s0, 4
  %s9 = sld [smem:[%s8]]
  %s10 = scalar_lea.smem %s0, 5
  %s11 = sld [smem:[%s10]]
  %s12 = scalar_lea.smem %s0, 6
  %s13 = sld [smem:[%s12]]
  %s14 = scalar_lea.smem %s0, 7
  %s15 = sld [smem:[%s14]]
  %s16 = scalar_lea.smem %s0, 8
  %s17 = sld [smem:[%s16]]
  %s18 = scalar_lea.smem %s0, 9
  %s19 = sld [smem:[%s18]]
  %s20 = scalar_lea.smem %s0, 10
  %s21 = sld [smem:[%s20]]
  %s22 = scalar_lea.smem %s0, 11
  %s23 = sld [smem:[%s22]]
  %s24 = scalar_lea.smem %s0, 12
  %s25 = sld [smem:[%s24]]
  %s26 = scalar_lea.smem %s0, 13
  %s27 = sld [smem:[%s26]]
  %s28 = scalar_lea.smem %s0, 14
  %s29 = sld [smem:[%s28]]
  %s30 = scalar_lea.smem %s0, 15
  %s31 = sld [smem:[%s30]]
  %s32 = scalar_lea.smem %s0, 16
  %s33 = sld [smem:[%s32]]
  %s34 = scalar_lea.smem %s0, 17
  %s35 = sld [smem:[%s34]]
  %s36 = scalar_lea.smem %s0, 18
  %s37 = sld [smem:[%s36]]
  %s38 = scalar_lea.smem %s0, 19
  %s39 = sld [smem:[%s38]]
  %s40 = scalar_lea.smem %s0, 20
  %s41 = sld [smem:[%s40]]
  %s42 = scalar_lea.smem %s0, 21
  %s43 = sld [smem:[%s42]]
  %s44 = scalar_lea.smem %s0, 22
  %s45 = sld [smem:[%s44]]
  %s46 = scalar_lea.smem %s0, 23
  %s47 = sld [smem:[%s46]]
  %s48 = scalar_lea.smem %s0, 24
  %s49 = sld [smem:[%s48]]
  %s50 = scalar_lea.smem %s0, 25
  %s51 = sld [smem:[%s50]]
  %s52 = scalar_lea.smem %s0, 26
  %s53 = sld [smem:[%s52]]
  %s54 = scalar_lea.smem %s0, 27
  %s55 = sld [smem:[%s54]]
  %s56 = scalar_lea.smem %s0, 28
  %s57 = sld [smem:[%s56]]
  %s58 = scalar_lea.smem %s0, 29
  %s59 = sld [smem:[%s58]]
  %s60 = scalar_lea.smem %s0, 30
  %s61 = sld [smem:[%s60]]
  %s62 = scalar_lea.smem %s0, 31
  %s63 = sld [smem:[%s62]]
  %s64 = scalar_lea.smem %s0, 32
  %s65 = sld [smem:[%s64]]
  %s66 = scalar_lea.smem %s0, 33
  %s67 = sld [smem:[%s66]]
  %s68 = scalar_lea.smem %s0, 34
  %s69 = sld [smem:[%s68]]
  %s70 = scalar_lea.smem %s0, 35
  %s71 = sld [smem:[%s70]]
  %s72 = scalar_lea.smem %s0, 36
  %s73 = sld [smem:[%s72]]
  %s74 = scalar_lea.smem %s0, 37
  %s75 = sld [smem:[%s74]]
  %s76 = scalar_lea.smem %s0, 38
  %s77 = sld [smem:[%s76]]
  %s78 = scalar_lea.smem %s0, 39
  %s79 = sld [smem:[%s78]]
  %s80 = scalar_lea.smem %s0, 40
  %s81 = sld [smem:[%s80]]
  %s82 = scalar_lea.smem %s0, 41
  %s83 = sld [smem:[%s82]]
  %s84 = scalar_lea.smem %s0, 42
  %s85 = sld [smem:[%s84]]
  %s86 = scalar_lea.smem %s0, 43
  %s87 = sld [smem:[%s86]]
  %s88 = scalar_lea.smem %s0, 44
  %s89 = sld [smem:[%s88]]
  %s90 = sld [smem:[#allocation0]]
  $region202: #{tpu_custom_call.1} parent=0
    _
  %s92 = ssub.s32 1, %s90
  %s93 = scalar_select 0, %s92, %s90
  $region1: #{tpu_custom_call.1} parent=0
    #allocation2 [shape = 'u8[512]{0}', space=vmem, size = 0x400, scoped, tag = 'input window, operand 26, single buffered']
    #allocation3 [shape = 's32[1]{0}', space=sflag, size = 0x4, scoped, tag = 'scoped memory for tpu_custom_call.1']
    #allocation4 [shape = 's32[1]{0}', space=sflag, size = 0x4, scoped, tag = 'scoped memory for tpu_custom_call.1']
    #allocation5 [shape = 'u8[512]{0}', space=vmem, size = 0x400, scoped, tag = 'input window, operand 27, single buffered']
    #allocation6 [shape = 's32[1]{0}', space=sflag, size = 0x4, scoped, tag = 'scoped memory for tpu_custom_call.1']
    #allocation7 [shape = 'u8[512]{0}', space=vmem, size = 0x400, scoped, tag = 'input window, operand 29, single buffered']
    #allocation8 [shape = 'u8[512]{0}', space=vmem, size = 0x400, scoped, tag = 'input window, operand 31, single buffered']
    #allocation9 [shape = 's32[1]{0}', space=sflag, size = 0x4, scoped, tag = 'scoped memory for tpu_custom_call.1']
    #allocation10 [shape = 'u8[8192]{0}', space=vmem, size = 0x2000, scoped, tag = 'output window, operand 0, single buffered']
    %94 = vsyncpa [#allocation3], 0
    %95 = vsyncpa [#allocation6], 0
    %96 = vsyncpa [#allocation9], 0
    %97 = vsyncpa [#allocation4], 0
    // Predicated region
    $region2: #{tpu_custom_call.1} parent=1 // pred_check
      _
    $region3: #{tpu_custom_call.1} parent=1 // pred_check_branch
      %99 = sbr.rel (0) target = $region5
    $region4: #{tpu_custom_call.1} parent=1 // pred_region
      _
    $region5: #{tpu_custom_call.1} parent=1 // pred_fallthru
      _
    // Predicated region
    $region6: #{tpu_custom_call.1} parent=1 // pred_check
      _
    $region7: #{tpu_custom_call.1} parent=1 // pred_check_branch
      %101 = sbr.rel (0) target = $region9
    $region8: #{tpu_custom_call.1} parent=1 // pred_region
      _
    $region9: #{tpu_custom_call.1} parent=1 // pred_fallthru
      _
    // Predicated region
    $region10: #{tpu_custom_call.1} parent=1 // pred_check
      _
    $region11: #{tpu_custom_call.1} parent=1 // pred_check_branch
      %103 = sbr.rel (0) target = $region13
    $region12: #{tpu_custom_call.1} parent=1 // pred_region
      _
    $region13: #{tpu_custom_call.1} parent=1 // pred_fallthru
      _
    // Predicated region
    $region14: #{tpu_custom_call.1} parent=1 // pred_check
      _
    $region15: #{tpu_custom_call.1} parent=1 // pred_check_branch
      %105 = sbr.rel (0) target = $region17
    $region16: #{tpu_custom_call.1} parent=1 // pred_region
      _
    $region17: #{tpu_custom_call.1} parent=1 // pred_fallthru
      _
    // Predicated region
    $region18: #{tpu_custom_call.1} parent=1 // pred_check
      _
    $region19: #{tpu_custom_call.1} parent=1 // pred_check_branch
      %107 = sbr.rel (0) target = $region21
    $region20: #{tpu_custom_call.1} parent=1 // pred_region
      _
    $region21: #{tpu_custom_call.1} parent=1 // pred_fallthru
      _
    // Predicated region
    $region22: #{tpu_custom_call.1} parent=1 // pred_check
      _
    $region23: #{tpu_custom_call.1} parent=1 // pred_check_branch
      %109 = sbr.rel (0) target = $region25
    $region24: #{tpu_custom_call.1} parent=1 // pred_region
      _
    $region25: #{tpu_custom_call.1} parent=1 // pred_fallthru
      _
    // Predicated region
    $region26: #{tpu_custom_call.1} parent=1 // pred_check
      _
    $region27: #{tpu_custom_call.1} parent=1 // pred_check_branch
      %111 = sbr.rel (0) target = $region29
    $region28: #{tpu_custom_call.1} parent=1 // pred_region
      _
    $region29: #{tpu_custom_call.1} parent=1 // pred_fallthru
      _
    // Predicated region
    $region30: #{tpu_custom_call.1} parent=1 // pred_check
      _
    $region31: #{tpu_custom_call.1} parent=1 // pred_check_branch
      %113 = sbr.rel (0) target = $region33
    $region32: #{tpu_custom_call.1} parent=1 // pred_region
      _
    $region33: #{tpu_custom_call.1} parent=1 // pred_fallthru
      _
    // Predicated region
    $region34: #{tpu_custom_call.1} parent=1 // pred_check
      _
    $region35: #{tpu_custom_call.1} parent=1 // pred_check_branch
      %115 = sbr.rel (0) target = $region37
    $region36: #{tpu_custom_call.1} parent=1 // pred_region
      _
    $region37: #{tpu_custom_call.1} parent=1 // pred_fallthru
      _
    // Predicated region
    $region38: #{tpu_custom_call.1} parent=1 // pred_check
      _
    $region39: #{tpu_custom_call.1} parent=1 // pred_check_branch
      %117 = sbr.rel (0) target = $region41
    $region40: #{tpu_custom_call.1} parent=1 // pred_region
      _
    $region41: #{tpu_custom_call.1} parent=1 // pred_fallthru
      _
    // Predicated region
    $region42: #{tpu_custom_call.1} parent=1 // pred_check
      _
    $region43: #{tpu_custom_call.1} parent=1 // pred_check_branch
      %119 = sbr.rel (0) target = $region45
    $region44: #{tpu_custom_call.1} parent=1 // pred_region
      _
    $region45: #{tpu_custom_call.1} parent=1 // pred_fallthru
      _
    // Predicated region
    $region46: #{tpu_custom_call.1} parent=1 // pred_check
      _
    $region47: #{tpu_custom_call.1} parent=1 // pred_check_branch
      %121 = sbr.rel (0) target = $region49
    $region48: #{tpu_custom_call.1} parent=1 // pred_region
      _
    $region49: #{tpu_custom_call.1} parent=1 // pred_fallthru
      _
    // Predicated region
    $region50: #{tpu_custom_call.1} parent=1 // pred_check
      _
    $region51: #{tpu_custom_call.1} parent=1 // pred_check_branch
      %123 = sbr.rel (0) target = $region53
    $region52: #{tpu_custom_call.1} parent=1 // pred_region
      _
    $region53: #{tpu_custom_call.1} parent=1 // pred_fallthru
      _
    // Predicated region
    $region54: #{tpu_custom_call.1} parent=1 // pred_check
      _
    $region55: #{tpu_custom_call.1} parent=1 // pred_check_branch
      %125 = sbr.rel (0) target = $region57
    $region56: #{tpu_custom_call.1} parent=1 // pred_region
      _
    $region57: #{tpu_custom_call.1} parent=1 // pred_fallthru
      _
    // Predicated region
    $region58: #{tpu_custom_call.1} parent=1 // pred_check
      _
    $region59: #{tpu_custom_call.1} parent=1 // pred_check_branch
      %127 = sbr.rel (0) target = $region61
    $region60: #{tpu_custom_call.1} parent=1 // pred_region
      _
    $region61: #{tpu_custom_call.1} parent=1 // pred_fallthru
      _
    // Predicated region
    $region62: #{tpu_custom_call.1} parent=1 // pred_check
      _
    $region63: #{tpu_custom_call.1} parent=1 // pred_check_branch
      %129 = sbr.rel (0) target = $region65
    $region64: #{tpu_custom_call.1} parent=1 // pred_region
      _
    $region65: #{tpu_custom_call.1} parent=1 // pred_fallthru
      _
    // Predicated region
    $region66: #{tpu_custom_call.1} parent=1 // pred_check
      _
    $region67: #{tpu_custom_call.1} parent=1 // pred_check_branch
      %131 = sbr.rel (0) target = $region69
    $region68: #{tpu_custom_call.1} parent=1 // pred_region
      _
    $region69: #{tpu_custom_call.1} parent=1 // pred_fallthru
      _
    // Predicated region
    $region70: #{tpu_custom_call.1} parent=1 // pred_check
      _
    $region71: #{tpu_custom_call.1} parent=1 // pred_check_branch
      %133 = sbr.rel (0) target = $region73
    $region72: #{tpu_custom_call.1} parent=1 // pred_region
      _
    $region73: #{tpu_custom_call.1} parent=1 // pred_fallthru
      _
    // Predicated region
    $region74: #{tpu_custom_call.1} parent=1 // pred_check
      _
    $region75: #{tpu_custom_call.1} parent=1 // pred_check_branch
      %135 = sbr.rel (0) target = $region77
    $region76: #{tpu_custom_call.1} parent=1 // pred_region
      _
    $region77: #{tpu_custom_call.1} parent=1 // pred_fallthru
      _
    // Predicated region
    $region78: #{tpu_custom_call.1} parent=1 // pred_check
      _
    $region79: #{tpu_custom_call.1} parent=1 // pred_check_branch
      %137 = sbr.rel (0) target = $region81
    $region80: #{tpu_custom_call.1} parent=1 // pred_region
      _
    $region81: #{tpu_custom_call.1} parent=1 // pred_fallthru
      _
    // Predicated region
    $region82: #{tpu_custom_call.1} parent=1 // pred_check
      _
    $region83: #{tpu_custom_call.1} parent=1 // pred_check_branch
      %139 = sbr.rel (0) target = $region85
    $region84: #{tpu_custom_call.1} parent=1 // pred_region
      _
    $region85: #{tpu_custom_call.1} parent=1 // pred_fallthru
      _
    // Predicated region
    $region86: #{tpu_custom_call.1} parent=1 // pred_check
      _
    $region87: #{tpu_custom_call.1} parent=1 // pred_check_branch
      %141 = sbr.rel (0) target = $region89
    $region88: #{tpu_custom_call.1} parent=1 // pred_region
      _
    $region89: #{tpu_custom_call.1} parent=1 // pred_fallthru
      _
    // Predicated region
    $region90: #{tpu_custom_call.1} parent=1 // pred_check
      _
    $region91: #{tpu_custom_call.1} parent=1 // pred_check_branch
      %143 = sbr.rel (0) target = $region93
    $region92: #{tpu_custom_call.1} parent=1 // pred_region
      _
    $region93: #{tpu_custom_call.1} parent=1 // pred_fallthru
      _
    // Predicated region
    $region94: #{tpu_custom_call.1} parent=1 // pred_check
      _
    $region95: #{tpu_custom_call.1} parent=1 // pred_check_branch
      %145 = sbr.rel (0) target = $region97
    $region96: #{tpu_custom_call.1} parent=1 // pred_region
      _
    $region97: #{tpu_custom_call.1} parent=1 // pred_fallthru
      _
    // Predicated region
    $region98: #{tpu_custom_call.1} parent=1 // pred_check
      _
    $region99: #{tpu_custom_call.1} parent=1 // pred_check_branch
      %147 = sbr.rel (0) target = $region101
    $region100: #{tpu_custom_call.1} parent=1 // pred_region
      _
    $region101: #{tpu_custom_call.1} parent=1 // pred_fallthru
      _
    // Predicated region
    $region102: #{tpu_custom_call.1} parent=1 // pred_check
      _
    $region103: #{tpu_custom_call.1} parent=1 // pred_check_branch
      %149 = sbr.rel (0) target = $region105
    $region104: #{tpu_custom_call.1} parent=1 // pred_region
      _
    $region105: #{tpu_custom_call.1} parent=1 // pred_fallthru
      _
    // Predicated region
    $region106: #{tpu_custom_call.1} parent=1 // pred_check
      _
    $region107: #{tpu_custom_call.1} parent=1 // pred_check_branch
      %151 = sbr.rel (0) target = $region109
    $region108: #{tpu_custom_call.1} parent=1 // pred_region
      %s153 = ssub.s32 16, 16
      %154 = vsyncadd [#allocation3], %s153
      %s156 = sshll.u32 [#allocation2], 4
      %s157 = int_to_ptr.vmem [resolvable:$true] %s156
      %159 = dma.hbm_to_vmem [thread:$0]  %s53, 16, %s157, [#allocation3]
    $region109: #{tpu_custom_call.1} parent=1 // pred_fallthru
      _
    // Predicated region
    $region110: #{tpu_custom_call.1} parent=1 // pred_check
      _
    $region111: #{tpu_custom_call.1} parent=1 // pred_check_branch
      %161 = sbr.rel (0) target = $region113
    $region112: #{tpu_custom_call.1} parent=1 // pred_region
      %s163 = ssub.s32 16, 16
      %164 = vsyncadd [#allocation6], %s163
      %s166 = sshll.u32 [#allocation5], 4
      %s167 = int_to_ptr.vmem [resolvable:$true] %s166
      %169 = dma.hbm_to_vmem [thread:$0]  %s55, 16, %s167, [#allocation6]
    $region113: #{tpu_custom_call.1} parent=1 // pred_fallthru
      _
    // Predicated region
    $region114: #{tpu_custom_call.1} parent=1 // pred_check
      _
    $region115: #{tpu_custom_call.1} parent=1 // pred_check_branch
      %171 = sbr.rel (0) target = $region117
    $region116: #{tpu_custom_call.1} parent=1 // pred_region
      _
    $region117: #{tpu_custom_call.1} parent=1 // pred_fallthru
      _
    // Predicated region
    $region118: #{tpu_custom_call.1} parent=1 // pred_check
      _
    $region119: #{tpu_custom_call.1} parent=1 // pred_check_branch
      %173 = sbr.rel (0) target = $region121
    $region120: #{tpu_custom_call.1} parent=1 // pred_region
      %s175 = ssub.s32 16, 16
      %176 = vsyncadd [#allocation6], %s175
      %s178 = sshll.u32 [#allocation7], 4
      %s179 = int_to_ptr.vmem [resolvable:$true] %s178
      %181 = dma.hbm_to_vmem [thread:$0]  %s59, 16, %s179, [#allocation6]
    $region121: #{tpu_custom_call.1} parent=1 // pred_fallthru
      _
    // Predicated region
    $region122: #{tpu_custom_call.1} parent=1 // pred_check
      _
    $region123: #{tpu_custom_call.1} parent=1 // pred_check_branch
      %183 = sbr.rel (0) target = $region125
    $region124: #{tpu_custom_call.1} parent=1 // pred_region
      _
    $region125: #{tpu_custom_call.1} parent=1 // pred_fallthru
      _
    // Predicated region
    $region126: #{tpu_custom_call.1} parent=1 // pred_check
      _
    $region127: #{tpu_custom_call.1} parent=1 // pred_check_branch
      %185 = sbr.rel (0) target = $region129
    $region128: #{tpu_custom_call.1} parent=1 // pred_region
      %s187 = ssub.s32 16, 16
      %188 = vsyncadd [#allocation9], %s187
      %s190 = sshll.u32 [#allocation8], 4
      %s191 = int_to_ptr.vmem [resolvable:$true] %s190
      %193 = dma.hbm_to_vmem [thread:$0]  %s63, 16, %s191, [#allocation9]
    $region129: #{tpu_custom_call.1} parent=1 // pred_fallthru
      _
    // Predicated region
    $region130: #{tpu_custom_call.1} parent=1 // pred_check
      _
    $region131: #{tpu_custom_call.1} parent=1 // pred_check_branch
      %195 = sbr.rel (0) target = $region133
    $region132: #{tpu_custom_call.1} parent=1 // pred_region
      _
    $region133: #{tpu_custom_call.1} parent=1 // pred_fallthru
      _
    // Predicated region
    $region134: #{tpu_custom_call.1} parent=1 // pred_check
      _
    $region135: #{tpu_custom_call.1} parent=1 // pred_check_branch
      %197 = sbr.rel (0) target = $region137
    $region136: #{tpu_custom_call.1} parent=1 // pred_region
      _
    $region137: #{tpu_custom_call.1} parent=1 // pred_fallthru
      _
    // Predicated region
    $region138: #{tpu_custom_call.1} parent=1 // pred_check
      _
    $region139: #{tpu_custom_call.1} parent=1 // pred_check_branch
      %199 = sbr.rel (0) target = $region141
    $region140: #{tpu_custom_call.1} parent=1 // pred_region
      _
    $region141: #{tpu_custom_call.1} parent=1 // pred_fallthru
      _
    // Predicated region
    $region142: #{tpu_custom_call.1} parent=1 // pred_check
      _
    $region143: #{tpu_custom_call.1} parent=1 // pred_check_branch
      %201 = sbr.rel (0) target = $region145
    $region144: #{tpu_custom_call.1} parent=1 // pred_region
      _
    $region145: #{tpu_custom_call.1} parent=1 // pred_fallthru
      _
    // Predicated region
    $region146: #{tpu_custom_call.1} parent=1 // pred_check
      _
    $region147: #{tpu_custom_call.1} parent=1 // pred_check_branch
      %203 = sbr.rel (0) target = $region149
    $region148: #{tpu_custom_call.1} parent=1 // pred_region
      _
    $region149: #{tpu_custom_call.1} parent=1 // pred_fallthru
      _
    // Predicated region
    $region150: #{tpu_custom_call.1} parent=1 // pred_check
      _
    $region151: #{tpu_custom_call.1} parent=1 // pred_check_branch
      %205 = sbr.rel (0) target = $region153
    $region152: #{tpu_custom_call.1} parent=1 // pred_region
      _
    $region153: #{tpu_custom_call.1} parent=1 // pred_fallthru
      _
    // Predicated region
    $region154: #{tpu_custom_call.1} parent=1 // pred_check
      _
    $region155: #{tpu_custom_call.1} parent=1 // pred_check_branch
      %207 = sbr.rel (0) target = $region157
    $region156: #{tpu_custom_call.1} parent=1 // pred_region
      _
    $region157: #{tpu_custom_call.1} parent=1 // pred_fallthru
      _
    // Predicated region
    $region158: #{tpu_custom_call.1} parent=1 // pred_check
      _
    $region159: #{tpu_custom_call.1} parent=1 // pred_check_branch
      %209 = sbr.rel (0) target = $region161
    $region160: #{tpu_custom_call.1} parent=1 // pred_region
      _
    $region161: #{tpu_custom_call.1} parent=1 // pred_fallthru
      _
    // Predicated region
    $region162: #{tpu_custom_call.1} parent=1 // pred_check
      _
    $region163: #{tpu_custom_call.1} parent=1 // pred_check_branch
      %211 = sbr.rel (0) target = $region165
    $region164: #{tpu_custom_call.1} parent=1 // pred_region
      _
    $region165: #{tpu_custom_call.1} parent=1 // pred_fallthru
      _
    // Predicated region
    $region166: #{tpu_custom_call.1} parent=1 // pred_check
      _
    $region167: #{tpu_custom_call.1} parent=1 // pred_check_branch
      %213 = sbr.rel (0) target = $region169
    $region168: #{tpu_custom_call.1} parent=1 // pred_region
      _
    $region169: #{tpu_custom_call.1} parent=1 // pred_fallthru
      _
    // Predicated region
    $region170: #{tpu_custom_call.1} parent=1 // pred_check
      _
    $region171: #{tpu_custom_call.1} parent=1 // pred_check_branch
      %215 = sbr.rel (0) target = $region173
    $region172: #{tpu_custom_call.1} parent=1 // pred_region
      _
    $region173: #{tpu_custom_call.1} parent=1 // pred_fallthru
      _
    // Predicated region
    $region174: #{tpu_custom_call.1} parent=1 // pred_check
      _
    $region175: #{tpu_custom_call.1} parent=1 // pred_check_branch
      %217 = sbr.rel (0) target = $region177
    $region176: #{tpu_custom_call.1} parent=1 // pred_region
      _
    $region177: #{tpu_custom_call.1} parent=1 // pred_fallthru
      _
    // Predicated region
    $region178: #{tpu_custom_call.1} parent=1 // pred_check
      _
    $region179: #{tpu_custom_call.1} parent=1 // pred_check_branch
      %219 = sbr.rel (0) target = $region181
    $region180: #{tpu_custom_call.1} parent=1 // pred_region
      %220 = dma.done [#allocation3], 16
    $region181: #{tpu_custom_call.1} parent=1 // pred_fallthru
      _
    // Predicated region
    $region182: #{tpu_custom_call.1} parent=1 // pred_check
      _
    $region183: #{tpu_custom_call.1} parent=1 // pred_check_branch
      %222 = sbr.rel (0) target = $region185
    $region184: #{tpu_custom_call.1} parent=1 // pred_region
      %223 = dma.done [#allocation6], 16
    $region185: #{tpu_custom_call.1} parent=1 // pred_fallthru
      _
    // Predicated region
    $region186: #{tpu_custom_call.1} parent=1 // pred_check
      _
    $region187: #{tpu_custom_call.1} parent=1 // pred_check_branch
      %225 = sbr.rel (0) target = $region189
    $region188: #{tpu_custom_call.1} parent=1 // pred_region
      %226 = dma.done [#allocation6], 16
    $region189: #{tpu_custom_call.1} parent=1 // pred_fallthru
      _
    // Predicated region
    $region190: #{tpu_custom_call.1} parent=1 // pred_check
      _
    $region191: #{tpu_custom_call.1} parent=1 // pred_check_branch
      %228 = sbr.rel (0) target = $region193
    $region192: #{tpu_custom_call.1} parent=1 // pred_region
      %229 = dma.done [#allocation9], 16
    $region193: #{tpu_custom_call.1} parent=1 // pred_fallthru
      _
    %v231 = vld [vmem:[%s5] sm:$0x1]
    %v232 = vld [vmem:[%s7] sm:$0x1]
    %v233 = vld [vmem:[%s9] sm:$0xf]
    %v234 = vld [vmem:[%s9 + $0x4] sm:$0xf]
    %v235 = vld [vmem:[%s9 + $0x8] sm:$0xf]
    %v236 = vld [vmem:[%s9 + $0xc] sm:$0xf]
    %v237 = vld [vmem:[%s11] sm:$0x1]
    %v238 = vld [vmem:[%s13] sm:$0xf]
    %v239 = vld [vmem:[%s13 + $0x4] sm:$0xf]
    %v240 = vld [vmem:[%s13 + $0x8] sm:$0xf]
    %v241 = vld [vmem:[%s13 + $0xc] sm:$0xf]
    %v242 = vld [vmem:[%s15] sm:$0x1]
    %v243 = vld [vmem:[%s17] sm:$0x1]
    %v244 = vld [vmem:[%s19] sm:$0x1]
    %v245 = vld [vmem:[%s21] sm:$0xf]
    %v246 = vld [vmem:[%s21 + $0x4] sm:$0xf]
    %v247 = vld [vmem:[%s21 + $0x8] sm:$0xf]
    %v248 = vld [vmem:[%s21 + $0xc] sm:$0xf]
    %v249 = vld [vmem:[%s23] sm:$0x1]
    %v250 = vld [vmem:[%s25] sm:$0xf]
    %v251 = vld [vmem:[%s25 + $0x4] sm:$0xf]
    %v252 = vld [vmem:[%s25 + $0x8] sm:$0xf]
    %v253 = vld [vmem:[%s25 + $0xc] sm:$0xf]
    %v254 = vld [vmem:[%s25 + $0x10] sm:$0xf]
    %v255 = vld [vmem:[%s25 + $0x14] sm:$0xf]
    %v256 = vld [vmem:[%s25 + $0x18] sm:$0xf]
    %v257 = vld [vmem:[%s25 + $0x1c] sm:$0xf]
    %v258 = vld [vmem:[%s25 + $0x20] sm:$0xf]
    %v259 = vld [vmem:[%s25 + $0x24] sm:$0xf]
    %v260 = vld [vmem:[%s25 + $0x28] sm:$0xf]
    %v261 = vld [vmem:[%s25 + $0x2c] sm:$0xf]
    %v262 = vld [vmem:[%s25 + $0x30] sm:$0xf]
    %v263 = vld [vmem:[%s25 + $0x34] sm:$0xf]
    %v264 = vld [vmem:[%s25 + $0x38] sm:$0xf]
    %v265 = vld [vmem:[%s25 + $0x3c] sm:$0xf]
    %v266 = vld [vmem:[%s27] sm:$0x1]
    %v267 = vld [vmem:[%s29] sm:$0x1]
    %v268 = vld [vmem:[%s31] sm:$0x1]
    %v269 = vld [vmem:[%s33] sm:$0x1]
    %v270 = vld [vmem:[%s35] sm:$0x1]
    %v271 = vld [vmem:[%s37] sm:$0xf]
    %v272 = vld [vmem:[%s37 + $0x4] sm:$0xf]
    %v273 = vld [vmem:[%s37 + $0x8] sm:$0xf]
    %v274 = vld [vmem:[%s37 + $0xc] sm:$0xf]
    %v275 = vld [vmem:[%s39] sm:$0x1]
    %v276 = vld [vmem:[%s41] sm:$0xf]
    %v277 = vld [vmem:[%s41 + $0x4] sm:$0xf]
    %v278 = vld [vmem:[%s41 + $0x8] sm:$0xf]
    %v279 = vld [vmem:[%s41 + $0xc] sm:$0xf]
    %v280 = vld [vmem:[%s43] sm:$0x1]
    %v281 = vld [vmem:[%s45] sm:$0xf]
    %v282 = vld [vmem:[%s45 + $0x4] sm:$0xf]
    %v283 = vld [vmem:[%s45 + $0x8] sm:$0xf]
    %v284 = vld [vmem:[%s45 + $0xc] sm:$0xf]
    %v285 = vld [vmem:[%s47] sm:$0x1]
    %v286 = vld [vmem:[%s49] sm:$0xf]
    %v287 = vld [vmem:[%s49 + $0x4] sm:$0xf]
    %v288 = vld [vmem:[%s49 + $0x8] sm:$0xf]
    %v289 = vld [vmem:[%s49 + $0xc] sm:$0xf]
    %v290 = vld [vmem:[%s51] sm:$0x1]
    %v291 = vld [vmem:[#allocation2] sm:$0x1]
    %v292 = vld [vmem:[#allocation5] sm:$0x1]
    %v293 = vld [vmem:[%s57] sm:$0xf]
    %v294 = vld [vmem:[%s57 + $0x4] sm:$0xf]
    %v295 = vld [vmem:[%s57 + $0x8] sm:$0xf]
    %v296 = vld [vmem:[%s57 + $0xc] sm:$0xf]
    %v297 = vld [vmem:[#allocation7] sm:$0x1]
    %v298 = vld [vmem:[%s61] sm:$0xf]
    %v299 = vld [vmem:[%s61 + $0x4] sm:$0xf]
    %v300 = vld [vmem:[%s61 + $0x8] sm:$0xf]
    %v301 = vld [vmem:[%s61 + $0xc] sm:$0xf]
    %v302 = vld [vmem:[%s61 + $0x10] sm:$0xf]
    %v303 = vld [vmem:[%s61 + $0x14] sm:$0xf]
    %v304 = vld [vmem:[%s61 + $0x18] sm:$0xf]
    %v305 = vld [vmem:[%s61 + $0x1c] sm:$0xf]
    %v306 = vld [vmem:[%s61 + $0x20] sm:$0xf]
    %v307 = vld [vmem:[%s61 + $0x24] sm:$0xf]
    %v308 = vld [vmem:[%s61 + $0x28] sm:$0xf]
    %v309 = vld [vmem:[%s61 + $0x2c] sm:$0xf]
    %v310 = vld [vmem:[%s61 + $0x30] sm:$0xf]
    %v311 = vld [vmem:[%s61 + $0x34] sm:$0xf]
    %v312 = vld [vmem:[%s61 + $0x38] sm:$0xf]
    %v313 = vld [vmem:[%s61 + $0x3c] sm:$0xf]
    %v314 = vld [vmem:[#allocation8] sm:$0x1]
    %v315 = vld [vmem:[%s1] sm:$0xff]
    %v316 = vld [vmem:[%s1 + $0x8] sm:$0xff]
    %v317 = vld [vmem:[%s1 + $0x10] sm:$0xff]
    %v318 = vld [vmem:[%s1 + $0x18] sm:$0xff]
    %vm319 = vcmask 261120
    %v320 = vsel %vm319, %v315, 0.0
    %321 = vadd.xlane.f32.xlu0 %v320
    %v322 = vpop.xlane.xlu0 %321
    %v323 = vsel %vm319, %v316, 0.0
    %324 = vadd.xlane.f32.xlu0 %v323
    %v325 = vpop.xlane.xlu0 %324
    %v326 = vsel %vm319, %v317, 0.0
    %327 = vadd.xlane.f32.xlu0 %v326
    %v328 = vpop.xlane.xlu0 %327
    %v329 = vsel %vm319, %v318, 0.0
    %330 = vadd.xlane.f32.xlu0 %v329
    %v331 = vpop.xlane.xlu0 %330
    %v332 = vrcp.pop 32.0
    %v333 = vmul.f32 %v322, %v332
    %v334 = vmul.f32 %v325, %v332
    %v335 = vmul.f32 %v328, %v332
    %v336 = vmul.f32 %v331, %v332
    %v337 = vsub.f32 %v315, %v333
    %v338 = vsub.f32 %v316, %v334
    %v339 = vsub.f32 %v317, %v335
    %v340 = vsub.f32 %v318, %v336
    %v341 = vmul.f32 %v337, %v337
    %v342 = vmul.f32 %v338, %v338
    %v343 = vmul.f32 %v339, %v339
    %v344 = vmul.f32 %v340, %v340
    %v345 = vsel %vm319, %v341, 0.0
    %346 = vadd.xlane.f32.xlu0 %v345
    %v347 = vpop.xlane.xlu0 %346
    %v348 = vsel %vm319, %v342, 0.0
    %349 = vadd.xlane.f32.xlu0 %v348
    %v350 = vpop.xlane.xlu0 %349
    %v351 = vsel %vm319, %v343, 0.0
    %352 = vadd.xlane.f32.xlu0 %v351
    %v353 = vpop.xlane.xlu0 %352
    %v354 = vsel %vm319, %v344, 0.0
    %355 = vadd.xlane.f32.xlu0 %v354
    %v356 = vpop.xlane.xlu0 %355
    %v357 = vmul.f32 %v347, %v332
    %v358 = vmul.f32 %v350, %v332
    %v359 = vmul.f32 %v353, %v332
    %v360 = vmul.f32 %v356, %v332
    %v361 = vadd.f32 %v357, 1e-05
    %v362 = vadd.f32 %v358, 1e-05
    %v363 = vadd.f32 %v359, 1e-05
    %v364 = vadd.f32 %v360, 1e-05
    %v365 = vrsqrt.pop %v361
    %v366 = vrsqrt.pop %v362
    %v367 = vrsqrt.pop %v363
    %v368 = vrsqrt.pop %v364
    %v369 = vmul.f32 %v337, %v365
    %v370 = vmul.f32 %v338, %v366
    %v371 = vmul.f32 %v339, %v367
    %v372 = vmul.f32 %v340, %v368
    %v374 = vlaneseq
    %v375 = vshrl.u32 %v374, 7
    %v376 = vsub.s32 0, %v375
    %v377 = vrot.slane %v231, %v376
    %v379 = vmul.f32 %v369, %v377
    %v380 = vmul.f32 %v370, %v377
    %v381 = vmul.f32 %v371, %v377
    %v382 = vmul.f32 %v372, %v377
    %v384 = vlaneseq
    %v385 = vshrl.u32 %v384, 7
    %v386 = vsub.s32 0, %v385
    %v387 = vrot.slane %v232, %v386
    %v389 = vadd.f32 %v379, %v387
    %v390 = vadd.f32 %v380, %v387
    %v391 = vadd.f32 %v381, %v387
    %v392 = vadd.f32 %v382, %v387
    %v393 = vpack.c.bf16 %v390, %v389
    %v394 = vpack.c.bf16 %v392, %v391
    %v396 = vlaneseq
    %v397 = vshrl.u32 %v396, 7
    %v398 = vsub.s32 0, %v397
    %v399 = vrot.slane %v237, %v398
    %v405 = vunpack.c.l.b16 %v233
    %v406 = vunpack.c.l.b16 %v234
    %v407 = vunpack.c.l.b16 %v235
    %v408 = vunpack.c.l.b16 %v236
    %v409 = vpack.c.b16 %v406, %v405
    %v410 = vpack.c.b16 %v408, %v407
    %v414 = vsel %vm319, %v393, 0
    %v417 = vsel %vm319, %v394, 0
    %419 = vmatprep.subr.bf16.mxu0 0
    %420 = vmatpush1.bf16.msra.mxu0 %v409
    %421 = vmatprep.subr.bf16.mxu0 0
    %422 = vmatpush1.bf16.msra.mxu0 %v410
    %423 = vmatprep.subr.bf16.mxu0 0
    %424 = vmatpush1.bf16.msra.mxu0 0
    %425 = vmatprep.subr.bf16.mxu0 0
    %426 = vmatpush1.bf16.msra.mxu0 0
    %427 = vmatprep.subr.bf16.mxu0 0
    %428 = vmatpush1.bf16.msra.mxu0 0
    %429 = vmatprep.subr.bf16.mxu0 0
    %430 = vmatpush1.bf16.msra.mxu0 0
    %431 = vmatprep.subr.bf16.mxu0 0
    %432 = vmatpush1.bf16.msra.mxu0 0
    %433 = vmatprep.subr.bf16.mxu0 0
    %434 = vmatpush1.bf16.msra.mxu0 0
    %435 = vmatprep.subr.bf16.mxu0 0
    %436 = vmatpush1.bf16.msra.mxu0 0
    %437 = vmatprep.subr.bf16.mxu0 0
    %438 = vmatpush1.bf16.msra.mxu0 0
    %439 = vmatprep.subr.bf16.mxu0 0
    %440 = vmatpush1.bf16.msra.mxu0 0
    %441 = vmatprep.subr.bf16.mxu0 0
    %442 = vmatpush1.bf16.msra.mxu0 0
    %443 = vmatprep.subr.bf16.mxu0 0
    %444 = vmatpush1.bf16.msra.mxu0 0
    %445 = vmatprep.subr.bf16.mxu0 0
    %446 = vmatpush1.bf16.msra.mxu0 0
    %447 = vmatprep.subr.bf16.mxu0 0
    %448 = vmatpush1.bf16.msra.mxu0 0
    %449 = vmatprep.subr.bf16.mxu0 0
    %450 = vmatpush1.bf16.msra.mxu0 0
    %451 = vmatprep.mubr.bf16.mxu0 0
    %452 = vmatmul.mubr.bf16.gmra.mrb[0].mxu0 %v414
    %v453 = vpop.f32.mrb[0].mxu0
    %v454 = vadd.f32 %v399, %v453
    %v455 = vpop.f32.mrb[0].mxu0
    %v456 = vpop.f32.mrb[0].mxu0
    %v457 = vadd.f32 %v399, %v456
    %v458 = vpop.f32.mrb[0].mxu0
    %459 = vmatprep.mubr.bf16.mxu0 0
    %460 = vmatmul.mubr.bf16.gmra.mrb[0].mxu0 %v417
    %v461 = vpop.f32.mrb[0].mxu0
    %v462 = vadd.f32 %v399, %v461
    %v463 = vpop.f32.mrb[0].mxu0
    %v464 = vpop.f32.mrb[0].mxu0
    %v465 = vadd.f32 %v399, %v464
    %v466 = vpop.f32.mrb[0].mxu0
    %467 = vdwg.mxu0
    %v468 = vpack.c.bf16 %v457, %v454
    %470 = vrot.lane.b32.xlu0 %v468, 96
    %v471 = vpop.permute.xlu0 %470
    %vm472 = vcmask 130048
    %v474 = vsel %vm472, %v468, 0
    %v477 = vsel %vm472, %v471, 0
    %479 = vmatprep.subr.bf16.mxu0 0
    %480 = vmatpush1.bf16.xpose.msra.mxu0 %v477
    %481 = vmatprep.subr.bf16.mxu0 0
    %482 = vmatpush1.bf16.xpose.msra.mxu0 0
    %483 = vmatprep.subr.bf16.mxu0 0
    %484 = vmatpush1.bf16.xpose.msra.mxu0 0
    %485 = vmatprep.subr.bf16.mxu0 0
    %486 = vmatpush1.bf16.xpose.msra.mxu0 0
    %487 = vmatprep.subr.bf16.mxu0 0
    %488 = vmatpush1.bf16.xpose.msra.mxu0 0
    %489 = vmatprep.subr.bf16.mxu0 0
    %490 = vmatpush1.bf16.xpose.msra.mxu0 0
    %491 = vmatprep.subr.bf16.mxu0 0
    %492 = vmatpush1.bf16.xpose.msra.mxu0 0
    %493 = vmatprep.subr.bf16.mxu0 0
    %494 = vmatpush1.bf16.xpose.msra.mxu0 0
    %495 = vmatprep.subr.bf16.mxu0 0
    %496 = vmatpush1.bf16.xpose.msra.mxu0 0
    %497 = vmatprep.subr.bf16.mxu0 0
    %498 = vmatpush1.bf16.xpose.msra.mxu0 0
    %499 = vmatprep.subr.bf16.mxu0 0
    %500 = vmatpush1.bf16.xpose.msra.mxu0 0
    %501 = vmatprep.subr.bf16.mxu0 0
    %502 = vmatpush1.bf16.xpose.msra.mxu0 0
    %503 = vmatprep.subr.bf16.mxu0 0
    %504 = vmatpush1.bf16.xpose.msra.mxu0 0
    %505 = vmatprep.subr.bf16.mxu0 0
    %506 = vmatpush1.bf16.xpose.msra.mxu0 0
    %507 = vmatprep.subr.bf16.mxu0 0
    %508 = vmatpush1.bf16.xpose.msra.mxu0 0
    %509 = vmatprep.subr.bf16.mxu0 0
    %510 = vmatpush1.bf16.xpose.msra.mxu0 0
    %511 = vmatprep.mubr.bf16.mxu0 0
    %512 = vmatmul.mubr.bf16.gmra.mrb[0].mxu0 %v474
    %v513 = vpop.f32.mrb[0].mxu0
    %v514 = vadd.f32 0.0, %v513
    %v515 = vpop.f32.mrb[0].mxu0
    %v516 = vpop.f32.mrb[0].mxu0
    %v517 = vadd.f32 0.0, %v516
    %v518 = vpop.f32.mrb[0].mxu0
    %519 = vdwg.mxu0
    %v520 = vmul.f32 %v514, 0.25
    %v521 = vmul.f32 %v517, 0.25
    %v522 = vsel %vm472, %v520, -inf
    %523 = vmax.xlane.f32.xlu0 %v522
    %v524 = vpop.xlane.xlu0 %523
    %v525 = vsel %vm472, %v521, -inf
    %526 = vmax.xlane.f32.xlu0 %v525
    %v527 = vpop.xlane.xlu0 %526
    %v528 = vsub.f32 %v520, %v524
    %v529 = vsub.f32 %v521, %v527
    %v530 = vmul.f32 %v528, 1.442695
    %v531 = vpow.pop %v530
    %v532 = vmul.f32 %v529, 1.442695
    %v533 = vpow.pop %v532
    %v534 = vsel %vm472, %v531, 0.0
    %535 = vadd.xlane.f32.xlu0 %v534
    %v536 = vpop.xlane.xlu0 %535
    %v537 = vsel %vm472, %v533, 0.0
    %538 = vadd.xlane.f32.xlu0 %v537
    %v539 = vpop.xlane.xlu0 %538
    %v540 = vrcp.pop %v536
    %v541 = vrcp.pop %v539
    %v542 = vmul.f32 %v531, %v540
    %v543 = vmul.f32 %v533, %v541
    %v544 = vpack.c.bf16 %v543, %v542
    %545 = vrot.lane.b32.xlu0 %v468, 64
    %v546 = vpop.permute.xlu0 %545
    %v549 = vsel %vm472, %v544, 0
    %551 = vmatprep.subr.bf16.mxu0 0
    %552 = vmatpush1.bf16.msra.mxu0 %v546
    %553 = vmatprep.subr.bf16.mxu0 0
    %554 = vmatpush1.bf16.msra.mxu0 0
    %555 = vmatprep.subr.bf16.mxu0 0
    %556 = vmatpush1.bf16.msra.mxu0 0
    %557 = vmatprep.subr.bf16.mxu0 0
    %558 = vmatpush1.bf16.msra.mxu0 0
    %559 = vmatprep.subr.bf16.mxu0 0
    %560 = vmatpush1.bf16.msra.mxu0 0
    %561 = vmatprep.subr.bf16.mxu0 0
    %562 = vmatpush1.bf16.msra.mxu0 0
    %563 = vmatprep.subr.bf16.mxu0 0
    %564 = vmatpush1.bf16.msra.mxu0 0
    %565 = vmatprep.subr.bf16.mxu0 0
    %566 = vmatpush1.bf16.msra.mxu0 0
    %567 = vmatprep.subr.bf16.mxu0 0
    %568 = vmatpush1.bf16.msra.mxu0 0
    %569 = vmatprep.subr.bf16.mxu0 0
    %570 = vmatpush1.bf16.msra.mxu0 0
    %571 = vmatprep.subr.bf16.mxu0 0
    %572 = vmatpush1.bf16.msra.mxu0 0
    %573 = vmatprep.subr.bf16.mxu0 0
    %574 = vmatpush1.bf16.msra.mxu0 0
    %575 = vmatprep.subr.bf16.mxu0 0
    %576 = vmatpush1.bf16.msra.mxu0 0
    %577 = vmatprep.subr.bf16.mxu0 0
    %578 = vmatpush1.bf16.msra.mxu0 0
    %579 = vmatprep.subr.bf16.mxu0 0
    %580 = vmatpush1.bf16.msra.mxu0 0
    %581 = vmatprep.subr.bf16.mxu0 0
    %582 = vmatpush1.bf16.msra.mxu0 0
    %583 = vmatprep.mubr.bf16.mxu0 0
    %584 = vmatmul.mubr.bf16.gmra.mrb[0].mxu0 %v549
    %v585 = vpop.f32.mrb[0].mxu0
    %v586 = vadd.f32 0.0, %v585
    %v587 = vpop.f32.mrb[0].mxu0
    %v588 = vpop.f32.mrb[0].mxu0
    %v589 = vadd.f32 0.0, %v588
    %v590 = vpop.f32.mrb[0].mxu0
    %591 = vdwg.mxu0
    %v592 = vpack.c.bf16 %v589, %v586
    %593 = vrot.lane.b32.xlu0 %v468, 112
    %v594 = vpop.permute.xlu0 %593
    %595 = vrot.lane.b32.xlu0 %v468, 80
    %v596 = vpop.permute.xlu0 %595
    %v598 = vsel %vm472, %v594, 0
    %v601 = vsel %vm472, %v596, 0
    %603 = vmatprep.subr.bf16.mxu0 0
    %604 = vmatpush1.bf16.xpose.msra.mxu0 %v601
    %605 = vmatprep.subr.bf16.mxu0 0
    %606 = vmatpush1.bf16.xpose.msra.mxu0 0
    %607 = vmatprep.subr.bf16.mxu0 0
    %608 = vmatpush1.bf16.xpose.msra.mxu0 0
    %609 = vmatprep.subr.bf16.mxu0 0
    %610 = vmatpush1.bf16.xpose.msra.mxu0 0
    %611 = vmatprep.subr.bf16.mxu0 0
    %612 = vmatpush1.bf16.xpose.msra.mxu0 0
    %613 = vmatprep.subr.bf16.mxu0 0
    %614 = vmatpush1.bf16.xpose.msra.mxu0 0
    %615 = vmatprep.subr.bf16.mxu0 0
    %616 = vmatpush1.bf16.xpose.msra.mxu0 0
    %617 = vmatprep.subr.bf16.mxu0 0
    %618 = vmatpush1.bf16.xpose.msra.mxu0 0
    %619 = vmatprep.subr.bf16.mxu0 0
    %620 = vmatpush1.bf16.xpose.msra.mxu0 0
    %621 = vmatprep.subr.bf16.mxu0 0
    %622 = vmatpush1.bf16.xpose.msra.mxu0 0
    %623 = vmatprep.subr.bf16.mxu0 0
    %624 = vmatpush1.bf16.xpose.msra.mxu0 0
    %625 = vmatprep.subr.bf16.mxu0 0
    %626 = vmatpush1.bf16.xpose.msra.mxu0 0
    %627 = vmatprep.subr.bf16.mxu0 0
    %628 = vmatpush1.bf16.xpose.msra.mxu0 0
    %629 = vmatprep.subr.bf16.mxu0 0
    %630 = vmatpush1.bf16.xpose.msra.mxu0 0
    %631 = vmatprep.subr.bf16.mxu0 0
    %632 = vmatpush1.bf16.xpose.msra.mxu0 0
    %633 = vmatprep.subr.bf16.mxu0 0
    %634 = vmatpush1.bf16.xpose.msra.mxu0 0
    %635 = vmatprep.mubr.bf16.mxu0 0
    %636 = vmatmul.mubr.bf16.gmra.mrb[0].mxu0 %v598
    %v637 = vpop.f32.mrb[0].mxu0
    %v638 = vadd.f32 0.0, %v637
    %v639 = vpop.f32.mrb[0].mxu0
    %v640 = vpop.f32.mrb[0].mxu0
    %v641 = vadd.f32 0.0, %v640
    %v642 = vpop.f32.mrb[0].mxu0
    %643 = vdwg.mxu0
    %v644 = vmul.f32 %v638, 0.25
    %v645 = vmul.f32 %v641, 0.25
    %v646 = vsel %vm472, %v644, -inf
    %647 = vmax.xlane.f32.xlu0 %v646
    %v648 = vpop.xlane.xlu0 %647
    %v649 = vsel %vm472, %v645, -inf
    %650 = vmax.xlane.f32.xlu0 %v649
    %v651 = vpop.xlane.xlu0 %650
    %v652 = vsub.f32 %v644, %v648
    %v653 = vsub.f32 %v645, %v651
    %v654 = vmul.f32 %v652, 1.442695
    %v655 = vpow.pop %v654
    %v656 = vmul.f32 %v653, 1.442695
    %v657 = vpow.pop %v656
    %v658 = vsel %vm472, %v655, 0.0
    %659 = vadd.xlane.f32.xlu0 %v658
    %v660 = vpop.xlane.xlu0 %659
    %v661 = vsel %vm472, %v657, 0.0
    %662 = vadd.xlane.f32.xlu0 %v661
    %v663 = vpop.xlane.xlu0 %662
    %v664 = vrcp.pop %v660
    %v665 = vrcp.pop %v663
    %v666 = vmul.f32 %v655, %v664
    %v667 = vmul.f32 %v657, %v665
    %v668 = vpack.c.bf16 %v667, %v666
    %669 = vrot.lane.b32.xlu0 %v468, 48
    %v670 = vpop.permute.xlu0 %669
    %v673 = vsel %vm472, %v668, 0
    %675 = vmatprep.subr.bf16.mxu0 0
    %676 = vmatpush1.bf16.msra.mxu0 %v670
    %677 = vmatprep.subr.bf16.mxu0 0
    %678 = vmatpush1.bf16.msra.mxu0 0
    %679 = vmatprep.subr.bf16.mxu0 0
    %680 = vmatpush1.bf16.msra.mxu0 0
    %681 = vmatprep.subr.bf16.mxu0 0
    %682 = vmatpush1.bf16.msra.mxu0 0
    %683 = vmatprep.subr.bf16.mxu0 0
    %684 = vmatpush1.bf16.msra.mxu0 0
    %685 = vmatprep.subr.bf16.mxu0 0
    %686 = vmatpush1.bf16.msra.mxu0 0
    %687 = vmatprep.subr.bf16.mxu0 0
    %688 = vmatpush1.bf16.msra.mxu0 0
    %689 = vmatprep.subr.bf16.mxu0 0
    %690 = vmatpush1.bf16.msra.mxu0 0
    %691 = vmatprep.subr.bf16.mxu0 0
    %692 = vmatpush1.bf16.msra.mxu0 0
    %693 = vmatprep.subr.bf16.mxu0 0
    %694 = vmatpush1.bf16.msra.mxu0 0
    %695 = vmatprep.subr.bf16.mxu0 0
    %696 = vmatpush1.bf16.msra.mxu0 0
    %697 = vmatprep.subr.bf16.mxu0 0
    %698 = vmatpush1.bf16.msra.mxu0 0
    %699 = vmatprep.subr.bf16.mxu0 0
    %700 = vmatpush1.bf16.msra.mxu0 0
    %701 = vmatprep.subr.bf16.mxu0 0
    %702 = vmatpush1.bf16.msra.mxu0 0
    %703 = vmatprep.subr.bf16.mxu0 0
    %704 = vmatpush1.bf16.msra.mxu0 0
    %705 = vmatprep.subr.bf16.mxu0 0
    %706 = vmatpush1.bf16.msra.mxu0 0
    %707 = vmatprep.mubr.bf16.mxu0 0
    %708 = vmatmul.mubr.bf16.gmra.mrb[0].mxu0 %v673
    %v709 = vpop.f32.mrb[0].mxu0
    %v710 = vadd.f32 0.0, %v709
    %v711 = vpop.f32.mrb[0].mxu0
    %v712 = vpop.f32.mrb[0].mxu0
    %v713 = vadd.f32 0.0, %v712
    %v714 = vpop.f32.mrb[0].mxu0
    %715 = vdwg.mxu0
    %v716 = vpack.c.bf16 %v713, %v710
    %v719 = vunpack.c.l.b16 %v240
    %v720 = vunpack.c.l.b16 %v241
    %v721 = vpack.c.b16 %v720, %v719
    %v724 = vsel %vm472, %v716, 0
    %726 = vmatprep.subr.bf16.mxu0 0
    %727 = vmatpush1.bf16.msra.mxu0 %v721
    %728 = vmatprep.subr.bf16.mxu0 0
    %729 = vmatpush1.bf16.msra.mxu0 0
    %730 = vmatprep.subr.bf16.mxu0 0
    %731 = vmatpush1.bf16.msra.mxu0 0
    %732 = vmatprep.subr.bf16.mxu0 0
    %733 = vmatpush1.bf16.msra.mxu0 0
    %734 = vmatprep.subr.bf16.mxu0 0
    %735 = vmatpush1.bf16.msra.mxu0 0
    %736 = vmatprep.subr.bf16.mxu0 0
    %737 = vmatpush1.bf16.msra.mxu0 0
    %738 = vmatprep.subr.bf16.mxu0 0
    %739 = vmatpush1.bf16.msra.mxu0 0
    %740 = vmatprep.subr.bf16.mxu0 0
    %741 = vmatpush1.bf16.msra.mxu0 0
    %742 = vmatprep.subr.bf16.mxu0 0
    %743 = vmatpush1.bf16.msra.mxu0 0
    %744 = vmatprep.subr.bf16.mxu0 0
    %745 = vmatpush1.bf16.msra.mxu0 0
    %746 = vmatprep.subr.bf16.mxu0 0
    %747 = vmatpush1.bf16.msra.mxu0 0
    %748 = vmatprep.subr.bf16.mxu0 0
    %749 = vmatpush1.bf16.msra.mxu0 0
    %750 = vmatprep.subr.bf16.mxu0 0
    %751 = vmatpush1.bf16.msra.mxu0 0
    %752 = vmatprep.subr.bf16.mxu0 0
    %753 = vmatpush1.bf16.msra.mxu0 0
    %754 = vmatprep.subr.bf16.mxu0 0
    %755 = vmatpush1.bf16.msra.mxu0 0
    %756 = vmatprep.subr.bf16.mxu0 0
    %757 = vmatpush1.bf16.msra.mxu0 0
    %758 = vmatprep.mubr.bf16.mxu0 0
    %759 = vmatmul.mubr.bf16.gmra.mrb[0].mxu0 %v724
    %v760 = vpop.f32.mrb[0].mxu0
    %v761 = vadd.f32 0.0, %v760
    %v762 = vpop.f32.mrb[0].mxu0
    %v763 = vpop.f32.mrb[0].mxu0
    %v764 = vadd.f32 0.0, %v763
    %v765 = vpop.f32.mrb[0].mxu0
    %766 = vdwg.mxu0
    %v769 = vunpack.c.l.b16 %v238
    %v770 = vunpack.c.l.b16 %v239
    %v771 = vpack.c.b16 %v770, %v769
    %v774 = vsel %vm472, %v592, 0
    %776 = vmatprep.subr.bf16.mxu0 0
    %777 = vmatpush1.bf16.msra.mxu0 %v771
    %778 = vmatprep.subr.bf16.mxu0 0
    %779 = vmatpush1.bf16.msra.mxu0 0
    %780 = vmatprep.subr.bf16.mxu0 0
    %781 = vmatpush1.bf16.msra.mxu0 0
    %782 = vmatprep.subr.bf16.mxu0 0
    %783 = vmatpush1.bf16.msra.mxu0 0
    %784 = vmatprep.subr.bf16.mxu0 0
    %785 = vmatpush1.bf16.msra.mxu0 0
    %786 = vmatprep.subr.bf16.mxu0 0
    %787 = vmatpush1.bf16.msra.mxu0 0
    %788 = vmatprep.subr.bf16.mxu0 0
    %789 = vmatpush1.bf16.msra.mxu0 0
    %790 = vmatprep.subr.bf16.mxu0 0
    %791 = vmatpush1.bf16.msra.mxu0 0
    %792 = vmatprep.subr.bf16.mxu0 0
    %793 = vmatpush1.bf16.msra.mxu0 0
    %794 = vmatprep.subr.bf16.mxu0 0
    %795 = vmatpush1.bf16.msra.mxu0 0
    %796 = vmatprep.subr.bf16.mxu0 0
    %797 = vmatpush1.bf16.msra.mxu0 0
    %798 = vmatprep.subr.bf16.mxu0 0
    %799 = vmatpush1.bf16.msra.mxu0 0
    %800 = vmatprep.subr.bf16.mxu0 0
    %801 = vmatpush1.bf16.msra.mxu0 0
    %802 = vmatprep.subr.bf16.mxu0 0
    %803 = vmatpush1.bf16.msra.mxu0 0
    %804 = vmatprep.subr.bf16.mxu0 0
    %805 = vmatpush1.bf16.msra.mxu0 0
    %806 = vmatprep.subr.bf16.mxu0 0
    %807 = vmatpush1.bf16.msra.mxu0 0
    %808 = vmatprep.mubr.bf16.mxu0 0
    %809 = vmatmul.mubr.bf16.gmra.mrb[0].mxu0 %v774
    %v810 = vpop.f32.mrb[0].mxu0
    %v811 = vadd.f32 %v761, %v810
    %v812 = vpop.f32.mrb[0].mxu0
    %v813 = vpop.f32.mrb[0].mxu0
    %v814 = vadd.f32 %v764, %v813
    %v815 = vpop.f32.mrb[0].mxu0
    %816 = vdwg.mxu0
    %v817 = vpack.c.bf16 %v465, %v462
    %819 = vrot.lane.b32.xlu0 %v817, 96
    %v820 = vpop.permute.xlu0 %819
    %v822 = vsel %vm472, %v817, 0
    %v825 = vsel %vm472, %v820, 0
    %827 = vmatprep.subr.bf16.mxu0 0
    %828 = vmatpush1.bf16.xpose.msra.mxu0 %v825
    %829 = vmatprep.subr.bf16.mxu0 0
    %830 = vmatpush1.bf16.xpose.msra.mxu0 0
    %831 = vmatprep.subr.bf16.mxu0 0
    %832 = vmatpush1.bf16.xpose.msra.mxu0 0
    %833 = vmatprep.subr.bf16.mxu0 0
    %834 = vmatpush1.bf16.xpose.msra.mxu0 0
    %835 = vmatprep.subr.bf16.mxu0 0
    %836 = vmatpush1.bf16.xpose.msra.mxu0 0
    %837 = vmatprep.subr.bf16.mxu0 0
    %838 = vmatpush1.bf16.xpose.msra.mxu0 0
    %839 = vmatprep.subr.bf16.mxu0 0
    %840 = vmatpush1.bf16.xpose.msra.mxu0 0
    %841 = vmatprep.subr.bf16.mxu0 0
    %842 = vmatpush1.bf16.xpose.msra.mxu0 0
    %843 = vmatprep.subr.bf16.mxu0 0
    %844 = vmatpush1.bf16.xpose.msra.mxu0 0
    %845 = vmatprep.subr.bf16.mxu0 0
    %846 = vmatpush1.bf16.xpose.msra.mxu0 0
    %847 = vmatprep.subr.bf16.mxu0 0
    %848 = vmatpush1.bf16.xpose.msra.mxu0 0
    %849 = vmatprep.subr.bf16.mxu0 0
    %850 = vmatpush1.bf16.xpose.msra.mxu0 0
    %851 = vmatprep.subr.bf16.mxu0 0
    %852 = vmatpush1.bf16.xpose.msra.mxu0 0
    %853 = vmatprep.subr.bf16.mxu0 0
    %854 = vmatpush1.bf16.xpose.msra.mxu0 0
    %855 = vmatprep.subr.bf16.mxu0 0
    %856 = vmatpush1.bf16.xpose.msra.mxu0 0
    %857 = vmatprep.subr.bf16.mxu0 0
    %858 = vmatpush1.bf16.xpose.msra.mxu0 0
    %859 = vmatprep.mubr.bf16.mxu0 0
    %860 = vmatmul.mubr.bf16.gmra.mrb[0].mxu0 %v822
    %v861 = vpop.f32.mrb[0].mxu0
    %v862 = vadd.f32 0.0, %v861
    %v863 = vpop.f32.mrb[0].mxu0
    %v864 = vpop.f32.mrb[0].mxu0
    %v865 = vadd.f32 0.0, %v864
    %v866 = vpop.f32.mrb[0].mxu0
    %867 = vdwg.mxu0
    %v868 = vmul.f32 %v862, 0.25
    %v869 = vmul.f32 %v865, 0.25
    %v870 = vsel %vm472, %v868, -inf
    %871 = vmax.xlane.f32.xlu0 %v870
    %v872 = vpop.xlane.xlu0 %871
    %v873 = vsel %vm472, %v869, -inf
    %874 = vmax.xlane.f32.xlu0 %v873
    %v875 = vpop.xlane.xlu0 %874
    %v876 = vsub.f32 %v868, %v872
    %v877 = vsub.f32 %v869, %v875
    %v878 = vmul.f32 %v876, 1.442695
    %v879 = vpow.pop %v878
    %v880 = vmul.f32 %v877, 1.442695
    %v881 = vpow.pop %v880
    %v882 = vsel %vm472, %v879, 0.0
    %883 = vadd.xlane.f32.xlu0 %v882
    %v884 = vpop.xlane.xlu0 %883
    %v885 = vsel %vm472, %v881, 0.0
    %886 = vadd.xlane.f32.xlu0 %v885
    %v887 = vpop.xlane.xlu0 %886
    %v888 = vrcp.pop %v884
    %v889 = vrcp.pop %v887
    %v890 = vmul.f32 %v879, %v888
    %v891 = vmul.f32 %v881, %v889
    %v892 = vpack.c.bf16 %v891, %v890
    %893 = vrot.lane.b32.xlu0 %v817, 64
    %v894 = vpop.permute.xlu0 %893
    %v897 = vsel %vm472, %v892, 0
    %899 = vmatprep.subr.bf16.mxu0 0
    %900 = vmatpush1.bf16.msra.mxu0 %v894
    %901 = vmatprep.subr.bf16.mxu0 0
    %902 = vmatpush1.bf16.msra.mxu0 0
    %903 = vmatprep.subr.bf16.mxu0 0
    %904 = vmatpush1.bf16.msra.mxu0 0
    %905 = vmatprep.subr.bf16.mxu0 0
    %906 = vmatpush1.bf16.msra.mxu0 0
    %907 = vmatprep.subr.bf16.mxu0 0
    %908 = vmatpush1.bf16.msra.mxu0 0
    %909 = vmatprep.subr.bf16.mxu0 0
    %910 = vmatpush1.bf16.msra.mxu0 0
    %911 = vmatprep.subr.bf16.mxu0 0
    %912 = vmatpush1.bf16.msra.mxu0 0
    %913 = vmatprep.subr.bf16.mxu0 0
    %914 = vmatpush1.bf16.msra.mxu0 0
    %915 = vmatprep.subr.bf16.mxu0 0
    %916 = vmatpush1.bf16.msra.mxu0 0
    %917 = vmatprep.subr.bf16.mxu0 0
    %918 = vmatpush1.bf16.msra.mxu0 0
    %919 = vmatprep.subr.bf16.mxu0 0
    %920 = vmatpush1.bf16.msra.mxu0 0
    %921 = vmatprep.subr.bf16.mxu0 0
    %922 = vmatpush1.bf16.msra.mxu0 0
    %923 = vmatprep.subr.bf16.mxu0 0
    %924 = vmatpush1.bf16.msra.mxu0 0
    %925 = vmatprep.subr.bf16.mxu0 0
    %926 = vmatpush1.bf16.msra.mxu0 0
    %927 = vmatprep.subr.bf16.mxu0 0
    %928 = vmatpush1.bf16.msra.mxu0 0
    %929 = vmatprep.subr.bf16.mxu0 0
    %930 = vmatpush1.bf16.msra.mxu0 0
    %931 = vmatprep.mubr.bf16.mxu0 0
    %932 = vmatmul.mubr.bf16.gmra.mrb[0].mxu0 %v897
    %v933 = vpop.f32.mrb[0].mxu0
    %v934 = vadd.f32 0.0, %v933
    %v935 = vpop.f32.mrb[0].mxu0
    %v936 = vpop.f32.mrb[0].mxu0
    %v937 = vadd.f32 0.0, %v936
    %v938 = vpop.f32.mrb[0].mxu0
    %939 = vdwg.mxu0
    %v940 = vpack.c.bf16 %v937, %v934
    %941 = vrot.lane.b32.xlu0 %v817, 112
    %v942 = vpop.permute.xlu0 %941
    %943 = vrot.lane.b32.xlu0 %v817, 80
    %v944 = vpop.permute.xlu0 %943
    %v946 = vsel %vm472, %v942, 0
    %v949 = vsel %vm472, %v944, 0
    %951 = vmatprep.subr.bf16.mxu0 0
    %952 = vmatpush1.bf16.xpose.msra.mxu0 %v949
    %953 = vmatprep.subr.bf16.mxu0 0
    %954 = vmatpush1.bf16.xpose.msra.mxu0 0
    %955 = vmatprep.subr.bf16.mxu0 0
    %956 = vmatpush1.bf16.xpose.msra.mxu0 0
    %957 = vmatprep.subr.bf16.mxu0 0
    %958 = vmatpush1.bf16.xpose.msra.mxu0 0
    %959 = vmatprep.subr.bf16.mxu0 0
    %960 = vmatpush1.bf16.xpose.msra.mxu0 0
    %961 = vmatprep.subr.bf16.mxu0 0
    %962 = vmatpush1.bf16.xpose.msra.mxu0 0
    %963 = vmatprep.subr.bf16.mxu0 0
    %964 = vmatpush1.bf16.xpose.msra.mxu0 0
    %965 = vmatprep.subr.bf16.mxu0 0
    %966 = vmatpush1.bf16.xpose.msra.mxu0 0
    %967 = vmatprep.subr.bf16.mxu0 0
    %968 = vmatpush1.bf16.xpose.msra.mxu0 0
    %969 = vmatprep.subr.bf16.mxu0 0
    %970 = vmatpush1.bf16.xpose.msra.mxu0 0
    %971 = vmatprep.subr.bf16.mxu0 0
    %972 = vmatpush1.bf16.xpose.msra.mxu0 0
    %973 = vmatprep.subr.bf16.mxu0 0
    %974 = vmatpush1.bf16.xpose.msra.mxu0 0
    %975 = vmatprep.subr.bf16.mxu0 0
    %976 = vmatpush1.bf16.xpose.msra.mxu0 0
    %977 = vmatprep.subr.bf16.mxu0 0
    %978 = vmatpush1.bf16.xpose.msra.mxu0 0
    %979 = vmatprep.subr.bf16.mxu0 0
    %980 = vmatpush1.bf16.xpose.msra.mxu0 0
    %981 = vmatprep.subr.bf16.mxu0 0
    %982 = vmatpush1.bf16.xpose.msra.mxu0 0
    %983 = vmatprep.mubr.bf16.mxu0 0
    %984 = vmatmul.mubr.bf16.gmra.mrb[0].mxu0 %v946
    %v985 = vpop.f32.mrb[0].mxu0
    %v986 = vadd.f32 0.0, %v985
    %v987 = vpop.f32.mrb[0].mxu0
    %v988 = vpop.f32.mrb[0].mxu0
    %v989 = vadd.f32 0.0, %v988
    %v990 = vpop.f32.mrb[0].mxu0
    %991 = vdwg.mxu0
    %v992 = vmul.f32 %v986, 0.25
    %v993 = vmul.f32 %v989, 0.25
    %v994 = vsel %vm472, %v992, -inf
    %995 = vmax.xlane.f32.xlu0 %v994
    %v996 = vpop.xlane.xlu0 %995
    %v997 = vsel %vm472, %v993, -inf
    %998 = vmax.xlane.f32.xlu0 %v997
    %v999 = vpop.xlane.xlu0 %998
    %v1000 = vsub.f32 %v992, %v996
    %v1001 = vsub.f32 %v993, %v999
    %v1002 = vmul.f32 %v1000, 1.442695
    %v1003 = vpow.pop %v1002
    %v1004 = vmul.f32 %v1001, 1.442695
    %v1005 = vpow.pop %v1004
    %v1006 = vsel %vm472, %v1003, 0.0
    %1007 = vadd.xlane.f32.xlu0 %v1006
    %v1008 = vpop.xlane.xlu0 %1007
    %v1009 = vsel %vm472, %v1005, 0.0
    %1010 = vadd.xlane.f32.xlu0 %v1009
    %v1011 = vpop.xlane.xlu0 %1010
    %v1012 = vrcp.pop %v1008
    %v1013 = vrcp.pop %v1011
    %v1014 = vmul.f32 %v1003, %v1012
    %v1015 = vmul.f32 %v1005, %v1013
    %v1016 = vpack.c.bf16 %v1015, %v1014
    %1017 = vrot.lane.b32.xlu0 %v817, 48
    %v1018 = vpop.permute.xlu0 %1017
    %v1021 = vsel %vm472, %v1016, 0
    %1023 = vmatprep.subr.bf16.mxu0 0
    %1024 = vmatpush1.bf16.msra.mxu0 %v1018
    %1025 = vmatprep.subr.bf16.mxu0 0
    %1026 = vmatpush1.bf16.msra.mxu0 0
    %1027 = vmatprep.subr.bf16.mxu0 0
    %1028 = vmatpush1.bf16.msra.mxu0 0
    %1029 = vmatprep.subr.bf16.mxu0 0
    %1030 = vmatpush1.bf16.msra.mxu0 0
    %1031 = vmatprep.subr.bf16.mxu0 0
    %1032 = vmatpush1.bf16.msra.mxu0 0
    %1033 = vmatprep.subr.bf16.mxu0 0
    %1034 = vmatpush1.bf16.msra.mxu0 0
    %1035 = vmatprep.subr.bf16.mxu0 0
    %1036 = vmatpush1.bf16.msra.mxu0 0
    %1037 = vmatprep.subr.bf16.mxu0 0
    %1038 = vmatpush1.bf16.msra.mxu0 0
    %1039 = vmatprep.subr.bf16.mxu0 0
    %1040 = vmatpush1.bf16.msra.mxu0 0
    %1041 = vmatprep.subr.bf16.mxu0 0
    %1042 = vmatpush1.bf16.msra.mxu0 0
    %1043 = vmatprep.subr.bf16.mxu0 0
    %1044 = vmatpush1.bf16.msra.mxu0 0
    %1045 = vmatprep.subr.bf16.mxu0 0
    %1046 = vmatpush1.bf16.msra.mxu0 0
    %1047 = vmatprep.subr.bf16.mxu0 0
    %1048 = vmatpush1.bf16.msra.mxu0 0
    %1049 = vmatprep.subr.bf16.mxu0 0
    %1050 = vmatpush1.bf16.msra.mxu0 0
    %1051 = vmatprep.subr.bf16.mxu0 0
    %1052 = vmatpush1.bf16.msra.mxu0 0
    %1053 = vmatprep.subr.bf16.mxu0 0
    %1054 = vmatpush1.bf16.msra.mxu0 0
    %1055 = vmatprep.mubr.bf16.mxu0 0
    %1056 = vmatmul.mubr.bf16.gmra.mrb[0].mxu0 %v1021
    %v1057 = vpop.f32.mrb[0].mxu0
    %v1058 = vadd.f32 0.0, %v1057
    %v1059 = vpop.f32.mrb[0].mxu0
    %v1060 = vpop.f32.mrb[0].mxu0
    %v1061 = vadd.f32 0.0, %v1060
    %v1062 = vpop.f32.mrb[0].mxu0
    %1063 = vdwg.mxu0
    %v1064 = vpack.c.bf16 %v1061, %v1058
    %v1066 = vsel %vm472, %v1064, 0
    %1068 = vmatprep.subr.bf16.mxu0 0
    %1069 = vmatpush1.bf16.msra.mxu0 %v721
    %1070 = vmatprep.subr.bf16.mxu0 0
    %1071 = vmatpush1.bf16.msra.mxu0 0
    %1072 = vmatprep.subr.bf16.mxu0 0
    %1073 = vmatpush1.bf16.msra.mxu0 0
    %1074 = vmatprep.subr.bf16.mxu0 0
    %1075 = vmatpush1.bf16.msra.mxu0 0
    %1076 = vmatprep.subr.bf16.mxu0 0
    %1077 = vmatpush1.bf16.msra.mxu0 0
    %1078 = vmatprep.subr.bf16.mxu0 0
    %1079 = vmatpush1.bf16.msra.mxu0 0
    %1080 = vmatprep.subr.bf16.mxu0 0
    %1081 = vmatpush1.bf16.msra.mxu0 0
    %1082 = vmatprep.subr.bf16.mxu0 0
    %1083 = vmatpush1.bf16.msra.mxu0 0
    %1084 = vmatprep.subr.bf16.mxu0 0
    %1085 = vmatpush1.bf16.msra.mxu0 0
    %1086 = vmatprep.subr.bf16.mxu0 0
    %1087 = vmatpush1.bf16.msra.mxu0 0
    %1088 = vmatprep.subr.bf16.mxu0 0
    %1089 = vmatpush1.bf16.msra.mxu0 0
    %1090 = vmatprep.subr.bf16.mxu0 0
    %1091 = vmatpush1.bf16.msra.mxu0 0
    %1092 = vmatprep.subr.bf16.mxu0 0
    %1093 = vmatpush1.bf16.msra.mxu0 0
    %1094 = vmatprep.subr.bf16.mxu0 0
    %1095 = vmatpush1.bf16.msra.mxu0 0
    %1096 = vmatprep.subr.bf16.mxu0 0
    %1097 = vmatpush1.bf16.msra.mxu0 0
    %1098 = vmatprep.subr.bf16.mxu0 0
    %1099 = vmatpush1.bf16.msra.mxu0 0
    %1100 = vmatprep.mubr.bf16.mxu0 0
    %1101 = vmatmul.mubr.bf16.gmra.mrb[0].mxu0 %v1066
    %v1102 = vpop.f32.mrb[0].mxu0
    %v1103 = vadd.f32 0.0, %v1102
    %v1104 = vpop.f32.mrb[0].mxu0
    %v1105 = vpop.f32.mrb[0].mxu0
    %v1106 = vadd.f32 0.0, %v1105
    %v1107 = vpop.f32.mrb[0].mxu0
    %1108 = vdwg.mxu0
    %v1110 = vsel %vm472, %v940, 0
    %1112 = vmatprep.subr.bf16.mxu0 0
    %1113 = vmatpush1.bf16.msra.mxu0 %v771
    %1114 = vmatprep.subr.bf16.mxu0 0
    %1115 = vmatpush1.bf16.msra.mxu0 0
    %1116 = vmatprep.subr.bf16.mxu0 0
    %1117 = vmatpush1.bf16.msra.mxu0 0
    %1118 = vmatprep.subr.bf16.mxu0 0
    %1119 = vmatpush1.bf16.msra.mxu0 0
    %1120 = vmatprep.subr.bf16.mxu0 0
    %1121 = vmatpush1.bf16.msra.mxu0 0
    %1122 = vmatprep.subr.bf16.mxu0 0
    %1123 = vmatpush1.bf16.msra.mxu0 0
    %1124 = vmatprep.subr.bf16.mxu0 0
    %1125 = vmatpush1.bf16.msra.mxu0 0
    %1126 = vmatprep.subr.bf16.mxu0 0
    %1127 = vmatpush1.bf16.msra.mxu0 0
    %1128 = vmatprep.subr.bf16.mxu0 0
    %1129 = vmatpush1.bf16.msra.mxu0 0
    %1130 = vmatprep.subr.bf16.mxu0 0
    %1131 = vmatpush1.bf16.msra.mxu0 0
    %1132 = vmatprep.subr.bf16.mxu0 0
    %1133 = vmatpush1.bf16.msra.mxu0 0
    %1134 = vmatprep.subr.bf16.mxu0 0
    %1135 = vmatpush1.bf16.msra.mxu0 0
    %1136 = vmatprep.subr.bf16.mxu0 0
    %1137 = vmatpush1.bf16.msra.mxu0 0
    %1138 = vmatprep.subr.bf16.mxu0 0
    %1139 = vmatpush1.bf16.msra.mxu0 0
    %1140 = vmatprep.subr.bf16.mxu0 0
    %1141 = vmatpush1.bf16.msra.mxu0 0
    %1142 = vmatprep.subr.bf16.mxu0 0
    %1143 = vmatpush1.bf16.msra.mxu0 0
    %1144 = vmatprep.mubr.bf16.mxu0 0
    %1145 = vmatmul.mubr.bf16.gmra.mrb[0].mxu0 %v1110
    %v1146 = vpop.f32.mrb[0].mxu0
    %v1147 = vadd.f32 %v1103, %v1146
    %v1148 = vpop.f32.mrb[0].mxu0
    %v1149 = vpop.f32.mrb[0].mxu0
    %v1150 = vadd.f32 %v1106, %v1149
    %v1151 = vpop.f32.mrb[0].mxu0
    %1152 = vdwg.mxu0
    %v1153 = vadd.f32 %v315, %v811
    %v1154 = vadd.f32 %v316, %v814
    %v1155 = vadd.f32 %v317, %v1147
    %v1156 = vadd.f32 %v318, %v1150
    %v1158 = vlaneseq
    %v1159 = vshrl.u32 %v1158, 7
    %v1160 = vsub.s32 0, %v1159
    %v1161 = vrot.slane %v242, %v1160
    %v1163 = vadd.f32 %v1153, %v1161
    %v1164 = vadd.f32 %v1154, %v1161
    %v1165 = vadd.f32 %v1155, %v1161
    %v1166 = vadd.f32 %v1156, %v1161
    %v1167 = vsel %vm319, %v1163, 0.0
    %1168 = vadd.xlane.f32.xlu0 %v1167
    %v1169 = vpop.xlane.xlu0 %1168
    %v1170 = vsel %vm319, %v1164, 0.0
    %1171 = vadd.xlane.f32.xlu0 %v1170
    %v1172 = vpop.xlane.xlu0 %1171
    %v1173 = vsel %vm319, %v1165, 0.0
    %1174 = vadd.xlane.f32.xlu0 %v1173
    %v1175 = vpop.xlane.xlu0 %1174
    %v1176 = vsel %vm319, %v1166, 0.0
    %1177 = vadd.xlane.f32.xlu0 %v1176
    %v1178 = vpop.xlane.xlu0 %1177
    %v1179 = vmul.f32 %v1169, %v332
    %v1180 = vmul.f32 %v1172, %v332
    %v1181 = vmul.f32 %v1175, %v332
    %v1182 = vmul.f32 %v1178, %v332
    %v1183 = vsub.f32 %v1163, %v1179
    %v1184 = vsub.f32 %v1164, %v1180
    %v1185 = vsub.f32 %v1165, %v1181
    %v1186 = vsub.f32 %v1166, %v1182
    %v1187 = vmul.f32 %v1183, %v1183
    %v1188 = vmul.f32 %v1184, %v1184
    %v1189 = vmul.f32 %v1185, %v1185
    %v1190 = vmul.f32 %v1186, %v1186
    %v1191 = vsel %vm319, %v1187, 0.0
    %1192 = vadd.xlane.f32.xlu0 %v1191
    %v1193 = vpop.xlane.xlu0 %1192
    %v1194 = vsel %vm319, %v1188, 0.0
    %1195 = vadd.xlane.f32.xlu0 %v1194
    %v1196 = vpop.xlane.xlu0 %1195
    %v1197 = vsel %vm319, %v1189, 0.0
    %1198 = vadd.xlane.f32.xlu0 %v1197
    %v1199 = vpop.xlane.xlu0 %1198
    %v1200 = vsel %vm319, %v1190, 0.0
    %1201 = vadd.xlane.f32.xlu0 %v1200
    %v1202 = vpop.xlane.xlu0 %1201
    %v1203 = vmul.f32 %v1193, %v332
    %v1204 = vmul.f32 %v1196, %v332
    %v1205 = vmul.f32 %v1199, %v332
    %v1206 = vmul.f32 %v1202, %v332
    %v1207 = vadd.f32 %v1203, 1e-05
    %v1208 = vadd.f32 %v1204, 1e-05
    %v1209 = vadd.f32 %v1205, 1e-05
    %v1210 = vadd.f32 %v1206, 1e-05
    %v1211 = vrsqrt.pop %v1207
    %v1212 = vrsqrt.pop %v1208
    %v1213 = vrsqrt.pop %v1209
    %v1214 = vrsqrt.pop %v1210
    %v1215 = vmul.f32 %v1183, %v1211
    %v1216 = vmul.f32 %v1184, %v1212
    %v1217 = vmul.f32 %v1185, %v1213
    %v1218 = vmul.f32 %v1186, %v1214
    %v1220 = vlaneseq
    %v1221 = vshrl.u32 %v1220, 7
    %v1222 = vsub.s32 0, %v1221
    %v1223 = vrot.slane %v243, %v1222
    %v1225 = vmul.f32 %v1215, %v1223
    %v1226 = vmul.f32 %v1216, %v1223
    %v1227 = vmul.f32 %v1217, %v1223
    %v1228 = vmul.f32 %v1218, %v1223
    %v1230 = vlaneseq
    %v1231 = vshrl.u32 %v1230, 7
    %v1232 = vsub.s32 0, %v1231
    %v1233 = vrot.slane %v244, %v1232
    %v1235 = vadd.f32 %v1225, %v1233
    %v1236 = vadd.f32 %v1226, %v1233
    %v1237 = vadd.f32 %v1227, %v1233
    %v1238 = vadd.f32 %v1228, %v1233
    %v1239 = vpack.c.bf16 %v1236, %v1235
    %v1240 = vpack.c.bf16 %v1238, %v1237
    %v1242 = vlaneseq
    %v1243 = vshrl.u32 %v1242, 7
    %v1244 = vsub.s32 0, %v1243
    %v1245 = vrot.slane %v249, %v1244
    %v1251 = vunpack.c.l.b16 %v245
    %v1252 = vunpack.c.l.b16 %v246
    %v1253 = vunpack.c.l.b16 %v247
    %v1254 = vunpack.c.l.b16 %v248
    %v1255 = vpack.c.b16 %v1252, %v1251
    %v1256 = vpack.c.b16 %v1254, %v1253
    %v1260 = vsel %vm319, %v1239, 0
    %v1263 = vsel %vm319, %v1240, 0
    %1265 = vmatprep.subr.bf16.mxu0 0
    %1266 = vmatpush1.bf16.msra.mxu0 %v1255
    %1267 = vmatprep.subr.bf16.mxu0 0
    %1268 = vmatpush1.bf16.msra.mxu0 %v1256
    %1269 = vmatprep.subr.bf16.mxu0 0
    %1270 = vmatpush1.bf16.msra.mxu0 0
    %1271 = vmatprep.subr.bf16.mxu0 0
    %1272 = vmatpush1.bf16.msra.mxu0 0
    %1273 = vmatprep.subr.bf16.mxu0 0
    %1274 = vmatpush1.bf16.msra.mxu0 0
    %1275 = vmatprep.subr.bf16.mxu0 0
    %1276 = vmatpush1.bf16.msra.mxu0 0
    %1277 = vmatprep.subr.bf16.mxu0 0
    %1278 = vmatpush1.bf16.msra.mxu0 0
    %1279 = vmatprep.subr.bf16.mxu0 0
    %1280 = vmatpush1.bf16.msra.mxu0 0
    %1281 = vmatprep.subr.bf16.mxu0 0
    %1282 = vmatpush1.bf16.msra.mxu0 0
    %1283 = vmatprep.subr.bf16.mxu0 0
    %1284 = vmatpush1.bf16.msra.mxu0 0
    %1285 = vmatprep.subr.bf16.mxu0 0
    %1286 = vmatpush1.bf16.msra.mxu0 0
    %1287 = vmatprep.subr.bf16.mxu0 0
    %1288 = vmatpush1.bf16.msra.mxu0 0
    %1289 = vmatprep.subr.bf16.mxu0 0
    %1290 = vmatpush1.bf16.msra.mxu0 0
    %1291 = vmatprep.subr.bf16.mxu0 0
    %1292 = vmatpush1.bf16.msra.mxu0 0
    %1293 = vmatprep.subr.bf16.mxu0 0
    %1294 = vmatpush1.bf16.msra.mxu0 0
    %1295 = vmatprep.subr.bf16.mxu0 0
    %1296 = vmatpush1.bf16.msra.mxu0 0
    %1297 = vmatprep.mubr.bf16.mxu0 0
    %1298 = vmatmul.mubr.bf16.gmra.mrb[0].mxu0 %v1260
    %v1299 = vpop.f32.mrb[0].mxu0
    %v1300 = vadd.f32 %v1245, %v1299
    %v1301 = vpop.f32.mrb[0].mxu0
    %v1302 = vpop.f32.mrb[0].mxu0
    %v1303 = vadd.f32 %v1245, %v1302
    %v1304 = vpop.f32.mrb[0].mxu0
    %1305 = vmatprep.mubr.bf16.mxu0 0
    %1306 = vmatmul.mubr.bf16.gmra.mrb[0].mxu0 %v1263
    %v1307 = vpop.f32.mrb[0].mxu0
    %v1308 = vadd.f32 %v1245, %v1307
    %v1309 = vpop.f32.mrb[0].mxu0
    %v1310 = vpop.f32.mrb[0].mxu0
    %v1311 = vadd.f32 %v1245, %v1310
    %v1312 = vpop.f32.mrb[0].mxu0
    %1313 = vdwg.mxu0
    %v1314 = vmul.f32 %v1300, %v1300
    %v1315 = vmul.f32 %v1303, %v1303
    %v1316 = vmul.f32 %v1308, %v1308
    %v1317 = vmul.f32 %v1311, %v1311
    %v1318 = vmul.f32 %v1300, %v1314
    %v1319 = vmul.f32 %v1303, %v1315
    %v1320 = vmul.f32 %v1308, %v1316
    %v1321 = vmul.f32 %v1311, %v1317
    %v1322 = vmul.f32 %v1318, 0.044715
    %v1323 = vmul.f32 %v1319, 0.044715
    %v1324 = vmul.f32 %v1320, 0.044715
    %v1325 = vmul.f32 %v1321, 0.044715
    %v1326 = vadd.f32 %v1300, %v1322
    %v1327 = vadd.f32 %v1303, %v1323
    %v1328 = vadd.f32 %v1308, %v1324
    %v1329 = vadd.f32 %v1311, %v1325
    %v1330 = vmul.f32 %v1326, 0.7978846
    %v1331 = vmul.f32 %v1327, 0.7978846
    %v1332 = vmul.f32 %v1328, 0.7978846
    %v1333 = vmul.f32 %v1329, 0.7978846
    %v1334 = vtanh.pop %v1330
    %v1335 = vtanh.pop %v1331
    %v1336 = vtanh.pop %v1332
    %v1337 = vtanh.pop %v1333
    %v1338 = vadd.f32 %v1334, 1.0
    %v1339 = vadd.f32 %v1335, 1.0
    %v1340 = vadd.f32 %v1336, 1.0
    %v1341 = vadd.f32 %v1337, 1.0
    %v1342 = vmul.f32 %v1338, 0.5
    %v1343 = vmul.f32 %v1339, 0.5
    %v1344 = vmul.f32 %v1340, 0.5
    %v1345 = vmul.f32 %v1341, 0.5
    %v1346 = vmul.f32 %v1300, %v1342
    %v1347 = vmul.f32 %v1303, %v1343
    %v1348 = vmul.f32 %v1308, %v1344
    %v1349 = vmul.f32 %v1311, %v1345
    %v1350 = vpack.c.bf16 %v1347, %v1346
    %v1351 = vpack.c.bf16 %v1349, %v1348
    %v1368 = vunpack.c.l.b16 %v250
    %v1369 = vunpack.c.l.b16 %v251
    %v1370 = vunpack.c.l.b16 %v252
    %v1371 = vunpack.c.l.b16 %v253
    %v1372 = vunpack.c.l.b16 %v254
    %v1373 = vunpack.c.l.b16 %v255
    %v1374 = vunpack.c.l.b16 %v256
    %v1375 = vunpack.c.l.b16 %v257
    %v1376 = vunpack.c.l.b16 %v258
    %v1377 = vunpack.c.l.b16 %v259
    %v1378 = vunpack.c.l.b16 %v260
    %v1379 = vunpack.c.l.b16 %v261
    %v1380 = vunpack.c.l.b16 %v262
    %v1381 = vunpack.c.l.b16 %v263
    %v1382 = vunpack.c.l.b16 %v264
    %v1383 = vunpack.c.l.b16 %v265
    %v1384 = vpack.c.b16 %v1369, %v1368
    %v1385 = vpack.c.b16 %v1371, %v1370
    %v1386 = vpack.c.b16 %v1373, %v1372
    %v1387 = vpack.c.b16 %v1375, %v1374
    %v1388 = vpack.c.b16 %v1377, %v1376
    %v1389 = vpack.c.b16 %v1379, %v1378
    %v1390 = vpack.c.b16 %v1381, %v1380
    %v1391 = vpack.c.b16 %v1383, %v1382
    %1400 = vmatprep.subr.bf16.mxu0 0
    %1401 = vmatpush1.bf16.msra.mxu0 %v1384
    %1402 = vmatprep.subr.bf16.mxu0 0
    %1403 = vmatpush1.bf16.msra.mxu0 %v1385
    %1404 = vmatprep.subr.bf16.mxu0 0
    %1405 = vmatpush1.bf16.msra.mxu0 %v1386
    %1406 = vmatprep.subr.bf16.mxu0 0
    %1407 = vmatpush1.bf16.msra.mxu0 %v1387
    %1408 = vmatprep.subr.bf16.mxu0 0
    %1409 = vmatpush1.bf16.msra.mxu0 %v1388
    %1410 = vmatprep.subr.bf16.mxu0 0
    %1411 = vmatpush1.bf16.msra.mxu0 %v1389
    %1412 = vmatprep.subr.bf16.mxu0 0
    %1413 = vmatpush1.bf16.msra.mxu0 %v1390
    %1414 = vmatprep.subr.bf16.mxu0 0
    %1415 = vmatpush1.bf16.msra.mxu0 %v1391
    %1416 = vmatprep.subr.bf16.mxu0 0
    %1417 = vmatpush1.bf16.msra.mxu0 0
    %1418 = vmatprep.subr.bf16.mxu0 0
    %1419 = vmatpush1.bf16.msra.mxu0 0
    %1420 = vmatprep.subr.bf16.mxu0 0
    %1421 = vmatpush1.bf16.msra.mxu0 0
    %1422 = vmatprep.subr.bf16.mxu0 0
    %1423 = vmatpush1.bf16.msra.mxu0 0
    %1424 = vmatprep.subr.bf16.mxu0 0
    %1425 = vmatpush1.bf16.msra.mxu0 0
    %1426 = vmatprep.subr.bf16.mxu0 0
    %1427 = vmatpush1.bf16.msra.mxu0 0
    %1428 = vmatprep.subr.bf16.mxu0 0
    %1429 = vmatpush1.bf16.msra.mxu0 0
    %1430 = vmatprep.subr.bf16.mxu0 0
    %1431 = vmatpush1.bf16.msra.mxu0 0
    %1432 = vmatprep.mubr.bf16.mxu0 0
    %1433 = vmatmul.mubr.bf16.gmra.mrb[0].mxu0 %v1350
    %v1434 = vpop.f32.mrb[0].mxu0
    %v1435 = vadd.f32 0.0, %v1434
    %v1436 = vpop.f32.mrb[0].mxu0
    %v1437 = vpop.f32.mrb[0].mxu0
    %v1438 = vadd.f32 0.0, %v1437
    %v1439 = vpop.f32.mrb[0].mxu0
    %1440 = vmatprep.mubr.bf16.mxu0 0
    %1441 = vmatmul.mubr.bf16.gmra.mrb[0].mxu0 %v1351
    %v1442 = vpop.f32.mrb[0].mxu0
    %v1443 = vadd.f32 0.0, %v1442
    %v1444 = vpop.f32.mrb[0].mxu0
    %v1445 = vpop.f32.mrb[0].mxu0
    %v1446 = vadd.f32 0.0, %v1445
    %v1447 = vpop.f32.mrb[0].mxu0
    %1448 = vdwg.mxu0
    %v1449 = vadd.f32 %v1163, %v1435
    %v1450 = vadd.f32 %v1164, %v1438
    %v1451 = vadd.f32 %v1165, %v1443
    %v1452 = vadd.f32 %v1166, %v1446
    %v1454 = vlaneseq
    %v1455 = vshrl.u32 %v1454, 7
    %v1456 = vsub.s32 0, %v1455
    %v1457 = vrot.slane %v266, %v1456
    %v1459 = vadd.f32 %v1449, %v1457
    %v1460 = vadd.f32 %v1450, %v1457
    %v1461 = vadd.f32 %v1451, %v1457
    %v1462 = vadd.f32 %v1452, %v1457
    %v1463 = vld [vmem:[%s3] sm:$0xff]
    %v1464 = vsel %vm319, %v1463, 0.0
    %1465 = vadd.xlane.f32.xlu0 %v1464
    %v1466 = vpop.xlane.xlu0 %1465
    %v1467 = vmul.f32 %v1466, %v332
    %v1468 = vsub.f32 %v1463, %v1467
    %v1469 = vmul.f32 %v1468, %v1468
    %v1470 = vsel %vm319, %v1469, 0.0
    %1471 = vadd.xlane.f32.xlu0 %v1470
    %v1472 = vpop.xlane.xlu0 %1471
    %v1473 = vmul.f32 %v1472, %v332
    %v1474 = vadd.f32 %v1473, 1e-05
    %v1475 = vrsqrt.pop %v1474
    %v1476 = vmul.f32 %v1468, %v1475
    %v1478 = vlaneseq
    %v1479 = vshrl.u32 %v1478, 7
    %v1480 = vsub.s32 0, %v1479
    %v1481 = vrot.slane %v267, %v1480
    %v1483 = vmul.f32 %v1476, %v1481
    %v1485 = vlaneseq
    %v1486 = vshrl.u32 %v1485, 7
    %v1487 = vsub.s32 0, %v1486
    %v1488 = vrot.slane %v268, %v1487
    %v1490 = vadd.f32 %v1483, %v1488
    %v1491 = vpack.c.bf16 %v1490, %v1490
    %v1493 = vlaneseq
    %v1494 = vshrl.u32 %v1493, 7
    %v1495 = vsub.s32 0, %v1494
    %v1496 = vrot.slane %v275, %v1495
    %v1502 = vunpack.c.l.b16 %v271
    %v1503 = vunpack.c.l.b16 %v272
    %v1504 = vunpack.c.l.b16 %v273
    %v1505 = vunpack.c.l.b16 %v274
    %v1506 = vpack.c.b16 %v1503, %v1502
    %v1507 = vpack.c.b16 %v1505, %v1504
    %v1511 = vsel %vm319, %v1491, 0
    %1513 = vmatprep.subr.bf16.mxu0 0
    %1514 = vmatpush1.bf16.msra.mxu0 %v1506
    %1515 = vmatprep.subr.bf16.mxu0 0
    %1516 = vmatpush1.bf16.msra.mxu0 %v1507
    %1517 = vmatprep.subr.bf16.mxu0 0
    %1518 = vmatpush1.bf16.msra.mxu0 0
    %1519 = vmatprep.subr.bf16.mxu0 0
    %1520 = vmatpush1.bf16.msra.mxu0 0
    %1521 = vmatprep.subr.bf16.mxu0 0
    %1522 = vmatpush1.bf16.msra.mxu0 0
    %1523 = vmatprep.subr.bf16.mxu0 0
    %1524 = vmatpush1.bf16.msra.mxu0 0
    %1525 = vmatprep.subr.bf16.mxu0 0
    %1526 = vmatpush1.bf16.msra.mxu0 0
    %1527 = vmatprep.subr.bf16.mxu0 0
    %1528 = vmatpush1.bf16.msra.mxu0 0
    %1529 = vmatprep.subr.bf16.mxu0 0
    %1530 = vmatpush1.bf16.msra.mxu0 0
    %1531 = vmatprep.subr.bf16.mxu0 0
    %1532 = vmatpush1.bf16.msra.mxu0 0
    %1533 = vmatprep.subr.bf16.mxu0 0
    %1534 = vmatpush1.bf16.msra.mxu0 0
    %1535 = vmatprep.subr.bf16.mxu0 0
    %1536 = vmatpush1.bf16.msra.mxu0 0
    %1537 = vmatprep.subr.bf16.mxu0 0
    %1538 = vmatpush1.bf16.msra.mxu0 0
    %1539 = vmatprep.subr.bf16.mxu0 0
    %1540 = vmatpush1.bf16.msra.mxu0 0
    %1541 = vmatprep.subr.bf16.mxu0 0
    %1542 = vmatpush1.bf16.msra.mxu0 0
    %1543 = vmatprep.subr.bf16.mxu0 0
    %1544 = vmatpush1.bf16.msra.mxu0 0
    %1545 = vmatprep.mubr.bf16.mxu0 0
    %1546 = vmatmul.mubr.bf16.gmra.mrb[0].mxu0 %v1511
    %v1547 = vpop.f32.mrb[0].mxu0
    %v1548 = vadd.f32 %v1496, %v1547
    %v1549 = vpop.f32.mrb[0].mxu0
    %v1550 = vpop.f32.mrb[0].mxu0
    %v1551 = vpop.f32.mrb[0].mxu0
    %1552 = vdwg.mxu0
    %v1553 = vsel %vm319, %v1459, 0.0
    %1554 = vadd.xlane.f32.xlu0 %v1553
    %v1555 = vpop.xlane.xlu0 %1554
    %v1556 = vsel %vm319, %v1460, 0.0
    %1557 = vadd.xlane.f32.xlu0 %v1556
    %v1558 = vpop.xlane.xlu0 %1557
    %v1559 = vsel %vm319, %v1461, 0.0
    %1560 = vadd.xlane.f32.xlu0 %v1559
    %v1561 = vpop.xlane.xlu0 %1560
    %v1562 = vsel %vm319, %v1462, 0.0
    %1563 = vadd.xlane.f32.xlu0 %v1562
    %v1564 = vpop.xlane.xlu0 %1563
    %v1565 = vmul.f32 %v1555, %v332
    %v1566 = vmul.f32 %v1558, %v332
    %v1567 = vmul.f32 %v1561, %v332
    %v1568 = vmul.f32 %v1564, %v332
    %v1569 = vsub.f32 %v1459, %v1565
    %v1570 = vsub.f32 %v1460, %v1566
    %v1571 = vsub.f32 %v1461, %v1567
    %v1572 = vsub.f32 %v1462, %v1568
    %v1573 = vmul.f32 %v1569, %v1569
    %v1574 = vmul.f32 %v1570, %v1570
    %v1575 = vmul.f32 %v1571, %v1571
    %v1576 = vmul.f32 %v1572, %v1572
    %v1577 = vsel %vm319, %v1573, 0.0
    %1578 = vadd.xlane.f32.xlu0 %v1577
    %v1579 = vpop.xlane.xlu0 %1578
    %v1580 = vsel %vm319, %v1574, 0.0
    %1581 = vadd.xlane.f32.xlu0 %v1580
    %v1582 = vpop.xlane.xlu0 %1581
    %v1583 = vsel %vm319, %v1575, 0.0
    %1584 = vadd.xlane.f32.xlu0 %v1583
    %v1585 = vpop.xlane.xlu0 %1584
    %v1586 = vsel %vm319, %v1576, 0.0
    %1587 = vadd.xlane.f32.xlu0 %v1586
    %v1588 = vpop.xlane.xlu0 %1587
    %v1589 = vmul.f32 %v1579, %v332
    %v1590 = vmul.f32 %v1582, %v332
    %v1591 = vmul.f32 %v1585, %v332
    %v1592 = vmul.f32 %v1588, %v332
    %v1593 = vadd.f32 %v1589, 1e-05
    %v1594 = vadd.f32 %v1590, 1e-05
    %v1595 = vadd.f32 %v1591, 1e-05
    %v1596 = vadd.f32 %v1592, 1e-05
    %v1597 = vrsqrt.pop %v1593
    %v1598 = vrsqrt.pop %v1594
    %v1599 = vrsqrt.pop %v1595
    %v1600 = vrsqrt.pop %v1596
    %v1601 = vmul.f32 %v1569, %v1597
    %v1602 = vmul.f32 %v1570, %v1598
    %v1603 = vmul.f32 %v1571, %v1599
    %v1604 = vmul.f32 %v1572, %v1600
    %v1606 = vlaneseq
    %v1607 = vshrl.u32 %v1606, 7
    %v1608 = vsub.s32 0, %v1607
    %v1609 = vrot.slane %v269, %v1608
    %v1611 = vmul.f32 %v1601, %v1609
    %v1612 = vmul.f32 %v1602, %v1609
    %v1613 = vmul.f32 %v1603, %v1609
    %v1614 = vmul.f32 %v1604, %v1609
    %v1616 = vlaneseq
    %v1617 = vshrl.u32 %v1616, 7
    %v1618 = vsub.s32 0, %v1617
    %v1619 = vrot.slane %v270, %v1618
    %v1621 = vadd.f32 %v1611, %v1619
    %v1622 = vadd.f32 %v1612, %v1619
    %v1623 = vadd.f32 %v1613, %v1619
    %v1624 = vadd.f32 %v1614, %v1619
    %v1625 = vpack.c.bf16 %v1622, %v1621
    %v1626 = vpack.c.bf16 %v1624, %v1623
    %v1628 = vlaneseq
    %v1629 = vshrl.u32 %v1628, 7
    %v1630 = vsub.s32 0, %v1629
    %v1631 = vrot.slane %v280, %v1630
    %v1637 = vunpack.c.l.b16 %v276
    %v1638 = vunpack.c.l.b16 %v277
    %v1639 = vunpack.c.l.b16 %v278
    %v1640 = vunpack.c.l.b16 %v279
    %v1641 = vpack.c.b16 %v1638, %v1637
    %v1642 = vpack.c.b16 %v1640, %v1639
    %v1646 = vsel %vm319, %v1625, 0
    %v1649 = vsel %vm319, %v1626, 0
    %1651 = vmatprep.subr.bf16.mxu0 0
    %1652 = vmatpush1.bf16.msra.mxu0 %v1641
    %1653 = vmatprep.subr.bf16.mxu0 0
    %1654 = vmatpush1.bf16.msra.mxu0 %v1642
    %1655 = vmatprep.subr.bf16.mxu0 0
    %1656 = vmatpush1.bf16.msra.mxu0 0
    %1657 = vmatprep.subr.bf16.mxu0 0
    %1658 = vmatpush1.bf16.msra.mxu0 0
    %1659 = vmatprep.subr.bf16.mxu0 0
    %1660 = vmatpush1.bf16.msra.mxu0 0
    %1661 = vmatprep.subr.bf16.mxu0 0
    %1662 = vmatpush1.bf16.msra.mxu0 0
    %1663 = vmatprep.subr.bf16.mxu0 0
    %1664 = vmatpush1.bf16.msra.mxu0 0
    %1665 = vmatprep.subr.bf16.mxu0 0
    %1666 = vmatpush1.bf16.msra.mxu0 0
    %1667 = vmatprep.subr.bf16.mxu0 0
    %1668 = vmatpush1.bf16.msra.mxu0 0
    %1669 = vmatprep.subr.bf16.mxu0 0
    %1670 = vmatpush1.bf16.msra.mxu0 0
    %1671 = vmatprep.subr.bf16.mxu0 0
    %1672 = vmatpush1.bf16.msra.mxu0 0
    %1673 = vmatprep.subr.bf16.mxu0 0
    %1674 = vmatpush1.bf16.msra.mxu0 0
    %1675 = vmatprep.subr.bf16.mxu0 0
    %1676 = vmatpush1.bf16.msra.mxu0 0
    %1677 = vmatprep.subr.bf16.mxu0 0
    %1678 = vmatpush1.bf16.msra.mxu0 0
    %1679 = vmatprep.subr.bf16.mxu0 0
    %1680 = vmatpush1.bf16.msra.mxu0 0
    %1681 = vmatprep.subr.bf16.mxu0 0
    %1682 = vmatpush1.bf16.msra.mxu0 0
    %1683 = vmatprep.mubr.bf16.mxu0 0
    %1684 = vmatmul.mubr.bf16.gmra.mrb[0].mxu0 %v1646
    %v1685 = vpop.f32.mrb[0].mxu0
    %v1686 = vadd.f32 %v1631, %v1685
    %v1687 = vpop.f32.mrb[0].mxu0
    %v1688 = vpop.f32.mrb[0].mxu0
    %v1689 = vadd.f32 %v1631, %v1688
    %v1690 = vpop.f32.mrb[0].mxu0
    %1691 = vmatprep.mubr.bf16.mxu0 0
    %1692 = vmatmul.mubr.bf16.gmra.mrb[0].mxu0 %v1649
    %v1693 = vpop.f32.mrb[0].mxu0
    %v1694 = vadd.f32 %v1631, %v1693
    %v1695 = vpop.f32.mrb[0].mxu0
    %v1696 = vpop.f32.mrb[0].mxu0
    %v1697 = vadd.f32 %v1631, %v1696
    %v1698 = vpop.f32.mrb[0].mxu0
    %1699 = vdwg.mxu0
    %v1701 = vlaneseq
    %v1702 = vshrl.u32 %v1701, 7
    %v1703 = vsub.s32 0, %v1702
    %v1704 = vrot.slane %v285, %v1703
    %v1710 = vunpack.c.l.b16 %v281
    %v1711 = vunpack.c.l.b16 %v282
    %v1712 = vunpack.c.l.b16 %v283
    %v1713 = vunpack.c.l.b16 %v284
    %v1714 = vpack.c.b16 %v1711, %v1710
    %v1715 = vpack.c.b16 %v1713, %v1712
    %1718 = vmatprep.subr.bf16.mxu0 0
    %1719 = vmatpush1.bf16.msra.mxu0 %v1714
    %1720 = vmatprep.subr.bf16.mxu0 0
    %1721 = vmatpush1.bf16.msra.mxu0 %v1715
    %1722 = vmatprep.subr.bf16.mxu0 0
    %1723 = vmatpush1.bf16.msra.mxu0 0
    %1724 = vmatprep.subr.bf16.mxu0 0
    %1725 = vmatpush1.bf16.msra.mxu0 0
    %1726 = vmatprep.subr.bf16.mxu0 0
    %1727 = vmatpush1.bf16.msra.mxu0 0
    %1728 = vmatprep.subr.bf16.mxu0 0
    %1729 = vmatpush1.bf16.msra.mxu0 0
    %1730 = vmatprep.subr.bf16.mxu0 0
    %1731 = vmatpush1.bf16.msra.mxu0 0
    %1732 = vmatprep.subr.bf16.mxu0 0
    %1733 = vmatpush1.bf16.msra.mxu0 0
    %1734 = vmatprep.subr.bf16.mxu0 0
    %1735 = vmatpush1.bf16.msra.mxu0 0
    %1736 = vmatprep.subr.bf16.mxu0 0
    %1737 = vmatpush1.bf16.msra.mxu0 0
    %1738 = vmatprep.subr.bf16.mxu0 0
    %1739 = vmatpush1.bf16.msra.mxu0 0
    %1740 = vmatprep.subr.bf16.mxu0 0
    %1741 = vmatpush1.bf16.msra.mxu0 0
    %1742 = vmatprep.subr.bf16.mxu0 0
    %1743 = vmatpush1.bf16.msra.mxu0 0
    %1744 = vmatprep.subr.bf16.mxu0 0
    %1745 = vmatpush1.bf16.msra.mxu0 0
    %1746 = vmatprep.subr.bf16.mxu0 0
    %1747 = vmatpush1.bf16.msra.mxu0 0
    %1748 = vmatprep.subr.bf16.mxu0 0
    %1749 = vmatpush1.bf16.msra.mxu0 0
    %1750 = vmatprep.mubr.bf16.mxu0 0
    %1751 = vmatmul.mubr.bf16.gmra.mrb[0].mxu0 %v1646
    %v1752 = vpop.f32.mrb[0].mxu0
    %v1753 = vadd.f32 %v1704, %v1752
    %v1754 = vpop.f32.mrb[0].mxu0
    %v1755 = vpop.f32.mrb[0].mxu0
    %v1756 = vadd.f32 %v1704, %v1755
    %v1757 = vpop.f32.mrb[0].mxu0
    %1758 = vmatprep.mubr.bf16.mxu0 0
    %1759 = vmatmul.mubr.bf16.gmra.mrb[0].mxu0 %v1649
    %v1760 = vpop.f32.mrb[0].mxu0
    %v1761 = vadd.f32 %v1704, %v1760
    %v1762 = vpop.f32.mrb[0].mxu0
    %v1763 = vpop.f32.mrb[0].mxu0
    %v1764 = vadd.f32 %v1704, %v1763
    %v1765 = vpop.f32.mrb[0].mxu0
    %1766 = vdwg.mxu0
    %v1767 = vpack.c.bf16 %v1548, %v1548
    %v1768 = vpack.c.bf16 %v1689, %v1686
    %v1769 = vpack.c.bf16 %v1756, %v1753
    %v1771 = vsel %vm472, %v1767, 0
    %v1774 = vsel %vm472, %v1768, 0
    %1776 = vmatprep.subr.bf16.mxu0 0
    %1777 = vmatpush1.bf16.xpose.msra.mxu0 %v1774
    %1778 = vmatprep.subr.bf16.mxu0 0
    %1779 = vmatpush1.bf16.xpose.msra.mxu0 0
    %1780 = vmatprep.subr.bf16.mxu0 0
    %1781 = vmatpush1.bf16.xpose.msra.mxu0 0
    %1782 = vmatprep.subr.bf16.mxu0 0
    %1783 = vmatpush1.bf16.xpose.msra.mxu0 0
    %1784 = vmatprep.subr.bf16.mxu0 0
    %1785 = vmatpush1.bf16.xpose.msra.mxu0 0
    %1786 = vmatprep.subr.bf16.mxu0 0
    %1787 = vmatpush1.bf16.xpose.msra.mxu0 0
    %1788 = vmatprep.subr.bf16.mxu0 0
    %1789 = vmatpush1.bf16.xpose.msra.mxu0 0
    %1790 = vmatprep.subr.bf16.mxu0 0
    %1791 = vmatpush1.bf16.xpose.msra.mxu0 0
    %1792 = vmatprep.subr.bf16.mxu0 0
    %1793 = vmatpush1.bf16.xpose.msra.mxu0 0
    %1794 = vmatprep.subr.bf16.mxu0 0
    %1795 = vmatpush1.bf16.xpose.msra.mxu0 0
    %1796 = vmatprep.subr.bf16.mxu0 0
    %1797 = vmatpush1.bf16.xpose.msra.mxu0 0
    %1798 = vmatprep.subr.bf16.mxu0 0
    %1799 = vmatpush1.bf16.xpose.msra.mxu0 0
    %1800 = vmatprep.subr.bf16.mxu0 0
    %1801 = vmatpush1.bf16.xpose.msra.mxu0 0
    %1802 = vmatprep.subr.bf16.mxu0 0
    %1803 = vmatpush1.bf16.xpose.msra.mxu0 0
    %1804 = vmatprep.subr.bf16.mxu0 0
    %1805 = vmatpush1.bf16.xpose.msra.mxu0 0
    %1806 = vmatprep.subr.bf16.mxu0 0
    %1807 = vmatpush1.bf16.xpose.msra.mxu0 0
    %1808 = vmatprep.mubr.bf16.mxu0 0
    %1809 = vmatmul.mubr.bf16.gmra.mrb[0].mxu0 %v1771
    %v1810 = vpop.f32.mrb[0].mxu0
    %v1811 = vadd.f32 0.0, %v1810
    %v1812 = vpop.f32.mrb[0].mxu0
    %v1813 = vpop.f32.mrb[0].mxu0
    %v1814 = vpop.f32.mrb[0].mxu0
    %1815 = vdwg.mxu0
    %v1816 = vmul.f32 %v1811, 0.25
    %v1817 = vsel %vm472, %v1816, -inf
    %1818 = vmax.xlane.f32.xlu0 %v1817
    %v1819 = vpop.xlane.xlu0 %1818
    %v1820 = vsub.f32 %v1816, %v1819
    %v1821 = vmul.f32 %v1820, 1.442695
    %v1822 = vpow.pop %v1821
    %v1823 = vsel %vm472, %v1822, 0.0
    %1824 = vadd.xlane.f32.xlu0 %v1823
    %v1825 = vpop.xlane.xlu0 %1824
    %v1826 = vrcp.pop %v1825
    %v1827 = vmul.f32 %v1822, %v1826
    %v1828 = vpack.c.bf16 %v1827, %v1827
    %v1830 = vsel %vm472, %v1828, 0
    %1832 = vmatprep.subr.bf16.mxu0 0
    %1833 = vmatpush1.bf16.msra.mxu0 %v1769
    %1834 = vmatprep.subr.bf16.mxu0 0
    %1835 = vmatpush1.bf16.msra.mxu0 0
    %1836 = vmatprep.subr.bf16.mxu0 0
    %1837 = vmatpush1.bf16.msra.mxu0 0
    %1838 = vmatprep.subr.bf16.mxu0 0
    %1839 = vmatpush1.bf16.msra.mxu0 0
    %1840 = vmatprep.subr.bf16.mxu0 0
    %1841 = vmatpush1.bf16.msra.mxu0 0
    %1842 = vmatprep.subr.bf16.mxu0 0
    %1843 = vmatpush1.bf16.msra.mxu0 0
    %1844 = vmatprep.subr.bf16.mxu0 0
    %1845 = vmatpush1.bf16.msra.mxu0 0
    %1846 = vmatprep.subr.bf16.mxu0 0
    %1847 = vmatpush1.bf16.msra.mxu0 0
    %1848 = vmatprep.subr.bf16.mxu0 0
    %1849 = vmatpush1.bf16.msra.mxu0 0
    %1850 = vmatprep.subr.bf16.mxu0 0
    %1851 = vmatpush1.bf16.msra.mxu0 0
    %1852 = vmatprep.subr.bf16.mxu0 0
    %1853 = vmatpush1.bf16.msra.mxu0 0
    %1854 = vmatprep.subr.bf16.mxu0 0
    %1855 = vmatpush1.bf16.msra.mxu0 0
    %1856 = vmatprep.subr.bf16.mxu0 0
    %1857 = vmatpush1.bf16.msra.mxu0 0
    %1858 = vmatprep.subr.bf16.mxu0 0
    %1859 = vmatpush1.bf16.msra.mxu0 0
    %1860 = vmatprep.subr.bf16.mxu0 0
    %1861 = vmatpush1.bf16.msra.mxu0 0
    %1862 = vmatprep.subr.bf16.mxu0 0
    %1863 = vmatpush1.bf16.msra.mxu0 0
    %1864 = vmatprep.mubr.bf16.mxu0 0
    %1865 = vmatmul.mubr.bf16.gmra.mrb[0].mxu0 %v1830
    %v1866 = vpop.f32.mrb[0].mxu0
    %v1867 = vadd.f32 0.0, %v1866
    %v1868 = vpop.f32.mrb[0].mxu0
    %v1869 = vpop.f32.mrb[0].mxu0
    %v1870 = vpop.f32.mrb[0].mxu0
    %1871 = vdwg.mxu0
    %v1872 = vpack.c.bf16 %v1867, %v1867
    %1874 = vrot.lane.b32.xlu0 %v1767, 112
    %v1875 = vpop.permute.xlu0 %1874
    %1877 = vrot.lane.b32.xlu0 %v1768, 112
    %v1878 = vpop.permute.xlu0 %1877
    %v1880 = vsel %vm472, %v1875, 0
    %v1883 = vsel %vm472, %v1878, 0
    %1885 = vmatprep.subr.bf16.mxu0 0
    %1886 = vmatpush1.bf16.xpose.msra.mxu0 %v1883
    %1887 = vmatprep.subr.bf16.mxu0 0
    %1888 = vmatpush1.bf16.xpose.msra.mxu0 0
    %1889 = vmatprep.subr.bf16.mxu0 0
    %1890 = vmatpush1.bf16.xpose.msra.mxu0 0
    %1891 = vmatprep.subr.bf16.mxu0 0
    %1892 = vmatpush1.bf16.xpose.msra.mxu0 0
    %1893 = vmatprep.subr.bf16.mxu0 0
    %1894 = vmatpush1.bf16.xpose.msra.mxu0 0
    %1895 = vmatprep.subr.bf16.mxu0 0
    %1896 = vmatpush1.bf16.xpose.msra.mxu0 0
    %1897 = vmatprep.subr.bf16.mxu0 0
    %1898 = vmatpush1.bf16.xpose.msra.mxu0 0
    %1899 = vmatprep.subr.bf16.mxu0 0
    %1900 = vmatpush1.bf16.xpose.msra.mxu0 0
    %1901 = vmatprep.subr.bf16.mxu0 0
    %1902 = vmatpush1.bf16.xpose.msra.mxu0 0
    %1903 = vmatprep.subr.bf16.mxu0 0
    %1904 = vmatpush1.bf16.xpose.msra.mxu0 0
    %1905 = vmatprep.subr.bf16.mxu0 0
    %1906 = vmatpush1.bf16.xpose.msra.mxu0 0
    %1907 = vmatprep.subr.bf16.mxu0 0
    %1908 = vmatpush1.bf16.xpose.msra.mxu0 0
    %1909 = vmatprep.subr.bf16.mxu0 0
    %1910 = vmatpush1.bf16.xpose.msra.mxu0 0
    %1911 = vmatprep.subr.bf16.mxu0 0
    %1912 = vmatpush1.bf16.xpose.msra.mxu0 0
    %1913 = vmatprep.subr.bf16.mxu0 0
    %1914 = vmatpush1.bf16.xpose.msra.mxu0 0
    %1915 = vmatprep.subr.bf16.mxu0 0
    %1916 = vmatpush1.bf16.xpose.msra.mxu0 0
    %1917 = vmatprep.mubr.bf16.mxu0 0
    %1918 = vmatmul.mubr.bf16.gmra.mrb[0].mxu0 %v1880
    %v1919 = vpop.f32.mrb[0].mxu0
    %v1920 = vadd.f32 0.0, %v1919
    %v1921 = vpop.f32.mrb[0].mxu0
    %v1922 = vpop.f32.mrb[0].mxu0
    %v1923 = vpop.f32.mrb[0].mxu0
    %1924 = vdwg.mxu0
    %v1925 = vmul.f32 %v1920, 0.25
    %v1926 = vsel %vm472, %v1925, -inf
    %1927 = vmax.xlane.f32.xlu0 %v1926
    %v1928 = vpop.xlane.xlu0 %1927
    %v1929 = vsub.f32 %v1925, %v1928
    %v1930 = vmul.f32 %v1929, 1.442695
    %v1931 = vpow.pop %v1930
    %v1932 = vsel %vm472, %v1931, 0.0
    %1933 = vadd.xlane.f32.xlu0 %v1932
    %v1934 = vpop.xlane.xlu0 %1933
    %v1935 = vrcp.pop %v1934
    %v1936 = vmul.f32 %v1931, %v1935
    %v1937 = vpack.c.bf16 %v1936, %v1936
    %1939 = vrot.lane.b32.xlu0 %v1769, 112
    %v1940 = vpop.permute.xlu0 %1939
    %v1943 = vsel %vm472, %v1937, 0
    %1945 = vmatprep.subr.bf16.mxu0 0
    %1946 = vmatpush1.bf16.msra.mxu0 %v1940
    %1947 = vmatprep.subr.bf16.mxu0 0
    %1948 = vmatpush1.bf16.msra.mxu0 0
    %1949 = vmatprep.subr.bf16.mxu0 0
    %1950 = vmatpush1.bf16.msra.mxu0 0
    %1951 = vmatprep.subr.bf16.mxu0 0
    %1952 = vmatpush1.bf16.msra.mxu0 0
    %1953 = vmatprep.subr.bf16.mxu0 0
    %1954 = vmatpush1.bf16.msra.mxu0 0
    %1955 = vmatprep.subr.bf16.mxu0 0
    %1956 = vmatpush1.bf16.msra.mxu0 0
    %1957 = vmatprep.subr.bf16.mxu0 0
    %1958 = vmatpush1.bf16.msra.mxu0 0
    %1959 = vmatprep.subr.bf16.mxu0 0
    %1960 = vmatpush1.bf16.msra.mxu0 0
    %1961 = vmatprep.subr.bf16.mxu0 0
    %1962 = vmatpush1.bf16.msra.mxu0 0
    %1963 = vmatprep.subr.bf16.mxu0 0
    %1964 = vmatpush1.bf16.msra.mxu0 0
    %1965 = vmatprep.subr.bf16.mxu0 0
    %1966 = vmatpush1.bf16.msra.mxu0 0
    %1967 = vmatprep.subr.bf16.mxu0 0
    %1968 = vmatpush1.bf16.msra.mxu0 0
    %1969 = vmatprep.subr.bf16.mxu0 0
    %1970 = vmatpush1.bf16.msra.mxu0 0
    %1971 = vmatprep.subr.bf16.mxu0 0
    %1972 = vmatpush1.bf16.msra.mxu0 0
    %1973 = vmatprep.subr.bf16.mxu0 0
    %1974 = vmatpush1.bf16.msra.mxu0 0
    %1975 = vmatprep.subr.bf16.mxu0 0
    %1976 = vmatpush1.bf16.msra.mxu0 0
    %1977 = vmatprep.mubr.bf16.mxu0 0
    %1978 = vmatmul.mubr.bf16.gmra.mrb[0].mxu0 %v1943
    %v1979 = vpop.f32.mrb[0].mxu0
    %v1980 = vadd.f32 0.0, %v1979
    %v1981 = vpop.f32.mrb[0].mxu0
    %v1982 = vpop.f32.mrb[0].mxu0
    %v1983 = vpop.f32.mrb[0].mxu0
    %1984 = vdwg.mxu0
    %v1985 = vpack.c.bf16 %v1980, %v1980
    %v1988 = vunpack.c.l.b16 %v288
    %v1989 = vunpack.c.l.b16 %v289
    %v1990 = vpack.c.b16 %v1989, %v1988
    %v1993 = vsel %vm472, %v1985, 0
    %1995 = vmatprep.subr.bf16.mxu0 0
    %1996 = vmatpush1.bf16.msra.mxu0 %v1990
    %1997 = vmatprep.subr.bf16.mxu0 0
    %1998 = vmatpush1.bf16.msra.mxu0 0
    %1999 = vmatprep.subr.bf16.mxu0 0
    %2000 = vmatpush1.bf16.msra.mxu0 0
    %2001 = vmatprep.subr.bf16.mxu0 0
    %2002 = vmatpush1.bf16.msra.mxu0 0
    %2003 = vmatprep.subr.bf16.mxu0 0
    %2004 = vmatpush1.bf16.msra.mxu0 0
    %2005 = vmatprep.subr.bf16.mxu0 0
    %2006 = vmatpush1.bf16.msra.mxu0 0
    %2007 = vmatprep.subr.bf16.mxu0 0
    %2008 = vmatpush1.bf16.msra.mxu0 0
    %2009 = vmatprep.subr.bf16.mxu0 0
    %2010 = vmatpush1.bf16.msra.mxu0 0
    %2011 = vmatprep.subr.bf16.mxu0 0
    %2012 = vmatpush1.bf16.msra.mxu0 0
    %2013 = vmatprep.subr.bf16.mxu0 0
    %2014 = vmatpush1.bf16.msra.mxu0 0
    %2015 = vmatprep.subr.bf16.mxu0 0
    %2016 = vmatpush1.bf16.msra.mxu0 0
    %2017 = vmatprep.subr.bf16.mxu0 0
    %2018 = vmatpush1.bf16.msra.mxu0 0
    %2019 = vmatprep.subr.bf16.mxu0 0
    %2020 = vmatpush1.bf16.msra.mxu0 0
    %2021 = vmatprep.subr.bf16.mxu0 0
    %2022 = vmatpush1.bf16.msra.mxu0 0
    %2023 = vmatprep.subr.bf16.mxu0 0
    %2024 = vmatpush1.bf16.msra.mxu0 0
    %2025 = vmatprep.subr.bf16.mxu0 0
    %2026 = vmatpush1.bf16.msra.mxu0 0
    %2027 = vmatprep.mubr.bf16.mxu0 0
    %2028 = vmatmul.mubr.bf16.gmra.mrb[0].mxu0 %v1993
    %v2029 = vpop.f32.mrb[0].mxu0
    %v2030 = vadd.f32 0.0, %v2029
    %v2031 = vpop.f32.mrb[0].mxu0
    %v2032 = vpop.f32.mrb[0].mxu0
    %v2033 = vpop.f32.mrb[0].mxu0
    %2034 = vdwg.mxu0
    %v2037 = vunpack.c.l.b16 %v286
    %v2038 = vunpack.c.l.b16 %v287
    %v2039 = vpack.c.b16 %v2038, %v2037
    %v2042 = vsel %vm472, %v1872, 0
    %2044 = vmatprep.subr.bf16.mxu0 0
    %2045 = vmatpush1.bf16.msra.mxu0 %v2039
    %2046 = vmatprep.subr.bf16.mxu0 0
    %2047 = vmatpush1.bf16.msra.mxu0 0
    %2048 = vmatprep.subr.bf16.mxu0 0
    %2049 = vmatpush1.bf16.msra.mxu0 0
    %2050 = vmatprep.subr.bf16.mxu0 0
    %2051 = vmatpush1.bf16.msra.mxu0 0
    %2052 = vmatprep.subr.bf16.mxu0 0
    %2053 = vmatpush1.bf16.msra.mxu0 0
    %2054 = vmatprep.subr.bf16.mxu0 0
    %2055 = vmatpush1.bf16.msra.mxu0 0
    %2056 = vmatprep.subr.bf16.mxu0 0
    %2057 = vmatpush1.bf16.msra.mxu0 0
    %2058 = vmatprep.subr.bf16.mxu0 0
    %2059 = vmatpush1.bf16.msra.mxu0 0
    %2060 = vmatprep.subr.bf16.mxu0 0
    %2061 = vmatpush1.bf16.msra.mxu0 0
    %2062 = vmatprep.subr.bf16.mxu0 0
    %2063 = vmatpush1.bf16.msra.mxu0 0
    %2064 = vmatprep.subr.bf16.mxu0 0
    %2065 = vmatpush1.bf16.msra.mxu0 0
    %2066 = vmatprep.subr.bf16.mxu0 0
    %2067 = vmatpush1.bf16.msra.mxu0 0
    %2068 = vmatprep.subr.bf16.mxu0 0
    %2069 = vmatpush1.bf16.msra.mxu0 0
    %2070 = vmatprep.subr.bf16.mxu0 0
    %2071 = vmatpush1.bf16.msra.mxu0 0
    %2072 = vmatprep.subr.bf16.mxu0 0
    %2073 = vmatpush1.bf16.msra.mxu0 0
    %2074 = vmatprep.subr.bf16.mxu0 0
    %2075 = vmatpush1.bf16.msra.mxu0 0
    %2076 = vmatprep.mubr.bf16.mxu0 0
    %2077 = vmatmul.mubr.bf16.gmra.mrb[0].mxu0 %v2042
    %v2078 = vpop.f32.mrb[0].mxu0
    %v2079 = vadd.f32 %v2030, %v2078
    %v2080 = vpop.f32.mrb[0].mxu0
    %v2081 = vpop.f32.mrb[0].mxu0
    %v2082 = vpop.f32.mrb[0].mxu0
    %2083 = vdwg.mxu0
    %v2084 = vadd.f32 %v1463, %v2079
    %v2086 = vlaneseq
    %v2087 = vshrl.u32 %v2086, 7
    %v2088 = vsub.s32 0, %v2087
    %v2089 = vrot.slane %v290, %v2088
    %v2091 = vadd.f32 %v2084, %v2089
    %v2092 = vpack.c.bf16 %v1697, %v1694
    %v2093 = vpack.c.bf16 %v1764, %v1761
    %v2095 = vsel %vm472, %v2092, 0
    %2097 = vmatprep.subr.bf16.mxu0 0
    %2098 = vmatpush1.bf16.xpose.msra.mxu0 %v2095
    %2099 = vmatprep.subr.bf16.mxu0 0
    %2100 = vmatpush1.bf16.xpose.msra.mxu0 0
    %2101 = vmatprep.subr.bf16.mxu0 0
    %2102 = vmatpush1.bf16.xpose.msra.mxu0 0
    %2103 = vmatprep.subr.bf16.mxu0 0
    %2104 = vmatpush1.bf16.xpose.msra.mxu0 0
    %2105 = vmatprep.subr.bf16.mxu0 0
    %2106 = vmatpush1.bf16.xpose.msra.mxu0 0
    %2107 = vmatprep.subr.bf16.mxu0 0
    %2108 = vmatpush1.bf16.xpose.msra.mxu0 0
    %2109 = vmatprep.subr.bf16.mxu0 0
    %2110 = vmatpush1.bf16.xpose.msra.mxu0 0
    %2111 = vmatprep.subr.bf16.mxu0 0
    %2112 = vmatpush1.bf16.xpose.msra.mxu0 0
    %2113 = vmatprep.subr.bf16.mxu0 0
    %2114 = vmatpush1.bf16.xpose.msra.mxu0 0
    %2115 = vmatprep.subr.bf16.mxu0 0
    %2116 = vmatpush1.bf16.xpose.msra.mxu0 0
    %2117 = vmatprep.subr.bf16.mxu0 0
    %2118 = vmatpush1.bf16.xpose.msra.mxu0 0
    %2119 = vmatprep.subr.bf16.mxu0 0
    %2120 = vmatpush1.bf16.xpose.msra.mxu0 0
    %2121 = vmatprep.subr.bf16.mxu0 0
    %2122 = vmatpush1.bf16.xpose.msra.mxu0 0
    %2123 = vmatprep.subr.bf16.mxu0 0
    %2124 = vmatpush1.bf16.xpose.msra.mxu0 0
    %2125 = vmatprep.subr.bf16.mxu0 0
    %2126 = vmatpush1.bf16.xpose.msra.mxu0 0
    %2127 = vmatprep.subr.bf16.mxu0 0
    %2128 = vmatpush1.bf16.xpose.msra.mxu0 0
    %2129 = vmatprep.mubr.bf16.mxu0 0
    %2130 = vmatmul.mubr.bf16.gmra.mrb[0].mxu0 %v1771
    %v2131 = vpop.f32.mrb[0].mxu0
    %v2132 = vadd.f32 0.0, %v2131
    %v2133 = vpop.f32.mrb[0].mxu0
    %v2134 = vpop.f32.mrb[0].mxu0
    %v2135 = vpop.f32.mrb[0].mxu0
    %2136 = vdwg.mxu0
    %v2137 = vmul.f32 %v2132, 0.25
    %v2138 = vsel %vm472, %v2137, -inf
    %2139 = vmax.xlane.f32.xlu0 %v2138
    %v2140 = vpop.xlane.xlu0 %2139
    %v2141 = vsub.f32 %v2137, %v2140
    %v2142 = vmul.f32 %v2141, 1.442695
    %v2143 = vpow.pop %v2142
    %v2144 = vsel %vm472, %v2143, 0.0
    %2145 = vadd.xlane.f32.xlu0 %v2144
    %v2146 = vpop.xlane.xlu0 %2145
    %v2147 = vrcp.pop %v2146
    %v2148 = vmul.f32 %v2143, %v2147
    %v2149 = vpack.c.bf16 %v2148, %v2148
    %v2151 = vsel %vm472, %v2149, 0
    %2153 = vmatprep.subr.bf16.mxu0 0
    %2154 = vmatpush1.bf16.msra.mxu0 %v2093
    %2155 = vmatprep.subr.bf16.mxu0 0
    %2156 = vmatpush1.bf16.msra.mxu0 0
    %2157 = vmatprep.subr.bf16.mxu0 0
    %2158 = vmatpush1.bf16.msra.mxu0 0
    %2159 = vmatprep.subr.bf16.mxu0 0
    %2160 = vmatpush1.bf16.msra.mxu0 0
    %2161 = vmatprep.subr.bf16.mxu0 0
    %2162 = vmatpush1.bf16.msra.mxu0 0
    %2163 = vmatprep.subr.bf16.mxu0 0
    %2164 = vmatpush1.bf16.msra.mxu0 0
    %2165 = vmatprep.subr.bf16.mxu0 0
    %2166 = vmatpush1.bf16.msra.mxu0 0
    %2167 = vmatprep.subr.bf16.mxu0 0
    %2168 = vmatpush1.bf16.msra.mxu0 0
    %2169 = vmatprep.subr.bf16.mxu0 0
    %2170 = vmatpush1.bf16.msra.mxu0 0
    %2171 = vmatprep.subr.bf16.mxu0 0
    %2172 = vmatpush1.bf16.msra.mxu0 0
    %2173 = vmatprep.subr.bf16.mxu0 0
    %2174 = vmatpush1.bf16.msra.mxu0 0
    %2175 = vmatprep.subr.bf16.mxu0 0
    %2176 = vmatpush1.bf16.msra.mxu0 0
    %2177 = vmatprep.subr.bf16.mxu0 0
    %2178 = vmatpush1.bf16.msra.mxu0 0
    %2179 = vmatprep.subr.bf16.mxu0 0
    %2180 = vmatpush1.bf16.msra.mxu0 0
    %2181 = vmatprep.subr.bf16.mxu0 0
    %2182 = vmatpush1.bf16.msra.mxu0 0
    %2183 = vmatprep.subr.bf16.mxu0 0
    %2184 = vmatpush1.bf16.msra.mxu0 0
    %2185 = vmatprep.mubr.bf16.mxu0 0
    %2186 = vmatmul.mubr.bf16.gmra.mrb[0].mxu0 %v2151
    %v2187 = vpop.f32.mrb[0].mxu0
    %v2188 = vadd.f32 0.0, %v2187
    %v2189 = vpop.f32.mrb[0].mxu0
    %v2190 = vpop.f32.mrb[0].mxu0
    %v2191 = vpop.f32.mrb[0].mxu0
    %2192 = vdwg.mxu0
    %v2193 = vpack.c.bf16 %v2188, %v2188
    %2195 = vrot.lane.b32.xlu0 %v2092, 112
    %v2196 = vpop.permute.xlu0 %2195
    %v2198 = vsel %vm472, %v2196, 0
    %2200 = vmatprep.subr.bf16.mxu0 0
    %2201 = vmatpush1.bf16.xpose.msra.mxu0 %v2198
    %2202 = vmatprep.subr.bf16.mxu0 0
    %2203 = vmatpush1.bf16.xpose.msra.mxu0 0
    %2204 = vmatprep.subr.bf16.mxu0 0
    %2205 = vmatpush1.bf16.xpose.msra.mxu0 0
    %2206 = vmatprep.subr.bf16.mxu0 0
    %2207 = vmatpush1.bf16.xpose.msra.mxu0 0
    %2208 = vmatprep.subr.bf16.mxu0 0
    %2209 = vmatpush1.bf16.xpose.msra.mxu0 0
    %2210 = vmatprep.subr.bf16.mxu0 0
    %2211 = vmatpush1.bf16.xpose.msra.mxu0 0
    %2212 = vmatprep.subr.bf16.mxu0 0
    %2213 = vmatpush1.bf16.xpose.msra.mxu0 0
    %2214 = vmatprep.subr.bf16.mxu0 0
    %2215 = vmatpush1.bf16.xpose.msra.mxu0 0
    %2216 = vmatprep.subr.bf16.mxu0 0
    %2217 = vmatpush1.bf16.xpose.msra.mxu0 0
    %2218 = vmatprep.subr.bf16.mxu0 0
    %2219 = vmatpush1.bf16.xpose.msra.mxu0 0
    %2220 = vmatprep.subr.bf16.mxu0 0
    %2221 = vmatpush1.bf16.xpose.msra.mxu0 0
    %2222 = vmatprep.subr.bf16.mxu0 0
    %2223 = vmatpush1.bf16.xpose.msra.mxu0 0
    %2224 = vmatprep.subr.bf16.mxu0 0
    %2225 = vmatpush1.bf16.xpose.msra.mxu0 0
    %2226 = vmatprep.subr.bf16.mxu0 0
    %2227 = vmatpush1.bf16.xpose.msra.mxu0 0
    %2228 = vmatprep.subr.bf16.mxu0 0
    %2229 = vmatpush1.bf16.xpose.msra.mxu0 0
    %2230 = vmatprep.subr.bf16.mxu0 0
    %2231 = vmatpush1.bf16.xpose.msra.mxu0 0
    %2232 = vmatprep.mubr.bf16.mxu0 0
    %2233 = vmatmul.mubr.bf16.gmra.mrb[0].mxu0 %v1880
    %v2234 = vpop.f32.mrb[0].mxu0
    %v2235 = vadd.f32 0.0, %v2234
    %v2236 = vpop.f32.mrb[0].mxu0
    %v2237 = vpop.f32.mrb[0].mxu0
    %v2238 = vpop.f32.mrb[0].mxu0
    %2239 = vdwg.mxu0
    %v2240 = vmul.f32 %v2235, 0.25
    %v2241 = vsel %vm472, %v2240, -inf
    %2242 = vmax.xlane.f32.xlu0 %v2241
    %v2243 = vpop.xlane.xlu0 %2242
    %v2244 = vsub.f32 %v2240, %v2243
    %v2245 = vmul.f32 %v2244, 1.442695
    %v2246 = vpow.pop %v2245
    %v2247 = vsel %vm472, %v2246, 0.0
    %2248 = vadd.xlane.f32.xlu0 %v2247
    %v2249 = vpop.xlane.xlu0 %2248
    %v2250 = vrcp.pop %v2249
    %v2251 = vmul.f32 %v2246, %v2250
    %v2252 = vpack.c.bf16 %v2251, %v2251
    %2254 = vrot.lane.b32.xlu0 %v2093, 112
    %v2255 = vpop.permute.xlu0 %2254
    %v2258 = vsel %vm472, %v2252, 0
    %2260 = vmatprep.subr.bf16.mxu0 0
    %2261 = vmatpush1.bf16.msra.mxu0 %v2255
    %2262 = vmatprep.subr.bf16.mxu0 0
    %2263 = vmatpush1.bf16.msra.mxu0 0
    %2264 = vmatprep.subr.bf16.mxu0 0
    %2265 = vmatpush1.bf16.msra.mxu0 0
    %2266 = vmatprep.subr.bf16.mxu0 0
    %2267 = vmatpush1.bf16.msra.mxu0 0
    %2268 = vmatprep.subr.bf16.mxu0 0
    %2269 = vmatpush1.bf16.msra.mxu0 0
    %2270 = vmatprep.subr.bf16.mxu0 0
    %2271 = vmatpush1.bf16.msra.mxu0 0
    %2272 = vmatprep.subr.bf16.mxu0 0
    %2273 = vmatpush1.bf16.msra.mxu0 0
    %2274 = vmatprep.subr.bf16.mxu0 0
    %2275 = vmatpush1.bf16.msra.mxu0 0
    %2276 = vmatprep.subr.bf16.mxu0 0
    %2277 = vmatpush1.bf16.msra.mxu0 0
    %2278 = vmatprep.subr.bf16.mxu0 0
    %2279 = vmatpush1.bf16.msra.mxu0 0
    %2280 = vmatprep.subr.bf16.mxu0 0
    %2281 = vmatpush1.bf16.msra.mxu0 0
    %2282 = vmatprep.subr.bf16.mxu0 0
    %2283 = vmatpush1.bf16.msra.mxu0 0
    %2284 = vmatprep.subr.bf16.mxu0 0
    %2285 = vmatpush1.bf16.msra.mxu0 0
    %2286 = vmatprep.subr.bf16.mxu0 0
    %2287 = vmatpush1.bf16.msra.mxu0 0
    %2288 = vmatprep.subr.bf16.mxu0 0
    %2289 = vmatpush1.bf16.msra.mxu0 0
    %2290 = vmatprep.subr.bf16.mxu0 0
    %2291 = vmatpush1.bf16.msra.mxu0 0
    %2292 = vmatprep.mubr.bf16.mxu0 0
    %2293 = vmatmul.mubr.bf16.gmra.mrb[0].mxu0 %v2258
    %v2294 = vpop.f32.mrb[0].mxu0
    %v2295 = vadd.f32 0.0, %v2294
    %v2296 = vpop.f32.mrb[0].mxu0
    %v2297 = vpop.f32.mrb[0].mxu0
    %v2298 = vpop.f32.mrb[0].mxu0
    %2299 = vdwg.mxu0
    %v2300 = vpack.c.bf16 %v2295, %v2295
    %v2302 = vsel %vm472, %v2300, 0
    %2304 = vmatprep.subr.bf16.mxu0 0
    %2305 = vmatpush1.bf16.msra.mxu0 %v1990
    %2306 = vmatprep.subr.bf16.mxu0 0
    %2307 = vmatpush1.bf16.msra.mxu0 0
    %2308 = vmatprep.subr.bf16.mxu0 0
    %2309 = vmatpush1.bf16.msra.mxu0 0
    %2310 = vmatprep.subr.bf16.mxu0 0
    %2311 = vmatpush1.bf16.msra.mxu0 0
    %2312 = vmatprep.subr.bf16.mxu0 0
    %2313 = vmatpush1.bf16.msra.mxu0 0
    %2314 = vmatprep.subr.bf16.mxu0 0
    %2315 = vmatpush1.bf16.msra.mxu0 0
    %2316 = vmatprep.subr.bf16.mxu0 0
    %2317 = vmatpush1.bf16.msra.mxu0 0
    %2318 = vmatprep.subr.bf16.mxu0 0
    %2319 = vmatpush1.bf16.msra.mxu0 0
    %2320 = vmatprep.subr.bf16.mxu0 0
    %2321 = vmatpush1.bf16.msra.mxu0 0
    %2322 = vmatprep.subr.bf16.mxu0 0
    %2323 = vmatpush1.bf16.msra.mxu0 0
    %2324 = vmatprep.subr.bf16.mxu0 0
    %2325 = vmatpush1.bf16.msra.mxu0 0
    %2326 = vmatprep.subr.bf16.mxu0 0
    %2327 = vmatpush1.bf16.msra.mxu0 0
    %2328 = vmatprep.subr.bf16.mxu0 0
    %2329 = vmatpush1.bf16.msra.mxu0 0
    %2330 = vmatprep.subr.bf16.mxu0 0
    %2331 = vmatpush1.bf16.msra.mxu0 0
    %2332 = vmatprep.subr.bf16.mxu0 0
    %2333 = vmatpush1.bf16.msra.mxu0 0
    %2334 = vmatprep.subr.bf16.mxu0 0
    %2335 = vmatpush1.bf16.msra.mxu0 0
    %2336 = vmatprep.mubr.bf16.mxu0 0
    %2337 = vmatmul.mubr.bf16.gmra.mrb[0].mxu0 %v2302
    %v2338 = vpop.f32.mrb[0].mxu0
    %v2339 = vadd.f32 0.0, %v2338
    %v2340 = vpop.f32.mrb[0].mxu0
    %v2341 = vpop.f32.mrb[0].mxu0
    %v2342 = vpop.f32.mrb[0].mxu0
    %2343 = vdwg.mxu0
    %v2345 = vsel %vm472, %v2193, 0
    %2347 = vmatprep.subr.bf16.mxu0 0
    %2348 = vmatpush1.bf16.msra.mxu0 %v2039
    %2349 = vmatprep.subr.bf16.mxu0 0
    %2350 = vmatpush1.bf16.msra.mxu0 0
    %2351 = vmatprep.subr.bf16.mxu0 0
    %2352 = vmatpush1.bf16.msra.mxu0 0
    %2353 = vmatprep.subr.bf16.mxu0 0
    %2354 = vmatpush1.bf16.msra.mxu0 0
    %2355 = vmatprep.subr.bf16.mxu0 0
    %2356 = vmatpush1.bf16.msra.mxu0 0
    %2357 = vmatprep.subr.bf16.mxu0 0
    %2358 = vmatpush1.bf16.msra.mxu0 0
    %2359 = vmatprep.subr.bf16.mxu0 0
    %2360 = vmatpush1.bf16.msra.mxu0 0
    %2361 = vmatprep.subr.bf16.mxu0 0
    %2362 = vmatpush1.bf16.msra.mxu0 0
    %2363 = vmatprep.subr.bf16.mxu0 0
    %2364 = vmatpush1.bf16.msra.mxu0 0
    %2365 = vmatprep.subr.bf16.mxu0 0
    %2366 = vmatpush1.bf16.msra.mxu0 0
    %2367 = vmatprep.subr.bf16.mxu0 0
    %2368 = vmatpush1.bf16.msra.mxu0 0
    %2369 = vmatprep.subr.bf16.mxu0 0
    %2370 = vmatpush1.bf16.msra.mxu0 0
    %2371 = vmatprep.subr.bf16.mxu0 0
    %2372 = vmatpush1.bf16.msra.mxu0 0
    %2373 = vmatprep.subr.bf16.mxu0 0
    %2374 = vmatpush1.bf16.msra.mxu0 0
    %2375 = vmatprep.subr.bf16.mxu0 0
    %2376 = vmatpush1.bf16.msra.mxu0 0
    %2377 = vmatprep.subr.bf16.mxu0 0
    %2378 = vmatpush1.bf16.msra.mxu0 0
    %2379 = vmatprep.mubr.bf16.mxu0 0
    %2380 = vmatmul.mubr.bf16.gmra.mrb[0].mxu0 %v2345
    %v2381 = vpop.f32.mrb[0].mxu0
    %v2382 = vadd.f32 %v2339, %v2381
    %v2383 = vpop.f32.mrb[0].mxu0
    %v2384 = vpop.f32.mrb[0].mxu0
    %v2385 = vpop.f32.mrb[0].mxu0
    %2386 = vdwg.mxu0
    %v2387 = vadd.f32 %v1463, %v2382
    %v2388 = vadd.f32 %v2387, %v2089
    %v2389 = vsel %vm319, %v2091, 0.0
    %2390 = vadd.xlane.f32.xlu0 %v2389
    %v2391 = vpop.xlane.xlu0 %2390
    %v2392 = vsel %vm319, %v2388, 0.0
    %2393 = vadd.xlane.f32.xlu0 %v2392
    %v2394 = vpop.xlane.xlu0 %2393
    %v2395 = vmul.f32 %v2391, %v332
    %v2396 = vmul.f32 %v2394, %v332
    %v2397 = vsub.f32 %v2091, %v2395
    %v2398 = vsub.f32 %v2388, %v2396
    %v2399 = vmul.f32 %v2397, %v2397
    %v2400 = vmul.f32 %v2398, %v2398
    %v2401 = vsel %vm319, %v2399, 0.0
    %2402 = vadd.xlane.f32.xlu0 %v2401
    %v2403 = vpop.xlane.xlu0 %2402
    %v2404 = vsel %vm319, %v2400, 0.0
    %2405 = vadd.xlane.f32.xlu0 %v2404
    %v2406 = vpop.xlane.xlu0 %2405
    %v2407 = vmul.f32 %v2403, %v332
    %v2408 = vmul.f32 %v2406, %v332
    %v2409 = vadd.f32 %v2407, 1e-05
    %v2410 = vadd.f32 %v2408, 1e-05
    %v2411 = vrsqrt.pop %v2409
    %v2412 = vrsqrt.pop %v2410
    %v2413 = vmul.f32 %v2397, %v2411
    %v2414 = vmul.f32 %v2398, %v2412
    %v2416 = vlaneseq
    %v2417 = vshrl.u32 %v2416, 7
    %v2418 = vsub.s32 0, %v2417
    %v2419 = vrot.slane %v291, %v2418
    %v2421 = vmul.f32 %v2413, %v2419
    %v2422 = vmul.f32 %v2414, %v2419
    %v2424 = vlaneseq
    %v2425 = vshrl.u32 %v2424, 7
    %v2426 = vsub.s32 0, %v2425
    %v2427 = vrot.slane %v292, %v2426
    %v2429 = vadd.f32 %v2421, %v2427
    %v2430 = vadd.f32 %v2422, %v2427
    %v2431 = vpack.c.bf16 %v2430, %v2429
    %v2433 = vlaneseq
    %v2434 = vshrl.u32 %v2433, 7
    %v2435 = vsub.s32 0, %v2434
    %v2436 = vrot.slane %v297, %v2435
    %v2442 = vunpack.c.l.b16 %v293
    %v2443 = vunpack.c.l.b16 %v294
    %v2444 = vunpack.c.l.b16 %v295
    %v2445 = vunpack.c.l.b16 %v296
    %v2446 = vpack.c.b16 %v2443, %v2442
    %v2447 = vpack.c.b16 %v2445, %v2444
    %v2451 = vsel %vm319, %v2431, 0
    %2453 = vmatprep.subr.bf16.mxu0 0
    %2454 = vmatpush1.bf16.msra.mxu0 %v2446
    %2455 = vmatprep.subr.bf16.mxu0 0
    %2456 = vmatpush1.bf16.msra.mxu0 %v2447
    %2457 = vmatprep.subr.bf16.mxu0 0
    %2458 = vmatpush1.bf16.msra.mxu0 0
    %2459 = vmatprep.subr.bf16.mxu0 0
    %2460 = vmatpush1.bf16.msra.mxu0 0
    %2461 = vmatprep.subr.bf16.mxu0 0
    %2462 = vmatpush1.bf16.msra.mxu0 0
    %2463 = vmatprep.subr.bf16.mxu0 0
    %2464 = vmatpush1.bf16.msra.mxu0 0
    %2465 = vmatprep.subr.bf16.mxu0 0
    %2466 = vmatpush1.bf16.msra.mxu0 0
    %2467 = vmatprep.subr.bf16.mxu0 0
    %2468 = vmatpush1.bf16.msra.mxu0 0
    %2469 = vmatprep.subr.bf16.mxu0 0
    %2470 = vmatpush1.bf16.msra.mxu0 0
    %2471 = vmatprep.subr.bf16.mxu0 0
    %2472 = vmatpush1.bf16.msra.mxu0 0
    %2473 = vmatprep.subr.bf16.mxu0 0
    %2474 = vmatpush1.bf16.msra.mxu0 0
    %2475 = vmatprep.subr.bf16.mxu0 0
    %2476 = vmatpush1.bf16.msra.mxu0 0
    %2477 = vmatprep.subr.bf16.mxu0 0
    %2478 = vmatpush1.bf16.msra.mxu0 0
    %2479 = vmatprep.subr.bf16.mxu0 0
    %2480 = vmatpush1.bf16.msra.mxu0 0
    %2481 = vmatprep.subr.bf16.mxu0 0
    %2482 = vmatpush1.bf16.msra.mxu0 0
    %2483 = vmatprep.subr.bf16.mxu0 0
    %2484 = vmatpush1.bf16.msra.mxu0 0
    %2485 = vmatprep.mubr.bf16.mxu0 0
    %2486 = vmatmul.mubr.bf16.gmra.mrb[0].mxu0 %v2451
    %v2487 = vpop.f32.mrb[0].mxu0
    %v2488 = vadd.f32 %v2436, %v2487
    %v2489 = vpop.f32.mrb[0].mxu0
    %v2490 = vpop.f32.mrb[0].mxu0
    %v2491 = vadd.f32 %v2436, %v2490
    %v2492 = vpop.f32.mrb[0].mxu0
    %2493 = vdwg.mxu0
    %v2494 = vmul.f32 %v2488, %v2488
    %v2495 = vmul.f32 %v2491, %v2491
    %v2496 = vmul.f32 %v2488, %v2494
    %v2497 = vmul.f32 %v2491, %v2495
    %v2498 = vmul.f32 %v2496, 0.044715
    %v2499 = vmul.f32 %v2497, 0.044715
    %v2500 = vadd.f32 %v2488, %v2498
    %v2501 = vadd.f32 %v2491, %v2499
    %v2502 = vmul.f32 %v2500, 0.7978846
    %v2503 = vmul.f32 %v2501, 0.7978846
    %v2504 = vtanh.pop %v2502
    %v2505 = vtanh.pop %v2503
    %v2506 = vadd.f32 %v2504, 1.0
    %v2507 = vadd.f32 %v2505, 1.0
    %v2508 = vmul.f32 %v2506, 0.5
    %v2509 = vmul.f32 %v2507, 0.5
    %v2510 = vmul.f32 %v2488, %v2508
    %v2511 = vmul.f32 %v2491, %v2509
    %v2512 = vpack.c.bf16 %v2511, %v2510
    %v2529 = vunpack.c.l.b16 %v298
    %v2530 = vunpack.c.l.b16 %v299
    %v2531 = vunpack.c.l.b16 %v300
    %v2532 = vunpack.c.l.b16 %v301
    %v2533 = vunpack.c.l.b16 %v302
    %v2534 = vunpack.c.l.b16 %v303
    %v2535 = vunpack.c.l.b16 %v304
    %v2536 = vunpack.c.l.b16 %v305
    %v2537 = vunpack.c.l.b16 %v306
    %v2538 = vunpack.c.l.b16 %v307
    %v2539 = vunpack.c.l.b16 %v308
    %v2540 = vunpack.c.l.b16 %v309
    %v2541 = vunpack.c.l.b16 %v310
    %v2542 = vunpack.c.l.b16 %v311
    %v2543 = vunpack.c.l.b16 %v312
    %v2544 = vunpack.c.l.b16 %v313
    %v2545 = vpack.c.b16 %v2530, %v2529
    %v2546 = vpack.c.b16 %v2532, %v2531
    %v2547 = vpack.c.b16 %v2534, %v2533
    %v2548 = vpack.c.b16 %v2536, %v2535
    %v2549 = vpack.c.b16 %v2538, %v2537
    %v2550 = vpack.c.b16 %v2540, %v2539
    %v2551 = vpack.c.b16 %v2542, %v2541
    %v2552 = vpack.c.b16 %v2544, %v2543
    %2561 = vmatprep.subr.bf16.mxu0 0
    %2562 = vmatpush1.bf16.msra.mxu0 %v2545
    %2563 = vmatprep.subr.bf16.mxu0 0
    %2564 = vmatpush1.bf16.msra.mxu0 %v2546
    %2565 = vmatprep.subr.bf16.mxu0 0
    %2566 = vmatpush1.bf16.msra.mxu0 %v2547
    %2567 = vmatprep.subr.bf16.mxu0 0
    %2568 = vmatpush1.bf16.msra.mxu0 %v2548
    %2569 = vmatprep.subr.bf16.mxu0 0
    %2570 = vmatpush1.bf16.msra.mxu0 %v2549
    %2571 = vmatprep.subr.bf16.mxu0 0
    %2572 = vmatpush1.bf16.msra.mxu0 %v2550
    %2573 = vmatprep.subr.bf16.mxu0 0
    %2574 = vmatpush1.bf16.msra.mxu0 %v2551
    %2575 = vmatprep.subr.bf16.mxu0 0
    %2576 = vmatpush1.bf16.msra.mxu0 %v2552
    %2577 = vmatprep.subr.bf16.mxu0 0
    %2578 = vmatpush1.bf16.msra.mxu0 0
    %2579 = vmatprep.subr.bf16.mxu0 0
    %2580 = vmatpush1.bf16.msra.mxu0 0
    %2581 = vmatprep.subr.bf16.mxu0 0
    %2582 = vmatpush1.bf16.msra.mxu0 0
    %2583 = vmatprep.subr.bf16.mxu0 0
    %2584 = vmatpush1.bf16.msra.mxu0 0
    %2585 = vmatprep.subr.bf16.mxu0 0
    %2586 = vmatpush1.bf16.msra.mxu0 0
    %2587 = vmatprep.subr.bf16.mxu0 0
    %2588 = vmatpush1.bf16.msra.mxu0 0
    %2589 = vmatprep.subr.bf16.mxu0 0
    %2590 = vmatpush1.bf16.msra.mxu0 0
    %2591 = vmatprep.subr.bf16.mxu0 0
    %2592 = vmatpush1.bf16.msra.mxu0 0
    %2593 = vmatprep.mubr.bf16.mxu0 0
    %2594 = vmatmul.mubr.bf16.gmra.mrb[0].mxu0 %v2512
    %v2595 = vpop.f32.mrb[0].mxu0
    %v2596 = vadd.f32 0.0, %v2595
    %v2597 = vpop.f32.mrb[0].mxu0
    %v2598 = vpop.f32.mrb[0].mxu0
    %v2599 = vadd.f32 0.0, %v2598
    %v2600 = vpop.f32.mrb[0].mxu0
    %2601 = vdwg.mxu0
    %v2602 = vadd.f32 %v2091, %v2596
    %v2603 = vadd.f32 %v2388, %v2599
    %v2605 = vlaneseq
    %v2606 = vshrl.u32 %v2605, 7
    %v2607 = vsub.s32 0, %v2606
    %v2608 = vrot.slane %v314, %v2607
    %v2610 = vadd.f32 %v2602, %v2608
    %v2611 = vadd.f32 %v2603, %v2608
    %v2612 = vld [vmem:[%s65] sm:$0x1]
    %v2613 = vld [vmem:[%s67] sm:$0x1]
    %v2614 = vld [vmem:[%s69] sm:$0xf]
    %v2615 = vld [vmem:[%s69 + $0x4] sm:$0xf]
    %v2616 = vld [vmem:[%s69 + $0x8] sm:$0xf]
    %v2617 = vld [vmem:[%s69 + $0xc] sm:$0xf]
    %v2618 = vld [vmem:[%s71] sm:$0x1]
    %v2619 = vld [vmem:[%s73] sm:$0xf]
    %v2620 = vld [vmem:[%s73 + $0x4] sm:$0xf]
    %v2621 = vld [vmem:[%s73 + $0x8] sm:$0xf]
    %v2622 = vld [vmem:[%s73 + $0xc] sm:$0xf]
    %v2623 = vld [vmem:[%s75] sm:$0x1]
    %v2624 = vld [vmem:[%s77] sm:$0x1]
    %v2625 = vld [vmem:[%s79] sm:$0x1]
    %v2626 = vld [vmem:[%s81] sm:$0xf]
    %v2627 = vld [vmem:[%s81 + $0x4] sm:$0xf]
    %v2628 = vld [vmem:[%s81 + $0x8] sm:$0xf]
    %v2629 = vld [vmem:[%s81 + $0xc] sm:$0xf]
    %v2630 = vld [vmem:[%s83] sm:$0x1]
    %v2631 = vld [vmem:[%s85] sm:$0xf]
    %v2632 = vld [vmem:[%s85 + $0x4] sm:$0xf]
    %v2633 = vld [vmem:[%s85 + $0x8] sm:$0xf]
    %v2634 = vld [vmem:[%s85 + $0xc] sm:$0xf]
    %v2635 = vld [vmem:[%s85 + $0x10] sm:$0xf]
    %v2636 = vld [vmem:[%s85 + $0x14] sm:$0xf]
    %v2637 = vld [vmem:[%s85 + $0x18] sm:$0xf]
    %v2638 = vld [vmem:[%s85 + $0x1c] sm:$0xf]
    %v2639 = vld [vmem:[%s85 + $0x20] sm:$0xf]
    %v2640 = vld [vmem:[%s85 + $0x24] sm:$0xf]
    %v2641 = vld [vmem:[%s85 + $0x28] sm:$0xf]
    %v2642 = vld [vmem:[%s85 + $0x2c] sm:$0xf]
    %v2643 = vld [vmem:[%s85 + $0x30] sm:$0xf]
    %v2644 = vld [vmem:[%s85 + $0x34] sm:$0xf]
    %v2645 = vld [vmem:[%s85 + $0x38] sm:$0xf]
    %v2646 = vld [vmem:[%s85 + $0x3c] sm:$0xf]
    %v2647 = vld [vmem:[%s87] sm:$0x1]
    %v2648 = vsel %vm319, %v2610, 0.0
    %2649 = vadd.xlane.f32.xlu0 %v2648
    %v2650 = vpop.xlane.xlu0 %2649
    %v2651 = vsel %vm319, %v2611, 0.0
    %2652 = vadd.xlane.f32.xlu0 %v2651
    %v2653 = vpop.xlane.xlu0 %2652
    %v2654 = vmul.f32 %v2650, %v332
    %v2655 = vmul.f32 %v2653, %v332
    %v2656 = vsub.f32 %v2610, %v2654
    %v2657 = vsub.f32 %v2611, %v2655
    %v2658 = vmul.f32 %v2656, %v2656
    %v2659 = vmul.f32 %v2657, %v2657
    %v2660 = vsel %vm319, %v2658, 0.0
    %2661 = vadd.xlane.f32.xlu0 %v2660
    %v2662 = vpop.xlane.xlu0 %2661
    %v2663 = vsel %vm319, %v2659, 0.0
    %2664 = vadd.xlane.f32.xlu0 %v2663
    %v2665 = vpop.xlane.xlu0 %2664
    %v2666 = vmul.f32 %v2662, %v332
    %v2667 = vmul.f32 %v2665, %v332
    %v2668 = vadd.f32 %v2666, 1e-05
    %v2669 = vadd.f32 %v2667, 1e-05
    %v2670 = vrsqrt.pop %v2668
    %v2671 = vrsqrt.pop %v2669
    %v2672 = vmul.f32 %v2656, %v2670
    %v2673 = vmul.f32 %v2657, %v2671
    %v2675 = vlaneseq
    %v2676 = vshrl.u32 %v2675, 7
    %v2677 = vsub.s32 0, %v2676
    %v2678 = vrot.slane %v2612, %v2677
    %v2680 = vmul.f32 %v2672, %v2678
    %v2681 = vmul.f32 %v2673, %v2678
    %v2683 = vlaneseq
    %v2684 = vshrl.u32 %v2683, 7
    %v2685 = vsub.s32 0, %v2684
    %v2686 = vrot.slane %v2613, %v2685
    %v2688 = vadd.f32 %v2680, %v2686
    %v2689 = vadd.f32 %v2681, %v2686
    %v2690 = vpack.c.bf16 %v2689, %v2688
    %v2692 = vlaneseq
    %v2693 = vshrl.u32 %v2692, 7
    %v2694 = vsub.s32 0, %v2693
    %v2695 = vrot.slane %v2618, %v2694
    %v2701 = vunpack.c.l.b16 %v2614
    %v2702 = vunpack.c.l.b16 %v2615
    %v2703 = vunpack.c.l.b16 %v2616
    %v2704 = vunpack.c.l.b16 %v2617
    %v2705 = vpack.c.b16 %v2702, %v2701
    %v2706 = vpack.c.b16 %v2704, %v2703
    %v2710 = vsel %vm319, %v2690, 0
    %2712 = vmatprep.subr.bf16.mxu0 0
    %2713 = vmatpush1.bf16.msra.mxu0 %v2705
    %2714 = vmatprep.subr.bf16.mxu0 0
    %2715 = vmatpush1.bf16.msra.mxu0 %v2706
    %2716 = vmatprep.subr.bf16.mxu0 0
    %2717 = vmatpush1.bf16.msra.mxu0 0
    %2718 = vmatprep.subr.bf16.mxu0 0
    %2719 = vmatpush1.bf16.msra.mxu0 0
    %2720 = vmatprep.subr.bf16.mxu0 0
    %2721 = vmatpush1.bf16.msra.mxu0 0
    %2722 = vmatprep.subr.bf16.mxu0 0
    %2723 = vmatpush1.bf16.msra.mxu0 0
    %2724 = vmatprep.subr.bf16.mxu0 0
    %2725 = vmatpush1.bf16.msra.mxu0 0
    %2726 = vmatprep.subr.bf16.mxu0 0
    %2727 = vmatpush1.bf16.msra.mxu0 0
    %2728 = vmatprep.subr.bf16.mxu0 0
    %2729 = vmatpush1.bf16.msra.mxu0 0
    %2730 = vmatprep.subr.bf16.mxu0 0
    %2731 = vmatpush1.bf16.msra.mxu0 0
    %2732 = vmatprep.subr.bf16.mxu0 0
    %2733 = vmatpush1.bf16.msra.mxu0 0
    %2734 = vmatprep.subr.bf16.mxu0 0
    %2735 = vmatpush1.bf16.msra.mxu0 0
    %2736 = vmatprep.subr.bf16.mxu0 0
    %2737 = vmatpush1.bf16.msra.mxu0 0
    %2738 = vmatprep.subr.bf16.mxu0 0
    %2739 = vmatpush1.bf16.msra.mxu0 0
    %2740 = vmatprep.subr.bf16.mxu0 0
    %2741 = vmatpush1.bf16.msra.mxu0 0
    %2742 = vmatprep.subr.bf16.mxu0 0
    %2743 = vmatpush1.bf16.msra.mxu0 0
    %2744 = vmatprep.mubr.bf16.mxu0 0
    %2745 = vmatmul.mubr.bf16.gmra.mrb[0].mxu0 %v2710
    %v2746 = vpop.f32.mrb[0].mxu0
    %v2747 = vadd.f32 %v2695, %v2746
    %v2748 = vpop.f32.mrb[0].mxu0
    %v2749 = vpop.f32.mrb[0].mxu0
    %v2750 = vadd.f32 %v2695, %v2749
    %v2751 = vpop.f32.mrb[0].mxu0
    %2752 = vdwg.mxu0
    %v2753 = vpack.c.bf16 %v2747, %v2747
    %2755 = vrot.lane.b32.xlu0 %v2753, 96
    %v2756 = vpop.permute.xlu0 %2755
    %v2758 = vsel %vm472, %v2753, 0
    %v2761 = vsel %vm472, %v2756, 0
    %2763 = vmatprep.subr.bf16.mxu0 0
    %2764 = vmatpush1.bf16.xpose.msra.mxu0 %v2761
    %2765 = vmatprep.subr.bf16.mxu0 0
    %2766 = vmatpush1.bf16.xpose.msra.mxu0 0
    %2767 = vmatprep.subr.bf16.mxu0 0
    %2768 = vmatpush1.bf16.xpose.msra.mxu0 0
    %2769 = vmatprep.subr.bf16.mxu0 0
    %2770 = vmatpush1.bf16.xpose.msra.mxu0 0
    %2771 = vmatprep.subr.bf16.mxu0 0
    %2772 = vmatpush1.bf16.xpose.msra.mxu0 0
    %2773 = vmatprep.subr.bf16.mxu0 0
    %2774 = vmatpush1.bf16.xpose.msra.mxu0 0
    %2775 = vmatprep.subr.bf16.mxu0 0
    %2776 = vmatpush1.bf16.xpose.msra.mxu0 0
    %2777 = vmatprep.subr.bf16.mxu0 0
    %2778 = vmatpush1.bf16.xpose.msra.mxu0 0
    %2779 = vmatprep.subr.bf16.mxu0 0
    %2780 = vmatpush1.bf16.xpose.msra.mxu0 0
    %2781 = vmatprep.subr.bf16.mxu0 0
    %2782 = vmatpush1.bf16.xpose.msra.mxu0 0
    %2783 = vmatprep.subr.bf16.mxu0 0
    %2784 = vmatpush1.bf16.xpose.msra.mxu0 0
    %2785 = vmatprep.subr.bf16.mxu0 0
    %2786 = vmatpush1.bf16.xpose.msra.mxu0 0
    %2787 = vmatprep.subr.bf16.mxu0 0
    %2788 = vmatpush1.bf16.xpose.msra.mxu0 0
    %2789 = vmatprep.subr.bf16.mxu0 0
    %2790 = vmatpush1.bf16.xpose.msra.mxu0 0
    %2791 = vmatprep.subr.bf16.mxu0 0
    %2792 = vmatpush1.bf16.xpose.msra.mxu0 0
    %2793 = vmatprep.subr.bf16.mxu0 0
    %2794 = vmatpush1.bf16.xpose.msra.mxu0 0
    %2795 = vmatprep.mubr.bf16.mxu0 0
    %2796 = vmatmul.mubr.bf16.gmra.mrb[0].mxu0 %v2758
    %v2797 = vpop.f32.mrb[0].mxu0
    %v2798 = vadd.f32 0.0, %v2797
    %v2799 = vpop.f32.mrb[0].mxu0
    %v2800 = vpop.f32.mrb[0].mxu0
    %v2801 = vpop.f32.mrb[0].mxu0
    %2802 = vdwg.mxu0
    %v2803 = vmul.f32 %v2798, 0.25
    %vm2804 = vcmask 64512
    %v2805 = vsel %vm2804, %v2803, -inf
    %2806 = vmax.xlane.f32.xlu0 %v2805
    %v2807 = vpop.xlane.xlu0 %2806
    %v2808 = vsub.f32 %v2803, %v2807
    %v2809 = vmul.f32 %v2808, 1.442695
    %v2810 = vpow.pop %v2809
    %v2811 = vsel %vm2804, %v2810, 0.0
    %2812 = vadd.xlane.f32.xlu0 %v2811
    %v2813 = vpop.xlane.xlu0 %2812
    %v2814 = vrcp.pop %v2813
    %v2815 = vmul.f32 %v2810, %v2814
    %v2816 = vpack.c.bf16 %v2815, %v2815
    %2817 = vrot.lane.b32.xlu0 %v2753, 64
    %v2818 = vpop.permute.xlu0 %2817
    %v2820 = vsel %vm2804, %v2816, 0
    %vm2822 = vcmask 1043456
    %v2824 = vsel %vm2822, %v2818, 0
    %2826 = vmatprep.subr.bf16.mxu0 0
    %2827 = vmatpush1.bf16.msra.mxu0 %v2824
    %2828 = vmatprep.subr.bf16.mxu0 0
    %2829 = vmatpush1.bf16.msra.mxu0 0
    %2830 = vmatprep.subr.bf16.mxu0 0
    %2831 = vmatpush1.bf16.msra.mxu0 0
    %2832 = vmatprep.subr.bf16.mxu0 0
    %2833 = vmatpush1.bf16.msra.mxu0 0
    %2834 = vmatprep.subr.bf16.mxu0 0
    %2835 = vmatpush1.bf16.msra.mxu0 0
    %2836 = vmatprep.subr.bf16.mxu0 0
    %2837 = vmatpush1.bf16.msra.mxu0 0
    %2838 = vmatprep.subr.bf16.mxu0 0
    %2839 = vmatpush1.bf16.msra.mxu0 0
    %2840 = vmatprep.subr.bf16.mxu0 0
    %2841 = vmatpush1.bf16.msra.mxu0 0
    %2842 = vmatprep.subr.bf16.mxu0 0
    %2843 = vmatpush1.bf16.msra.mxu0 0
    %2844 = vmatprep.subr.bf16.mxu0 0
    %2845 = vmatpush1.bf16.msra.mxu0 0
    %2846 = vmatprep.subr.bf16.mxu0 0
    %2847 = vmatpush1.bf16.msra.mxu0 0
    %2848 = vmatprep.subr.bf16.mxu0 0
    %2849 = vmatpush1.bf16.msra.mxu0 0
    %2850 = vmatprep.subr.bf16.mxu0 0
    %2851 = vmatpush1.bf16.msra.mxu0 0
    %2852 = vmatprep.subr.bf16.mxu0 0
    %2853 = vmatpush1.bf16.msra.mxu0 0
    %2854 = vmatprep.subr.bf16.mxu0 0
    %2855 = vmatpush1.bf16.msra.mxu0 0
    %2856 = vmatprep.subr.bf16.mxu0 0
    %2857 = vmatpush1.bf16.msra.mxu0 0
    %2858 = vmatprep.mubr.bf16.mxu0 0
    %2859 = vmatmul.mubr.bf16.gmra.mrb[0].mxu0 %v2820
    %v2860 = vpop.f32.mrb[0].mxu0
    %v2861 = vadd.f32 0.0, %v2860
    %v2862 = vpop.f32.mrb[0].mxu0
    %v2863 = vpop.f32.mrb[0].mxu0
    %v2864 = vpop.f32.mrb[0].mxu0
    %2865 = vdwg.mxu0
    %v2866 = vpack.c.bf16 %v2861, %v2861
    %2867 = vrot.lane.b32.xlu0 %v2753, 112
    %v2868 = vpop.permute.xlu0 %2867
    %2869 = vrot.lane.b32.xlu0 %v2753, 80
    %v2870 = vpop.permute.xlu0 %2869
    %v2872 = vsel %vm472, %v2868, 0
    %v2875 = vsel %vm472, %v2870, 0
    %2877 = vmatprep.subr.bf16.mxu0 0
    %2878 = vmatpush1.bf16.xpose.msra.mxu0 %v2875
    %2879 = vmatprep.subr.bf16.mxu0 0
    %2880 = vmatpush1.bf16.xpose.msra.mxu0 0
    %2881 = vmatprep.subr.bf16.mxu0 0
    %2882 = vmatpush1.bf16.xpose.msra.mxu0 0
    %2883 = vmatprep.subr.bf16.mxu0 0
    %2884 = vmatpush1.bf16.xpose.msra.mxu0 0
    %2885 = vmatprep.subr.bf16.mxu0 0
    %2886 = vmatpush1.bf16.xpose.msra.mxu0 0
    %2887 = vmatprep.subr.bf16.mxu0 0
    %2888 = vmatpush1.bf16.xpose.msra.mxu0 0
    %2889 = vmatprep.subr.bf16.mxu0 0
    %2890 = vmatpush1.bf16.xpose.msra.mxu0 0
    %2891 = vmatprep.subr.bf16.mxu0 0
    %2892 = vmatpush1.bf16.xpose.msra.mxu0 0
    %2893 = vmatprep.subr.bf16.mxu0 0
    %2894 = vmatpush1.bf16.xpose.msra.mxu0 0
    %2895 = vmatprep.subr.bf16.mxu0 0
    %2896 = vmatpush1.bf16.xpose.msra.mxu0 0
    %2897 = vmatprep.subr.bf16.mxu0 0
    %2898 = vmatpush1.bf16.xpose.msra.mxu0 0
    %2899 = vmatprep.subr.bf16.mxu0 0
    %2900 = vmatpush1.bf16.xpose.msra.mxu0 0
    %2901 = vmatprep.subr.bf16.mxu0 0
    %2902 = vmatpush1.bf16.xpose.msra.mxu0 0
    %2903 = vmatprep.subr.bf16.mxu0 0
    %2904 = vmatpush1.bf16.xpose.msra.mxu0 0
    %2905 = vmatprep.subr.bf16.mxu0 0
    %2906 = vmatpush1.bf16.xpose.msra.mxu0 0
    %2907 = vmatprep.subr.bf16.mxu0 0
    %2908 = vmatpush1.bf16.xpose.msra.mxu0 0
    %2909 = vmatprep.mubr.bf16.mxu0 0
    %2910 = vmatmul.mubr.bf16.gmra.mrb[0].mxu0 %v2872
    %v2911 = vpop.f32.mrb[0].mxu0
    %v2912 = vadd.f32 0.0, %v2911
    %v2913 = vpop.f32.mrb[0].mxu0
    %v2914 = vpop.f32.mrb[0].mxu0
    %v2915 = vpop.f32.mrb[0].mxu0
    %2916 = vdwg.mxu0
    %v2917 = vmul.f32 %v2912, 0.25
    %v2918 = vsel %vm2804, %v2917, -inf
    %2919 = vmax.xlane.f32.xlu0 %v2918
    %v2920 = vpop.xlane.xlu0 %2919
    %v2921 = vsub.f32 %v2917, %v2920
    %v2922 = vmul.f32 %v2921, 1.442695
    %v2923 = vpow.pop %v2922
    %v2924 = vsel %vm2804, %v2923, 0.0
    %2925 = vadd.xlane.f32.xlu0 %v2924
    %v2926 = vpop.xlane.xlu0 %2925
    %v2927 = vrcp.pop %v2926
    %v2928 = vmul.f32 %v2923, %v2927
    %v2929 = vpack.c.bf16 %v2928, %v2928
    %2930 = vrot.lane.b32.xlu0 %v2753, 48
    %v2931 = vpop.permute.xlu0 %2930
    %v2933 = vsel %vm2804, %v2929, 0
    %v2936 = vsel %vm2822, %v2931, 0
    %2938 = vmatprep.subr.bf16.mxu0 0
    %2939 = vmatpush1.bf16.msra.mxu0 %v2936
    %2940 = vmatprep.subr.bf16.mxu0 0
    %2941 = vmatpush1.bf16.msra.mxu0 0
    %2942 = vmatprep.subr.bf16.mxu0 0
    %2943 = vmatpush1.bf16.msra.mxu0 0
    %2944 = vmatprep.subr.bf16.mxu0 0
    %2945 = vmatpush1.bf16.msra.mxu0 0
    %2946 = vmatprep.subr.bf16.mxu0 0
    %2947 = vmatpush1.bf16.msra.mxu0 0
    %2948 = vmatprep.subr.bf16.mxu0 0
    %2949 = vmatpush1.bf16.msra.mxu0 0
    %2950 = vmatprep.subr.bf16.mxu0 0
    %2951 = vmatpush1.bf16.msra.mxu0 0
    %2952 = vmatprep.subr.bf16.mxu0 0
    %2953 = vmatpush1.bf16.msra.mxu0 0
    %2954 = vmatprep.subr.bf16.mxu0 0
    %2955 = vmatpush1.bf16.msra.mxu0 0
    %2956 = vmatprep.subr.bf16.mxu0 0
    %2957 = vmatpush1.bf16.msra.mxu0 0
    %2958 = vmatprep.subr.bf16.mxu0 0
    %2959 = vmatpush1.bf16.msra.mxu0 0
    %2960 = vmatprep.subr.bf16.mxu0 0
    %2961 = vmatpush1.bf16.msra.mxu0 0
    %2962 = vmatprep.subr.bf16.mxu0 0
    %2963 = vmatpush1.bf16.msra.mxu0 0
    %2964 = vmatprep.subr.bf16.mxu0 0
    %2965 = vmatpush1.bf16.msra.mxu0 0
    %2966 = vmatprep.subr.bf16.mxu0 0
    %2967 = vmatpush1.bf16.msra.mxu0 0
    %2968 = vmatprep.subr.bf16.mxu0 0
    %2969 = vmatpush1.bf16.msra.mxu0 0
    %2970 = vmatprep.mubr.bf16.mxu0 0
    %2971 = vmatmul.mubr.bf16.gmra.mrb[0].mxu0 %v2933
    %v2972 = vpop.f32.mrb[0].mxu0
    %v2973 = vadd.f32 0.0, %v2972
    %v2974 = vpop.f32.mrb[0].mxu0
    %v2975 = vpop.f32.mrb[0].mxu0
    %v2976 = vpop.f32.mrb[0].mxu0
    %2977 = vdwg.mxu0
    %v2978 = vpack.c.bf16 %v2973, %v2973
    %v2981 = vunpack.c.l.b16 %v2621
    %v2982 = vunpack.c.l.b16 %v2622
    %v2983 = vpack.c.b16 %v2982, %v2981
    %v2986 = vsel %vm472, %v2978, 0
    %2988 = vmatprep.subr.bf16.mxu0 0
    %2989 = vmatpush1.bf16.msra.mxu0 %v2983
    %2990 = vmatprep.subr.bf16.mxu0 0
    %2991 = vmatpush1.bf16.msra.mxu0 0
    %2992 = vmatprep.subr.bf16.mxu0 0
    %2993 = vmatpush1.bf16.msra.mxu0 0
    %2994 = vmatprep.subr.bf16.mxu0 0
    %2995 = vmatpush1.bf16.msra.mxu0 0
    %2996 = vmatprep.subr.bf16.mxu0 0
    %2997 = vmatpush1.bf16.msra.mxu0 0
    %2998 = vmatprep.subr.bf16.mxu0 0
    %2999 = vmatpush1.bf16.msra.mxu0 0
    %3000 = vmatprep.subr.bf16.mxu0 0
    %3001 = vmatpush1.bf16.msra.mxu0 0
    %3002 = vmatprep.subr.bf16.mxu0 0
    %3003 = vmatpush1.bf16.msra.mxu0 0
    %3004 = vmatprep.subr.bf16.mxu0 0
    %3005 = vmatpush1.bf16.msra.mxu0 0
    %3006 = vmatprep.subr.bf16.mxu0 0
    %3007 = vmatpush1.bf16.msra.mxu0 0
    %3008 = vmatprep.subr.bf16.mxu0 0
    %3009 = vmatpush1.bf16.msra.mxu0 0
    %3010 = vmatprep.subr.bf16.mxu0 0
    %3011 = vmatpush1.bf16.msra.mxu0 0
    %3012 = vmatprep.subr.bf16.mxu0 0
    %3013 = vmatpush1.bf16.msra.mxu0 0
    %3014 = vmatprep.subr.bf16.mxu0 0
    %3015 = vmatpush1.bf16.msra.mxu0 0
    %3016 = vmatprep.subr.bf16.mxu0 0
    %3017 = vmatpush1.bf16.msra.mxu0 0
    %3018 = vmatprep.subr.bf16.mxu0 0
    %3019 = vmatpush1.bf16.msra.mxu0 0
    %3020 = vmatprep.mubr.bf16.mxu0 0
    %3021 = vmatmul.mubr.bf16.gmra.mrb[0].mxu0 %v2986
    %v3022 = vpop.f32.mrb[0].mxu0
    %v3023 = vadd.f32 0.0, %v3022
    %v3024 = vpop.f32.mrb[0].mxu0
    %v3025 = vpop.f32.mrb[0].mxu0
    %v3026 = vpop.f32.mrb[0].mxu0
    %3027 = vdwg.mxu0
    %v3030 = vunpack.c.l.b16 %v2619
    %v3031 = vunpack.c.l.b16 %v2620
    %v3032 = vpack.c.b16 %v3031, %v3030
    %v3035 = vsel %vm472, %v2866, 0
    %3037 = vmatprep.subr.bf16.mxu0 0
    %3038 = vmatpush1.bf16.msra.mxu0 %v3032
    %3039 = vmatprep.subr.bf16.mxu0 0
    %3040 = vmatpush1.bf16.msra.mxu0 0
    %3041 = vmatprep.subr.bf16.mxu0 0
    %3042 = vmatpush1.bf16.msra.mxu0 0
    %3043 = vmatprep.subr.bf16.mxu0 0
    %3044 = vmatpush1.bf16.msra.mxu0 0
    %3045 = vmatprep.subr.bf16.mxu0 0
    %3046 = vmatpush1.bf16.msra.mxu0 0
    %3047 = vmatprep.subr.bf16.mxu0 0
    %3048 = vmatpush1.bf16.msra.mxu0 0
    %3049 = vmatprep.subr.bf16.mxu0 0
    %3050 = vmatpush1.bf16.msra.mxu0 0
    %3051 = vmatprep.subr.bf16.mxu0 0
    %3052 = vmatpush1.bf16.msra.mxu0 0
    %3053 = vmatprep.subr.bf16.mxu0 0
    %3054 = vmatpush1.bf16.msra.mxu0 0
    %3055 = vmatprep.subr.bf16.mxu0 0
    %3056 = vmatpush1.bf16.msra.mxu0 0
    %3057 = vmatprep.subr.bf16.mxu0 0
    %3058 = vmatpush1.bf16.msra.mxu0 0
    %3059 = vmatprep.subr.bf16.mxu0 0
    %3060 = vmatpush1.bf16.msra.mxu0 0
    %3061 = vmatprep.subr.bf16.mxu0 0
    %3062 = vmatpush1.bf16.msra.mxu0 0
    %3063 = vmatprep.subr.bf16.mxu0 0
    %3064 = vmatpush1.bf16.msra.mxu0 0
    %3065 = vmatprep.subr.bf16.mxu0 0
    %3066 = vmatpush1.bf16.msra.mxu0 0
    %3067 = vmatprep.subr.bf16.mxu0 0
    %3068 = vmatpush1.bf16.msra.mxu0 0
    %3069 = vmatprep.mubr.bf16.mxu0 0
    %3070 = vmatmul.mubr.bf16.gmra.mrb[0].mxu0 %v3035
    %v3071 = vpop.f32.mrb[0].mxu0
    %v3072 = vadd.f32 %v3023, %v3071
    %v3073 = vpop.f32.mrb[0].mxu0
    %v3074 = vpop.f32.mrb[0].mxu0
    %v3075 = vpop.f32.mrb[0].mxu0
    %3076 = vdwg.mxu0
    %v3077 = vpack.c.bf16 %v2750, %v2750
    %3079 = vrot.lane.b32.xlu0 %v3077, 96
    %v3080 = vpop.permute.xlu0 %3079
    %v3082 = vsel %vm472, %v3077, 0
    %v3085 = vsel %vm472, %v3080, 0
    %3087 = vmatprep.subr.bf16.mxu0 0
    %3088 = vmatpush1.bf16.xpose.msra.mxu0 %v3085
    %3089 = vmatprep.subr.bf16.mxu0 0
    %3090 = vmatpush1.bf16.xpose.msra.mxu0 0
    %3091 = vmatprep.subr.bf16.mxu0 0
    %3092 = vmatpush1.bf16.xpose.msra.mxu0 0
    %3093 = vmatprep.subr.bf16.mxu0 0
    %3094 = vmatpush1.bf16.xpose.msra.mxu0 0
    %3095 = vmatprep.subr.bf16.mxu0 0
    %3096 = vmatpush1.bf16.xpose.msra.mxu0 0
    %3097 = vmatprep.subr.bf16.mxu0 0
    %3098 = vmatpush1.bf16.xpose.msra.mxu0 0
    %3099 = vmatprep.subr.bf16.mxu0 0
    %3100 = vmatpush1.bf16.xpose.msra.mxu0 0
    %3101 = vmatprep.subr.bf16.mxu0 0
    %3102 = vmatpush1.bf16.xpose.msra.mxu0 0
    %3103 = vmatprep.subr.bf16.mxu0 0
    %3104 = vmatpush1.bf16.xpose.msra.mxu0 0
    %3105 = vmatprep.subr.bf16.mxu0 0
    %3106 = vmatpush1.bf16.xpose.msra.mxu0 0
    %3107 = vmatprep.subr.bf16.mxu0 0
    %3108 = vmatpush1.bf16.xpose.msra.mxu0 0
    %3109 = vmatprep.subr.bf16.mxu0 0
    %3110 = vmatpush1.bf16.xpose.msra.mxu0 0
    %3111 = vmatprep.subr.bf16.mxu0 0
    %3112 = vmatpush1.bf16.xpose.msra.mxu0 0
    %3113 = vmatprep.subr.bf16.mxu0 0
    %3114 = vmatpush1.bf16.xpose.msra.mxu0 0
    %3115 = vmatprep.subr.bf16.mxu0 0
    %3116 = vmatpush1.bf16.xpose.msra.mxu0 0
    %3117 = vmatprep.subr.bf16.mxu0 0
    %3118 = vmatpush1.bf16.xpose.msra.mxu0 0
    %3119 = vmatprep.mubr.bf16.mxu0 0
    %3120 = vmatmul.mubr.bf16.gmra.mrb[0].mxu0 %v3082
    %v3121 = vpop.f32.mrb[0].mxu0
    %v3122 = vadd.f32 0.0, %v3121
    %v3123 = vpop.f32.mrb[0].mxu0
    %v3124 = vpop.f32.mrb[0].mxu0
    %v3125 = vpop.f32.mrb[0].mxu0
    %3126 = vdwg.mxu0
    %v3127 = vmul.f32 %v3122, 0.25
    %v3128 = vsel %vm2804, %v3127, -inf
    %3129 = vmax.xlane.f32.xlu0 %v3128
    %v3130 = vpop.xlane.xlu0 %3129
    %v3131 = vsub.f32 %v3127, %v3130
    %v3132 = vmul.f32 %v3131, 1.442695
    %v3133 = vpow.pop %v3132
    %v3134 = vsel %vm2804, %v3133, 0.0
    %3135 = vadd.xlane.f32.xlu0 %v3134
    %v3136 = vpop.xlane.xlu0 %3135
    %v3137 = vrcp.pop %v3136
    %v3138 = vmul.f32 %v3133, %v3137
    %v3139 = vpack.c.bf16 %v3138, %v3138
    %3140 = vrot.lane.b32.xlu0 %v3077, 64
    %v3141 = vpop.permute.xlu0 %3140
    %v3143 = vsel %vm2804, %v3139, 0
    %v3146 = vsel %vm2822, %v3141, 0
    %3148 = vmatprep.subr.bf16.mxu0 0
    %3149 = vmatpush1.bf16.msra.mxu0 %v3146
    %3150 = vmatprep.subr.bf16.mxu0 0
    %3151 = vmatpush1.bf16.msra.mxu0 0
    %3152 = vmatprep.subr.bf16.mxu0 0
    %3153 = vmatpush1.bf16.msra.mxu0 0
    %3154 = vmatprep.subr.bf16.mxu0 0
    %3155 = vmatpush1.bf16.msra.mxu0 0
    %3156 = vmatprep.subr.bf16.mxu0 0
    %3157 = vmatpush1.bf16.msra.mxu0 0
    %3158 = vmatprep.subr.bf16.mxu0 0
    %3159 = vmatpush1.bf16.msra.mxu0 0
    %3160 = vmatprep.subr.bf16.mxu0 0
    %3161 = vmatpush1.bf16.msra.mxu0 0
    %3162 = vmatprep.subr.bf16.mxu0 0
    %3163 = vmatpush1.bf16.msra.mxu0 0
    %3164 = vmatprep.subr.bf16.mxu0 0
    %3165 = vmatpush1.bf16.msra.mxu0 0
    %3166 = vmatprep.subr.bf16.mxu0 0
    %3167 = vmatpush1.bf16.msra.mxu0 0
    %3168 = vmatprep.subr.bf16.mxu0 0
    %3169 = vmatpush1.bf16.msra.mxu0 0
    %3170 = vmatprep.subr.bf16.mxu0 0
    %3171 = vmatpush1.bf16.msra.mxu0 0
    %3172 = vmatprep.subr.bf16.mxu0 0
    %3173 = vmatpush1.bf16.msra.mxu0 0
    %3174 = vmatprep.subr.bf16.mxu0 0
    %3175 = vmatpush1.bf16.msra.mxu0 0
    %3176 = vmatprep.subr.bf16.mxu0 0
    %3177 = vmatpush1.bf16.msra.mxu0 0
    %3178 = vmatprep.subr.bf16.mxu0 0
    %3179 = vmatpush1.bf16.msra.mxu0 0
    %3180 = vmatprep.mubr.bf16.mxu0 0
    %3181 = vmatmul.mubr.bf16.gmra.mrb[0].mxu0 %v3143
    %v3182 = vpop.f32.mrb[0].mxu0
    %v3183 = vadd.f32 0.0, %v3182
    %v3184 = vpop.f32.mrb[0].mxu0
    %v3185 = vpop.f32.mrb[0].mxu0
    %v3186 = vpop.f32.mrb[0].mxu0
    %3187 = vdwg.mxu0
    %v3188 = vpack.c.bf16 %v3183, %v3183
    %3189 = vrot.lane.b32.xlu0 %v3077, 112
    %v3190 = vpop.permute.xlu0 %3189
    %3191 = vrot.lane.b32.xlu0 %v3077, 80
    %v3192 = vpop.permute.xlu0 %3191
    %v3194 = vsel %vm472, %v3190, 0
    %v3197 = vsel %vm472, %v3192, 0
    %3199 = vmatprep.subr.bf16.mxu0 0
    %3200 = vmatpush1.bf16.xpose.msra.mxu0 %v3197
    %3201 = vmatprep.subr.bf16.mxu0 0
    %3202 = vmatpush1.bf16.xpose.msra.mxu0 0
    %3203 = vmatprep.subr.bf16.mxu0 0
    %3204 = vmatpush1.bf16.xpose.msra.mxu0 0
    %3205 = vmatprep.subr.bf16.mxu0 0
    %3206 = vmatpush1.bf16.xpose.msra.mxu0 0
    %3207 = vmatprep.subr.bf16.mxu0 0
    %3208 = vmatpush1.bf16.xpose.msra.mxu0 0
    %3209 = vmatprep.subr.bf16.mxu0 0
    %3210 = vmatpush1.bf16.xpose.msra.mxu0 0
    %3211 = vmatprep.subr.bf16.mxu0 0
    %3212 = vmatpush1.bf16.xpose.msra.mxu0 0
    %3213 = vmatprep.subr.bf16.mxu0 0
    %3214 = vmatpush1.bf16.xpose.msra.mxu0 0
    %3215 = vmatprep.subr.bf16.mxu0 0
    %3216 = vmatpush1.bf16.xpose.msra.mxu0 0
    %3217 = vmatprep.subr.bf16.mxu0 0
    %3218 = vmatpush1.bf16.xpose.msra.mxu0 0
    %3219 = vmatprep.subr.bf16.mxu0 0
    %3220 = vmatpush1.bf16.xpose.msra.mxu0 0
    %3221 = vmatprep.subr.bf16.mxu0 0
    %3222 = vmatpush1.bf16.xpose.msra.mxu0 0
    %3223 = vmatprep.subr.bf16.mxu0 0
    %3224 = vmatpush1.bf16.xpose.msra.mxu0 0
    %3225 = vmatprep.subr.bf16.mxu0 0
    %3226 = vmatpush1.bf16.xpose.msra.mxu0 0
    %3227 = vmatprep.subr.bf16.mxu0 0
    %3228 = vmatpush1.bf16.xpose.msra.mxu0 0
    %3229 = vmatprep.subr.bf16.mxu0 0
    %3230 = vmatpush1.bf16.xpose.msra.mxu0 0
    %3231 = vmatprep.mubr.bf16.mxu0 0
    %3232 = vmatmul.mubr.bf16.gmra.mrb[0].mxu0 %v3194
    %v3233 = vpop.f32.mrb[0].mxu0
    %v3234 = vadd.f32 0.0, %v3233
    %v3235 = vpop.f32.mrb[0].mxu0
    %v3236 = vpop.f32.mrb[0].mxu0
    %v3237 = vpop.f32.mrb[0].mxu0
    %3238 = vdwg.mxu0
    %v3239 = vmul.f32 %v3234, 0.25
    %v3240 = vsel %vm2804, %v3239, -inf
    %3241 = vmax.xlane.f32.xlu0 %v3240
    %v3242 = vpop.xlane.xlu0 %3241
    %v3243 = vsub.f32 %v3239, %v3242
    %v3244 = vmul.f32 %v3243, 1.442695
    %v3245 = vpow.pop %v3244
    %v3246 = vsel %vm2804, %v3245, 0.0
    %3247 = vadd.xlane.f32.xlu0 %v3246
    %v3248 = vpop.xlane.xlu0 %3247
    %v3249 = vrcp.pop %v3248
    %v3250 = vmul.f32 %v3245, %v3249
    %v3251 = vpack.c.bf16 %v3250, %v3250
    %3252 = vrot.lane.b32.xlu0 %v3077, 48
    %v3253 = vpop.permute.xlu0 %3252
    %v3255 = vsel %vm2804, %v3251, 0
    %v3258 = vsel %vm2822, %v3253, 0
    %3260 = vmatprep.subr.bf16.mxu0 0
    %3261 = vmatpush1.bf16.msra.mxu0 %v3258
    %3262 = vmatprep.subr.bf16.mxu0 0
    %3263 = vmatpush1.bf16.msra.mxu0 0
    %3264 = vmatprep.subr.bf16.mxu0 0
    %3265 = vmatpush1.bf16.msra.mxu0 0
    %3266 = vmatprep.subr.bf16.mxu0 0
    %3267 = vmatpush1.bf16.msra.mxu0 0
    %3268 = vmatprep.subr.bf16.mxu0 0
    %3269 = vmatpush1.bf16.msra.mxu0 0
    %3270 = vmatprep.subr.bf16.mxu0 0
    %3271 = vmatpush1.bf16.msra.mxu0 0
    %3272 = vmatprep.subr.bf16.mxu0 0
    %3273 = vmatpush1.bf16.msra.mxu0 0
    %3274 = vmatprep.subr.bf16.mxu0 0
    %3275 = vmatpush1.bf16.msra.mxu0 0
    %3276 = vmatprep.subr.bf16.mxu0 0
    %3277 = vmatpush1.bf16.msra.mxu0 0
    %3278 = vmatprep.subr.bf16.mxu0 0
    %3279 = vmatpush1.bf16.msra.mxu0 0
    %3280 = vmatprep.subr.bf16.mxu0 0
    %3281 = vmatpush1.bf16.msra.mxu0 0
    %3282 = vmatprep.subr.bf16.mxu0 0
    %3283 = vmatpush1.bf16.msra.mxu0 0
    %3284 = vmatprep.subr.bf16.mxu0 0
    %3285 = vmatpush1.bf16.msra.mxu0 0
    %3286 = vmatprep.subr.bf16.mxu0 0
    %3287 = vmatpush1.bf16.msra.mxu0 0
    %3288 = vmatprep.subr.bf16.mxu0 0
    %3289 = vmatpush1.bf16.msra.mxu0 0
    %3290 = vmatprep.subr.bf16.mxu0 0
    %3291 = vmatpush1.bf16.msra.mxu0 0
    %3292 = vmatprep.mubr.bf16.mxu0 0
    %3293 = vmatmul.mubr.bf16.gmra.mrb[0].mxu0 %v3255
    %v3294 = vpop.f32.mrb[0].mxu0
    %v3295 = vadd.f32 0.0, %v3294
    %v3296 = vpop.f32.mrb[0].mxu0
    %v3297 = vpop.f32.mrb[0].mxu0
    %v3298 = vpop.f32.mrb[0].mxu0
    %3299 = vdwg.mxu0
    %v3300 = vpack.c.bf16 %v3295, %v3295
    %v3302 = vsel %vm472, %v3300, 0
    %3304 = vmatprep.subr.bf16.mxu0 0
    %3305 = vmatpush1.bf16.msra.mxu0 %v2983
    %3306 = vmatprep.subr.bf16.mxu0 0
    %3307 = vmatpush1.bf16.msra.mxu0 0
    %3308 = vmatprep.subr.bf16.mxu0 0
    %3309 = vmatpush1.bf16.msra.mxu0 0
    %3310 = vmatprep.subr.bf16.mxu0 0
    %3311 = vmatpush1.bf16.msra.mxu0 0
    %3312 = vmatprep.subr.bf16.mxu0 0
    %3313 = vmatpush1.bf16.msra.mxu0 0
    %3314 = vmatprep.subr.bf16.mxu0 0
    %3315 = vmatpush1.bf16.msra.mxu0 0
    %3316 = vmatprep.subr.bf16.mxu0 0
    %3317 = vmatpush1.bf16.msra.mxu0 0
    %3318 = vmatprep.subr.bf16.mxu0 0
    %3319 = vmatpush1.bf16.msra.mxu0 0
    %3320 = vmatprep.subr.bf16.mxu0 0
    %3321 = vmatpush1.bf16.msra.mxu0 0
    %3322 = vmatprep.subr.bf16.mxu0 0
    %3323 = vmatpush1.bf16.msra.mxu0 0
    %3324 = vmatprep.subr.bf16.mxu0 0
    %3325 = vmatpush1.bf16.msra.mxu0 0
    %3326 = vmatprep.subr.bf16.mxu0 0
    %3327 = vmatpush1.bf16.msra.mxu0 0
    %3328 = vmatprep.subr.bf16.mxu0 0
    %3329 = vmatpush1.bf16.msra.mxu0 0
    %3330 = vmatprep.subr.bf16.mxu0 0
    %3331 = vmatpush1.bf16.msra.mxu0 0
    %3332 = vmatprep.subr.bf16.mxu0 0
    %3333 = vmatpush1.bf16.msra.mxu0 0
    %3334 = vmatprep.subr.bf16.mxu0 0
    %3335 = vmatpush1.bf16.msra.mxu0 0
    %3336 = vmatprep.mubr.bf16.mxu0 0
    %3337 = vmatmul.mubr.bf16.gmra.mrb[0].mxu0 %v3302
    %v3338 = vpop.f32.mrb[0].mxu0
    %v3339 = vadd.f32 0.0, %v3338
    %v3340 = vpop.f32.mrb[0].mxu0
    %v3341 = vpop.f32.mrb[0].mxu0
    %v3342 = vpop.f32.mrb[0].mxu0
    %3343 = vdwg.mxu0
    %v3345 = vsel %vm472, %v3188, 0
    %3347 = vmatprep.subr.bf16.mxu0 0
    %3348 = vmatpush1.bf16.msra.mxu0 %v3032
    %3349 = vmatprep.subr.bf16.mxu0 0
    %3350 = vmatpush1.bf16.msra.mxu0 0
    %3351 = vmatprep.subr.bf16.mxu0 0
    %3352 = vmatpush1.bf16.msra.mxu0 0
    %3353 = vmatprep.subr.bf16.mxu0 0
    %3354 = vmatpush1.bf16.msra.mxu0 0
    %3355 = vmatprep.subr.bf16.mxu0 0
    %3356 = vmatpush1.bf16.msra.mxu0 0
    %3357 = vmatprep.subr.bf16.mxu0 0
    %3358 = vmatpush1.bf16.msra.mxu0 0
    %3359 = vmatprep.subr.bf16.mxu0 0
    %3360 = vmatpush1.bf16.msra.mxu0 0
    %3361 = vmatprep.subr.bf16.mxu0 0
    %3362 = vmatpush1.bf16.msra.mxu0 0
    %3363 = vmatprep.subr.bf16.mxu0 0
    %3364 = vmatpush1.bf16.msra.mxu0 0
    %3365 = vmatprep.subr.bf16.mxu0 0
    %3366 = vmatpush1.bf16.msra.mxu0 0
    %3367 = vmatprep.subr.bf16.mxu0 0
    %3368 = vmatpush1.bf16.msra.mxu0 0
    %3369 = vmatprep.subr.bf16.mxu0 0
    %3370 = vmatpush1.bf16.msra.mxu0 0
    %3371 = vmatprep.subr.bf16.mxu0 0
    %3372 = vmatpush1.bf16.msra.mxu0 0
    %3373 = vmatprep.subr.bf16.mxu0 0
    %3374 = vmatpush1.bf16.msra.mxu0 0
    %3375 = vmatprep.subr.bf16.mxu0 0
    %3376 = vmatpush1.bf16.msra.mxu0 0
    %3377 = vmatprep.subr.bf16.mxu0 0
    %3378 = vmatpush1.bf16.msra.mxu0 0
    %3379 = vmatprep.mubr.bf16.mxu0 0
    %3380 = vmatmul.mubr.bf16.gmra.mrb[0].mxu0 %v3345
    %v3381 = vpop.f32.mrb[0].mxu0
    %v3382 = vadd.f32 %v3339, %v3381
    %v3383 = vpop.f32.mrb[0].mxu0
    %v3384 = vpop.f32.mrb[0].mxu0
    %v3385 = vpop.f32.mrb[0].mxu0
    %3386 = vdwg.mxu0
    %v3387 = vadd.f32 %v2610, %v3072
    %v3388 = vadd.f32 %v2611, %v3382
    %v3390 = vlaneseq
    %v3391 = vshrl.u32 %v3390, 7
    %v3392 = vsub.s32 0, %v3391
    %v3393 = vrot.slane %v2623, %v3392
    %v3395 = vadd.f32 %v3387, %v3393
    %v3396 = vadd.f32 %v3388, %v3393
    %v3397 = vsel %vm319, %v3395, 0.0
    %3398 = vadd.xlane.f32.xlu0 %v3397
    %v3399 = vpop.xlane.xlu0 %3398
    %v3400 = vsel %vm319, %v3396, 0.0
    %3401 = vadd.xlane.f32.xlu0 %v3400
    %v3402 = vpop.xlane.xlu0 %3401
    %v3403 = vmul.f32 %v3399, %v332
    %v3404 = vmul.f32 %v3402, %v332
    %v3405 = vsub.f32 %v3395, %v3403
    %v3406 = vsub.f32 %v3396, %v3404
    %v3407 = vmul.f32 %v3405, %v3405
    %v3408 = vmul.f32 %v3406, %v3406
    %v3409 = vsel %vm319, %v3407, 0.0
    %3410 = vadd.xlane.f32.xlu0 %v3409
    %v3411 = vpop.xlane.xlu0 %3410
    %v3412 = vsel %vm319, %v3408, 0.0
    %3413 = vadd.xlane.f32.xlu0 %v3412
    %v3414 = vpop.xlane.xlu0 %3413
    %v3415 = vmul.f32 %v3411, %v332
    %v3416 = vmul.f32 %v3414, %v332
    %v3417 = vadd.f32 %v3415, 1e-05
    %v3418 = vadd.f32 %v3416, 1e-05
    %v3419 = vrsqrt.pop %v3417
    %v3420 = vrsqrt.pop %v3418
    %v3421 = vmul.f32 %v3405, %v3419
    %v3422 = vmul.f32 %v3406, %v3420
    %v3424 = vlaneseq
    %v3425 = vshrl.u32 %v3424, 7
    %v3426 = vsub.s32 0, %v3425
    %v3427 = vrot.slane %v2624, %v3426
    %v3429 = vmul.f32 %v3421, %v3427
    %v3430 = vmul.f32 %v3422, %v3427
    %v3432 = vlaneseq
    %v3433 = vshrl.u32 %v3432, 7
    %v3434 = vsub.s32 0, %v3433
    %v3435 = vrot.slane %v2625, %v3434
    %v3437 = vadd.f32 %v3429, %v3435
    %v3438 = vadd.f32 %v3430, %v3435
    %v3439 = vpack.c.bf16 %v3438, %v3437
    %v3441 = vlaneseq
    %v3442 = vshrl.u32 %v3441, 7
    %v3443 = vsub.s32 0, %v3442
    %v3444 = vrot.slane %v2630, %v3443
    %v3450 = vunpack.c.l.b16 %v2626
    %v3451 = vunpack.c.l.b16 %v2627
    %v3452 = vunpack.c.l.b16 %v2628
    %v3453 = vunpack.c.l.b16 %v2629
    %v3454 = vpack.c.b16 %v3451, %v3450
    %v3455 = vpack.c.b16 %v3453, %v3452
    %v3459 = vsel %vm319, %v3439, 0
    %3461 = vmatprep.subr.bf16.mxu0 0
    %3462 = vmatpush1.bf16.msra.mxu0 %v3454
    %3463 = vmatprep.subr.bf16.mxu0 0
    %3464 = vmatpush1.bf16.msra.mxu0 %v3455
    %3465 = vmatprep.subr.bf16.mxu0 0
    %3466 = vmatpush1.bf16.msra.mxu0 0
    %3467 = vmatprep.subr.bf16.mxu0 0
    %3468 = vmatpush1.bf16.msra.mxu0 0
    %3469 = vmatprep.subr.bf16.mxu0 0
    %3470 = vmatpush1.bf16.msra.mxu0 0
    %3471 = vmatprep.subr.bf16.mxu0 0
    %3472 = vmatpush1.bf16.msra.mxu0 0
    %3473 = vmatprep.subr.bf16.mxu0 0
    %3474 = vmatpush1.bf16.msra.mxu0 0
    %3475 = vmatprep.subr.bf16.mxu0 0
    %3476 = vmatpush1.bf16.msra.mxu0 0
    %3477 = vmatprep.subr.bf16.mxu0 0
    %3478 = vmatpush1.bf16.msra.mxu0 0
    %3479 = vmatprep.subr.bf16.mxu0 0
    %3480 = vmatpush1.bf16.msra.mxu0 0
    %3481 = vmatprep.subr.bf16.mxu0 0
    %3482 = vmatpush1.bf16.msra.mxu0 0
    %3483 = vmatprep.subr.bf16.mxu0 0
    %3484 = vmatpush1.bf16.msra.mxu0 0
    %3485 = vmatprep.subr.bf16.mxu0 0
    %3486 = vmatpush1.bf16.msra.mxu0 0
    %3487 = vmatprep.subr.bf16.mxu0 0
    %3488 = vmatpush1.bf16.msra.mxu0 0
    %3489 = vmatprep.subr.bf16.mxu0 0
    %3490 = vmatpush1.bf16.msra.mxu0 0
    %3491 = vmatprep.subr.bf16.mxu0 0
    %3492 = vmatpush1.bf16.msra.mxu0 0
    %3493 = vmatprep.mubr.bf16.mxu0 0
    %3494 = vmatmul.mubr.bf16.gmra.mrb[0].mxu0 %v3459
    %v3495 = vpop.f32.mrb[0].mxu0
    %v3496 = vadd.f32 %v3444, %v3495
    %v3497 = vpop.f32.mrb[0].mxu0
    %v3498 = vpop.f32.mrb[0].mxu0
    %v3499 = vadd.f32 %v3444, %v3498
    %v3500 = vpop.f32.mrb[0].mxu0
    %3501 = vdwg.mxu0
    %v3502 = vmul.f32 %v3496, %v3496
    %v3503 = vmul.f32 %v3499, %v3499
    %v3504 = vmul.f32 %v3496, %v3502
    %v3505 = vmul.f32 %v3499, %v3503
    %v3506 = vmul.f32 %v3504, 0.044715
    %v3507 = vmul.f32 %v3505, 0.044715
    %v3508 = vadd.f32 %v3496, %v3506
    %v3509 = vadd.f32 %v3499, %v3507
    %v3510 = vmul.f32 %v3508, 0.7978846
    %v3511 = vmul.f32 %v3509, 0.7978846
    %v3512 = vtanh.pop %v3510
    %v3513 = vtanh.pop %v3511
    %v3514 = vadd.f32 %v3512, 1.0
    %v3515 = vadd.f32 %v3513, 1.0
    %v3516 = vmul.f32 %v3514, 0.5
    %v3517 = vmul.f32 %v3515, 0.5
    %v3518 = vmul.f32 %v3496, %v3516
    %v3519 = vmul.f32 %v3499, %v3517
    %v3520 = vpack.c.bf16 %v3519, %v3518
    %v3537 = vunpack.c.l.b16 %v2631
    %v3538 = vunpack.c.l.b16 %v2632
    %v3539 = vunpack.c.l.b16 %v2633
    %v3540 = vunpack.c.l.b16 %v2634
    %v3541 = vunpack.c.l.b16 %v2635
    %v3542 = vunpack.c.l.b16 %v2636
    %v3543 = vunpack.c.l.b16 %v2637
    %v3544 = vunpack.c.l.b16 %v2638
    %v3545 = vunpack.c.l.b16 %v2639
    %v3546 = vunpack.c.l.b16 %v2640
    %v3547 = vunpack.c.l.b16 %v2641
    %v3548 = vunpack.c.l.b16 %v2642
    %v3549 = vunpack.c.l.b16 %v2643
    %v3550 = vunpack.c.l.b16 %v2644
    %v3551 = vunpack.c.l.b16 %v2645
    %v3552 = vunpack.c.l.b16 %v2646
    %v3553 = vpack.c.b16 %v3538, %v3537
    %v3554 = vpack.c.b16 %v3540, %v3539
    %v3555 = vpack.c.b16 %v3542, %v3541
    %v3556 = vpack.c.b16 %v3544, %v3543
    %v3557 = vpack.c.b16 %v3546, %v3545
    %v3558 = vpack.c.b16 %v3548, %v3547
    %v3559 = vpack.c.b16 %v3550, %v3549
    %v3560 = vpack.c.b16 %v3552, %v3551
    %3569 = vmatprep.subr.bf16.mxu0 0
    %3570 = vmatpush1.bf16.msra.mxu0 %v3553
    %3571 = vmatprep.subr.bf16.mxu0 0
    %3572 = vmatpush1.bf16.msra.mxu0 %v3554
    %3573 = vmatprep.subr.bf16.mxu0 0
    %3574 = vmatpush1.bf16.msra.mxu0 %v3555
    %3575 = vmatprep.subr.bf16.mxu0 0
    %3576 = vmatpush1.bf16.msra.mxu0 %v3556
    %3577 = vmatprep.subr.bf16.mxu0 0
    %3578 = vmatpush1.bf16.msra.mxu0 %v3557
    %3579 = vmatprep.subr.bf16.mxu0 0
    %3580 = vmatpush1.bf16.msra.mxu0 %v3558
    %3581 = vmatprep.subr.bf16.mxu0 0
    %3582 = vmatpush1.bf16.msra.mxu0 %v3559
    %3583 = vmatprep.subr.bf16.mxu0 0
    %3584 = vmatpush1.bf16.msra.mxu0 %v3560
    %3585 = vmatprep.subr.bf16.mxu0 0
    %3586 = vmatpush1.bf16.msra.mxu0 0
    %3587 = vmatprep.subr.bf16.mxu0 0
    %3588 = vmatpush1.bf16.msra.mxu0 0
    %3589 = vmatprep.subr.bf16.mxu0 0
    %3590 = vmatpush1.bf16.msra.mxu0 0
    %3591 = vmatprep.subr.bf16.mxu0 0
    %3592 = vmatpush1.bf16.msra.mxu0 0
    %3593 = vmatprep.subr.bf16.mxu0 0
    %3594 = vmatpush1.bf16.msra.mxu0 0
    %3595 = vmatprep.subr.bf16.mxu0 0
    %3596 = vmatpush1.bf16.msra.mxu0 0
    %3597 = vmatprep.subr.bf16.mxu0 0
    %3598 = vmatpush1.bf16.msra.mxu0 0
    %3599 = vmatprep.subr.bf16.mxu0 0
    %3600 = vmatpush1.bf16.msra.mxu0 0
    %3601 = vmatprep.mubr.bf16.mxu0 0
    %3602 = vmatmul.mubr.bf16.gmra.mrb[0].mxu0 %v3520
    %v3603 = vpop.f32.mrb[0].mxu0
    %v3604 = vadd.f32 0.0, %v3603
    %v3605 = vpop.f32.mrb[0].mxu0
    %v3606 = vpop.f32.mrb[0].mxu0
    %v3607 = vadd.f32 0.0, %v3606
    %v3608 = vpop.f32.mrb[0].mxu0
    %3609 = vdwg.mxu0
    %v3610 = vadd.f32 %v3395, %v3604
    %v3611 = vadd.f32 %v3396, %v3607
    %v3613 = vlaneseq
    %v3614 = vshrl.u32 %v3613, 7
    %v3615 = vsub.s32 0, %v3614
    %v3616 = vrot.slane %v2647, %v3615
    %v3618 = vadd.f32 %v3610, %v3616
    %v3619 = vadd.f32 %v3611, %v3616
    %s3620 = scalar_lea.vmem %s65, 1
    %v3621 = vld [vmem:[%s3620] sm:$0x1]
    %s3622 = scalar_lea.vmem %s67, 1
    %v3623 = vld [vmem:[%s3622] sm:$0x1]
    %s3624 = scalar_lea.vmem %s69, 16
    %v3625 = vld [vmem:[%s3624] sm:$0xf]
    %v3626 = vld [vmem:[%s3624 + $0x4] sm:$0xf]
    %v3627 = vld [vmem:[%s3624 + $0x8] sm:$0xf]
    %v3628 = vld [vmem:[%s3624 + $0xc] sm:$0xf]
    %s3629 = scalar_lea.vmem %s71, 1
    %v3630 = vld [vmem:[%s3629] sm:$0x1]
    %s3631 = scalar_lea.vmem %s73, 16
    %v3632 = vld [vmem:[%s3631] sm:$0xf]
    %v3633 = vld [vmem:[%s3631 + $0x4] sm:$0xf]
    %v3634 = vld [vmem:[%s3631 + $0x8] sm:$0xf]
    %v3635 = vld [vmem:[%s3631 + $0xc] sm:$0xf]
    %s3636 = scalar_lea.vmem %s75, 1
    %v3637 = vld [vmem:[%s3636] sm:$0x1]
    %s3638 = scalar_lea.vmem %s77, 1
    %v3639 = vld [vmem:[%s3638] sm:$0x1]
    %s3640 = scalar_lea.vmem %s79, 1
    %v3641 = vld [vmem:[%s3640] sm:$0x1]
    %s3642 = scalar_lea.vmem %s81, 16
    %v3643 = vld [vmem:[%s3642] sm:$0xf]
    %v3644 = vld [vmem:[%s3642 + $0x4] sm:$0xf]
    %v3645 = vld [vmem:[%s3642 + $0x8] sm:$0xf]
    %v3646 = vld [vmem:[%s3642 + $0xc] sm:$0xf]
    %s3647 = scalar_lea.vmem %s83, 1
    %v3648 = vld [vmem:[%s3647] sm:$0x1]
    %s3649 = scalar_lea.vmem %s85, 64
    %v3650 = vld [vmem:[%s3649] sm:$0xf]
    %v3651 = vld [vmem:[%s3649 + $0x4] sm:$0xf]
    %v3652 = vld [vmem:[%s3649 + $0x8] sm:$0xf]
    %v3653 = vld [vmem:[%s3649 + $0xc] sm:$0xf]
    %v3654 = vld [vmem:[%s3649 + $0x10] sm:$0xf]
    %v3655 = vld [vmem:[%s3649 + $0x14] sm:$0xf]
    %v3656 = vld [vmem:[%s3649 + $0x18] sm:$0xf]
    %v3657 = vld [vmem:[%s3649 + $0x1c] sm:$0xf]
    %v3658 = vld [vmem:[%s3649 + $0x20] sm:$0xf]
    %v3659 = vld [vmem:[%s3649 + $0x24] sm:$0xf]
    %v3660 = vld [vmem:[%s3649 + $0x28] sm:$0xf]
    %v3661 = vld [vmem:[%s3649 + $0x2c] sm:$0xf]
    %v3662 = vld [vmem:[%s3649 + $0x30] sm:$0xf]
    %v3663 = vld [vmem:[%s3649 + $0x34] sm:$0xf]
    %v3664 = vld [vmem:[%s3649 + $0x38] sm:$0xf]
    %v3665 = vld [vmem:[%s3649 + $0x3c] sm:$0xf]
    %s3666 = scalar_lea.vmem %s87, 1
    %v3667 = vld [vmem:[%s3666] sm:$0x1]
    %v3668 = vsel %vm319, %v3618, 0.0
    %3669 = vadd.xlane.f32.xlu0 %v3668
    %v3670 = vpop.xlane.xlu0 %3669
    %v3671 = vsel %vm319, %v3619, 0.0
    %3672 = vadd.xlane.f32.xlu0 %v3671
    %v3673 = vpop.xlane.xlu0 %3672
    %v3674 = vmul.f32 %v3670, %v332
    %v3675 = vmul.f32 %v3673, %v332
    %v3676 = vsub.f32 %v3618, %v3674
    %v3677 = vsub.f32 %v3619, %v3675
    %v3678 = vmul.f32 %v3676, %v3676
    %v3679 = vmul.f32 %v3677, %v3677
    %v3680 = vsel %vm319, %v3678, 0.0
    %3681 = vadd.xlane.f32.xlu0 %v3680
    %v3682 = vpop.xlane.xlu0 %3681
    %v3683 = vsel %vm319, %v3679, 0.0
    %3684 = vadd.xlane.f32.xlu0 %v3683
    %v3685 = vpop.xlane.xlu0 %3684
    %v3686 = vmul.f32 %v3682, %v332
    %v3687 = vmul.f32 %v3685, %v332
    %v3688 = vadd.f32 %v3686, 1e-05
    %v3689 = vadd.f32 %v3687, 1e-05
    %v3690 = vrsqrt.pop %v3688
    %v3691 = vrsqrt.pop %v3689
    %v3692 = vmul.f32 %v3676, %v3690
    %v3693 = vmul.f32 %v3677, %v3691
    %v3695 = vlaneseq
    %v3696 = vshrl.u32 %v3695, 7
    %v3697 = vsub.s32 0, %v3696
    %v3698 = vrot.slane %v3621, %v3697
    %v3700 = vmul.f32 %v3692, %v3698
    %v3701 = vmul.f32 %v3693, %v3698
    %v3703 = vlaneseq
    %v3704 = vshrl.u32 %v3703, 7
    %v3705 = vsub.s32 0, %v3704
    %v3706 = vrot.slane %v3623, %v3705
    %v3708 = vadd.f32 %v3700, %v3706
    %v3709 = vadd.f32 %v3701, %v3706
    %v3710 = vpack.c.bf16 %v3709, %v3708
    %v3712 = vlaneseq
    %v3713 = vshrl.u32 %v3712, 7
    %v3714 = vsub.s32 0, %v3713
    %v3715 = vrot.slane %v3630, %v3714
    %v3721 = vunpack.c.l.b16 %v3625
    %v3722 = vunpack.c.l.b16 %v3626
    %v3723 = vunpack.c.l.b16 %v3627
    %v3724 = vunpack.c.l.b16 %v3628
    %v3725 = vpack.c.b16 %v3722, %v3721
    %v3726 = vpack.c.b16 %v3724, %v3723
    %v3730 = vsel %vm319, %v3710, 0
    %3732 = vmatprep.subr.bf16.mxu0 0
    %3733 = vmatpush1.bf16.msra.mxu0 %v3725
    %3734 = vmatprep.subr.bf16.mxu0 0
    %3735 = vmatpush1.bf16.msra.mxu0 %v3726
    %3736 = vmatprep.subr.bf16.mxu0 0
    %3737 = vmatpush1.bf16.msra.mxu0 0
    %3738 = vmatprep.subr.bf16.mxu0 0
    %3739 = vmatpush1.bf16.msra.mxu0 0
    %3740 = vmatprep.subr.bf16.mxu0 0
    %3741 = vmatpush1.bf16.msra.mxu0 0
    %3742 = vmatprep.subr.bf16.mxu0 0
    %3743 = vmatpush1.bf16.msra.mxu0 0
    %3744 = vmatprep.subr.bf16.mxu0 0
    %3745 = vmatpush1.bf16.msra.mxu0 0
    %3746 = vmatprep.subr.bf16.mxu0 0
    %3747 = vmatpush1.bf16.msra.mxu0 0
    %3748 = vmatprep.subr.bf16.mxu0 0
    %3749 = vmatpush1.bf16.msra.mxu0 0
    %3750 = vmatprep.subr.bf16.mxu0 0
    %3751 = vmatpush1.bf16.msra.mxu0 0
    %3752 = vmatprep.subr.bf16.mxu0 0
    %3753 = vmatpush1.bf16.msra.mxu0 0
    %3754 = vmatprep.subr.bf16.mxu0 0
    %3755 = vmatpush1.bf16.msra.mxu0 0
    %3756 = vmatprep.subr.bf16.mxu0 0
    %3757 = vmatpush1.bf16.msra.mxu0 0
    %3758 = vmatprep.subr.bf16.mxu0 0
    %3759 = vmatpush1.bf16.msra.mxu0 0
    %3760 = vmatprep.subr.bf16.mxu0 0
    %3761 = vmatpush1.bf16.msra.mxu0 0
    %3762 = vmatprep.subr.bf16.mxu0 0
    %3763 = vmatpush1.bf16.msra.mxu0 0
    %3764 = vmatprep.mubr.bf16.mxu0 0
    %3765 = vmatmul.mubr.bf16.gmra.mrb[0].mxu0 %v3730
    %v3766 = vpop.f32.mrb[0].mxu0
    %v3767 = vadd.f32 %v3715, %v3766
    %v3768 = vpop.f32.mrb[0].mxu0
    %v3769 = vpop.f32.mrb[0].mxu0
    %v3770 = vadd.f32 %v3715, %v3769
    %v3771 = vpop.f32.mrb[0].mxu0
    %3772 = vdwg.mxu0
    %v3773 = vpack.c.bf16 %v3767, %v3767
    %3775 = vrot.lane.b32.xlu0 %v3773, 96
    %v3776 = vpop.permute.xlu0 %3775
    %v3778 = vsel %vm472, %v3773, 0
    %v3781 = vsel %vm472, %v3776, 0
    %3783 = vmatprep.subr.bf16.mxu0 0
    %3784 = vmatpush1.bf16.xpose.msra.mxu0 %v3781
    %3785 = vmatprep.subr.bf16.mxu0 0
    %3786 = vmatpush1.bf16.xpose.msra.mxu0 0
    %3787 = vmatprep.subr.bf16.mxu0 0
    %3788 = vmatpush1.bf16.xpose.msra.mxu0 0
    %3789 = vmatprep.subr.bf16.mxu0 0
    %3790 = vmatpush1.bf16.xpose.msra.mxu0 0
    %3791 = vmatprep.subr.bf16.mxu0 0
    %3792 = vmatpush1.bf16.xpose.msra.mxu0 0
    %3793 = vmatprep.subr.bf16.mxu0 0
    %3794 = vmatpush1.bf16.xpose.msra.mxu0 0
    %3795 = vmatprep.subr.bf16.mxu0 0
    %3796 = vmatpush1.bf16.xpose.msra.mxu0 0
    %3797 = vmatprep.subr.bf16.mxu0 0
    %3798 = vmatpush1.bf16.xpose.msra.mxu0 0
    %3799 = vmatprep.subr.bf16.mxu0 0
    %3800 = vmatpush1.bf16.xpose.msra.mxu0 0
    %3801 = vmatprep.subr.bf16.mxu0 0
    %3802 = vmatpush1.bf16.xpose.msra.mxu0 0
    %3803 = vmatprep.subr.bf16.mxu0 0
    %3804 = vmatpush1.bf16.xpose.msra.mxu0 0
    %3805 = vmatprep.subr.bf16.mxu0 0
    %3806 = vmatpush1.bf16.xpose.msra.mxu0 0
    %3807 = vmatprep.subr.bf16.mxu0 0
    %3808 = vmatpush1.bf16.xpose.msra.mxu0 0
    %3809 = vmatprep.subr.bf16.mxu0 0
    %3810 = vmatpush1.bf16.xpose.msra.mxu0 0
    %3811 = vmatprep.subr.bf16.mxu0 0
    %3812 = vmatpush1.bf16.xpose.msra.mxu0 0
    %3813 = vmatprep.subr.bf16.mxu0 0
    %3814 = vmatpush1.bf16.xpose.msra.mxu0 0
    %3815 = vmatprep.mubr.bf16.mxu0 0
    %3816 = vmatmul.mubr.bf16.gmra.mrb[0].mxu0 %v3778
    %v3817 = vpop.f32.mrb[0].mxu0
    %v3818 = vadd.f32 0.0, %v3817
    %v3819 = vpop.f32.mrb[0].mxu0
    %v3820 = vpop.f32.mrb[0].mxu0
    %v3821 = vpop.f32.mrb[0].mxu0
    %3822 = vdwg.mxu0
    %v3823 = vmul.f32 %v3818, 0.25
    %v3824 = vsel %vm2804, %v3823, -inf
    %3825 = vmax.xlane.f32.xlu0 %v3824
    %v3826 = vpop.xlane.xlu0 %3825
    %v3827 = vsub.f32 %v3823, %v3826
    %v3828 = vmul.f32 %v3827, 1.442695
    %v3829 = vpow.pop %v3828
    %v3830 = vsel %vm2804, %v3829, 0.0
    %3831 = vadd.xlane.f32.xlu0 %v3830
    %v3832 = vpop.xlane.xlu0 %3831
    %v3833 = vrcp.pop %v3832
    %v3834 = vmul.f32 %v3829, %v3833
    %v3835 = vpack.c.bf16 %v3834, %v3834
    %3836 = vrot.lane.b32.xlu0 %v3773, 64
    %v3837 = vpop.permute.xlu0 %3836
    %v3839 = vsel %vm2804, %v3835, 0
    %v3842 = vsel %vm2822, %v3837, 0
    %3844 = vmatprep.subr.bf16.mxu0 0
    %3845 = vmatpush1.bf16.msra.mxu0 %v3842
    %3846 = vmatprep.subr.bf16.mxu0 0
    %3847 = vmatpush1.bf16.msra.mxu0 0
    %3848 = vmatprep.subr.bf16.mxu0 0
    %3849 = vmatpush1.bf16.msra.mxu0 0
    %3850 = vmatprep.subr.bf16.mxu0 0
    %3851 = vmatpush1.bf16.msra.mxu0 0
    %3852 = vmatprep.subr.bf16.mxu0 0
    %3853 = vmatpush1.bf16.msra.mxu0 0
    %3854 = vmatprep.subr.bf16.mxu0 0
    %3855 = vmatpush1.bf16.msra.mxu0 0
    %3856 = vmatprep.subr.bf16.mxu0 0
    %3857 = vmatpush1.bf16.msra.mxu0 0
    %3858 = vmatprep.subr.bf16.mxu0 0
    %3859 = vmatpush1.bf16.msra.mxu0 0
    %3860 = vmatprep.subr.bf16.mxu0 0
    %3861 = vmatpush1.bf16.msra.mxu0 0
    %3862 = vmatprep.subr.bf16.mxu0 0
    %3863 = vmatpush1.bf16.msra.mxu0 0
    %3864 = vmatprep.subr.bf16.mxu0 0
    %3865 = vmatpush1.bf16.msra.mxu0 0
    %3866 = vmatprep.subr.bf16.mxu0 0
    %3867 = vmatpush1.bf16.msra.mxu0 0
    %3868 = vmatprep.subr.bf16.mxu0 0
    %3869 = vmatpush1.bf16.msra.mxu0 0
    %3870 = vmatprep.subr.bf16.mxu0 0
    %3871 = vmatpush1.bf16.msra.mxu0 0
    %3872 = vmatprep.subr.bf16.mxu0 0
    %3873 = vmatpush1.bf16.msra.mxu0 0
    %3874 = vmatprep.subr.bf16.mxu0 0
    %3875 = vmatpush1.bf16.msra.mxu0 0
    %3876 = vmatprep.mubr.bf16.mxu0 0
    %3877 = vmatmul.mubr.bf16.gmra.mrb[0].mxu0 %v3839
    %v3878 = vpop.f32.mrb[0].mxu0
    %v3879 = vadd.f32 0.0, %v3878
    %v3880 = vpop.f32.mrb[0].mxu0
    %v3881 = vpop.f32.mrb[0].mxu0
    %v3882 = vpop.f32.mrb[0].mxu0
    %3883 = vdwg.mxu0
    %v3884 = vpack.c.bf16 %v3879, %v3879
    %3885 = vrot.lane.b32.xlu0 %v3773, 112
    %v3886 = vpop.permute.xlu0 %3885
    %3887 = vrot.lane.b32.xlu0 %v3773, 80
    %v3888 = vpop.permute.xlu0 %3887
    %v3890 = vsel %vm472, %v3886, 0
    %v3893 = vsel %vm472, %v3888, 0
    %3895 = vmatprep.subr.bf16.mxu0 0
    %3896 = vmatpush1.bf16.xpose.msra.mxu0 %v3893
    %3897 = vmatprep.subr.bf16.mxu0 0
    %3898 = vmatpush1.bf16.xpose.msra.mxu0 0
    %3899 = vmatprep.subr.bf16.mxu0 0
    %3900 = vmatpush1.bf16.xpose.msra.mxu0 0
    %3901 = vmatprep.subr.bf16.mxu0 0
    %3902 = vmatpush1.bf16.xpose.msra.mxu0 0
    %3903 = vmatprep.subr.bf16.mxu0 0
    %3904 = vmatpush1.bf16.xpose.msra.mxu0 0
    %3905 = vmatprep.subr.bf16.mxu0 0
    %3906 = vmatpush1.bf16.xpose.msra.mxu0 0
    %3907 = vmatprep.subr.bf16.mxu0 0
    %3908 = vmatpush1.bf16.xpose.msra.mxu0 0
    %3909 = vmatprep.subr.bf16.mxu0 0
    %3910 = vmatpush1.bf16.xpose.msra.mxu0 0
    %3911 = vmatprep.subr.bf16.mxu0 0
    %3912 = vmatpush1.bf16.xpose.msra.mxu0 0
    %3913 = vmatprep.subr.bf16.mxu0 0
    %3914 = vmatpush1.bf16.xpose.msra.mxu0 0
    %3915 = vmatprep.subr.bf16.mxu0 0
    %3916 = vmatpush1.bf16.xpose.msra.mxu0 0
    %3917 = vmatprep.subr.bf16.mxu0 0
    %3918 = vmatpush1.bf16.xpose.msra.mxu0 0
    %3919 = vmatprep.subr.bf16.mxu0 0
    %3920 = vmatpush1.bf16.xpose.msra.mxu0 0
    %3921 = vmatprep.subr.bf16.mxu0 0
    %3922 = vmatpush1.bf16.xpose.msra.mxu0 0
    %3923 = vmatprep.subr.bf16.mxu0 0
    %3924 = vmatpush1.bf16.xpose.msra.mxu0 0
    %3925 = vmatprep.subr.bf16.mxu0 0
    %3926 = vmatpush1.bf16.xpose.msra.mxu0 0
    %3927 = vmatprep.mubr.bf16.mxu0 0
    %3928 = vmatmul.mubr.bf16.gmra.mrb[0].mxu0 %v3890
    %v3929 = vpop.f32.mrb[0].mxu0
    %v3930 = vadd.f32 0.0, %v3929
    %v3931 = vpop.f32.mrb[0].mxu0
    %v3932 = vpop.f32.mrb[0].mxu0
    %v3933 = vpop.f32.mrb[0].mxu0
    %3934 = vdwg.mxu0
    %v3935 = vmul.f32 %v3930, 0.25
    %v3936 = vsel %vm2804, %v3935, -inf
    %3937 = vmax.xlane.f32.xlu0 %v3936
    %v3938 = vpop.xlane.xlu0 %3937
    %v3939 = vsub.f32 %v3935, %v3938
    %v3940 = vmul.f32 %v3939, 1.442695
    %v3941 = vpow.pop %v3940
    %v3942 = vsel %vm2804, %v3941, 0.0
    %3943 = vadd.xlane.f32.xlu0 %v3942
    %v3944 = vpop.xlane.xlu0 %3943
    %v3945 = vrcp.pop %v3944
    %v3946 = vmul.f32 %v3941, %v3945
    %v3947 = vpack.c.bf16 %v3946, %v3946
    %3948 = vrot.lane.b32.xlu0 %v3773, 48
    %v3949 = vpop.permute.xlu0 %3948
    %v3951 = vsel %vm2804, %v3947, 0
    %v3954 = vsel %vm2822, %v3949, 0
    %3956 = vmatprep.subr.bf16.mxu0 0
    %3957 = vmatpush1.bf16.msra.mxu0 %v3954
    %3958 = vmatprep.subr.bf16.mxu0 0
    %3959 = vmatpush1.bf16.msra.mxu0 0
    %3960 = vmatprep.subr.bf16.mxu0 0
    %3961 = vmatpush1.bf16.msra.mxu0 0
    %3962 = vmatprep.subr.bf16.mxu0 0
    %3963 = vmatpush1.bf16.msra.mxu0 0
    %3964 = vmatprep.subr.bf16.mxu0 0
    %3965 = vmatpush1.bf16.msra.mxu0 0
    %3966 = vmatprep.subr.bf16.mxu0 0
    %3967 = vmatpush1.bf16.msra.mxu0 0
    %3968 = vmatprep.subr.bf16.mxu0 0
    %3969 = vmatpush1.bf16.msra.mxu0 0
    %3970 = vmatprep.subr.bf16.mxu0 0
    %3971 = vmatpush1.bf16.msra.mxu0 0
    %3972 = vmatprep.subr.bf16.mxu0 0
    %3973 = vmatpush1.bf16.msra.mxu0 0
    %3974 = vmatprep.subr.bf16.mxu0 0
    %3975 = vmatpush1.bf16.msra.mxu0 0
    %3976 = vmatprep.subr.bf16.mxu0 0
    %3977 = vmatpush1.bf16.msra.mxu0 0
    %3978 = vmatprep.subr.bf16.mxu0 0
    %3979 = vmatpush1.bf16.msra.mxu0 0
    %3980 = vmatprep.subr.bf16.mxu0 0
    %3981 = vmatpush1.bf16.msra.mxu0 0
    %3982 = vmatprep.subr.bf16.mxu0 0
    %3983 = vmatpush1.bf16.msra.mxu0 0
    %3984 = vmatprep.subr.bf16.mxu0 0
    %3985 = vmatpush1.bf16.msra.mxu0 0
    %3986 = vmatprep.subr.bf16.mxu0 0
    %3987 = vmatpush1.bf16.msra.mxu0 0
    %3988 = vmatprep.mubr.bf16.mxu0 0
    %3989 = vmatmul.mubr.bf16.gmra.mrb[0].mxu0 %v3951
    %v3990 = vpop.f32.mrb[0].mxu0
    %v3991 = vadd.f32 0.0, %v3990
    %v3992 = vpop.f32.mrb[0].mxu0
    %v3993 = vpop.f32.mrb[0].mxu0
    %v3994 = vpop.f32.mrb[0].mxu0
    %3995 = vdwg.mxu0
    %v3996 = vpack.c.bf16 %v3991, %v3991
    %v3999 = vunpack.c.l.b16 %v3634
    %v4000 = vunpack.c.l.b16 %v3635
    %v4001 = vpack.c.b16 %v4000, %v3999
    %v4004 = vsel %vm472, %v3996, 0
    %4006 = vmatprep.subr.bf16.mxu0 0
    %4007 = vmatpush1.bf16.msra.mxu0 %v4001
    %4008 = vmatprep.subr.bf16.mxu0 0
    %4009 = vmatpush1.bf16.msra.mxu0 0
    %4010 = vmatprep.subr.bf16.mxu0 0
    %4011 = vmatpush1.bf16.msra.mxu0 0
    %4012 = vmatprep.subr.bf16.mxu0 0
    %4013 = vmatpush1.bf16.msra.mxu0 0
    %4014 = vmatprep.subr.bf16.mxu0 0
    %4015 = vmatpush1.bf16.msra.mxu0 0
    %4016 = vmatprep.subr.bf16.mxu0 0
    %4017 = vmatpush1.bf16.msra.mxu0 0
    %4018 = vmatprep.subr.bf16.mxu0 0
    %4019 = vmatpush1.bf16.msra.mxu0 0
    %4020 = vmatprep.subr.bf16.mxu0 0
    %4021 = vmatpush1.bf16.msra.mxu0 0
    %4022 = vmatprep.subr.bf16.mxu0 0
    %4023 = vmatpush1.bf16.msra.mxu0 0
    %4024 = vmatprep.subr.bf16.mxu0 0
    %4025 = vmatpush1.bf16.msra.mxu0 0
    %4026 = vmatprep.subr.bf16.mxu0 0
    %4027 = vmatpush1.bf16.msra.mxu0 0
    %4028 = vmatprep.subr.bf16.mxu0 0
    %4029 = vmatpush1.bf16.msra.mxu0 0
    %4030 = vmatprep.subr.bf16.mxu0 0
    %4031 = vmatpush1.bf16.msra.mxu0 0
    %4032 = vmatprep.subr.bf16.mxu0 0
    %4033 = vmatpush1.bf16.msra.mxu0 0
    %4034 = vmatprep.subr.bf16.mxu0 0
    %4035 = vmatpush1.bf16.msra.mxu0 0
    %4036 = vmatprep.subr.bf16.mxu0 0
    %4037 = vmatpush1.bf16.msra.mxu0 0
    %4038 = vmatprep.mubr.bf16.mxu0 0
    %4039 = vmatmul.mubr.bf16.gmra.mrb[0].mxu0 %v4004
    %v4040 = vpop.f32.mrb[0].mxu0
    %v4041 = vadd.f32 0.0, %v4040
    %v4042 = vpop.f32.mrb[0].mxu0
    %v4043 = vpop.f32.mrb[0].mxu0
    %v4044 = vpop.f32.mrb[0].mxu0
    %4045 = vdwg.mxu0
    %v4048 = vunpack.c.l.b16 %v3632
    %v4049 = vunpack.c.l.b16 %v3633
    %v4050 = vpack.c.b16 %v4049, %v4048
    %v4053 = vsel %vm472, %v3884, 0
    %4055 = vmatprep.subr.bf16.mxu0 0
    %4056 = vmatpush1.bf16.msra.mxu0 %v4050
    %4057 = vmatprep.subr.bf16.mxu0 0
    %4058 = vmatpush1.bf16.msra.mxu0 0
    %4059 = vmatprep.subr.bf16.mxu0 0
    %4060 = vmatpush1.bf16.msra.mxu0 0
    %4061 = vmatprep.subr.bf16.mxu0 0
    %4062 = vmatpush1.bf16.msra.mxu0 0
    %4063 = vmatprep.subr.bf16.mxu0 0
    %4064 = vmatpush1.bf16.msra.mxu0 0
    %4065 = vmatprep.subr.bf16.mxu0 0
    %4066 = vmatpush1.bf16.msra.mxu0 0
    %4067 = vmatprep.subr.bf16.mxu0 0
    %4068 = vmatpush1.bf16.msra.mxu0 0
    %4069 = vmatprep.subr.bf16.mxu0 0
    %4070 = vmatpush1.bf16.msra.mxu0 0
    %4071 = vmatprep.subr.bf16.mxu0 0
    %4072 = vmatpush1.bf16.msra.mxu0 0
    %4073 = vmatprep.subr.bf16.mxu0 0
    %4074 = vmatpush1.bf16.msra.mxu0 0
    %4075 = vmatprep.subr.bf16.mxu0 0
    %4076 = vmatpush1.bf16.msra.mxu0 0
    %4077 = vmatprep.subr.bf16.mxu0 0
    %4078 = vmatpush1.bf16.msra.mxu0 0
    %4079 = vmatprep.subr.bf16.mxu0 0
    %4080 = vmatpush1.bf16.msra.mxu0 0
    %4081 = vmatprep.subr.bf16.mxu0 0
    %4082 = vmatpush1.bf16.msra.mxu0 0
    %4083 = vmatprep.subr.bf16.mxu0 0
    %4084 = vmatpush1.bf16.msra.mxu0 0
    %4085 = vmatprep.subr.bf16.mxu0 0
    %4086 = vmatpush1.bf16.msra.mxu0 0
    %4087 = vmatprep.mubr.bf16.mxu0 0
    %4088 = vmatmul.mubr.bf16.gmra.mrb[0].mxu0 %v4053
    %v4089 = vpop.f32.mrb[0].mxu0
    %v4090 = vadd.f32 %v4041, %v4089
    %v4091 = vpop.f32.mrb[0].mxu0
    %v4092 = vpop.f32.mrb[0].mxu0
    %v4093 = vpop.f32.mrb[0].mxu0
    %4094 = vdwg.mxu0
    %v4095 = vpack.c.bf16 %v3770, %v3770
    %4097 = vrot.lane.b32.xlu0 %v4095, 96
    %v4098 = vpop.permute.xlu0 %4097
    %v4100 = vsel %vm472, %v4095, 0
    %v4103 = vsel %vm472, %v4098, 0
    %4105 = vmatprep.subr.bf16.mxu0 0
    %4106 = vmatpush1.bf16.xpose.msra.mxu0 %v4103
    %4107 = vmatprep.subr.bf16.mxu0 0
    %4108 = vmatpush1.bf16.xpose.msra.mxu0 0
    %4109 = vmatprep.subr.bf16.mxu0 0
    %4110 = vmatpush1.bf16.xpose.msra.mxu0 0
    %4111 = vmatprep.subr.bf16.mxu0 0
    %4112 = vmatpush1.bf16.xpose.msra.mxu0 0
    %4113 = vmatprep.subr.bf16.mxu0 0
    %4114 = vmatpush1.bf16.xpose.msra.mxu0 0
    %4115 = vmatprep.subr.bf16.mxu0 0
    %4116 = vmatpush1.bf16.xpose.msra.mxu0 0
    %4117 = vmatprep.subr.bf16.mxu0 0
    %4118 = vmatpush1.bf16.xpose.msra.mxu0 0
    %4119 = vmatprep.subr.bf16.mxu0 0
    %4120 = vmatpush1.bf16.xpose.msra.mxu0 0
    %4121 = vmatprep.subr.bf16.mxu0 0
    %4122 = vmatpush1.bf16.xpose.msra.mxu0 0
    %4123 = vmatprep.subr.bf16.mxu0 0
    %4124 = vmatpush1.bf16.xpose.msra.mxu0 0
    %4125 = vmatprep.subr.bf16.mxu0 0
    %4126 = vmatpush1.bf16.xpose.msra.mxu0 0
    %4127 = vmatprep.subr.bf16.mxu0 0
    %4128 = vmatpush1.bf16.xpose.msra.mxu0 0
    %4129 = vmatprep.subr.bf16.mxu0 0
    %4130 = vmatpush1.bf16.xpose.msra.mxu0 0
    %4131 = vmatprep.subr.bf16.mxu0 0
    %4132 = vmatpush1.bf16.xpose.msra.mxu0 0
    %4133 = vmatprep.subr.bf16.mxu0 0
    %4134 = vmatpush1.bf16.xpose.msra.mxu0 0
    %4135 = vmatprep.subr.bf16.mxu0 0
    %4136 = vmatpush1.bf16.xpose.msra.mxu0 0
    %4137 = vmatprep.mubr.bf16.mxu0 0
    %4138 = vmatmul.mubr.bf16.gmra.mrb[0].mxu0 %v4100
    %v4139 = vpop.f32.mrb[0].mxu0
    %v4140 = vadd.f32 0.0, %v4139
    %v4141 = vpop.f32.mrb[0].mxu0
    %v4142 = vpop.f32.mrb[0].mxu0
    %v4143 = vpop.f32.mrb[0].mxu0
    %4144 = vdwg.mxu0
    %v4145 = vmul.f32 %v4140, 0.25
    %v4146 = vsel %vm2804, %v4145, -inf
    %4147 = vmax.xlane.f32.xlu0 %v4146
    %v4148 = vpop.xlane.xlu0 %4147
    %v4149 = vsub.f32 %v4145, %v4148
    %v4150 = vmul.f32 %v4149, 1.442695
    %v4151 = vpow.pop %v4150
    %v4152 = vsel %vm2804, %v4151, 0.0
    %4153 = vadd.xlane.f32.xlu0 %v4152
    %v4154 = vpop.xlane.xlu0 %4153
    %v4155 = vrcp.pop %v4154
    %v4156 = vmul.f32 %v4151, %v4155
    %v4157 = vpack.c.bf16 %v4156, %v4156
    %4158 = vrot.lane.b32.xlu0 %v4095, 64
    %v4159 = vpop.permute.xlu0 %4158
    %v4161 = vsel %vm2804, %v4157, 0
    %v4164 = vsel %vm2822, %v4159, 0
    %4166 = vmatprep.subr.bf16.mxu0 0
    %4167 = vmatpush1.bf16.msra.mxu0 %v4164
    %4168 = vmatprep.subr.bf16.mxu0 0
    %4169 = vmatpush1.bf16.msra.mxu0 0
    %4170 = vmatprep.subr.bf16.mxu0 0
    %4171 = vmatpush1.bf16.msra.mxu0 0
    %4172 = vmatprep.subr.bf16.mxu0 0
    %4173 = vmatpush1.bf16.msra.mxu0 0
    %4174 = vmatprep.subr.bf16.mxu0 0
    %4175 = vmatpush1.bf16.msra.mxu0 0
    %4176 = vmatprep.subr.bf16.mxu0 0
    %4177 = vmatpush1.bf16.msra.mxu0 0
    %4178 = vmatprep.subr.bf16.mxu0 0
    %4179 = vmatpush1.bf16.msra.mxu0 0
    %4180 = vmatprep.subr.bf16.mxu0 0
    %4181 = vmatpush1.bf16.msra.mxu0 0
    %4182 = vmatprep.subr.bf16.mxu0 0
    %4183 = vmatpush1.bf16.msra.mxu0 0
    %4184 = vmatprep.subr.bf16.mxu0 0
    %4185 = vmatpush1.bf16.msra.mxu0 0
    %4186 = vmatprep.subr.bf16.mxu0 0
    %4187 = vmatpush1.bf16.msra.mxu0 0
    %4188 = vmatprep.subr.bf16.mxu0 0
    %4189 = vmatpush1.bf16.msra.mxu0 0
    %4190 = vmatprep.subr.bf16.mxu0 0
    %4191 = vmatpush1.bf16.msra.mxu0 0
    %4192 = vmatprep.subr.bf16.mxu0 0
    %4193 = vmatpush1.bf16.msra.mxu0 0
    %4194 = vmatprep.subr.bf16.mxu0 0
    %4195 = vmatpush1.bf16.msra.mxu0 0
    %4196 = vmatprep.subr.bf16.mxu0 0
    %4197 = vmatpush1.bf16.msra.mxu0 0
    %4198 = vmatprep.mubr.bf16.mxu0 0
    %4199 = vmatmul.mubr.bf16.gmra.mrb[0].mxu0 %v4161
    %v4200 = vpop.f32.mrb[0].mxu0
    %v4201 = vadd.f32 0.0, %v4200
    %v4202 = vpop.f32.mrb[0].mxu0
    %v4203 = vpop.f32.mrb[0].mxu0
    %v4204 = vpop.f32.mrb[0].mxu0
    %4205 = vdwg.mxu0
    %v4206 = vpack.c.bf16 %v4201, %v4201
    %4207 = vrot.lane.b32.xlu0 %v4095, 112
    %v4208 = vpop.permute.xlu0 %4207
    %4209 = vrot.lane.b32.xlu0 %v4095, 80
    %v4210 = vpop.permute.xlu0 %4209
    %v4212 = vsel %vm472, %v4208, 0
    %v4215 = vsel %vm472, %v4210, 0
    %4217 = vmatprep.subr.bf16.mxu0 0
    %4218 = vmatpush1.bf16.xpose.msra.mxu0 %v4215
    %4219 = vmatprep.subr.bf16.mxu0 0
    %4220 = vmatpush1.bf16.xpose.msra.mxu0 0
    %4221 = vmatprep.subr.bf16.mxu0 0
    %4222 = vmatpush1.bf16.xpose.msra.mxu0 0
    %4223 = vmatprep.subr.bf16.mxu0 0
    %4224 = vmatpush1.bf16.xpose.msra.mxu0 0
    %4225 = vmatprep.subr.bf16.mxu0 0
    %4226 = vmatpush1.bf16.xpose.msra.mxu0 0
    %4227 = vmatprep.subr.bf16.mxu0 0
    %4228 = vmatpush1.bf16.xpose.msra.mxu0 0
    %4229 = vmatprep.subr.bf16.mxu0 0
    %4230 = vmatpush1.bf16.xpose.msra.mxu0 0
    %4231 = vmatprep.subr.bf16.mxu0 0
    %4232 = vmatpush1.bf16.xpose.msra.mxu0 0
    %4233 = vmatprep.subr.bf16.mxu0 0
    %4234 = vmatpush1.bf16.xpose.msra.mxu0 0
    %4235 = vmatprep.subr.bf16.mxu0 0
    %4236 = vmatpush1.bf16.xpose.msra.mxu0 0
    %4237 = vmatprep.subr.bf16.mxu0 0
    %4238 = vmatpush1.bf16.xpose.msra.mxu0 0
    %4239 = vmatprep.subr.bf16.mxu0 0
    %4240 = vmatpush1.bf16.xpose.msra.mxu0 0
    %4241 = vmatprep.subr.bf16.mxu0 0
    %4242 = vmatpush1.bf16.xpose.msra.mxu0 0
    %4243 = vmatprep.subr.bf16.mxu0 0
    %4244 = vmatpush1.bf16.xpose.msra.mxu0 0
    %4245 = vmatprep.subr.bf16.mxu0 0
    %4246 = vmatpush1.bf16.xpose.msra.mxu0 0
    %4247 = vmatprep.subr.bf16.mxu0 0
    %4248 = vmatpush1.bf16.xpose.msra.mxu0 0
    %4249 = vmatprep.mubr.bf16.mxu0 0
    %4250 = vmatmul.mubr.bf16.gmra.mrb[0].mxu0 %v4212
    %v4251 = vpop.f32.mrb[0].mxu0
    %v4252 = vadd.f32 0.0, %v4251
    %v4253 = vpop.f32.mrb[0].mxu0
    %v4254 = vpop.f32.mrb[0].mxu0
    %v4255 = vpop.f32.mrb[0].mxu0
    %4256 = vdwg.mxu0
    %v4257 = vmul.f32 %v4252, 0.25
    %v4258 = vsel %vm2804, %v4257, -inf
    %4259 = vmax.xlane.f32.xlu0 %v4258
    %v4260 = vpop.xlane.xlu0 %4259
    %v4261 = vsub.f32 %v4257, %v4260
    %v4262 = vmul.f32 %v4261, 1.442695
    %v4263 = vpow.pop %v4262
    %v4264 = vsel %vm2804, %v4263, 0.0
    %4265 = vadd.xlane.f32.xlu0 %v4264
    %v4266 = vpop.xlane.xlu0 %4265
    %v4267 = vrcp.pop %v4266
    %v4268 = vmul.f32 %v4263, %v4267
    %v4269 = vpack.c.bf16 %v4268, %v4268
    %4270 = vrot.lane.b32.xlu0 %v4095, 48
    %v4271 = vpop.permute.xlu0 %4270
    %v4273 = vsel %vm2804, %v4269, 0
    %v4276 = vsel %vm2822, %v4271, 0
    %4278 = vmatprep.subr.bf16.mxu0 0
    %4279 = vmatpush1.bf16.msra.mxu0 %v4276
    %4280 = vmatprep.subr.bf16.mxu0 0
    %4281 = vmatpush1.bf16.msra.mxu0 0
    %4282 = vmatprep.subr.bf16.mxu0 0
    %4283 = vmatpush1.bf16.msra.mxu0 0
    %4284 = vmatprep.subr.bf16.mxu0 0
    %4285 = vmatpush1.bf16.msra.mxu0 0
    %4286 = vmatprep.subr.bf16.mxu0 0
    %4287 = vmatpush1.bf16.msra.mxu0 0
    %4288 = vmatprep.subr.bf16.mxu0 0
    %4289 = vmatpush1.bf16.msra.mxu0 0
    %4290 = vmatprep.subr.bf16.mxu0 0
    %4291 = vmatpush1.bf16.msra.mxu0 0
    %4292 = vmatprep.subr.bf16.mxu0 0
    %4293 = vmatpush1.bf16.msra.mxu0 0
    %4294 = vmatprep.subr.bf16.mxu0 0
    %4295 = vmatpush1.bf16.msra.mxu0 0
    %4296 = vmatprep.subr.bf16.mxu0 0
    %4297 = vmatpush1.bf16.msra.mxu0 0
    %4298 = vmatprep.subr.bf16.mxu0 0
    %4299 = vmatpush1.bf16.msra.mxu0 0
    %4300 = vmatprep.subr.bf16.mxu0 0
    %4301 = vmatpush1.bf16.msra.mxu0 0
    %4302 = vmatprep.subr.bf16.mxu0 0
    %4303 = vmatpush1.bf16.msra.mxu0 0
    %4304 = vmatprep.subr.bf16.mxu0 0
    %4305 = vmatpush1.bf16.msra.mxu0 0
    %4306 = vmatprep.subr.bf16.mxu0 0
    %4307 = vmatpush1.bf16.msra.mxu0 0
    %4308 = vmatprep.subr.bf16.mxu0 0
    %4309 = vmatpush1.bf16.msra.mxu0 0
    %4310 = vmatprep.mubr.bf16.mxu0 0
    %4311 = vmatmul.mubr.bf16.gmra.mrb[0].mxu0 %v4273
    %v4312 = vpop.f32.mrb[0].mxu0
    %v4313 = vadd.f32 0.0, %v4312
    %v4314 = vpop.f32.mrb[0].mxu0
    %v4315 = vpop.f32.mrb[0].mxu0
    %v4316 = vpop.f32.mrb[0].mxu0
    %4317 = vdwg.mxu0
    %v4318 = vpack.c.bf16 %v4313, %v4313
    %v4320 = vsel %vm472, %v4318, 0
    %4322 = vmatprep.subr.bf16.mxu0 0
    %4323 = vmatpush1.bf16.msra.mxu0 %v4001
    %4324 = vmatprep.subr.bf16.mxu0 0
    %4325 = vmatpush1.bf16.msra.mxu0 0
    %4326 = vmatprep.subr.bf16.mxu0 0
    %4327 = vmatpush1.bf16.msra.mxu0 0
    %4328 = vmatprep.subr.bf16.mxu0 0
    %4329 = vmatpush1.bf16.msra.mxu0 0
    %4330 = vmatprep.subr.bf16.mxu0 0
    %4331 = vmatpush1.bf16.msra.mxu0 0
    %4332 = vmatprep.subr.bf16.mxu0 0
    %4333 = vmatpush1.bf16.msra.mxu0 0
    %4334 = vmatprep.subr.bf16.mxu0 0
    %4335 = vmatpush1.bf16.msra.mxu0 0
    %4336 = vmatprep.subr.bf16.mxu0 0
    %4337 = vmatpush1.bf16.msra.mxu0 0
    %4338 = vmatprep.subr.bf16.mxu0 0
    %4339 = vmatpush1.bf16.msra.mxu0 0
    %4340 = vmatprep.subr.bf16.mxu0 0
    %4341 = vmatpush1.bf16.msra.mxu0 0
    %4342 = vmatprep.subr.bf16.mxu0 0
    %4343 = vmatpush1.bf16.msra.mxu0 0
    %4344 = vmatprep.subr.bf16.mxu0 0
    %4345 = vmatpush1.bf16.msra.mxu0 0
    %4346 = vmatprep.subr.bf16.mxu0 0
    %4347 = vmatpush1.bf16.msra.mxu0 0
    %4348 = vmatprep.subr.bf16.mxu0 0
    %4349 = vmatpush1.bf16.msra.mxu0 0
    %4350 = vmatprep.subr.bf16.mxu0 0
    %4351 = vmatpush1.bf16.msra.mxu0 0
    %4352 = vmatprep.subr.bf16.mxu0 0
    %4353 = vmatpush1.bf16.msra.mxu0 0
    %4354 = vmatprep.mubr.bf16.mxu0 0
    %4355 = vmatmul.mubr.bf16.gmra.mrb[0].mxu0 %v4320
    %v4356 = vpop.f32.mrb[0].mxu0
    %v4357 = vadd.f32 0.0, %v4356
    %v4358 = vpop.f32.mrb[0].mxu0
    %v4359 = vpop.f32.mrb[0].mxu0
    %v4360 = vpop.f32.mrb[0].mxu0
    %4361 = vdwg.mxu0
    %v4363 = vsel %vm472, %v4206, 0
    %4365 = vmatprep.subr.bf16.mxu0 0
    %4366 = vmatpush1.bf16.msra.mxu0 %v4050
    %4367 = vmatprep.subr.bf16.mxu0 0
    %4368 = vmatpush1.bf16.msra.mxu0 0
    %4369 = vmatprep.subr.bf16.mxu0 0
    %4370 = vmatpush1.bf16.msra.mxu0 0
    %4371 = vmatprep.subr.bf16.mxu0 0
    %4372 = vmatpush1.bf16.msra.mxu0 0
    %4373 = vmatprep.subr.bf16.mxu0 0
    %4374 = vmatpush1.bf16.msra.mxu0 0
    %4375 = vmatprep.subr.bf16.mxu0 0
    %4376 = vmatpush1.bf16.msra.mxu0 0
    %4377 = vmatprep.subr.bf16.mxu0 0
    %4378 = vmatpush1.bf16.msra.mxu0 0
    %4379 = vmatprep.subr.bf16.mxu0 0
    %4380 = vmatpush1.bf16.msra.mxu0 0
    %4381 = vmatprep.subr.bf16.mxu0 0
    %4382 = vmatpush1.bf16.msra.mxu0 0
    %4383 = vmatprep.subr.bf16.mxu0 0
    %4384 = vmatpush1.bf16.msra.mxu0 0
    %4385 = vmatprep.subr.bf16.mxu0 0
    %4386 = vmatpush1.bf16.msra.mxu0 0
    %4387 = vmatprep.subr.bf16.mxu0 0
    %4388 = vmatpush1.bf16.msra.mxu0 0
    %4389 = vmatprep.subr.bf16.mxu0 0
    %4390 = vmatpush1.bf16.msra.mxu0 0
    %4391 = vmatprep.subr.bf16.mxu0 0
    %4392 = vmatpush1.bf16.msra.mxu0 0
    %4393 = vmatprep.subr.bf16.mxu0 0
    %4394 = vmatpush1.bf16.msra.mxu0 0
    %4395 = vmatprep.subr.bf16.mxu0 0
    %4396 = vmatpush1.bf16.msra.mxu0 0
    %4397 = vmatprep.mubr.bf16.mxu0 0
    %4398 = vmatmul.mubr.bf16.gmra.mrb[0].mxu0 %v4363
    %v4399 = vpop.f32.mrb[0].mxu0
    %v4400 = vadd.f32 %v4357, %v4399
    %v4401 = vpop.f32.mrb[0].mxu0
    %v4402 = vpop.f32.mrb[0].mxu0
    %v4403 = vpop.f32.mrb[0].mxu0
    %4404 = vdwg.mxu0
    %v4405 = vadd.f32 %v3618, %v4090
    %v4406 = vadd.f32 %v3619, %v4400
    %v4408 = vlaneseq
    %v4409 = vshrl.u32 %v4408, 7
    %v4410 = vsub.s32 0, %v4409
    %v4411 = vrot.slane %v3637, %v4410
    %v4413 = vadd.f32 %v4405, %v4411
    %v4414 = vadd.f32 %v4406, %v4411
    %v4415 = vsel %vm319, %v4413, 0.0
    %4416 = vadd.xlane.f32.xlu0 %v4415
    %v4417 = vpop.xlane.xlu0 %4416
    %v4418 = vsel %vm319, %v4414, 0.0
    %4419 = vadd.xlane.f32.xlu0 %v4418
    %v4420 = vpop.xlane.xlu0 %4419
    %v4421 = vmul.f32 %v4417, %v332
    %v4422 = vmul.f32 %v4420, %v332
    %v4423 = vsub.f32 %v4413, %v4421
    %v4424 = vsub.f32 %v4414, %v4422
    %v4425 = vmul.f32 %v4423, %v4423
    %v4426 = vmul.f32 %v4424, %v4424
    %v4427 = vsel %vm319, %v4425, 0.0
    %4428 = vadd.xlane.f32.xlu0 %v4427
    %v4429 = vpop.xlane.xlu0 %4428
    %v4430 = vsel %vm319, %v4426, 0.0
    %4431 = vadd.xlane.f32.xlu0 %v4430
    %v4432 = vpop.xlane.xlu0 %4431
    %v4433 = vmul.f32 %v4429, %v332
    %v4434 = vmul.f32 %v4432, %v332
    %v4435 = vadd.f32 %v4433, 1e-05
    %v4436 = vadd.f32 %v4434, 1e-05
    %v4437 = vrsqrt.pop %v4435
    %v4438 = vrsqrt.pop %v4436
    %v4439 = vmul.f32 %v4423, %v4437
    %v4440 = vmul.f32 %v4424, %v4438
    %v4442 = vlaneseq
    %v4443 = vshrl.u32 %v4442, 7
    %v4444 = vsub.s32 0, %v4443
    %v4445 = vrot.slane %v3639, %v4444
    %v4447 = vmul.f32 %v4439, %v4445
    %v4448 = vmul.f32 %v4440, %v4445
    %v4450 = vlaneseq
    %v4451 = vshrl.u32 %v4450, 7
    %v4452 = vsub.s32 0, %v4451
    %v4453 = vrot.slane %v3641, %v4452
    %v4455 = vadd.f32 %v4447, %v4453
    %v4456 = vadd.f32 %v4448, %v4453
    %v4457 = vpack.c.bf16 %v4456, %v4455
    %v4459 = vlaneseq
    %v4460 = vshrl.u32 %v4459, 7
    %v4461 = vsub.s32 0, %v4460
    %v4462 = vrot.slane %v3648, %v4461
    %v4468 = vunpack.c.l.b16 %v3643
    %v4469 = vunpack.c.l.b16 %v3644
    %v4470 = vunpack.c.l.b16 %v3645
    %v4471 = vunpack.c.l.b16 %v3646
    %v4472 = vpack.c.b16 %v4469, %v4468
    %v4473 = vpack.c.b16 %v4471, %v4470
    %v4477 = vsel %vm319, %v4457, 0
    %4479 = vmatprep.subr.bf16.mxu0 0
    %4480 = vmatpush1.bf16.msra.mxu0 %v4472
    %4481 = vmatprep.subr.bf16.mxu0 0
    %4482 = vmatpush1.bf16.msra.mxu0 %v4473
    %4483 = vmatprep.subr.bf16.mxu0 0
    %4484 = vmatpush1.bf16.msra.mxu0 0
    %4485 = vmatprep.subr.bf16.mxu0 0
    %4486 = vmatpush1.bf16.msra.mxu0 0
    %4487 = vmatprep.subr.bf16.mxu0 0
    %4488 = vmatpush1.bf16.msra.mxu0 0
    %4489 = vmatprep.subr.bf16.mxu0 0
    %4490 = vmatpush1.bf16.msra.mxu0 0
    %4491 = vmatprep.subr.bf16.mxu0 0
    %4492 = vmatpush1.bf16.msra.mxu0 0
    %4493 = vmatprep.subr.bf16.mxu0 0
    %4494 = vmatpush1.bf16.msra.mxu0 0
    %4495 = vmatprep.subr.bf16.mxu0 0
    %4496 = vmatpush1.bf16.msra.mxu0 0
    %4497 = vmatprep.subr.bf16.mxu0 0
    %4498 = vmatpush1.bf16.msra.mxu0 0
    %4499 = vmatprep.subr.bf16.mxu0 0
    %4500 = vmatpush1.bf16.msra.mxu0 0
    %4501 = vmatprep.subr.bf16.mxu0 0
    %4502 = vmatpush1.bf16.msra.mxu0 0
    %4503 = vmatprep.subr.bf16.mxu0 0
    %4504 = vmatpush1.bf16.msra.mxu0 0
    %4505 = vmatprep.subr.bf16.mxu0 0
    %4506 = vmatpush1.bf16.msra.mxu0 0
    %4507 = vmatprep.subr.bf16.mxu0 0
    %4508 = vmatpush1.bf16.msra.mxu0 0
    %4509 = vmatprep.subr.bf16.mxu0 0
    %4510 = vmatpush1.bf16.msra.mxu0 0
    %4511 = vmatprep.mubr.bf16.mxu0 0
    %4512 = vmatmul.mubr.bf16.gmra.mrb[0].mxu0 %v4477
    %v4513 = vpop.f32.mrb[0].mxu0
    %v4514 = vadd.f32 %v4462, %v4513
    %v4515 = vpop.f32.mrb[0].mxu0
    %v4516 = vpop.f32.mrb[0].mxu0
    %v4517 = vadd.f32 %v4462, %v4516
    %v4518 = vpop.f32.mrb[0].mxu0
    %4519 = vdwg.mxu0
    %v4520 = vmul.f32 %v4514, %v4514
    %v4521 = vmul.f32 %v4517, %v4517
    %v4522 = vmul.f32 %v4514, %v4520
    %v4523 = vmul.f32 %v4517, %v4521
    %v4524 = vmul.f32 %v4522, 0.044715
    %v4525 = vmul.f32 %v4523, 0.044715
    %v4526 = vadd.f32 %v4514, %v4524
    %v4527 = vadd.f32 %v4517, %v4525
    %v4528 = vmul.f32 %v4526, 0.7978846
    %v4529 = vmul.f32 %v4527, 0.7978846
    %v4530 = vtanh.pop %v4528
    %v4531 = vtanh.pop %v4529
    %v4532 = vadd.f32 %v4530, 1.0
    %v4533 = vadd.f32 %v4531, 1.0
    %v4534 = vmul.f32 %v4532, 0.5
    %v4535 = vmul.f32 %v4533, 0.5
    %v4536 = vmul.f32 %v4514, %v4534
    %v4537 = vmul.f32 %v4517, %v4535
    %v4538 = vpack.c.bf16 %v4537, %v4536
    %v4555 = vunpack.c.l.b16 %v3650
    %v4556 = vunpack.c.l.b16 %v3651
    %v4557 = vunpack.c.l.b16 %v3652
    %v4558 = vunpack.c.l.b16 %v3653
    %v4559 = vunpack.c.l.b16 %v3654
    %v4560 = vunpack.c.l.b16 %v3655
    %v4561 = vunpack.c.l.b16 %v3656
    %v4562 = vunpack.c.l.b16 %v3657
    %v4563 = vunpack.c.l.b16 %v3658
    %v4564 = vunpack.c.l.b16 %v3659
    %v4565 = vunpack.c.l.b16 %v3660
    %v4566 = vunpack.c.l.b16 %v3661
    %v4567 = vunpack.c.l.b16 %v3662
    %v4568 = vunpack.c.l.b16 %v3663
    %v4569 = vunpack.c.l.b16 %v3664
    %v4570 = vunpack.c.l.b16 %v3665
    %v4571 = vpack.c.b16 %v4556, %v4555
    %v4572 = vpack.c.b16 %v4558, %v4557
    %v4573 = vpack.c.b16 %v4560, %v4559
    %v4574 = vpack.c.b16 %v4562, %v4561
    %v4575 = vpack.c.b16 %v4564, %v4563
    %v4576 = vpack.c.b16 %v4566, %v4565
    %v4577 = vpack.c.b16 %v4568, %v4567
    %v4578 = vpack.c.b16 %v4570, %v4569
    %4587 = vmatprep.subr.bf16.mxu0 0
    %4588 = vmatpush1.bf16.msra.mxu0 %v4571
    %4589 = vmatprep.subr.bf16.mxu0 0
    %4590 = vmatpush1.bf16.msra.mxu0 %v4572
    %4591 = vmatprep.subr.bf16.mxu0 0
    %4592 = vmatpush1.bf16.msra.mxu0 %v4573
    %4593 = vmatprep.subr.bf16.mxu0 0
    %4594 = vmatpush1.bf16.msra.mxu0 %v4574
    %4595 = vmatprep.subr.bf16.mxu0 0
    %4596 = vmatpush1.bf16.msra.mxu0 %v4575
    %4597 = vmatprep.subr.bf16.mxu0 0
    %4598 = vmatpush1.bf16.msra.mxu0 %v4576
    %4599 = vmatprep.subr.bf16.mxu0 0
    %4600 = vmatpush1.bf16.msra.mxu0 %v4577
    %4601 = vmatprep.subr.bf16.mxu0 0
    %4602 = vmatpush1.bf16.msra.mxu0 %v4578
    %4603 = vmatprep.subr.bf16.mxu0 0
    %4604 = vmatpush1.bf16.msra.mxu0 0
    %4605 = vmatprep.subr.bf16.mxu0 0
    %4606 = vmatpush1.bf16.msra.mxu0 0
    %4607 = vmatprep.subr.bf16.mxu0 0
    %4608 = vmatpush1.bf16.msra.mxu0 0
    %4609 = vmatprep.subr.bf16.mxu0 0
    %4610 = vmatpush1.bf16.msra.mxu0 0
    %4611 = vmatprep.subr.bf16.mxu0 0
    %4612 = vmatpush1.bf16.msra.mxu0 0
    %4613 = vmatprep.subr.bf16.mxu0 0
    %4614 = vmatpush1.bf16.msra.mxu0 0
    %4615 = vmatprep.subr.bf16.mxu0 0
    %4616 = vmatpush1.bf16.msra.mxu0 0
    %4617 = vmatprep.subr.bf16.mxu0 0
    %4618 = vmatpush1.bf16.msra.mxu0 0
    %4619 = vmatprep.mubr.bf16.mxu0 0
    %4620 = vmatmul.mubr.bf16.gmra.mrb[0].mxu0 %v4538
    %v4621 = vpop.f32.mrb[0].mxu0
    %v4622 = vadd.f32 0.0, %v4621
    %v4623 = vpop.f32.mrb[0].mxu0
    %v4624 = vpop.f32.mrb[0].mxu0
    %v4625 = vadd.f32 0.0, %v4624
    %v4626 = vpop.f32.mrb[0].mxu0
    %4627 = vdwg.mxu0
    %v4628 = vadd.f32 %v4413, %v4622
    %v4629 = vadd.f32 %v4414, %v4625
    %v4631 = vlaneseq
    %v4632 = vshrl.u32 %v4631, 7
    %v4633 = vsub.s32 0, %v4632
    %v4634 = vrot.slane %v3667, %v4633
    %v4636 = vadd.f32 %v4628, %v4634
    %v4637 = vadd.f32 %v4629, %v4634
    %4638 = vst.msk [vmem:[#allocation10] sm:$0xff] %vm319, %v4636
    %4639 = vst.msk [vmem:[#allocation10 + $0x8] sm:$0xff] %vm319, %v4637
    // Predicated region
    $region194: #{tpu_custom_call.1} parent=1 // pred_check
      _
    $region195: #{tpu_custom_call.1} parent=1 // pred_check_branch
      %4641 = sbr.rel (0) target = $region197
    $region196: #{tpu_custom_call.1} parent=1 // pred_region
      %s4643 = ssub.s32 256, 256
      %4644 = vsyncadd [#allocation4], %s4643
      %s4645 = sshll.u32 [#allocation10], 4
      %s4646 = int_to_ptr.vmem [resolvable:$true] %s4645
      %4651 = dma.vmem_to_hbm [thread:$0]  %s4646, 256, %s89, [#allocation4], 128, 128, 8
    $region197: #{tpu_custom_call.1} parent=1 // pred_fallthru
      _
    // Predicated region
    $region198: #{tpu_custom_call.1} parent=1 // pred_check
      _
    $region199: #{tpu_custom_call.1} parent=1 // pred_check_branch
      %4653 = sbr.rel (0) target = $region201
    $region200: #{tpu_custom_call.1} parent=1 // pred_region
      %4654 = dma.done [#allocation4], 256
    $region201: #{tpu_custom_call.1} parent=1 // pred_fallthru
      _
    %4655 = vsyncpa [#allocation3], 1
    %4656 = vsyncpa [#allocation6], 1
    %4657 = vsyncpa [#allocation9], 1
    %4658 = vsyncpa [#allocation4], 1

</llo_original>
